<compile_context>
chip_gen: v7x
topology: tpu7x:2x2x1
jax: 0.10.0
libtpu: 0.0.40
codegen_flags: <defaults>
</compile_context>

<pallas_src>
import functools

import jax
import jax.numpy as jnp
import numpy as np
from jax.experimental import pallas as pl
from jax.experimental.pallas import tpu as pltpu

# ----------------------------- configuration --------------------------------
IMG_SIZE = 16
NUM_CHANNELS = 3          # f = (img_size // patch)**2 * 3 hard-codes 3 channels
NUM_CLASSES = 10
PATCH = 4                 # number of patches per side
PATCH_SIZE = IMG_SIZE // PATCH
FEAT = PATCH_SIZE * PATCH_SIZE * NUM_CHANNELS       # per-patch feature dim (= 48)
NUM_PATCHES = PATCH * PATCH                         # 16
NUM_TOKENS = NUM_PATCHES + 1                        # +1 cls token = 17
HIDDEN = 32
MLP_HIDDEN = 64
HEADS = 8
HEAD_DIM = HIDDEN // HEADS
NUM_LAYERS = 2
BATCH = 2
ATTN_DIV = HIDDEN / 19.5                            # self.d = feats / 19.5
LN_EPS = 1e-5
NEG_INF = -1e30


# ------------------------------ in-kernel math -------------------------------
def _erf_f32(x):
    """Single-precision erf (Eigen/XLA rational approximation)."""
    x = jnp.clip(x, -4.0, 4.0)
    x2 = x * x
    p = jnp.float32(-2.72614225801306e-10)
    p = p * x2 + jnp.float32(2.77068142495902e-08)
    p = p * x2 + jnp.float32(-2.10102402082508e-06)
    p = p * x2 + jnp.float32(-5.69250639462346e-05)
    p = p * x2 + jnp.float32(-7.34990630326855e-04)
    p = p * x2 + jnp.float32(-2.95459980854025e-03)
    p = p * x2 + jnp.float32(-1.60960333262415e-02)
    p = p * x
    q = jnp.float32(-1.45660718464996e-05)
    q = q * x2 + jnp.float32(-2.13374055278905e-04)
    q = q * x2 + jnp.float32(-1.68282697438203e-03)
    q = q * x2 + jnp.float32(-7.37332916720468e-03)
    q = q * x2 + jnp.float32(-1.42647390514189e-02)
    return p / q


def _gelu_exact(x):
    # nn.GELU() default: x * 0.5 * (1 + erf(x / sqrt(2)))
    return 0.5 * x * (1.0 + _erf_f32(x * jnp.float32(0.7071067811865476)))


def _layernorm(x, g, b):
    mu = jnp.mean(x, axis=-1, keepdims=True)
    xc = x - mu
    var = jnp.mean(xc * xc, axis=-1, keepdims=True)
    return xc * jax.lax.rsqrt(var + LN_EPS) * g + b


def _softmax_lastdim(s):
    s = s - jnp.max(s, axis=-1, keepdims=True)
    e = jnp.exp(s)
    return e * pl.reciprocal(jnp.sum(e, axis=-1, keepdims=True), approx=True)


# --------------------------------- kernel ------------------------------------
def vit_kernel(x_ref, we_ref, init_ref, mask_ref,
               ln1g_ref, ln1b_ref, wqkv_ref, bqkv_ref, wo_ref, bo_ref,
               ln2g_ref, ln2b_ref, wm1_ref, bm1_ref, wm2_ref, bm2_ref,
               lnfg_ref, lnfb_ref, wfc_ref, bfc_ref,
               out_ref, *, num_layers, num_heads, b_tile, num_tokens, attn_div):
    bf16 = jnp.bfloat16
    f32 = jnp.float32

    # Patch embedding for every token row of every batch element in one MXU
    # push; init_ref already folds the embedding bias, cls token and pos-emb
    # (cls rows of x are all-zero, so the matmul contributes nothing there).
    x = x_ref[...].astype(bf16)                                  # (S, FEAT)
    seq = jnp.dot(x, we_ref[...], preferred_element_type=f32) + init_ref[...]

    # Block-diagonal mask: rows of different batch elements in the shared
    # token slab must not attend to each other (hoisted out of the layer loop).
    attn_mask = mask_ref[...]                                    # (S, S), 0 / -1e30
    inv_div = jnp.float32(1.0 / attn_div)

    for l in range(num_layers):
        # ----- multi-head self-attention -----------------------------------
        y = _layernorm(seq, ln1g_ref[l], ln1b_ref[l])
        # Single batched matmul produces Q, K and V for all heads at once,
        # already laid out head-major for the batched attention einsums.
        y_rep = jnp.broadcast_to(y.astype(bf16), (3 * num_heads,) + y.shape)
        qkv = jnp.einsum("bnf,bfd->bnd", y_rep, wqkv_ref[l],
                         preferred_element_type=f32) + bqkv_ref[l]   # (3H, S, HD)
        q = qkv[:num_heads]
        k = qkv[num_heads:2 * num_heads]
        v = qkv[2 * num_heads:]

        s = jnp.einsum("hqd,hkd->hqk", q.astype(bf16), k.astype(bf16),
                       preferred_element_type=f32) * inv_div
        p = _softmax_lastdim(s + attn_mask[None, :, :])
        ctx = jnp.einsum("hqk,hkd->hqd", p.astype(bf16), v.astype(bf16),
                         preferred_element_type=f32)                 # (H, S, HD)
        # Output projection with head-major weights: contract per head and sum
        # over heads -> no transpose back to a lane-major head layout.
        o_h = jnp.einsum("hqd,hdo->hqo", ctx.astype(bf16), wo_ref[l],
                         preferred_element_type=f32)                 # (H, S, HIDDEN)
        seq = jnp.sum(o_h, axis=0) + bo_ref[l] + seq

        # ----- MLP block (Linear-GELU-Linear-GELU) ---------------------------
        y2 = _layernorm(seq, ln2g_ref[l], ln2b_ref[l])
        m = _gelu_exact(jnp.dot(y2.astype(bf16), wm1_ref[l],
                                preferred_element_type=f32) + bm1_ref[l])
        m = _gelu_exact(jnp.dot(m.astype(bf16), wm2_ref[l],
                                preferred_element_type=f32) + bm2_ref[l])
        seq = m + seq

    # ----- readout: final LayerNorm + linear on the cls row of each element --
    cls_rows = jnp.concatenate(
        [seq[b * num_tokens:b * num_tokens + 1, :] for b in range(b_tile)],
        axis=0)                                                    # (b_tile, HIDDEN)
    cls_ln = _layernorm(cls_rows, lnfg_ref[...], lnfb_ref[...])
    out_ref[...] = (jnp.dot(cls_ln.astype(bf16), wfc_ref[...],
                            preferred_element_type=f32) + bfc_ref[...])


# ------------------------------ host-side glue --------------------------------
def to_words(x):
    """(B, C, H, W) -> (B, patch**2, patch_size**2 * C) matching torch unfold."""
    b = x.shape[0]
    out = x.reshape(b, NUM_CHANNELS, PATCH, PATCH_SIZE, PATCH, PATCH_SIZE)
    out = jnp.transpose(out, (0, 2, 4, 3, 5, 1))   # (b, pi, pj, dh, dw, c)
    return out.reshape(b, NUM_PATCHES, FEAT)


def _full_spec(arr):
    nd = arr.ndim
    return pl.BlockSpec(arr.shape, lambda *args, _n=nd: (0,) * _n)


def make_params(key):
    ks = iter(jax.random.split(key, 40))
    nrm = lambda k, shape, s=0.02: (s * jax.random.normal(k, shape)).astype(jnp.float32)
    P = {
        "we": nrm(next(ks), (FEAT, HIDDEN)),
        "be": nrm(next(ks), (1, HIDDEN)),
        "cls": jax.random.normal(next(ks), (1, HIDDEN), jnp.float32),
        "pos": jax.random.normal(next(ks), (NUM_TOKENS, HIDDEN), jnp.float32),
        "ln1g": jnp.ones((NUM_LAYERS, 1, HIDDEN), jnp.float32),
        "ln1b": jnp.zeros((NUM_LAYERS, 1, HIDDEN), jnp.float32),
        "wq": nrm(next(ks), (NUM_LAYERS, HIDDEN, HIDDEN)),
        "bq": nrm(next(ks), (NUM_LAYERS, 1, HIDDEN)),
        "wk": nrm(next(ks), (NUM_LAYERS, HIDDEN, HIDDEN)),
        "bk": nrm(next(ks), (NUM_LAYERS, 1, HIDDEN)),
        "wv": nrm(next(ks), (NUM_LAYERS, HIDDEN, HIDDEN)),
        "bv": nrm(next(ks), (NUM_LAYERS, 1, HIDDEN)),
        "wo": nrm(next(ks), (NUM_LAYERS, HIDDEN, HIDDEN)),
        "bo": nrm(next(ks), (NUM_LAYERS, 1, HIDDEN)),
        "ln2g": jnp.ones((NUM_LAYERS, 1, HIDDEN), jnp.float32),
        "ln2b": jnp.zeros((NUM_LAYERS, 1, HIDDEN), jnp.float32),
        "wm1": nrm(next(ks), (NUM_LAYERS, HIDDEN, MLP_HIDDEN)),
        "bm1": nrm(next(ks), (NUM_LAYERS, 1, MLP_HIDDEN)),
        "wm2": nrm(next(ks), (NUM_LAYERS, MLP_HIDDEN, HIDDEN)),
        "bm2": nrm(next(ks), (NUM_LAYERS, 1, HIDDEN)),
        "lnfg": jnp.ones((1, HIDDEN), jnp.float32),
        "lnfb": jnp.zeros((1, HIDDEN), jnp.float32),
        "wfc": nrm(next(ks), (HIDDEN, NUM_CLASSES)),
        "bfc": nrm(next(ks), (1, NUM_CLASSES)),
    }
    return P


KPARAM_ORDER = ["we", "init_add", "attn_mask", "ln1g", "ln1b", "wqkv", "bqkv",
                "wo", "bo", "ln2g", "ln2b", "wm1", "bm1", "wm2", "bm2",
                "lnfg", "lnfb", "wfc", "bfc"]


def prepare_kernel_params(P, b_tile):
    """Host-side weight fusion / reshaping for the kernel (bf16 matmul weights)."""
    s_rows = b_tile * NUM_TOKENS
    bf16 = lambda a: a.astype(jnp.bfloat16)

    def heads_of_out(w):   # (L, HIDDEN, HIDDEN) -> (L, HEADS, HIDDEN, HEAD_DIM)
        return jnp.transpose(
            w.reshape(NUM_LAYERS, HIDDEN, HEADS, HEAD_DIM), (0, 2, 1, 3))

    def heads_of_bias(b):  # (L, 1, HIDDEN) -> (L, HEADS, 1, HEAD_DIM)
        return jnp.transpose(
            b.reshape(NUM_LAYERS, 1, HEADS, HEAD_DIM), (0, 2, 1, 3))

    # Fused, head-major Q/K/V weights: one batched matmul per layer.
    wqkv = jnp.concatenate(
        [heads_of_out(P["wq"]), heads_of_out(P["wk"]), heads_of_out(P["wv"])],
        axis=1)                                            # (L, 3H, HIDDEN, HD)
    bqkv = jnp.concatenate(
        [heads_of_bias(P["bq"]), heads_of_bias(P["bk"]), heads_of_bias(P["bv"])],
        axis=1)                                            # (L, 3H, 1, HD)
    bqkv = jnp.broadcast_to(bqkv, (NUM_LAYERS, 3 * HEADS, s_rows, HEAD_DIM))
    wo = P["wo"].reshape(NUM_LAYERS, HEADS, HEAD_DIM, HIDDEN)

    # cls token + positional embedding + patch-embedding bias folded into one
    # additive row table (cls rows of the input are all-zero "patches").
    init_one = jnp.concatenate([P["cls"] + P["pos"][0:1],
                                P["be"] + P["pos"][1:]], axis=0)    # (NT, HIDDEN)
    init_add = jnp.tile(init_one, (b_tile, 1)).astype(jnp.float32)  # (rows, HIDDEN)

    # Block-diagonal additive attention mask (batch separation inside the slab).
    rb = jnp.arange(s_rows)[:, None] // NUM_TOKENS
    cb = jnp.arange(s_rows)[None, :] // NUM_TOKENS
    attn_mask = jnp.where(rb == cb, 0.0, NEG_INF).astype(jnp.float32)

    return {
        "we": bf16(P["we"]), "init_add": init_add, "attn_mask": attn_mask,
        "ln1g": P["ln1g"], "ln1b": P["ln1b"],
        "wqkv": bf16(wqkv), "bqkv": bqkv.astype(jnp.float32),
        "wo": bf16(wo), "bo": P["bo"],
        "ln2g": P["ln2g"], "ln2b": P["ln2b"],
        "wm1": bf16(P["wm1"]), "bm1": P["bm1"],
        "wm2": bf16(P["wm2"]), "bm2": P["bm2"],
        "lnfg": P["lnfg"], "lnfb": P["lnfb"],
        "wfc": bf16(P["wfc"]), "bfc": P["bfc"],
    }


def _cost_estimate(batch, arrays):
    per_tok = (2 * HIDDEN * 3 * HIDDEN          # fused qkv
               + 2 * HIDDEN * HIDDEN            # output projection
               + 2 * 2 * HIDDEN * MLP_HIDDEN)   # mlp (two linears)
    attn = 4 * HEADS * NUM_TOKENS * NUM_TOKENS * HEAD_DIM
    flops = batch * (2 * NUM_PATCHES * FEAT * HIDDEN
                     + NUM_LAYERS * (NUM_TOKENS * per_tok + attn)
                     + 2 * HIDDEN * NUM_CLASSES)
    trans = batch * NUM_LAYERS * (HEADS * NUM_TOKENS * NUM_TOKENS
                                  + NUM_TOKENS * (MLP_HIDDEN + HIDDEN))
    nbytes = sum(int(a.size) * a.dtype.itemsize for a in arrays)
    nbytes += batch * NUM_CLASSES * 4
    return pl.CostEstimate(flops=int(flops), transcendentals=int(trans),
                           bytes_accessed=int(nbytes))


def vit_forward(x, P):
    # NOTE: PyTorch forward computes (x - mean)/std and then discards it,
    # calling self._to_words(x) on the raw input — reproduced here.
    b = x.shape[0]
    b_tile = b                      # whole batch per grid step; VMEM is tiny here
    s_rows = b_tile * NUM_TOKENS

    patches = to_words(x)                                          # (B, NP, FEAT)
    # Prepend a zero "patch" row per batch element for the cls slot; the cls
    # token / emb bias / pos-emb are folded into the init_add table host-side.
    x_tok = jnp.concatenate(
        [jnp.zeros((b, 1, FEAT), patches.dtype), patches], axis=1)  # (B, NT, FEAT)
    x_rows = x_tok.reshape(b * NUM_TOKENS, FEAT)                    # (B*NT, FEAT)

    KP = prepare_kernel_params(P, b_tile)
    plist = [KP[k] for k in KPARAM_ORDER]

    kernel = functools.partial(
        vit_kernel, num_layers=NUM_LAYERS, num_heads=HEADS,
        b_tile=b_tile, num_tokens=NUM_TOKENS, attn_div=ATTN_DIV)

    in_specs = ([pl.BlockSpec((s_rows, FEAT), lambda i: (i, 0))]
                + [_full_spec(p) for p in plist])
    out_specs = pl.BlockSpec((b_tile, NUM_CLASSES), lambda i: (i, 0))

    return pl.pallas_call(
        kernel,
        out_shape=jax.ShapeDtypeStruct((b, NUM_CLASSES), jnp.float32),
        grid=(b // b_tile,),
        in_specs=in_specs,
        out_specs=out_specs,
        compiler_params=pltpu.CompilerParams(
            dimension_semantics=("parallel",)),
        cost_estimate=_cost_estimate(b, [x_rows] + plist),
    )(x_rows, *plist)


# ------------------------------ pure-JAX reference ----------------------------
def _layernorm_ref(x, g, b):
    mu = jnp.mean(x, axis=-1, keepdims=True)
    var = jnp.mean((x - mu) ** 2, axis=-1, keepdims=True)
    return (x - mu) / jnp.sqrt(var + LN_EPS) * g + b


def vit_reference(x, P):
    b = x.shape[0]
    patches = to_words(x)
    tok = patches @ P["we"] + P["be"]
    cls = jnp.broadcast_to(P["cls"][None], (b, 1, HIDDEN))
    seq = jnp.concatenate([cls, tok], axis=1) + P["pos"][None]
    for l in range(NUM_LAYERS):
        y = _layernorm_ref(seq, P["ln1g"][l], P["ln1b"][l])
        def split_heads(t):
            return jnp.transpose(t.reshape(b, NUM_TOKENS, HEADS, HEAD_DIM),
                                 (0, 2, 1, 3))
        q = split_heads(y @ P["wq"][l] + P["bq"][l])
        k = split_heads(y @ P["wk"][l] + P["bk"][l])
        v = split_heads(y @ P["wv"][l] + P["bv"][l])
        s = jax.nn.softmax(jnp.einsum("bhif,bhjf->bhij", q, k) / ATTN_DIV, axis=-1)
        attn = jnp.einsum("bhij,bhjf->bihf", s, v).reshape(b, NUM_TOKENS, HIDDEN)
        seq = (attn @ P["wo"][l] + P["bo"][l]) + seq
        y = _layernorm_ref(seq, P["ln2g"][l], P["ln2b"][l])
        m = jax.nn.gelu(y @ P["wm1"][l] + P["bm1"][l], approximate=False)
        m = jax.nn.gelu(m @ P["wm2"][l] + P["bm2"][l], approximate=False)
        seq = m + seq
    cls_out = _layernorm_ref(seq[:, 0], P["lnfg"][0], P["lnfb"][0])
    return cls_out @ P["wfc"] + P["bfc"][0]


# ----------------------------------- main -------------------------------------
if __name__ == "__main__":
    key = jax.random.PRNGKey(0)
    kx, kp = jax.random.split(key)
    x = jax.random.normal(kx, (BATCH, NUM_CHANNELS, IMG_SIZE, IMG_SIZE), jnp.float32)
    params = make_params(kp)

    out = jax.block_until_ready(vit_forward(x, params))
    ref = jax.block_until_ready(vit_reference(x, params))

    assert out.shape == (BATCH, NUM_CLASSES)
    assert np.all(np.isfinite(np.asarray(out)))
    # Kernel matmuls run with bf16 inputs / f32 accumulation -> compare at 1e-2.
    np.testing.assert_allclose(np.asarray(out), np.asarray(ref),
                               rtol=1e-2, atol=1e-2)
    print("KERNEL_OK")
</pallas_src>

<mosaic_0001>
module attributes {stable_mosaic.version = 11 : i64} {
  func.func @vit_kernel(%arg0: i32, %arg1: memref<34x48xf32, #tpu.memory_space<vmem>>, %arg2: memref<48x32xbf16, #tpu.memory_space<vmem>>, %arg3: memref<34x32xf32, #tpu.memory_space<vmem>>, %arg4: memref<34x34xf32, #tpu.memory_space<vmem>>, %arg5: memref<2x1x32xf32, #tpu.memory_space<vmem>>, %arg6: memref<2x1x32xf32, #tpu.memory_space<vmem>>, %arg7: memref<2x24x32x4xbf16, #tpu.memory_space<vmem>>, %arg8: memref<2x24x34x4xf32, #tpu.memory_space<vmem>>, %arg9: memref<2x8x4x32xbf16, #tpu.memory_space<vmem>>, %arg10: memref<2x1x32xf32, #tpu.memory_space<vmem>>, %arg11: memref<2x1x32xf32, #tpu.memory_space<vmem>>, %arg12: memref<2x1x32xf32, #tpu.memory_space<vmem>>, %arg13: memref<2x32x64xbf16, #tpu.memory_space<vmem>>, %arg14: memref<2x1x64xf32, #tpu.memory_space<vmem>>, %arg15: memref<2x64x32xbf16, #tpu.memory_space<vmem>>, %arg16: memref<2x1x32xf32, #tpu.memory_space<vmem>>, %arg17: memref<1x32xf32, #tpu.memory_space<vmem>>, %arg18: memref<1x32xf32, #tpu.memory_space<vmem>>, %arg19: memref<32x10xbf16, #tpu.memory_space<vmem>>, %arg20: memref<1x10xf32, #tpu.memory_space<vmem>>, %arg21: memref<2x10xf32, #tpu.memory_space<vmem>>) attributes {dimension_semantics = [#tpu.dimension_semantics<parallel>], iteration_bounds = array<i64: 1>, scalar_prefetch = 0 : i64, scratch_operands = 0 : i64, tpu.core_type = #tpu.core_type<tc>, window_params = [{transform_indices = @transform_0, window_bounds = array<i64: 34, 48>}, {pipeline_mode = #tpu.pipeline_mode<synchronous>, transform_indices = @transform_1, window_bounds = array<i64: 48, 32>}, {pipeline_mode = #tpu.pipeline_mode<synchronous>, transform_indices = @transform_2, window_bounds = array<i64: 34, 32>}, {pipeline_mode = #tpu.pipeline_mode<synchronous>, transform_indices = @transform_3, window_bounds = array<i64: 34, 34>}, {pipeline_mode = #tpu.pipeline_mode<synchronous>, transform_indices = @transform_4, window_bounds = array<i64: 2, 1, 32>}, {pipeline_mode = #tpu.pipeline_mode<synchronous>, transform_indices = @transform_5, window_bounds = array<i64: 2, 1, 32>}, {pipeline_mode = #tpu.pipeline_mode<synchronous>, transform_indices = @transform_6, window_bounds = array<i64: 2, 24, 32, 4>}, {pipeline_mode = #tpu.pipeline_mode<synchronous>, transform_indices = @transform_7, window_bounds = array<i64: 2, 24, 34, 4>}, {pipeline_mode = #tpu.pipeline_mode<synchronous>, transform_indices = @transform_8, window_bounds = array<i64: 2, 8, 4, 32>}, {pipeline_mode = #tpu.pipeline_mode<synchronous>, transform_indices = @transform_9, window_bounds = array<i64: 2, 1, 32>}, {pipeline_mode = #tpu.pipeline_mode<synchronous>, transform_indices = @transform_10, window_bounds = array<i64: 2, 1, 32>}, {pipeline_mode = #tpu.pipeline_mode<synchronous>, transform_indices = @transform_11, window_bounds = array<i64: 2, 1, 32>}, {pipeline_mode = #tpu.pipeline_mode<synchronous>, transform_indices = @transform_12, window_bounds = array<i64: 2, 32, 64>}, {pipeline_mode = #tpu.pipeline_mode<synchronous>, transform_indices = @transform_13, window_bounds = array<i64: 2, 1, 64>}, {pipeline_mode = #tpu.pipeline_mode<synchronous>, transform_indices = @transform_14, window_bounds = array<i64: 2, 64, 32>}, {pipeline_mode = #tpu.pipeline_mode<synchronous>, transform_indices = @transform_15, window_bounds = array<i64: 2, 1, 32>}, {pipeline_mode = #tpu.pipeline_mode<synchronous>, transform_indices = @transform_16, window_bounds = array<i64: 1, 32>}, {pipeline_mode = #tpu.pipeline_mode<synchronous>, transform_indices = @transform_17, window_bounds = array<i64: 1, 32>}, {pipeline_mode = #tpu.pipeline_mode<synchronous>, transform_indices = @transform_18, window_bounds = array<i64: 32, 10>}, {pipeline_mode = #tpu.pipeline_mode<synchronous>, transform_indices = @transform_19, window_bounds = array<i64: 1, 10>}, {transform_indices = @transform_20, window_bounds = array<i64: 2, 10>}]} {
    %c0 = arith.constant 0 : index
    %c0_0 = arith.constant 0 : index
    %0 = vector.load %arg1[%c0, %c0_0] : memref<34x48xf32, #tpu.memory_space<vmem>>, vector<34x48xf32>
    %1 = arith.truncf %0 : vector<34x48xf32> to vector<34x48xbf16>
    %c0_1 = arith.constant 0 : index
    %c0_2 = arith.constant 0 : index
    %2 = vector.load %arg2[%c0_1, %c0_2] : memref<48x32xbf16, #tpu.memory_space<vmem>>, vector<48x32xbf16>
    %cst = arith.constant dense<0.000000e+00> : vector<34x32xf32>
    %3 = tpu.matmul %1, %2, %cst {dimension_numbers = #tpu.dot_dimension_numbers<[1], [0], [0], [1], [0, 0, 1, 1], [], []>} : vector<34x48xbf16>, vector<48x32xbf16>, vector<34x32xf32> -> vector<34x32xf32>
    %c0_3 = arith.constant 0 : index
    %c0_4 = arith.constant 0 : index
    %4 = vector.load %arg3[%c0_3, %c0_4] : memref<34x32xf32, #tpu.memory_space<vmem>>, vector<34x32xf32>
    %5 = arith.addf %3, %4 : vector<34x32xf32>
    %c0_5 = arith.constant 0 : index
    %c0_6 = arith.constant 0 : index
    %6 = vector.load %arg4[%c0_5, %c0_6] : memref<34x34xf32, #tpu.memory_space<vmem>>, vector<34x34xf32>
    %c0_7 = arith.constant 0 : index
    %c0_8 = arith.constant 0 : index
    %c0_9 = arith.constant 0 : index
    %7 = vector.load %arg5[%c0_7, %c0_8, %c0_9] : memref<2x1x32xf32, #tpu.memory_space<vmem>>, vector<1x1x32xf32>
    %8 = vector.shape_cast %7 : vector<1x1x32xf32> to vector<1x32xf32>
    %c0_10 = arith.constant 0 : index
    %c0_11 = arith.constant 0 : index
    %c0_12 = arith.constant 0 : index
    %9 = vector.load %arg6[%c0_10, %c0_11, %c0_12] : memref<2x1x32xf32, #tpu.memory_space<vmem>>, vector<1x1x32xf32>
    %10 = vector.shape_cast %9 : vector<1x1x32xf32> to vector<1x32xf32>
    %cst_13 = arith.constant dense<0.000000e+00> : vector<34xf32>
    %11 = vector.multi_reduction <add>, %5, %cst_13 [1] : vector<34x32xf32> to vector<34xf32>
    %12 = vector.shape_cast %11 : vector<34xf32> to vector<34x1xf32>
    %cst_14 = arith.constant 3.200000e+01 : f32
    %13 = vector.broadcast %cst_14 : f32 to vector<34x1xf32>
    %14 = arith.divf %12, %13 : vector<34x1xf32>
    %15 = vector.broadcast %14 : vector<34x1xf32> to vector<34x32xf32>
    %16 = arith.subf %5, %15 : vector<34x32xf32>
    %17 = arith.mulf %16, %16 : vector<34x32xf32>
    %cst_15 = arith.constant dense<0.000000e+00> : vector<34xf32>
    %18 = vector.multi_reduction <add>, %17, %cst_15 [1] : vector<34x32xf32> to vector<34xf32>
    %19 = vector.shape_cast %18 : vector<34xf32> to vector<34x1xf32>
    %cst_16 = arith.constant 3.200000e+01 : f32
    %20 = vector.broadcast %cst_16 : f32 to vector<34x1xf32>
    %21 = arith.divf %19, %20 : vector<34x1xf32>
    %cst_17 = arith.constant 9.99999974E-6 : f32
    %22 = vector.broadcast %cst_17 : f32 to vector<34x1xf32>
    %23 = arith.addf %21, %22 : vector<34x1xf32>
    %24 = math.rsqrt %23 : vector<34x1xf32>
    %25 = vector.broadcast %24 : vector<34x1xf32> to vector<34x32xf32>
    %26 = arith.mulf %16, %25 : vector<34x32xf32>
    %27 = vector.broadcast %8 : vector<1x32xf32> to vector<34x32xf32>
    %28 = arith.mulf %26, %27 : vector<34x32xf32>
    %29 = vector.broadcast %10 : vector<1x32xf32> to vector<34x32xf32>
    %30 = arith.addf %28, %29 : vector<34x32xf32>
    %31 = arith.truncf %30 : vector<34x32xf32> to vector<34x32xbf16>
    %32 = vector.shape_cast %31 : vector<34x32xbf16> to vector<1x34x32xbf16>
    %33 = vector.broadcast %32 : vector<1x34x32xbf16> to vector<24x34x32xbf16>
    %c0_18 = arith.constant 0 : index
    %c0_19 = arith.constant 0 : index
    %c0_20 = arith.constant 0 : index
    %c0_21 = arith.constant 0 : index
    %34 = vector.load %arg7[%c0_18, %c0_19, %c0_20, %c0_21] : memref<2x24x32x4xbf16, #tpu.memory_space<vmem>>, vector<1x24x32x4xbf16>
    %35 = vector.shape_cast %34 : vector<1x24x32x4xbf16> to vector<24x32x4xbf16>
    "tpu.trace_start"() <{level = 10 : i32, message = "bnf,bfd->bnd"}> : () -> ()
    %cst_22 = arith.constant dense<0.000000e+00> : vector<24x34x4xf32>
    %36 = tpu.matmul %33, %35, %cst_22 {dimension_numbers = #tpu.dot_dimension_numbers<[2], [1], [1], [2], [0, 0, 0, 1, 1, 2], [0], [0]>} : vector<24x34x32xbf16>, vector<24x32x4xbf16>, vector<24x34x4xf32> -> vector<24x34x4xf32>
    "tpu.trace_stop"() : () -> ()
    %c0_23 = arith.constant 0 : index
    %c0_24 = arith.constant 0 : index
    %c0_25 = arith.constant 0 : index
    %c0_26 = arith.constant 0 : index
    %37 = vector.load %arg8[%c0_23, %c0_24, %c0_25, %c0_26] : memref<2x24x34x4xf32, #tpu.memory_space<vmem>>, vector<1x24x34x4xf32>
    %38 = vector.shape_cast %37 : vector<1x24x34x4xf32> to vector<24x34x4xf32>
    %39 = arith.addf %36, %38 : vector<24x34x4xf32>
    %40 = vector.extract_strided_slice %39 {offsets = [0, 0, 0], sizes = [8, 34, 4], strides = [1, 1, 1]} : vector<24x34x4xf32> to vector<8x34x4xf32>
    %41 = vector.extract_strided_slice %39 {offsets = [8, 0, 0], sizes = [8, 34, 4], strides = [1, 1, 1]} : vector<24x34x4xf32> to vector<8x34x4xf32>
    %42 = vector.extract_strided_slice %39 {offsets = [16, 0, 0], sizes = [8, 34, 4], strides = [1, 1, 1]} : vector<24x34x4xf32> to vector<8x34x4xf32>
    %43 = arith.truncf %40 : vector<8x34x4xf32> to vector<8x34x4xbf16>
    %44 = arith.truncf %41 : vector<8x34x4xf32> to vector<8x34x4xbf16>
    "tpu.trace_start"() <{level = 10 : i32, message = "hqd,hkd->hqk"}> : () -> ()
    %cst_27 = arith.constant dense<0.000000e+00> : vector<8x34x34xf32>
    %45 = tpu.matmul %43, %44, %cst_27 {dimension_numbers = #tpu.dot_dimension_numbers<[2], [2], [1], [1], [0, 0, 0, 1, 1, 1], [0], [0]>} : vector<8x34x4xbf16>, vector<8x34x4xbf16>, vector<8x34x34xf32> -> vector<8x34x34xf32>
    "tpu.trace_stop"() : () -> ()
    %cst_28 = arith.constant 6.093750e-01 : f32
    %46 = vector.broadcast %cst_28 : f32 to vector<8x34x34xf32>
    %47 = arith.mulf %45, %46 : vector<8x34x34xf32>
    %48 = vector.shape_cast %6 : vector<34x34xf32> to vector<1x34x34xf32>
    %49 = vector.broadcast %48 : vector<1x34x34xf32> to vector<8x34x34xf32>
    %50 = arith.addf %47, %49 : vector<8x34x34xf32>
    %cst_29 = arith.constant dense<0xFF800000> : vector<8x34xf32>
    %51 = vector.multi_reduction <maximumf>, %50, %cst_29 [2] : vector<8x34x34xf32> to vector<8x34xf32>
    %52 = vector.shape_cast %51 : vector<8x34xf32> to vector<8x34x1xf32>
    %53 = vector.broadcast %52 : vector<8x34x1xf32> to vector<8x34x34xf32>
    %54 = arith.subf %50, %53 : vector<8x34x34xf32>
    %55 = math.exp %54 : vector<8x34x34xf32>
    %cst_30 = arith.constant dense<0.000000e+00> : vector<8x34xf32>
    %56 = vector.multi_reduction <add>, %55, %cst_30 [2] : vector<8x34x34xf32> to vector<8x34xf32>
    %57 = vector.shape_cast %56 : vector<8x34xf32> to vector<8x34x1xf32>
    %58 = tpu.reciprocal %57 {approx = true} : vector<8x34x1xf32> -> vector<8x34x1xf32>
    %59 = vector.broadcast %58 : vector<8x34x1xf32> to vector<8x34x34xf32>
    %60 = arith.mulf %55, %59 : vector<8x34x34xf32>
    %61 = arith.truncf %60 : vector<8x34x34xf32> to vector<8x34x34xbf16>
    %62 = arith.truncf %42 : vector<8x34x4xf32> to vector<8x34x4xbf16>
    "tpu.trace_start"() <{level = 10 : i32, message = "hqk,hkd->hqd"}> : () -> ()
    %cst_31 = arith.constant dense<0.000000e+00> : vector<8x34x4xf32>
    %63 = tpu.matmul %61, %62, %cst_31 {dimension_numbers = #tpu.dot_dimension_numbers<[2], [1], [1], [2], [0, 0, 0, 1, 1, 2], [0], [0]>} : vector<8x34x34xbf16>, vector<8x34x4xbf16>, vector<8x34x4xf32> -> vector<8x34x4xf32>
    "tpu.trace_stop"() : () -> ()
    %64 = arith.truncf %63 : vector<8x34x4xf32> to vector<8x34x4xbf16>
    %c0_32 = arith.constant 0 : index
    %c0_33 = arith.constant 0 : index
    %c0_34 = arith.constant 0 : index
    %c0_35 = arith.constant 0 : index
    %65 = vector.load %arg9[%c0_32, %c0_33, %c0_34, %c0_35] : memref<2x8x4x32xbf16, #tpu.memory_space<vmem>>, vector<1x8x4x32xbf16>
    %66 = vector.shape_cast %65 : vector<1x8x4x32xbf16> to vector<8x4x32xbf16>
    "tpu.trace_start"() <{level = 10 : i32, message = "hqd,hdo->hqo"}> : () -> ()
    %cst_36 = arith.constant dense<0.000000e+00> : vector<8x34x32xf32>
    %67 = tpu.matmul %64, %66, %cst_36 {dimension_numbers = #tpu.dot_dimension_numbers<[2], [1], [1], [2], [0, 0, 0, 1, 1, 2], [0], [0]>} : vector<8x34x4xbf16>, vector<8x4x32xbf16>, vector<8x34x32xf32> -> vector<8x34x32xf32>
    "tpu.trace_stop"() : () -> ()
    %cst_37 = arith.constant dense<0.000000e+00> : vector<34x32xf32>
    %68 = vector.multi_reduction <add>, %67, %cst_37 [0] : vector<8x34x32xf32> to vector<34x32xf32>
    %c0_38 = arith.constant 0 : index
    %c0_39 = arith.constant 0 : index
    %c0_40 = arith.constant 0 : index
    %69 = vector.load %arg10[%c0_38, %c0_39, %c0_40] : memref<2x1x32xf32, #tpu.memory_space<vmem>>, vector<1x1x32xf32>
    %70 = vector.shape_cast %69 : vector<1x1x32xf32> to vector<1x32xf32>
    %71 = vector.broadcast %70 : vector<1x32xf32> to vector<34x32xf32>
    %72 = arith.addf %68, %71 : vector<34x32xf32>
    %73 = arith.addf %72, %5 : vector<34x32xf32>
    %c0_41 = arith.constant 0 : index
    %c0_42 = arith.constant 0 : index
    %c0_43 = arith.constant 0 : index
    %74 = vector.load %arg11[%c0_41, %c0_42, %c0_43] : memref<2x1x32xf32, #tpu.memory_space<vmem>>, vector<1x1x32xf32>
    %75 = vector.shape_cast %74 : vector<1x1x32xf32> to vector<1x32xf32>
    %c0_44 = arith.constant 0 : index
    %c0_45 = arith.constant 0 : index
    %c0_46 = arith.constant 0 : index
    %76 = vector.load %arg12[%c0_44, %c0_45, %c0_46] : memref<2x1x32xf32, #tpu.memory_space<vmem>>, vector<1x1x32xf32>
    %77 = vector.shape_cast %76 : vector<1x1x32xf32> to vector<1x32xf32>
    %cst_47 = arith.constant dense<0.000000e+00> : vector<34xf32>
    %78 = vector.multi_reduction <add>, %73, %cst_47 [1] : vector<34x32xf32> to vector<34xf32>
    %79 = vector.shape_cast %78 : vector<34xf32> to vector<34x1xf32>
    %cst_48 = arith.constant 3.200000e+01 : f32
    %80 = vector.broadcast %cst_48 : f32 to vector<34x1xf32>
    %81 = arith.divf %79, %80 : vector<34x1xf32>
    %82 = vector.broadcast %81 : vector<34x1xf32> to vector<34x32xf32>
    %83 = arith.subf %73, %82 : vector<34x32xf32>
    %84 = arith.mulf %83, %83 : vector<34x32xf32>
    %cst_49 = arith.constant dense<0.000000e+00> : vector<34xf32>
    %85 = vector.multi_reduction <add>, %84, %cst_49 [1] : vector<34x32xf32> to vector<34xf32>
    %86 = vector.shape_cast %85 : vector<34xf32> to vector<34x1xf32>
    %cst_50 = arith.constant 3.200000e+01 : f32
    %87 = vector.broadcast %cst_50 : f32 to vector<34x1xf32>
    %88 = arith.divf %86, %87 : vector<34x1xf32>
    %cst_51 = arith.constant 9.99999974E-6 : f32
    %89 = vector.broadcast %cst_51 : f32 to vector<34x1xf32>
    %90 = arith.addf %88, %89 : vector<34x1xf32>
    %91 = math.rsqrt %90 : vector<34x1xf32>
    %92 = vector.broadcast %91 : vector<34x1xf32> to vector<34x32xf32>
    %93 = arith.mulf %83, %92 : vector<34x32xf32>
    %94 = vector.broadcast %75 : vector<1x32xf32> to vector<34x32xf32>
    %95 = arith.mulf %93, %94 : vector<34x32xf32>
    %96 = vector.broadcast %77 : vector<1x32xf32> to vector<34x32xf32>
    %97 = arith.addf %95, %96 : vector<34x32xf32>
    %98 = arith.truncf %97 : vector<34x32xf32> to vector<34x32xbf16>
    %c0_52 = arith.constant 0 : index
    %c0_53 = arith.constant 0 : index
    %c0_54 = arith.constant 0 : index
    %99 = vector.load %arg13[%c0_52, %c0_53, %c0_54] : memref<2x32x64xbf16, #tpu.memory_space<vmem>>, vector<1x32x64xbf16>
    %100 = vector.shape_cast %99 : vector<1x32x64xbf16> to vector<32x64xbf16>
    %cst_55 = arith.constant dense<0.000000e+00> : vector<34x64xf32>
    %101 = tpu.matmul %98, %100, %cst_55 {dimension_numbers = #tpu.dot_dimension_numbers<[1], [0], [0], [1], [0, 0, 1, 1], [], []>} : vector<34x32xbf16>, vector<32x64xbf16>, vector<34x64xf32> -> vector<34x64xf32>
    %c0_56 = arith.constant 0 : index
    %c0_57 = arith.constant 0 : index
    %c0_58 = arith.constant 0 : index
    %102 = vector.load %arg14[%c0_56, %c0_57, %c0_58] : memref<2x1x64xf32, #tpu.memory_space<vmem>>, vector<1x1x64xf32>
    %103 = vector.shape_cast %102 : vector<1x1x64xf32> to vector<1x64xf32>
    %104 = vector.broadcast %103 : vector<1x64xf32> to vector<34x64xf32>
    %105 = arith.addf %101, %104 : vector<34x64xf32>
    %cst_59 = arith.constant 5.000000e-01 : f32
    %106 = vector.broadcast %cst_59 : f32 to vector<34x64xf32>
    %107 = arith.mulf %106, %105 : vector<34x64xf32>
    %cst_60 = arith.constant 0.707106769 : f32
    %108 = vector.broadcast %cst_60 : f32 to vector<34x64xf32>
    %109 = arith.mulf %105, %108 : vector<34x64xf32>
    %cst_61 = arith.constant -4.000000e+00 : f32
    %cst_62 = arith.constant 4.000000e+00 : f32
    %110 = vector.broadcast %cst_61 : f32 to vector<34x64xf32>
    %111 = arith.maximumf %110, %109 : vector<34x64xf32>
    %112 = vector.broadcast %cst_62 : f32 to vector<34x64xf32>
    %113 = arith.minimumf %112, %111 : vector<34x64xf32>
    %114 = arith.mulf %113, %113 : vector<34x64xf32>
    %cst_63 = arith.constant -2.72614237E-10 : f32
    %115 = vector.broadcast %cst_63 : f32 to vector<34x64xf32>
    %116 = arith.mulf %115, %114 : vector<34x64xf32>
    %cst_64 = arith.constant 2.77068146E-8 : f32
    %117 = vector.broadcast %cst_64 : f32 to vector<34x64xf32>
    %118 = arith.addf %116, %117 : vector<34x64xf32>
    %119 = arith.mulf %118, %114 : vector<34x64xf32>
    %cst_65 = arith.constant -2.10102394E-6 : f32
    %120 = vector.broadcast %cst_65 : f32 to vector<34x64xf32>
    %121 = arith.addf %119, %120 : vector<34x64xf32>
    %122 = arith.mulf %121, %114 : vector<34x64xf32>
    %cst_66 = arith.constant -5.69250624E-5 : f32
    %123 = vector.broadcast %cst_66 : f32 to vector<34x64xf32>
    %124 = arith.addf %122, %123 : vector<34x64xf32>
    %125 = arith.mulf %124, %114 : vector<34x64xf32>
    %cst_67 = arith.constant -7.34990637E-4 : f32
    %126 = vector.broadcast %cst_67 : f32 to vector<34x64xf32>
    %127 = arith.addf %125, %126 : vector<34x64xf32>
    %128 = arith.mulf %127, %114 : vector<34x64xf32>
    %cst_68 = arith.constant -2.954600e-03 : f32
    %129 = vector.broadcast %cst_68 : f32 to vector<34x64xf32>
    %130 = arith.addf %128, %129 : vector<34x64xf32>
    %131 = arith.mulf %130, %114 : vector<34x64xf32>
    %cst_69 = arith.constant -0.0160960332 : f32
    %132 = vector.broadcast %cst_69 : f32 to vector<34x64xf32>
    %133 = arith.addf %131, %132 : vector<34x64xf32>
    %134 = arith.mulf %133, %113 : vector<34x64xf32>
    %cst_70 = arith.constant -1.45660715E-5 : f32
    %135 = vector.broadcast %cst_70 : f32 to vector<34x64xf32>
    %136 = arith.mulf %135, %114 : vector<34x64xf32>
    %cst_71 = arith.constant -2.13374049E-4 : f32
    %137 = vector.broadcast %cst_71 : f32 to vector<34x64xf32>
    %138 = arith.addf %136, %137 : vector<34x64xf32>
    %139 = arith.mulf %138, %114 : vector<34x64xf32>
    %cst_72 = arith.constant -0.00168282702 : f32
    %140 = vector.broadcast %cst_72 : f32 to vector<34x64xf32>
    %141 = arith.addf %139, %140 : vector<34x64xf32>
    %142 = arith.mulf %141, %114 : vector<34x64xf32>
    %cst_73 = arith.constant -0.00737332925 : f32
    %143 = vector.broadcast %cst_73 : f32 to vector<34x64xf32>
    %144 = arith.addf %142, %143 : vector<34x64xf32>
    %145 = arith.mulf %144, %114 : vector<34x64xf32>
    %cst_74 = arith.constant -0.0142647391 : f32
    %146 = vector.broadcast %cst_74 : f32 to vector<34x64xf32>
    %147 = arith.addf %145, %146 : vector<34x64xf32>
    %148 = arith.divf %134, %147 : vector<34x64xf32>
    %cst_75 = arith.constant 1.000000e+00 : f32
    %149 = vector.broadcast %cst_75 : f32 to vector<34x64xf32>
    %150 = arith.addf %149, %148 : vector<34x64xf32>
    %151 = arith.mulf %107, %150 : vector<34x64xf32>
    %152 = arith.truncf %151 : vector<34x64xf32> to vector<34x64xbf16>
    %c0_76 = arith.constant 0 : index
    %c0_77 = arith.constant 0 : index
    %c0_78 = arith.constant 0 : index
    %153 = vector.load %arg15[%c0_76, %c0_77, %c0_78] : memref<2x64x32xbf16, #tpu.memory_space<vmem>>, vector<1x64x32xbf16>
    %154 = vector.shape_cast %153 : vector<1x64x32xbf16> to vector<64x32xbf16>
    %cst_79 = arith.constant dense<0.000000e+00> : vector<34x32xf32>
    %155 = tpu.matmul %152, %154, %cst_79 {dimension_numbers = #tpu.dot_dimension_numbers<[1], [0], [0], [1], [0, 0, 1, 1], [], []>} : vector<34x64xbf16>, vector<64x32xbf16>, vector<34x32xf32> -> vector<34x32xf32>
    %c0_80 = arith.constant 0 : index
    %c0_81 = arith.constant 0 : index
    %c0_82 = arith.constant 0 : index
    %156 = vector.load %arg16[%c0_80, %c0_81, %c0_82] : memref<2x1x32xf32, #tpu.memory_space<vmem>>, vector<1x1x32xf32>
    %157 = vector.shape_cast %156 : vector<1x1x32xf32> to vector<1x32xf32>
    %158 = vector.broadcast %157 : vector<1x32xf32> to vector<34x32xf32>
    %159 = arith.addf %155, %158 : vector<34x32xf32>
    %cst_83 = arith.constant 5.000000e-01 : f32
    %160 = vector.broadcast %cst_83 : f32 to vector<34x32xf32>
    %161 = arith.mulf %160, %159 : vector<34x32xf32>
    %cst_84 = arith.constant 0.707106769 : f32
    %162 = vector.broadcast %cst_84 : f32 to vector<34x32xf32>
    %163 = arith.mulf %159, %162 : vector<34x32xf32>
    %cst_85 = arith.constant -4.000000e+00 : f32
    %cst_86 = arith.constant 4.000000e+00 : f32
    %164 = vector.broadcast %cst_85 : f32 to vector<34x32xf32>
    %165 = arith.maximumf %164, %163 : vector<34x32xf32>
    %166 = vector.broadcast %cst_86 : f32 to vector<34x32xf32>
    %167 = arith.minimumf %166, %165 : vector<34x32xf32>
    %168 = arith.mulf %167, %167 : vector<34x32xf32>
    %cst_87 = arith.constant -2.72614237E-10 : f32
    %169 = vector.broadcast %cst_87 : f32 to vector<34x32xf32>
    %170 = arith.mulf %169, %168 : vector<34x32xf32>
    %cst_88 = arith.constant 2.77068146E-8 : f32
    %171 = vector.broadcast %cst_88 : f32 to vector<34x32xf32>
    %172 = arith.addf %170, %171 : vector<34x32xf32>
    %173 = arith.mulf %172, %168 : vector<34x32xf32>
    %cst_89 = arith.constant -2.10102394E-6 : f32
    %174 = vector.broadcast %cst_89 : f32 to vector<34x32xf32>
    %175 = arith.addf %173, %174 : vector<34x32xf32>
    %176 = arith.mulf %175, %168 : vector<34x32xf32>
    %cst_90 = arith.constant -5.69250624E-5 : f32
    %177 = vector.broadcast %cst_90 : f32 to vector<34x32xf32>
    %178 = arith.addf %176, %177 : vector<34x32xf32>
    %179 = arith.mulf %178, %168 : vector<34x32xf32>
    %cst_91 = arith.constant -7.34990637E-4 : f32
    %180 = vector.broadcast %cst_91 : f32 to vector<34x32xf32>
    %181 = arith.addf %179, %180 : vector<34x32xf32>
    %182 = arith.mulf %181, %168 : vector<34x32xf32>
    %cst_92 = arith.constant -2.954600e-03 : f32
    %183 = vector.broadcast %cst_92 : f32 to vector<34x32xf32>
    %184 = arith.addf %182, %183 : vector<34x32xf32>
    %185 = arith.mulf %184, %168 : vector<34x32xf32>
    %cst_93 = arith.constant -0.0160960332 : f32
    %186 = vector.broadcast %cst_93 : f32 to vector<34x32xf32>
    %187 = arith.addf %185, %186 : vector<34x32xf32>
    %188 = arith.mulf %187, %167 : vector<34x32xf32>
    %cst_94 = arith.constant -1.45660715E-5 : f32
    %189 = vector.broadcast %cst_94 : f32 to vector<34x32xf32>
    %190 = arith.mulf %189, %168 : vector<34x32xf32>
    %cst_95 = arith.constant -2.13374049E-4 : f32
    %191 = vector.broadcast %cst_95 : f32 to vector<34x32xf32>
    %192 = arith.addf %190, %191 : vector<34x32xf32>
    %193 = arith.mulf %192, %168 : vector<34x32xf32>
    %cst_96 = arith.constant -0.00168282702 : f32
    %194 = vector.broadcast %cst_96 : f32 to vector<34x32xf32>
    %195 = arith.addf %193, %194 : vector<34x32xf32>
    %196 = arith.mulf %195, %168 : vector<34x32xf32>
    %cst_97 = arith.constant -0.00737332925 : f32
    %197 = vector.broadcast %cst_97 : f32 to vector<34x32xf32>
    %198 = arith.addf %196, %197 : vector<34x32xf32>
    %199 = arith.mulf %198, %168 : vector<34x32xf32>
    %cst_98 = arith.constant -0.0142647391 : f32
    %200 = vector.broadcast %cst_98 : f32 to vector<34x32xf32>
    %201 = arith.addf %199, %200 : vector<34x32xf32>
    %202 = arith.divf %188, %201 : vector<34x32xf32>
    %cst_99 = arith.constant 1.000000e+00 : f32
    %203 = vector.broadcast %cst_99 : f32 to vector<34x32xf32>
    %204 = arith.addf %203, %202 : vector<34x32xf32>
    %205 = arith.mulf %161, %204 : vector<34x32xf32>
    %206 = arith.addf %205, %73 : vector<34x32xf32>
    %c1 = arith.constant 1 : index
    %c0_100 = arith.constant 0 : index
    %c0_101 = arith.constant 0 : index
    %207 = vector.load %arg5[%c1, %c0_100, %c0_101] : memref<2x1x32xf32, #tpu.memory_space<vmem>>, vector<1x1x32xf32>
    %208 = vector.shape_cast %207 : vector<1x1x32xf32> to vector<1x32xf32>
    %c1_102 = arith.constant 1 : index
    %c0_103 = arith.constant 0 : index
    %c0_104 = arith.constant 0 : index
    %209 = vector.load %arg6[%c1_102, %c0_103, %c0_104] : memref<2x1x32xf32, #tpu.memory_space<vmem>>, vector<1x1x32xf32>
    %210 = vector.shape_cast %209 : vector<1x1x32xf32> to vector<1x32xf32>
    %cst_105 = arith.constant dense<0.000000e+00> : vector<34xf32>
    %211 = vector.multi_reduction <add>, %206, %cst_105 [1] : vector<34x32xf32> to vector<34xf32>
    %212 = vector.shape_cast %211 : vector<34xf32> to vector<34x1xf32>
    %cst_106 = arith.constant 3.200000e+01 : f32
    %213 = vector.broadcast %cst_106 : f32 to vector<34x1xf32>
    %214 = arith.divf %212, %213 : vector<34x1xf32>
    %215 = vector.broadcast %214 : vector<34x1xf32> to vector<34x32xf32>
    %216 = arith.subf %206, %215 : vector<34x32xf32>
    %217 = arith.mulf %216, %216 : vector<34x32xf32>
    %cst_107 = arith.constant dense<0.000000e+00> : vector<34xf32>
    %218 = vector.multi_reduction <add>, %217, %cst_107 [1] : vector<34x32xf32> to vector<34xf32>
    %219 = vector.shape_cast %218 : vector<34xf32> to vector<34x1xf32>
    %cst_108 = arith.constant 3.200000e+01 : f32
    %220 = vector.broadcast %cst_108 : f32 to vector<34x1xf32>
    %221 = arith.divf %219, %220 : vector<34x1xf32>
    %cst_109 = arith.constant 9.99999974E-6 : f32
    %222 = vector.broadcast %cst_109 : f32 to vector<34x1xf32>
    %223 = arith.addf %221, %222 : vector<34x1xf32>
    %224 = math.rsqrt %223 : vector<34x1xf32>
    %225 = vector.broadcast %224 : vector<34x1xf32> to vector<34x32xf32>
    %226 = arith.mulf %216, %225 : vector<34x32xf32>
    %227 = vector.broadcast %208 : vector<1x32xf32> to vector<34x32xf32>
    %228 = arith.mulf %226, %227 : vector<34x32xf32>
    %229 = vector.broadcast %210 : vector<1x32xf32> to vector<34x32xf32>
    %230 = arith.addf %228, %229 : vector<34x32xf32>
    %231 = arith.truncf %230 : vector<34x32xf32> to vector<34x32xbf16>
    %232 = vector.shape_cast %231 : vector<34x32xbf16> to vector<1x34x32xbf16>
    %233 = vector.broadcast %232 : vector<1x34x32xbf16> to vector<24x34x32xbf16>
    %c1_110 = arith.constant 1 : index
    %c0_111 = arith.constant 0 : index
    %c0_112 = arith.constant 0 : index
    %c0_113 = arith.constant 0 : index
    %234 = vector.load %arg7[%c1_110, %c0_111, %c0_112, %c0_113] : memref<2x24x32x4xbf16, #tpu.memory_space<vmem>>, vector<1x24x32x4xbf16>
    %235 = vector.shape_cast %234 : vector<1x24x32x4xbf16> to vector<24x32x4xbf16>
    "tpu.trace_start"() <{level = 10 : i32, message = "bnf,bfd->bnd"}> : () -> ()
    %cst_114 = arith.constant dense<0.000000e+00> : vector<24x34x4xf32>
    %236 = tpu.matmul %233, %235, %cst_114 {dimension_numbers = #tpu.dot_dimension_numbers<[2], [1], [1], [2], [0, 0, 0, 1, 1, 2], [0], [0]>} : vector<24x34x32xbf16>, vector<24x32x4xbf16>, vector<24x34x4xf32> -> vector<24x34x4xf32>
    "tpu.trace_stop"() : () -> ()
    %c1_115 = arith.constant 1 : index
    %c0_116 = arith.constant 0 : index
    %c0_117 = arith.constant 0 : index
    %c0_118 = arith.constant 0 : index
    %237 = vector.load %arg8[%c1_115, %c0_116, %c0_117, %c0_118] : memref<2x24x34x4xf32, #tpu.memory_space<vmem>>, vector<1x24x34x4xf32>
    %238 = vector.shape_cast %237 : vector<1x24x34x4xf32> to vector<24x34x4xf32>
    %239 = arith.addf %236, %238 : vector<24x34x4xf32>
    %240 = vector.extract_strided_slice %239 {offsets = [0, 0, 0], sizes = [8, 34, 4], strides = [1, 1, 1]} : vector<24x34x4xf32> to vector<8x34x4xf32>
    %241 = vector.extract_strided_slice %239 {offsets = [8, 0, 0], sizes = [8, 34, 4], strides = [1, 1, 1]} : vector<24x34x4xf32> to vector<8x34x4xf32>
    %242 = vector.extract_strided_slice %239 {offsets = [16, 0, 0], sizes = [8, 34, 4], strides = [1, 1, 1]} : vector<24x34x4xf32> to vector<8x34x4xf32>
    %243 = arith.truncf %240 : vector<8x34x4xf32> to vector<8x34x4xbf16>
    %244 = arith.truncf %241 : vector<8x34x4xf32> to vector<8x34x4xbf16>
    "tpu.trace_start"() <{level = 10 : i32, message = "hqd,hkd->hqk"}> : () -> ()
    %cst_119 = arith.constant dense<0.000000e+00> : vector<8x34x34xf32>
    %245 = tpu.matmul %243, %244, %cst_119 {dimension_numbers = #tpu.dot_dimension_numbers<[2], [2], [1], [1], [0, 0, 0, 1, 1, 1], [0], [0]>} : vector<8x34x4xbf16>, vector<8x34x4xbf16>, vector<8x34x34xf32> -> vector<8x34x34xf32>
    "tpu.trace_stop"() : () -> ()
    %cst_120 = arith.constant 6.093750e-01 : f32
    %246 = vector.broadcast %cst_120 : f32 to vector<8x34x34xf32>
    %247 = arith.mulf %245, %246 : vector<8x34x34xf32>
    %248 = vector.shape_cast %6 : vector<34x34xf32> to vector<1x34x34xf32>
    %249 = vector.broadcast %248 : vector<1x34x34xf32> to vector<8x34x34xf32>
    %250 = arith.addf %247, %249 : vector<8x34x34xf32>
    %cst_121 = arith.constant dense<0xFF800000> : vector<8x34xf32>
    %251 = vector.multi_reduction <maximumf>, %250, %cst_121 [2] : vector<8x34x34xf32> to vector<8x34xf32>
    %252 = vector.shape_cast %251 : vector<8x34xf32> to vector<8x34x1xf32>
    %253 = vector.broadcast %252 : vector<8x34x1xf32> to vector<8x34x34xf32>
    %254 = arith.subf %250, %253 : vector<8x34x34xf32>
    %255 = math.exp %254 : vector<8x34x34xf32>
    %cst_122 = arith.constant dense<0.000000e+00> : vector<8x34xf32>
    %256 = vector.multi_reduction <add>, %255, %cst_122 [2] : vector<8x34x34xf32> to vector<8x34xf32>
    %257 = vector.shape_cast %256 : vector<8x34xf32> to vector<8x34x1xf32>
    %258 = tpu.reciprocal %257 {approx = true} : vector<8x34x1xf32> -> vector<8x34x1xf32>
    %259 = vector.broadcast %258 : vector<8x34x1xf32> to vector<8x34x34xf32>
    %260 = arith.mulf %255, %259 : vector<8x34x34xf32>
    %261 = arith.truncf %260 : vector<8x34x34xf32> to vector<8x34x34xbf16>
    %262 = arith.truncf %242 : vector<8x34x4xf32> to vector<8x34x4xbf16>
    "tpu.trace_start"() <{level = 10 : i32, message = "hqk,hkd->hqd"}> : () -> ()
    %cst_123 = arith.constant dense<0.000000e+00> : vector<8x34x4xf32>
    %263 = tpu.matmul %261, %262, %cst_123 {dimension_numbers = #tpu.dot_dimension_numbers<[2], [1], [1], [2], [0, 0, 0, 1, 1, 2], [0], [0]>} : vector<8x34x34xbf16>, vector<8x34x4xbf16>, vector<8x34x4xf32> -> vector<8x34x4xf32>
    "tpu.trace_stop"() : () -> ()
    %264 = arith.truncf %263 : vector<8x34x4xf32> to vector<8x34x4xbf16>
    %c1_124 = arith.constant 1 : index
    %c0_125 = arith.constant 0 : index
    %c0_126 = arith.constant 0 : index
    %c0_127 = arith.constant 0 : index
    %265 = vector.load %arg9[%c1_124, %c0_125, %c0_126, %c0_127] : memref<2x8x4x32xbf16, #tpu.memory_space<vmem>>, vector<1x8x4x32xbf16>
    %266 = vector.shape_cast %265 : vector<1x8x4x32xbf16> to vector<8x4x32xbf16>
    "tpu.trace_start"() <{level = 10 : i32, message = "hqd,hdo->hqo"}> : () -> ()
    %cst_128 = arith.constant dense<0.000000e+00> : vector<8x34x32xf32>
    %267 = tpu.matmul %264, %266, %cst_128 {dimension_numbers = #tpu.dot_dimension_numbers<[2], [1], [1], [2], [0, 0, 0, 1, 1, 2], [0], [0]>} : vector<8x34x4xbf16>, vector<8x4x32xbf16>, vector<8x34x32xf32> -> vector<8x34x32xf32>
    "tpu.trace_stop"() : () -> ()
    %cst_129 = arith.constant dense<0.000000e+00> : vector<34x32xf32>
    %268 = vector.multi_reduction <add>, %267, %cst_129 [0] : vector<8x34x32xf32> to vector<34x32xf32>
    %c1_130 = arith.constant 1 : index
    %c0_131 = arith.constant 0 : index
    %c0_132 = arith.constant 0 : index
    %269 = vector.load %arg10[%c1_130, %c0_131, %c0_132] : memref<2x1x32xf32, #tpu.memory_space<vmem>>, vector<1x1x32xf32>
    %270 = vector.shape_cast %269 : vector<1x1x32xf32> to vector<1x32xf32>
    %271 = vector.broadcast %270 : vector<1x32xf32> to vector<34x32xf32>
    %272 = arith.addf %268, %271 : vector<34x32xf32>
    %273 = arith.addf %272, %206 : vector<34x32xf32>
    %c1_133 = arith.constant 1 : index
    %c0_134 = arith.constant 0 : index
    %c0_135 = arith.constant 0 : index
    %274 = vector.load %arg11[%c1_133, %c0_134, %c0_135] : memref<2x1x32xf32, #tpu.memory_space<vmem>>, vector<1x1x32xf32>
    %275 = vector.shape_cast %274 : vector<1x1x32xf32> to vector<1x32xf32>
    %c1_136 = arith.constant 1 : index
    %c0_137 = arith.constant 0 : index
    %c0_138 = arith.constant 0 : index
    %276 = vector.load %arg12[%c1_136, %c0_137, %c0_138] : memref<2x1x32xf32, #tpu.memory_space<vmem>>, vector<1x1x32xf32>
    %277 = vector.shape_cast %276 : vector<1x1x32xf32> to vector<1x32xf32>
    %cst_139 = arith.constant dense<0.000000e+00> : vector<34xf32>
    %278 = vector.multi_reduction <add>, %273, %cst_139 [1] : vector<34x32xf32> to vector<34xf32>
    %279 = vector.shape_cast %278 : vector<34xf32> to vector<34x1xf32>
    %cst_140 = arith.constant 3.200000e+01 : f32
    %280 = vector.broadcast %cst_140 : f32 to vector<34x1xf32>
    %281 = arith.divf %279, %280 : vector<34x1xf32>
    %282 = vector.broadcast %281 : vector<34x1xf32> to vector<34x32xf32>
    %283 = arith.subf %273, %282 : vector<34x32xf32>
    %284 = arith.mulf %283, %283 : vector<34x32xf32>
    %cst_141 = arith.constant dense<0.000000e+00> : vector<34xf32>
    %285 = vector.multi_reduction <add>, %284, %cst_141 [1] : vector<34x32xf32> to vector<34xf32>
    %286 = vector.shape_cast %285 : vector<34xf32> to vector<34x1xf32>
    %cst_142 = arith.constant 3.200000e+01 : f32
    %287 = vector.broadcast %cst_142 : f32 to vector<34x1xf32>
    %288 = arith.divf %286, %287 : vector<34x1xf32>
    %cst_143 = arith.constant 9.99999974E-6 : f32
    %289 = vector.broadcast %cst_143 : f32 to vector<34x1xf32>
    %290 = arith.addf %288, %289 : vector<34x1xf32>
    %291 = math.rsqrt %290 : vector<34x1xf32>
    %292 = vector.broadcast %291 : vector<34x1xf32> to vector<34x32xf32>
    %293 = arith.mulf %283, %292 : vector<34x32xf32>
    %294 = vector.broadcast %275 : vector<1x32xf32> to vector<34x32xf32>
    %295 = arith.mulf %293, %294 : vector<34x32xf32>
    %296 = vector.broadcast %277 : vector<1x32xf32> to vector<34x32xf32>
    %297 = arith.addf %295, %296 : vector<34x32xf32>
    %298 = arith.truncf %297 : vector<34x32xf32> to vector<34x32xbf16>
    %c1_144 = arith.constant 1 : index
    %c0_145 = arith.constant 0 : index
    %c0_146 = arith.constant 0 : index
    %299 = vector.load %arg13[%c1_144, %c0_145, %c0_146] : memref<2x32x64xbf16, #tpu.memory_space<vmem>>, vector<1x32x64xbf16>
    %300 = vector.shape_cast %299 : vector<1x32x64xbf16> to vector<32x64xbf16>
    %cst_147 = arith.constant dense<0.000000e+00> : vector<34x64xf32>
    %301 = tpu.matmul %298, %300, %cst_147 {dimension_numbers = #tpu.dot_dimension_numbers<[1], [0], [0], [1], [0, 0, 1, 1], [], []>} : vector<34x32xbf16>, vector<32x64xbf16>, vector<34x64xf32> -> vector<34x64xf32>
    %c1_148 = arith.constant 1 : index
    %c0_149 = arith.constant 0 : index
    %c0_150 = arith.constant 0 : index
    %302 = vector.load %arg14[%c1_148, %c0_149, %c0_150] : memref<2x1x64xf32, #tpu.memory_space<vmem>>, vector<1x1x64xf32>
    %303 = vector.shape_cast %302 : vector<1x1x64xf32> to vector<1x64xf32>
    %304 = vector.broadcast %303 : vector<1x64xf32> to vector<34x64xf32>
    %305 = arith.addf %301, %304 : vector<34x64xf32>
    %cst_151 = arith.constant 5.000000e-01 : f32
    %306 = vector.broadcast %cst_151 : f32 to vector<34x64xf32>
    %307 = arith.mulf %306, %305 : vector<34x64xf32>
    %cst_152 = arith.constant 0.707106769 : f32
    %308 = vector.broadcast %cst_152 : f32 to vector<34x64xf32>
    %309 = arith.mulf %305, %308 : vector<34x64xf32>
    %cst_153 = arith.constant -4.000000e+00 : f32
    %cst_154 = arith.constant 4.000000e+00 : f32
    %310 = vector.broadcast %cst_153 : f32 to vector<34x64xf32>
    %311 = arith.maximumf %310, %309 : vector<34x64xf32>
    %312 = vector.broadcast %cst_154 : f32 to vector<34x64xf32>
    %313 = arith.minimumf %312, %311 : vector<34x64xf32>
    %314 = arith.mulf %313, %313 : vector<34x64xf32>
    %cst_155 = arith.constant -2.72614237E-10 : f32
    %315 = vector.broadcast %cst_155 : f32 to vector<34x64xf32>
    %316 = arith.mulf %315, %314 : vector<34x64xf32>
    %cst_156 = arith.constant 2.77068146E-8 : f32
    %317 = vector.broadcast %cst_156 : f32 to vector<34x64xf32>
    %318 = arith.addf %316, %317 : vector<34x64xf32>
    %319 = arith.mulf %318, %314 : vector<34x64xf32>
    %cst_157 = arith.constant -2.10102394E-6 : f32
    %320 = vector.broadcast %cst_157 : f32 to vector<34x64xf32>
    %321 = arith.addf %319, %320 : vector<34x64xf32>
    %322 = arith.mulf %321, %314 : vector<34x64xf32>
    %cst_158 = arith.constant -5.69250624E-5 : f32
    %323 = vector.broadcast %cst_158 : f32 to vector<34x64xf32>
    %324 = arith.addf %322, %323 : vector<34x64xf32>
    %325 = arith.mulf %324, %314 : vector<34x64xf32>
    %cst_159 = arith.constant -7.34990637E-4 : f32
    %326 = vector.broadcast %cst_159 : f32 to vector<34x64xf32>
    %327 = arith.addf %325, %326 : vector<34x64xf32>
    %328 = arith.mulf %327, %314 : vector<34x64xf32>
    %cst_160 = arith.constant -2.954600e-03 : f32
    %329 = vector.broadcast %cst_160 : f32 to vector<34x64xf32>
    %330 = arith.addf %328, %329 : vector<34x64xf32>
    %331 = arith.mulf %330, %314 : vector<34x64xf32>
    %cst_161 = arith.constant -0.0160960332 : f32
    %332 = vector.broadcast %cst_161 : f32 to vector<34x64xf32>
    %333 = arith.addf %331, %332 : vector<34x64xf32>
    %334 = arith.mulf %333, %313 : vector<34x64xf32>
    %cst_162 = arith.constant -1.45660715E-5 : f32
    %335 = vector.broadcast %cst_162 : f32 to vector<34x64xf32>
    %336 = arith.mulf %335, %314 : vector<34x64xf32>
    %cst_163 = arith.constant -2.13374049E-4 : f32
    %337 = vector.broadcast %cst_163 : f32 to vector<34x64xf32>
    %338 = arith.addf %336, %337 : vector<34x64xf32>
    %339 = arith.mulf %338, %314 : vector<34x64xf32>
    %cst_164 = arith.constant -0.00168282702 : f32
    %340 = vector.broadcast %cst_164 : f32 to vector<34x64xf32>
    %341 = arith.addf %339, %340 : vector<34x64xf32>
    %342 = arith.mulf %341, %314 : vector<34x64xf32>
    %cst_165 = arith.constant -0.00737332925 : f32
    %343 = vector.broadcast %cst_165 : f32 to vector<34x64xf32>
    %344 = arith.addf %342, %343 : vector<34x64xf32>
    %345 = arith.mulf %344, %314 : vector<34x64xf32>
    %cst_166 = arith.constant -0.0142647391 : f32
    %346 = vector.broadcast %cst_166 : f32 to vector<34x64xf32>
    %347 = arith.addf %345, %346 : vector<34x64xf32>
    %348 = arith.divf %334, %347 : vector<34x64xf32>
    %cst_167 = arith.constant 1.000000e+00 : f32
    %349 = vector.broadcast %cst_167 : f32 to vector<34x64xf32>
    %350 = arith.addf %349, %348 : vector<34x64xf32>
    %351 = arith.mulf %307, %350 : vector<34x64xf32>
    %352 = arith.truncf %351 : vector<34x64xf32> to vector<34x64xbf16>
    %c1_168 = arith.constant 1 : index
    %c0_169 = arith.constant 0 : index
    %c0_170 = arith.constant 0 : index
    %353 = vector.load %arg15[%c1_168, %c0_169, %c0_170] : memref<2x64x32xbf16, #tpu.memory_space<vmem>>, vector<1x64x32xbf16>
    %354 = vector.shape_cast %353 : vector<1x64x32xbf16> to vector<64x32xbf16>
    %cst_171 = arith.constant dense<0.000000e+00> : vector<34x32xf32>
    %355 = tpu.matmul %352, %354, %cst_171 {dimension_numbers = #tpu.dot_dimension_numbers<[1], [0], [0], [1], [0, 0, 1, 1], [], []>} : vector<34x64xbf16>, vector<64x32xbf16>, vector<34x32xf32> -> vector<34x32xf32>
    %c1_172 = arith.constant 1 : index
    %c0_173 = arith.constant 0 : index
    %c0_174 = arith.constant 0 : index
    %356 = vector.load %arg16[%c1_172, %c0_173, %c0_174] : memref<2x1x32xf32, #tpu.memory_space<vmem>>, vector<1x1x32xf32>
    %357 = vector.shape_cast %356 : vector<1x1x32xf32> to vector<1x32xf32>
    %358 = vector.broadcast %357 : vector<1x32xf32> to vector<34x32xf32>
    %359 = arith.addf %355, %358 : vector<34x32xf32>
    %cst_175 = arith.constant 5.000000e-01 : f32
    %360 = vector.broadcast %cst_175 : f32 to vector<34x32xf32>
    %361 = arith.mulf %360, %359 : vector<34x32xf32>
    %cst_176 = arith.constant 0.707106769 : f32
    %362 = vector.broadcast %cst_176 : f32 to vector<34x32xf32>
    %363 = arith.mulf %359, %362 : vector<34x32xf32>
    %cst_177 = arith.constant -4.000000e+00 : f32
    %cst_178 = arith.constant 4.000000e+00 : f32
    %364 = vector.broadcast %cst_177 : f32 to vector<34x32xf32>
    %365 = arith.maximumf %364, %363 : vector<34x32xf32>
    %366 = vector.broadcast %cst_178 : f32 to vector<34x32xf32>
    %367 = arith.minimumf %366, %365 : vector<34x32xf32>
    %368 = arith.mulf %367, %367 : vector<34x32xf32>
    %cst_179 = arith.constant -2.72614237E-10 : f32
    %369 = vector.broadcast %cst_179 : f32 to vector<34x32xf32>
    %370 = arith.mulf %369, %368 : vector<34x32xf32>
    %cst_180 = arith.constant 2.77068146E-8 : f32
    %371 = vector.broadcast %cst_180 : f32 to vector<34x32xf32>
    %372 = arith.addf %370, %371 : vector<34x32xf32>
    %373 = arith.mulf %372, %368 : vector<34x32xf32>
    %cst_181 = arith.constant -2.10102394E-6 : f32
    %374 = vector.broadcast %cst_181 : f32 to vector<34x32xf32>
    %375 = arith.addf %373, %374 : vector<34x32xf32>
    %376 = arith.mulf %375, %368 : vector<34x32xf32>
    %cst_182 = arith.constant -5.69250624E-5 : f32
    %377 = vector.broadcast %cst_182 : f32 to vector<34x32xf32>
    %378 = arith.addf %376, %377 : vector<34x32xf32>
    %379 = arith.mulf %378, %368 : vector<34x32xf32>
    %cst_183 = arith.constant -7.34990637E-4 : f32
    %380 = vector.broadcast %cst_183 : f32 to vector<34x32xf32>
    %381 = arith.addf %379, %380 : vector<34x32xf32>
    %382 = arith.mulf %381, %368 : vector<34x32xf32>
    %cst_184 = arith.constant -2.954600e-03 : f32
    %383 = vector.broadcast %cst_184 : f32 to vector<34x32xf32>
    %384 = arith.addf %382, %383 : vector<34x32xf32>
    %385 = arith.mulf %384, %368 : vector<34x32xf32>
    %cst_185 = arith.constant -0.0160960332 : f32
    %386 = vector.broadcast %cst_185 : f32 to vector<34x32xf32>
    %387 = arith.addf %385, %386 : vector<34x32xf32>
    %388 = arith.mulf %387, %367 : vector<34x32xf32>
    %cst_186 = arith.constant -1.45660715E-5 : f32
    %389 = vector.broadcast %cst_186 : f32 to vector<34x32xf32>
    %390 = arith.mulf %389, %368 : vector<34x32xf32>
    %cst_187 = arith.constant -2.13374049E-4 : f32
    %391 = vector.broadcast %cst_187 : f32 to vector<34x32xf32>
    %392 = arith.addf %390, %391 : vector<34x32xf32>
    %393 = arith.mulf %392, %368 : vector<34x32xf32>
    %cst_188 = arith.constant -0.00168282702 : f32
    %394 = vector.broadcast %cst_188 : f32 to vector<34x32xf32>
    %395 = arith.addf %393, %394 : vector<34x32xf32>
    %396 = arith.mulf %395, %368 : vector<34x32xf32>
    %cst_189 = arith.constant -0.00737332925 : f32
    %397 = vector.broadcast %cst_189 : f32 to vector<34x32xf32>
    %398 = arith.addf %396, %397 : vector<34x32xf32>
    %399 = arith.mulf %398, %368 : vector<34x32xf32>
    %cst_190 = arith.constant -0.0142647391 : f32
    %400 = vector.broadcast %cst_190 : f32 to vector<34x32xf32>
    %401 = arith.addf %399, %400 : vector<34x32xf32>
    %402 = arith.divf %388, %401 : vector<34x32xf32>
    %cst_191 = arith.constant 1.000000e+00 : f32
    %403 = vector.broadcast %cst_191 : f32 to vector<34x32xf32>
    %404 = arith.addf %403, %402 : vector<34x32xf32>
    %405 = arith.mulf %361, %404 : vector<34x32xf32>
    %406 = arith.addf %405, %273 : vector<34x32xf32>
    %407 = vector.extract_strided_slice %406 {offsets = [0, 0], sizes = [1, 32], strides = [1, 1]} : vector<34x32xf32> to vector<1x32xf32>
    %408 = vector.extract_strided_slice %406 {offsets = [17, 0], sizes = [1, 32], strides = [1, 1]} : vector<34x32xf32> to vector<1x32xf32>
    %409 = tpu.concatenate %407, %408 in 0 : vector<1x32xf32>, vector<1x32xf32> -> vector<2x32xf32>
    %c0_192 = arith.constant 0 : index
    %c0_193 = arith.constant 0 : index
    %410 = vector.load %arg17[%c0_192, %c0_193] : memref<1x32xf32, #tpu.memory_space<vmem>>, vector<1x32xf32>
    %c0_194 = arith.constant 0 : index
    %c0_195 = arith.constant 0 : index
    %411 = vector.load %arg18[%c0_194, %c0_195] : memref<1x32xf32, #tpu.memory_space<vmem>>, vector<1x32xf32>
    %cst_196 = arith.constant dense<0.000000e+00> : vector<2xf32>
    %412 = vector.multi_reduction <add>, %409, %cst_196 [1] : vector<2x32xf32> to vector<2xf32>
    %413 = vector.shape_cast %412 : vector<2xf32> to vector<2x1xf32>
    %cst_197 = arith.constant 3.200000e+01 : f32
    %414 = vector.broadcast %cst_197 : f32 to vector<2x1xf32>
    %415 = arith.divf %413, %414 : vector<2x1xf32>
    %416 = vector.broadcast %415 : vector<2x1xf32> to vector<2x32xf32>
    %417 = arith.subf %409, %416 : vector<2x32xf32>
    %418 = arith.mulf %417, %417 : vector<2x32xf32>
    %cst_198 = arith.constant dense<0.000000e+00> : vector<2xf32>
    %419 = vector.multi_reduction <add>, %418, %cst_198 [1] : vector<2x32xf32> to vector<2xf32>
    %420 = vector.shape_cast %419 : vector<2xf32> to vector<2x1xf32>
    %cst_199 = arith.constant 3.200000e+01 : f32
    %421 = vector.broadcast %cst_199 : f32 to vector<2x1xf32>
    %422 = arith.divf %420, %421 : vector<2x1xf32>
    %cst_200 = arith.constant 9.99999974E-6 : f32
    %423 = vector.broadcast %cst_200 : f32 to vector<2x1xf32>
    %424 = arith.addf %422, %423 : vector<2x1xf32>
    %425 = math.rsqrt %424 : vector<2x1xf32>
    %426 = vector.broadcast %425 : vector<2x1xf32> to vector<2x32xf32>
    %427 = arith.mulf %417, %426 : vector<2x32xf32>
    %428 = vector.broadcast %410 : vector<1x32xf32> to vector<2x32xf32>
    %429 = arith.mulf %427, %428 : vector<2x32xf32>
    %430 = vector.broadcast %411 : vector<1x32xf32> to vector<2x32xf32>
    %431 = arith.addf %429, %430 : vector<2x32xf32>
    %432 = arith.truncf %431 : vector<2x32xf32> to vector<2x32xbf16>
    %c0_201 = arith.constant 0 : index
    %c0_202 = arith.constant 0 : index
    %433 = vector.load %arg19[%c0_201, %c0_202] : memref<32x10xbf16, #tpu.memory_space<vmem>>, vector<32x10xbf16>
    %cst_203 = arith.constant dense<0.000000e+00> : vector<2x10xf32>
    %434 = tpu.matmul %432, %433, %cst_203 {dimension_numbers = #tpu.dot_dimension_numbers<[1], [0], [0], [1], [0, 0, 1, 1], [], []>} : vector<2x32xbf16>, vector<32x10xbf16>, vector<2x10xf32> -> vector<2x10xf32>
    %c0_204 = arith.constant 0 : index
    %c0_205 = arith.constant 0 : index
    %435 = vector.load %arg20[%c0_204, %c0_205] : memref<1x10xf32, #tpu.memory_space<vmem>>, vector<1x10xf32>
    %436 = vector.broadcast %435 : vector<1x10xf32> to vector<2x10xf32>
    %437 = arith.addf %434, %436 : vector<2x10xf32>
    %c0_206 = arith.constant 0 : index
    %c0_207 = arith.constant 0 : index
    %438 = vector.load %arg21[%c0_206, %c0_207] : memref<2x10xf32, #tpu.memory_space<vmem>>, vector<2x10xf32>
    tpu.vector_store %arg21[%c0_206, %c0_207], %437 {strides = array<i32>} : memref<2x10xf32, #tpu.memory_space<vmem>>, vector<2x10xf32>,
    return
  }
  func.func @transform_0(%arg0: i32) -> (i32, i32) {
    %c0_i32 = arith.constant 0 : i32
    %c0_i32_0 = arith.constant 0 : i32
    return %arg0, %c0_i32 : i32, i32
  }
  func.func @transform_1(%arg0: i32) -> (i32, i32) {
    %c0_i32 = arith.constant 0 : i32
    %c0_i32_0 = arith.constant 0 : i32
    %c0_i32_1 = arith.constant 0 : i32
    return %c0_i32, %c0_i32_0 : i32, i32
  }
  func.func @transform_2(%arg0: i32) -> (i32, i32) {
    %c0_i32 = arith.constant 0 : i32
    %c0_i32_0 = arith.constant 0 : i32
    %c0_i32_1 = arith.constant 0 : i32
    return %c0_i32, %c0_i32_0 : i32, i32
  }
  func.func @transform_3(%arg0: i32) -> (i32, i32) {
    %c0_i32 = arith.constant 0 : i32
    %c0_i32_0 = arith.constant 0 : i32
    %c0_i32_1 = arith.constant 0 : i32
    return %c0_i32, %c0_i32_0 : i32, i32
  }
  func.func @transform_4(%arg0: i32) -> (i32, i32, i32) {
    %c0_i32 = arith.constant 0 : i32
    %c0_i32_0 = arith.constant 0 : i32
    %c0_i32_1 = arith.constant 0 : i32
    %c0_i32_2 = arith.constant 0 : i32
    return %c0_i32, %c0_i32_0, %c0_i32_1 : i32, i32, i32
  }
  func.func @transform_5(%arg0: i32) -> (i32, i32, i32) {
    %c0_i32 = arith.constant 0 : i32
    %c0_i32_0 = arith.constant 0 : i32
    %c0_i32_1 = arith.constant 0 : i32
    %c0_i32_2 = arith.constant 0 : i32
    return %c0_i32, %c0_i32_0, %c0_i32_1 : i32, i32, i32
  }
  func.func @transform_6(%arg0: i32) -> (i32, i32, i32, i32) {
    %c0_i32 = arith.constant 0 : i32
    %c0_i32_0 = arith.constant 0 : i32
    %c0_i32_1 = arith.constant 0 : i32
    %c0_i32_2 = arith.constant 0 : i32
    %c0_i32_3 = arith.constant 0 : i32
    return %c0_i32, %c0_i32_0, %c0_i32_1, %c0_i32_2 : i32, i32, i32, i32
  }
  func.func @transform_7(%arg0: i32) -> (i32, i32, i32, i32) {
    %c0_i32 = arith.constant 0 : i32
    %c0_i32_0 = arith.constant 0 : i32
    %c0_i32_1 = arith.constant 0 : i32
    %c0_i32_2 = arith.constant 0 : i32
    %c0_i32_3 = arith.constant 0 : i32
    return %c0_i32, %c0_i32_0, %c0_i32_1, %c0_i32_2 : i32, i32, i32, i32
  }
  func.func @transform_8(%arg0: i32) -> (i32, i32, i32, i32) {
    %c0_i32 = arith.constant 0 : i32
    %c0_i32_0 = arith.constant 0 : i32
    %c0_i32_1 = arith.constant 0 : i32
    %c0_i32_2 = arith.constant 0 : i32
    %c0_i32_3 = arith.constant 0 : i32
    return %c0_i32, %c0_i32_0, %c0_i32_1, %c0_i32_2 : i32, i32, i32, i32
  }
  func.func @transform_9(%arg0: i32) -> (i32, i32, i32) {
    %c0_i32 = arith.constant 0 : i32
    %c0_i32_0 = arith.constant 0 : i32
    %c0_i32_1 = arith.constant 0 : i32
    %c0_i32_2 = arith.constant 0 : i32
    return %c0_i32, %c0_i32_0, %c0_i32_1 : i32, i32, i32
  }
  func.func @transform_10(%arg0: i32) -> (i32, i32, i32) {
    %c0_i32 = arith.constant 0 : i32
    %c0_i32_0 = arith.constant 0 : i32
    %c0_i32_1 = arith.constant 0 : i32
    %c0_i32_2 = arith.constant 0 : i32
    return %c0_i32, %c0_i32_0, %c0_i32_1 : i32, i32, i32
  }
  func.func @transform_11(%arg0: i32) -> (i32, i32, i32) {
    %c0_i32 = arith.constant 0 : i32
    %c0_i32_0 = arith.constant 0 : i32
    %c0_i32_1 = arith.constant 0 : i32
    %c0_i32_2 = arith.constant 0 : i32
    return %c0_i32, %c0_i32_0, %c0_i32_1 : i32, i32, i32
  }
  func.func @transform_12(%arg0: i32) -> (i32, i32, i32) {
    %c0_i32 = arith.constant 0 : i32
    %c0_i32_0 = arith.constant 0 : i32
    %c0_i32_1 = arith.constant 0 : i32
    %c0_i32_2 = arith.constant 0 : i32
    return %c0_i32, %c0_i32_0, %c0_i32_1 : i32, i32, i32
  }
  func.func @transform_13(%arg0: i32) -> (i32, i32, i32) {
    %c0_i32 = arith.constant 0 : i32
    %c0_i32_0 = arith.constant 0 : i32
    %c0_i32_1 = arith.constant 0 : i32
    %c0_i32_2 = arith.constant 0 : i32
    return %c0_i32, %c0_i32_0, %c0_i32_1 : i32, i32, i32
  }
  func.func @transform_14(%arg0: i32) -> (i32, i32, i32) {
    %c0_i32 = arith.constant 0 : i32
    %c0_i32_0 = arith.constant 0 : i32
    %c0_i32_1 = arith.constant 0 : i32
    %c0_i32_2 = arith.constant 0 : i32
    return %c0_i32, %c0_i32_0, %c0_i32_1 : i32, i32, i32
  }
  func.func @transform_15(%arg0: i32) -> (i32, i32, i32) {
    %c0_i32 = arith.constant 0 : i32
    %c0_i32_0 = arith.constant 0 : i32
    %c0_i32_1 = arith.constant 0 : i32
    %c0_i32_2 = arith.constant 0 : i32
    return %c0_i32, %c0_i32_0, %c0_i32_1 : i32, i32, i32
  }
  func.func @transform_16(%arg0: i32) -> (i32, i32) {
    %c0_i32 = arith.constant 0 : i32
    %c0_i32_0 = arith.constant 0 : i32
    %c0_i32_1 = arith.constant 0 : i32
    return %c0_i32, %c0_i32_0 : i32, i32
  }
  func.func @transform_17(%arg0: i32) -> (i32, i32) {
    %c0_i32 = arith.constant 0 : i32
    %c0_i32_0 = arith.constant 0 : i32
    %c0_i32_1 = arith.constant 0 : i32
    return %c0_i32, %c0_i32_0 : i32, i32
  }
  func.func @transform_18(%arg0: i32) -> (i32, i32) {
    %c0_i32 = arith.constant 0 : i32
    %c0_i32_0 = arith.constant 0 : i32
    %c0_i32_1 = arith.constant 0 : i32
    return %c0_i32, %c0_i32_0 : i32, i32
  }
  func.func @transform_19(%arg0: i32) -> (i32, i32) {
    %c0_i32 = arith.constant 0 : i32
    %c0_i32_0 = arith.constant 0 : i32
    %c0_i32_1 = arith.constant 0 : i32
    return %c0_i32, %c0_i32_0 : i32, i32
  }
  func.func @transform_20(%arg0: i32) -> (i32, i32) {
    %c0_i32 = arith.constant 0 : i32
    %c0_i32_0 = arith.constant 0 : i32
    return %arg0, %c0_i32 : i32, i32
  }
}

</mosaic_0001>

<llo_original>
// kernel: tpu_custom_call.1
$region0: #{tpu_custom_call.1}
  #allocation0 [shape = 'u32[]', space=smem, size = 0x4, offset = 0x4, fixed_abs, tag = 'smem constant byte address 0x4 - core index']
  #allocation1 [shape = 'u32[144,128]{1,0:T(1,128)}', space=vmem, size = 0x12000, scoped, tag = 'internal scratch']
  %s0 = inlined_call_operand.vmem [shape: f32[34,48], index: 0, kind: input, shape index: {}]
  %s1 = inlined_call_operand.vmem [shape: bf16[48,32], index: 1, kind: input, shape index: {}]
  %s2 = inlined_call_operand.vmem [shape: f32[34,32], index: 2, kind: input, shape index: {}]
  %s3 = inlined_call_operand.vmem [shape: f32[34,34], index: 3, kind: input, shape index: {}]
  %s4 = inlined_call_operand.vmem [shape: f32[2,1,32], index: 4, kind: input, shape index: {}]
  %s5 = inlined_call_operand.vmem [shape: f32[2,1,32], index: 5, kind: input, shape index: {}]
  %s6 = inlined_call_operand.vmem [shape: bf16[2,24,32,4], index: 6, kind: input, shape index: {}]
  %s7 = inlined_call_operand.vmem [shape: f32[2,24,34,4], index: 7, kind: input, shape index: {}]
  %s8 = inlined_call_operand.vmem [shape: bf16[2,8,4,32], index: 8, kind: input, shape index: {}]
  %s9 = inlined_call_operand.vmem [shape: f32[2,1,32], index: 9, kind: input, shape index: {}]
  %s10 = inlined_call_operand.vmem [shape: f32[2,1,32], index: 10, kind: input, shape index: {}]
  %s11 = inlined_call_operand.vmem [shape: f32[2,1,32], index: 11, kind: input, shape index: {}]
  %s12 = inlined_call_operand.vmem [shape: bf16[2,32,64], index: 12, kind: input, shape index: {}]
  %s13 = inlined_call_operand.vmem [shape: f32[2,1,64], index: 13, kind: input, shape index: {}]
  %s14 = inlined_call_operand.vmem [shape: bf16[2,64,32], index: 14, kind: input, shape index: {}]
  %s15 = inlined_call_operand.vmem [shape: f32[2,1,32], index: 15, kind: input, shape index: {}]
  %s16 = inlined_call_operand.vmem [shape: f32[1,32], index: 16, kind: input, shape index: {}]
  %s17 = inlined_call_operand.vmem [shape: f32[1,32], index: 17, kind: input, shape index: {}]
  %s18 = inlined_call_operand.vmem [shape: bf16[32,10], index: 18, kind: input, shape index: {}]
  %s19 = inlined_call_operand.vmem [shape: f32[1,10], index: 19, kind: input, shape index: {}]
  %s20 = inlined_call_operand.hbm [shape: f32[2,10], index: 20, kind: output, shape index: {}]
  %s21 = sld [smem:[#allocation0]]
  $region90: #{tpu_custom_call.1} parent=0
    _
  %s23 = ssub.s32 1, %s21
  %s24 = scalar_select 0, %s23, %s21
  $region1: #{tpu_custom_call.1} parent=0
    #allocation2 [shape = 'u8[1024]{0}', space=vmem, size = 0x400, scoped, tag = 'output window, operand 0, single buffered']
    #allocation3 [shape = 's32[1]{0}', space=sflag, size = 0x4, scoped, tag = 'scoped memory for tpu_custom_call.1']
    %25 = vsyncpa [#allocation3], 0
    // Predicated region
    $region2: #{tpu_custom_call.1} parent=1 // pred_check
      _
    $region3: #{tpu_custom_call.1} parent=1 // pred_check_branch
      %27 = sbr.rel (0) target = $region5
    $region4: #{tpu_custom_call.1} parent=1 // pred_region
      _
    $region5: #{tpu_custom_call.1} parent=1 // pred_fallthru
      _
    // Predicated region
    $region6: #{tpu_custom_call.1} parent=1 // pred_check
      _
    $region7: #{tpu_custom_call.1} parent=1 // pred_check_branch
      %29 = sbr.rel (0) target = $region9
    $region8: #{tpu_custom_call.1} parent=1 // pred_region
      _
    $region9: #{tpu_custom_call.1} parent=1 // pred_fallthru
      _
    // Predicated region
    $region10: #{tpu_custom_call.1} parent=1 // pred_check
      _
    $region11: #{tpu_custom_call.1} parent=1 // pred_check_branch
      %31 = sbr.rel (0) target = $region13
    $region12: #{tpu_custom_call.1} parent=1 // pred_region
      _
    $region13: #{tpu_custom_call.1} parent=1 // pred_fallthru
      _
    // Predicated region
    $region14: #{tpu_custom_call.1} parent=1 // pred_check
      _
    $region15: #{tpu_custom_call.1} parent=1 // pred_check_branch
      %33 = sbr.rel (0) target = $region17
    $region16: #{tpu_custom_call.1} parent=1 // pred_region
      _
    $region17: #{tpu_custom_call.1} parent=1 // pred_fallthru
      _
    // Predicated region
    $region18: #{tpu_custom_call.1} parent=1 // pred_check
      _
    $region19: #{tpu_custom_call.1} parent=1 // pred_check_branch
      %35 = sbr.rel (0) target = $region21
    $region20: #{tpu_custom_call.1} parent=1 // pred_region
      _
    $region21: #{tpu_custom_call.1} parent=1 // pred_fallthru
      _
    // Predicated region
    $region22: #{tpu_custom_call.1} parent=1 // pred_check
      _
    $region23: #{tpu_custom_call.1} parent=1 // pred_check_branch
      %37 = sbr.rel (0) target = $region25
    $region24: #{tpu_custom_call.1} parent=1 // pred_region
      _
    $region25: #{tpu_custom_call.1} parent=1 // pred_fallthru
      _
    // Predicated region
    $region26: #{tpu_custom_call.1} parent=1 // pred_check
      _
    $region27: #{tpu_custom_call.1} parent=1 // pred_check_branch
      %39 = sbr.rel (0) target = $region29
    $region28: #{tpu_custom_call.1} parent=1 // pred_region
      _
    $region29: #{tpu_custom_call.1} parent=1 // pred_fallthru
      _
    // Predicated region
    $region30: #{tpu_custom_call.1} parent=1 // pred_check
      _
    $region31: #{tpu_custom_call.1} parent=1 // pred_check_branch
      %41 = sbr.rel (0) target = $region33
    $region32: #{tpu_custom_call.1} parent=1 // pred_region
      _
    $region33: #{tpu_custom_call.1} parent=1 // pred_fallthru
      _
    // Predicated region
    $region34: #{tpu_custom_call.1} parent=1 // pred_check
      _
    $region35: #{tpu_custom_call.1} parent=1 // pred_check_branch
      %43 = sbr.rel (0) target = $region37
    $region36: #{tpu_custom_call.1} parent=1 // pred_region
      _
    $region37: #{tpu_custom_call.1} parent=1 // pred_fallthru
      _
    // Predicated region
    $region38: #{tpu_custom_call.1} parent=1 // pred_check
      _
    $region39: #{tpu_custom_call.1} parent=1 // pred_check_branch
      %45 = sbr.rel (0) target = $region41
    $region40: #{tpu_custom_call.1} parent=1 // pred_region
      _
    $region41: #{tpu_custom_call.1} parent=1 // pred_fallthru
      _
    // Predicated region
    $region42: #{tpu_custom_call.1} parent=1 // pred_check
      _
    $region43: #{tpu_custom_call.1} parent=1 // pred_check_branch
      %47 = sbr.rel (0) target = $region45
    $region44: #{tpu_custom_call.1} parent=1 // pred_region
      _
    $region45: #{tpu_custom_call.1} parent=1 // pred_fallthru
      _
    // Predicated region
    $region46: #{tpu_custom_call.1} parent=1 // pred_check
      _
    $region47: #{tpu_custom_call.1} parent=1 // pred_check_branch
      %49 = sbr.rel (0) target = $region49
    $region48: #{tpu_custom_call.1} parent=1 // pred_region
      _
    $region49: #{tpu_custom_call.1} parent=1 // pred_fallthru
      _
    // Predicated region
    $region50: #{tpu_custom_call.1} parent=1 // pred_check
      _
    $region51: #{tpu_custom_call.1} parent=1 // pred_check_branch
      %51 = sbr.rel (0) target = $region53
    $region52: #{tpu_custom_call.1} parent=1 // pred_region
      _
    $region53: #{tpu_custom_call.1} parent=1 // pred_fallthru
      _
    // Predicated region
    $region54: #{tpu_custom_call.1} parent=1 // pred_check
      _
    $region55: #{tpu_custom_call.1} parent=1 // pred_check_branch
      %53 = sbr.rel (0) target = $region57
    $region56: #{tpu_custom_call.1} parent=1 // pred_region
      _
    $region57: #{tpu_custom_call.1} parent=1 // pred_fallthru
      _
    // Predicated region
    $region58: #{tpu_custom_call.1} parent=1 // pred_check
      _
    $region59: #{tpu_custom_call.1} parent=1 // pred_check_branch
      %55 = sbr.rel (0) target = $region61
    $region60: #{tpu_custom_call.1} parent=1 // pred_region
      _
    $region61: #{tpu_custom_call.1} parent=1 // pred_fallthru
      _
    // Predicated region
    $region62: #{tpu_custom_call.1} parent=1 // pred_check
      _
    $region63: #{tpu_custom_call.1} parent=1 // pred_check_branch
      %57 = sbr.rel (0) target = $region65
    $region64: #{tpu_custom_call.1} parent=1 // pred_region
      _
    $region65: #{tpu_custom_call.1} parent=1 // pred_fallthru
      _
    // Predicated region
    $region66: #{tpu_custom_call.1} parent=1 // pred_check
      _
    $region67: #{tpu_custom_call.1} parent=1 // pred_check_branch
      %59 = sbr.rel (0) target = $region69
    $region68: #{tpu_custom_call.1} parent=1 // pred_region
      _
    $region69: #{tpu_custom_call.1} parent=1 // pred_fallthru
      _
    // Predicated region
    $region70: #{tpu_custom_call.1} parent=1 // pred_check
      _
    $region71: #{tpu_custom_call.1} parent=1 // pred_check_branch
      %61 = sbr.rel (0) target = $region73
    $region72: #{tpu_custom_call.1} parent=1 // pred_region
      _
    $region73: #{tpu_custom_call.1} parent=1 // pred_fallthru
      _
    // Predicated region
    $region74: #{tpu_custom_call.1} parent=1 // pred_check
      _
    $region75: #{tpu_custom_call.1} parent=1 // pred_check_branch
      %63 = sbr.rel (0) target = $region77
    $region76: #{tpu_custom_call.1} parent=1 // pred_region
      _
    $region77: #{tpu_custom_call.1} parent=1 // pred_fallthru
      _
    // Predicated region
    $region78: #{tpu_custom_call.1} parent=1 // pred_check
      _
    $region79: #{tpu_custom_call.1} parent=1 // pred_check_branch
      %65 = sbr.rel (0) target = $region81
    $region80: #{tpu_custom_call.1} parent=1 // pred_region
      _
    $region81: #{tpu_custom_call.1} parent=1 // pred_fallthru
      _
    %v67 = vld [vmem:[%s0] sm:$0xff]
    %v68 = vld [vmem:[%s0 + $0x8] sm:$0xff]
    %v69 = vld [vmem:[%s0 + $0x10] sm:$0xff]
    %v70 = vld [vmem:[%s0 + $0x18] sm:$0xff]
    %v71 = vld [vmem:[%s0 + $0x20] sm:$0x3]
    %v72 = vpack.c.bf16 %v68, %v67
    %v73 = vpack.c.bf16 %v70, %v69
    %v74 = vpack.c.bf16 %v71, %v71
    %v75 = vld [vmem:[%s1] sm:$0xf]
    %v76 = vld [vmem:[%s1 + $0x4] sm:$0xf]
    %v77 = vld [vmem:[%s1 + $0x8] sm:$0xf]
    %v78 = vld [vmem:[%s1 + $0xc] sm:$0xf]
    %v79 = vld [vmem:[%s1 + $0x10] sm:$0xf]
    %v80 = vld [vmem:[%s1 + $0x14] sm:$0xf]
    %v81 = vld [vmem:[%s2] sm:$0xff]
    %v82 = vld [vmem:[%s2 + $0x8] sm:$0xff]
    %v83 = vld [vmem:[%s2 + $0x10] sm:$0xff]
    %v84 = vld [vmem:[%s2 + $0x18] sm:$0xff]
    %v85 = vld [vmem:[%s2 + $0x20] sm:$0x3]
    %v92 = vunpack.c.l.b16 %v75
    %v93 = vunpack.c.l.b16 %v76
    %v94 = vunpack.c.l.b16 %v77
    %v95 = vunpack.c.l.b16 %v78
    %v96 = vunpack.c.l.b16 %v79
    %v97 = vunpack.c.l.b16 %v80
    %v98 = vpack.c.b16 %v93, %v92
    %v99 = vpack.c.b16 %v95, %v94
    %v100 = vpack.c.b16 %v97, %v96
    %vm104 = vcmask 392192
    %v106 = vsel %vm104, %v72, 0
    %v109 = vsel %vm104, %v73, 0
    %v112 = vsel %vm104, %v74, 0
    %114 = vmatprep.subr.bf16.mxu0 0
    %115 = vmatpush1.bf16.msra.mxu0 %v98
    %116 = vmatprep.subr.bf16.mxu0 0
    %117 = vmatpush1.bf16.msra.mxu0 %v99
    %118 = vmatprep.subr.bf16.mxu0 0
    %119 = vmatpush1.bf16.msra.mxu0 %v100
    %120 = vmatprep.subr.bf16.mxu0 0
    %121 = vmatpush1.bf16.msra.mxu0 0
    %122 = vmatprep.subr.bf16.mxu0 0
    %123 = vmatpush1.bf16.msra.mxu0 0
    %124 = vmatprep.subr.bf16.mxu0 0
    %125 = vmatpush1.bf16.msra.mxu0 0
    %126 = vmatprep.subr.bf16.mxu0 0
    %127 = vmatpush1.bf16.msra.mxu0 0
    %128 = vmatprep.subr.bf16.mxu0 0
    %129 = vmatpush1.bf16.msra.mxu0 0
    %130 = vmatprep.subr.bf16.mxu0 0
    %131 = vmatpush1.bf16.msra.mxu0 0
    %132 = vmatprep.subr.bf16.mxu0 0
    %133 = vmatpush1.bf16.msra.mxu0 0
    %134 = vmatprep.subr.bf16.mxu0 0
    %135 = vmatpush1.bf16.msra.mxu0 0
    %136 = vmatprep.subr.bf16.mxu0 0
    %137 = vmatpush1.bf16.msra.mxu0 0
    %138 = vmatprep.subr.bf16.mxu0 0
    %139 = vmatpush1.bf16.msra.mxu0 0
    %140 = vmatprep.subr.bf16.mxu0 0
    %141 = vmatpush1.bf16.msra.mxu0 0
    %142 = vmatprep.subr.bf16.mxu0 0
    %143 = vmatpush1.bf16.msra.mxu0 0
    %144 = vmatprep.subr.bf16.mxu0 0
    %145 = vmatpush1.bf16.msra.mxu0 0
    %146 = vmatprep.mubr.bf16.mxu0 0
    %147 = vmatmul.mubr.bf16.gmra.mrb[0].mxu0 %v106
    %v148 = vpop.f32.mrb[0].mxu0
    %v149 = vadd.f32 %v81, %v148
    %v150 = vpop.f32.mrb[0].mxu0
    %v151 = vpop.f32.mrb[0].mxu0
    %v152 = vadd.f32 %v82, %v151
    %v153 = vpop.f32.mrb[0].mxu0
    %154 = vmatprep.mubr.bf16.mxu0 0
    %155 = vmatmul.mubr.bf16.gmra.mrb[0].mxu0 %v109
    %v156 = vpop.f32.mrb[0].mxu0
    %v157 = vadd.f32 %v83, %v156
    %v158 = vpop.f32.mrb[0].mxu0
    %v159 = vpop.f32.mrb[0].mxu0
    %v160 = vadd.f32 %v84, %v159
    %v161 = vpop.f32.mrb[0].mxu0
    %162 = vmatprep.mubr.bf16.mxu0 0
    %163 = vmatmul.mubr.bf16.gmra.mrb[0].mxu0 %v112
    %v164 = vpop.f32.mrb[0].mxu0
    %v165 = vadd.f32 %v85, %v164
    %v166 = vpop.f32.mrb[0].mxu0
    %v167 = vpop.f32.mrb[0].mxu0
    %v168 = vpop.f32.mrb[0].mxu0
    %169 = vdwg.mxu0
    %v170 = vld [vmem:[%s3] sm:$0xff]
    %v171 = vld [vmem:[%s3 + $0x8] sm:$0xff]
    %v172 = vld [vmem:[%s3 + $0x10] sm:$0xff]
    %v173 = vld [vmem:[%s3 + $0x18] sm:$0xff]
    %v174 = vld [vmem:[%s3 + $0x20] sm:$0x3]
    %v175 = vld [vmem:[%s4] sm:$0x1]
    %v176 = vld [vmem:[%s5] sm:$0x1]
    %vm177 = vcmask 261120
    %v178 = vsel %vm177, %v149, 0.0
    %179 = vadd.xlane.f32.xlu0 %v178
    %v180 = vpop.xlane.xlu0 %179
    %v181 = vsel %vm177, %v152, 0.0
    %182 = vadd.xlane.f32.xlu0 %v181
    %v183 = vpop.xlane.xlu0 %182
    %v184 = vsel %vm177, %v157, 0.0
    %185 = vadd.xlane.f32.xlu0 %v184
    %v186 = vpop.xlane.xlu0 %185
    %v187 = vsel %vm177, %v160, 0.0
    %188 = vadd.xlane.f32.xlu0 %v187
    %v189 = vpop.xlane.xlu0 %188
    %vm190 = vcmask 254976
    %v191 = vsel %vm190, %v165, 0.0
    %192 = vadd.xlane.f32.xlu0 %v191
    %v193 = vpop.xlane.xlu0 %192
    %v194 = vrcp.pop 32.0
    %v195 = vmul.f32 %v180, %v194
    %v196 = vmul.f32 %v183, %v194
    %v197 = vmul.f32 %v186, %v194
    %v198 = vmul.f32 %v189, %v194
    %v199 = vmul.f32 %v193, %v194
    %v200 = vsub.f32 %v149, %v195
    %v201 = vsub.f32 %v152, %v196
    %v202 = vsub.f32 %v157, %v197
    %v203 = vsub.f32 %v160, %v198
    %v204 = vsub.f32 %v165, %v199
    %v205 = vmul.f32 %v200, %v200
    %v206 = vmul.f32 %v201, %v201
    %v207 = vmul.f32 %v202, %v202
    %v208 = vmul.f32 %v203, %v203
    %v209 = vmul.f32 %v204, %v204
    %v210 = vsel %vm177, %v205, 0.0
    %211 = vadd.xlane.f32.xlu0 %v210
    %v212 = vpop.xlane.xlu0 %211
    %v213 = vsel %vm177, %v206, 0.0
    %214 = vadd.xlane.f32.xlu0 %v213
    %v215 = vpop.xlane.xlu0 %214
    %v216 = vsel %vm177, %v207, 0.0
    %217 = vadd.xlane.f32.xlu0 %v216
    %v218 = vpop.xlane.xlu0 %217
    %v219 = vsel %vm177, %v208, 0.0
    %220 = vadd.xlane.f32.xlu0 %v219
    %v221 = vpop.xlane.xlu0 %220
    %v222 = vsel %vm190, %v209, 0.0
    %223 = vadd.xlane.f32.xlu0 %v222
    %v224 = vpop.xlane.xlu0 %223
    %v225 = vmul.f32 %v212, %v194
    %v226 = vmul.f32 %v215, %v194
    %v227 = vmul.f32 %v218, %v194
    %v228 = vmul.f32 %v221, %v194
    %v229 = vmul.f32 %v224, %v194
    %v230 = vadd.f32 %v225, 1e-05
    %v231 = vadd.f32 %v226, 1e-05
    %v232 = vadd.f32 %v227, 1e-05
    %v233 = vadd.f32 %v228, 1e-05
    %v234 = vadd.f32 %v229, 1e-05
    %v235 = vrsqrt.pop %v230
    %v236 = vrsqrt.pop %v231
    %v237 = vrsqrt.pop %v232
    %v238 = vrsqrt.pop %v233
    %v239 = vrsqrt.pop %v234
    %v240 = vmul.f32 %v200, %v235
    %v241 = vmul.f32 %v201, %v236
    %v242 = vmul.f32 %v202, %v237
    %v243 = vmul.f32 %v203, %v238
    %v244 = vmul.f32 %v204, %v239
    %v246 = vlaneseq
    %v247 = vshrl.u32 %v246, 7
    %v248 = vsub.s32 0, %v247
    %v249 = vrot.slane %v175, %v248
    %v251 = vmul.f32 %v240, %v249
    %v252 = vmul.f32 %v241, %v249
    %v253 = vmul.f32 %v242, %v249
    %v254 = vmul.f32 %v243, %v249
    %v255 = vmul.f32 %v244, %v249
    %v257 = vlaneseq
    %v258 = vshrl.u32 %v257, 7
    %v259 = vsub.s32 0, %v258
    %v260 = vrot.slane %v176, %v259
    %v262 = vadd.f32 %v251, %v260
    %v263 = vadd.f32 %v252, %v260
    %v264 = vadd.f32 %v253, %v260
    %v265 = vadd.f32 %v254, %v260
    %v266 = vadd.f32 %v255, %v260
    %v267 = vpack.c.bf16 %v263, %v262
    %v268 = vpack.c.bf16 %v265, %v264
    %v269 = vpack.c.bf16 %v266, %v266
    %v270 = vld [vmem:[%s6] sm:$0xf]
    %v271 = vld [vmem:[%s6 + $0x4] sm:$0xf]
    %v272 = vld [vmem:[%s6 + $0x8] sm:$0xf]
    %v273 = vld [vmem:[%s6 + $0xc] sm:$0xf]
    %v274 = vld [vmem:[%s6 + $0x10] sm:$0xf]
    %v275 = vld [vmem:[%s6 + $0x14] sm:$0xf]
    %v276 = vld [vmem:[%s6 + $0x18] sm:$0xf]
    %v277 = vld [vmem:[%s6 + $0x1c] sm:$0xf]
    %v278 = vld [vmem:[%s6 + $0x20] sm:$0xf]
    %v279 = vld [vmem:[%s6 + $0x24] sm:$0xf]
    %v280 = vld [vmem:[%s6 + $0x28] sm:$0xf]
    %v281 = vld [vmem:[%s6 + $0x2c] sm:$0xf]
    %v282 = vld [vmem:[%s6 + $0x30] sm:$0xf]
    %v283 = vld [vmem:[%s6 + $0x34] sm:$0xf]
    %v284 = vld [vmem:[%s6 + $0x38] sm:$0xf]
    %v285 = vld [vmem:[%s6 + $0x3c] sm:$0xf]
    %v286 = vld [vmem:[%s6 + $0x40] sm:$0xf]
    %v287 = vld [vmem:[%s6 + $0x44] sm:$0xf]
    %v288 = vld [vmem:[%s6 + $0x48] sm:$0xf]
    %v289 = vld [vmem:[%s6 + $0x4c] sm:$0xf]
    %v290 = vld [vmem:[%s6 + $0x50] sm:$0xf]
    %v291 = vld [vmem:[%s6 + $0x54] sm:$0xf]
    %v292 = vld [vmem:[%s6 + $0x58] sm:$0xf]
    %v293 = vld [vmem:[%s6 + $0x5c] sm:$0xf]
    %v294 = vld [vmem:[%s6 + $0x60] sm:$0xf]
    %v295 = vld [vmem:[%s6 + $0x64] sm:$0xf]
    %v296 = vld [vmem:[%s6 + $0x68] sm:$0xf]
    %v297 = vld [vmem:[%s6 + $0x6c] sm:$0xf]
    %v298 = vld [vmem:[%s6 + $0x70] sm:$0xf]
    %v299 = vld [vmem:[%s6 + $0x74] sm:$0xf]
    %v300 = vld [vmem:[%s6 + $0x78] sm:$0xf]
    %v301 = vld [vmem:[%s6 + $0x7c] sm:$0xf]
    %v302 = vld [vmem:[%s6 + $0x80] sm:$0xf]
    %v303 = vld [vmem:[%s6 + $0x84] sm:$0xf]
    %v304 = vld [vmem:[%s6 + $0x88] sm:$0xf]
    %v305 = vld [vmem:[%s6 + $0x8c] sm:$0xf]
    %v306 = vld [vmem:[%s6 + $0x90] sm:$0xf]
    %v307 = vld [vmem:[%s6 + $0x94] sm:$0xf]
    %v308 = vld [vmem:[%s6 + $0x98] sm:$0xf]
    %v309 = vld [vmem:[%s6 + $0x9c] sm:$0xf]
    %v310 = vld [vmem:[%s6 + $0xa0] sm:$0xf]
    %v311 = vld [vmem:[%s6 + $0xa4] sm:$0xf]
    %v312 = vld [vmem:[%s6 + $0xa8] sm:$0xf]
    %v313 = vld [vmem:[%s6 + $0xac] sm:$0xf]
    %v314 = vld [vmem:[%s6 + $0xb0] sm:$0xf]
    %v315 = vld [vmem:[%s6 + $0xb4] sm:$0xf]
    %v316 = vld [vmem:[%s6 + $0xb8] sm:$0xf]
    %v317 = vld [vmem:[%s6 + $0xbc] sm:$0xf]
    %v318 = vld [vmem:[%s6 + $0xc0] sm:$0xf]
    %v319 = vld [vmem:[%s6 + $0xc4] sm:$0xf]
    %v320 = vld [vmem:[%s6 + $0xc8] sm:$0xf]
    %v321 = vld [vmem:[%s6 + $0xcc] sm:$0xf]
    %v322 = vld [vmem:[%s6 + $0xd0] sm:$0xf]
    %v323 = vld [vmem:[%s6 + $0xd4] sm:$0xf]
    %v324 = vld [vmem:[%s6 + $0xd8] sm:$0xf]
    %v325 = vld [vmem:[%s6 + $0xdc] sm:$0xf]
    %v326 = vld [vmem:[%s6 + $0xe0] sm:$0xf]
    %v327 = vld [vmem:[%s6 + $0xe4] sm:$0xf]
    %v328 = vld [vmem:[%s6 + $0xe8] sm:$0xf]
    %v329 = vld [vmem:[%s6 + $0xec] sm:$0xf]
    %v330 = vld [vmem:[%s6 + $0xf0] sm:$0xf]
    %v331 = vld [vmem:[%s6 + $0xf4] sm:$0xf]
    %v332 = vld [vmem:[%s6 + $0xf8] sm:$0xf]
    %v333 = vld [vmem:[%s6 + $0xfc] sm:$0xf]
    %v334 = vld [vmem:[%s6 + $0x100] sm:$0xf]
    %v335 = vld [vmem:[%s6 + $0x104] sm:$0xf]
    %v336 = vld [vmem:[%s6 + $0x108] sm:$0xf]
    %v337 = vld [vmem:[%s6 + $0x10c] sm:$0xf]
    %v338 = vld [vmem:[%s6 + $0x110] sm:$0xf]
    %v339 = vld [vmem:[%s6 + $0x114] sm:$0xf]
    %v340 = vld [vmem:[%s6 + $0x118] sm:$0xf]
    %v341 = vld [vmem:[%s6 + $0x11c] sm:$0xf]
    %v342 = vld [vmem:[%s6 + $0x120] sm:$0xf]
    %v343 = vld [vmem:[%s6 + $0x124] sm:$0xf]
    %v344 = vld [vmem:[%s6 + $0x128] sm:$0xf]
    %v345 = vld [vmem:[%s6 + $0x12c] sm:$0xf]
    %v346 = vld [vmem:[%s6 + $0x130] sm:$0xf]
    %v347 = vld [vmem:[%s6 + $0x134] sm:$0xf]
    %v348 = vld [vmem:[%s6 + $0x138] sm:$0xf]
    %v349 = vld [vmem:[%s6 + $0x13c] sm:$0xf]
    %v350 = vld [vmem:[%s6 + $0x140] sm:$0xf]
    %v351 = vld [vmem:[%s6 + $0x144] sm:$0xf]
    %v352 = vld [vmem:[%s6 + $0x148] sm:$0xf]
    %v353 = vld [vmem:[%s6 + $0x14c] sm:$0xf]
    %v354 = vld [vmem:[%s6 + $0x150] sm:$0xf]
    %v355 = vld [vmem:[%s6 + $0x154] sm:$0xf]
    %v356 = vld [vmem:[%s6 + $0x158] sm:$0xf]
    %v357 = vld [vmem:[%s6 + $0x15c] sm:$0xf]
    %v358 = vld [vmem:[%s6 + $0x160] sm:$0xf]
    %v359 = vld [vmem:[%s6 + $0x164] sm:$0xf]
    %v360 = vld [vmem:[%s6 + $0x168] sm:$0xf]
    %v361 = vld [vmem:[%s6 + $0x16c] sm:$0xf]
    %v362 = vld [vmem:[%s6 + $0x170] sm:$0xf]
    %v363 = vld [vmem:[%s6 + $0x174] sm:$0xf]
    %v364 = vld [vmem:[%s6 + $0x178] sm:$0xf]
    %v365 = vld [vmem:[%s6 + $0x17c] sm:$0xf]
    %v366 = vld [vmem:[%s7] sm:$0xff]
    %v367 = vld [vmem:[%s7 + $0x8] sm:$0xff]
    %v368 = vld [vmem:[%s7 + $0x10] sm:$0xff]
    %v369 = vld [vmem:[%s7 + $0x18] sm:$0xff]
    %v370 = vld [vmem:[%s7 + $0x20] sm:$0x3]
    %v371 = vld [vmem:[%s7 + $0x28] sm:$0xff]
    %v372 = vld [vmem:[%s7 + $0x30] sm:$0xff]
    %v373 = vld [vmem:[%s7 + $0x38] sm:$0xff]
    %v374 = vld [vmem:[%s7 + $0x40] sm:$0xff]
    %v375 = vld [vmem:[%s7 + $0x48] sm:$0x3]
    %v376 = vld [vmem:[%s7 + $0x50] sm:$0xff]
    %v377 = vld [vmem:[%s7 + $0x58] sm:$0xff]
    %v378 = vld [vmem:[%s7 + $0x60] sm:$0xff]
    %v379 = vld [vmem:[%s7 + $0x68] sm:$0xff]
    %v380 = vld [vmem:[%s7 + $0x70] sm:$0x3]
    %v381 = vld [vmem:[%s7 + $0x78] sm:$0xff]
    %v382 = vld [vmem:[%s7 + $0x80] sm:$0xff]
    %v383 = vld [vmem:[%s7 + $0x88] sm:$0xff]
    %v384 = vld [vmem:[%s7 + $0x90] sm:$0xff]
    %v385 = vld [vmem:[%s7 + $0x98] sm:$0x3]
    %v386 = vld [vmem:[%s7 + $0xa0] sm:$0xff]
    %v387 = vld [vmem:[%s7 + $0xa8] sm:$0xff]
    %v388 = vld [vmem:[%s7 + $0xb0] sm:$0xff]
    %v389 = vld [vmem:[%s7 + $0xb8] sm:$0xff]
    %v390 = vld [vmem:[%s7 + $0xc0] sm:$0x3]
    %v391 = vld [vmem:[%s7 + $0xc8] sm:$0xff]
    %v392 = vld [vmem:[%s7 + $0xd0] sm:$0xff]
    %v393 = vld [vmem:[%s7 + $0xd8] sm:$0xff]
    %v394 = vld [vmem:[%s7 + $0xe0] sm:$0xff]
    %v395 = vld [vmem:[%s7 + $0xe8] sm:$0x3]
    %v396 = vld [vmem:[%s7 + $0xf0] sm:$0xff]
    %v397 = vld [vmem:[%s7 + $0xf8] sm:$0xff]
    %v398 = vld [vmem:[%s7 + $0x100] sm:$0xff]
    %v399 = vld [vmem:[%s7 + $0x108] sm:$0xff]
    %v400 = vld [vmem:[%s7 + $0x110] sm:$0x3]
    %v401 = vld [vmem:[%s7 + $0x118] sm:$0xff]
    %v402 = vld [vmem:[%s7 + $0x120] sm:$0xff]
    %v403 = vld [vmem:[%s7 + $0x128] sm:$0xff]
    %v404 = vld [vmem:[%s7 + $0x130] sm:$0xff]
    %v405 = vld [vmem:[%s7 + $0x138] sm:$0x3]
    %v406 = vld [vmem:[%s7 + $0x140] sm:$0xff]
    %v407 = vld [vmem:[%s7 + $0x148] sm:$0xff]
    %v408 = vld [vmem:[%s7 + $0x150] sm:$0xff]
    %v409 = vld [vmem:[%s7 + $0x158] sm:$0xff]
    %v410 = vld [vmem:[%s7 + $0x160] sm:$0x3]
    %v411 = vld [vmem:[%s7 + $0x168] sm:$0xff]
    %v412 = vld [vmem:[%s7 + $0x170] sm:$0xff]
    %v413 = vld [vmem:[%s7 + $0x178] sm:$0xff]
    %v414 = vld [vmem:[%s7 + $0x180] sm:$0xff]
    %v415 = vld [vmem:[%s7 + $0x188] sm:$0x3]
    %v416 = vld [vmem:[%s7 + $0x190] sm:$0xff]
    %v417 = vld [vmem:[%s7 + $0x198] sm:$0xff]
    %v418 = vld [vmem:[%s7 + $0x1a0] sm:$0xff]
    %v419 = vld [vmem:[%s7 + $0x1a8] sm:$0xff]
    %v420 = vld [vmem:[%s7 + $0x1b0] sm:$0x3]
    %v421 = vld [vmem:[%s7 + $0x1b8] sm:$0xff]
    %v422 = vld [vmem:[%s7 + $0x1c0] sm:$0xff]
    %v423 = vld [vmem:[%s7 + $0x1c8] sm:$0xff]
    %v424 = vld [vmem:[%s7 + $0x1d0] sm:$0xff]
    %v425 = vld [vmem:[%s7 + $0x1d8] sm:$0x3]
    %v426 = vld [vmem:[%s7 + $0x1e0] sm:$0xff]
    %v427 = vld [vmem:[%s7 + $0x1e8] sm:$0xff]
    %v428 = vld [vmem:[%s7 + $0x1f0] sm:$0xff]
    %v429 = vld [vmem:[%s7 + $0x1f8] sm:$0xff]
    %v430 = vld [vmem:[%s7 + $0x200] sm:$0x3]
    %v431 = vld [vmem:[%s7 + $0x208] sm:$0xff]
    %v432 = vld [vmem:[%s7 + $0x210] sm:$0xff]
    %v433 = vld [vmem:[%s7 + $0x218] sm:$0xff]
    %v434 = vld [vmem:[%s7 + $0x220] sm:$0xff]
    %v435 = vld [vmem:[%s7 + $0x228] sm:$0x3]
    %v436 = vld [vmem:[%s7 + $0x230] sm:$0xff]
    %v437 = vld [vmem:[%s7 + $0x238] sm:$0xff]
    %v438 = vld [vmem:[%s7 + $0x240] sm:$0xff]
    %v439 = vld [vmem:[%s7 + $0x248] sm:$0xff]
    %v440 = vld [vmem:[%s7 + $0x250] sm:$0x3]
    %v441 = vld [vmem:[%s7 + $0x258] sm:$0xff]
    %v442 = vld [vmem:[%s7 + $0x260] sm:$0xff]
    %v443 = vld [vmem:[%s7 + $0x268] sm:$0xff]
    %v444 = vld [vmem:[%s7 + $0x270] sm:$0xff]
    %v445 = vld [vmem:[%s7 + $0x278] sm:$0x3]
    %v446 = vld [vmem:[%s7 + $0x280] sm:$0xff]
    %v447 = vld [vmem:[%s7 + $0x288] sm:$0xff]
    %v448 = vld [vmem:[%s7 + $0x290] sm:$0xff]
    %v449 = vld [vmem:[%s7 + $0x298] sm:$0xff]
    %v450 = vld [vmem:[%s7 + $0x2a0] sm:$0x3]
    %v451 = vld [vmem:[%s7 + $0x2a8] sm:$0xff]
    %v452 = vld [vmem:[%s7 + $0x2b0] sm:$0xff]
    %v453 = vld [vmem:[%s7 + $0x2b8] sm:$0xff]
    %v454 = vld [vmem:[%s7 + $0x2c0] sm:$0xff]
    %v455 = vld [vmem:[%s7 + $0x2c8] sm:$0x3]
    %v456 = vld [vmem:[%s7 + $0x2d0] sm:$0xff]
    %v457 = vld [vmem:[%s7 + $0x2d8] sm:$0xff]
    %v458 = vld [vmem:[%s7 + $0x2e0] sm:$0xff]
    %v459 = vld [vmem:[%s7 + $0x2e8] sm:$0xff]
    %v460 = vld [vmem:[%s7 + $0x2f0] sm:$0x3]
    %v461 = vld [vmem:[%s7 + $0x2f8] sm:$0xff]
    %v462 = vld [vmem:[%s7 + $0x300] sm:$0xff]
    %v463 = vld [vmem:[%s7 + $0x308] sm:$0xff]
    %v464 = vld [vmem:[%s7 + $0x310] sm:$0xff]
    %v465 = vld [vmem:[%s7 + $0x318] sm:$0x3]
    %v466 = vld [vmem:[%s7 + $0x320] sm:$0xff]
    %v467 = vld [vmem:[%s7 + $0x328] sm:$0xff]
    %v468 = vld [vmem:[%s7 + $0x330] sm:$0xff]
    %v469 = vld [vmem:[%s7 + $0x338] sm:$0xff]
    %v470 = vld [vmem:[%s7 + $0x340] sm:$0x3]
    %v471 = vld [vmem:[%s7 + $0x348] sm:$0xff]
    %v472 = vld [vmem:[%s7 + $0x350] sm:$0xff]
    %v473 = vld [vmem:[%s7 + $0x358] sm:$0xff]
    %v474 = vld [vmem:[%s7 + $0x360] sm:$0xff]
    %v475 = vld [vmem:[%s7 + $0x368] sm:$0x3]
    %v476 = vld [vmem:[%s7 + $0x370] sm:$0xff]
    %v477 = vld [vmem:[%s7 + $0x378] sm:$0xff]
    %v478 = vld [vmem:[%s7 + $0x380] sm:$0xff]
    %v479 = vld [vmem:[%s7 + $0x388] sm:$0xff]
    %v480 = vld [vmem:[%s7 + $0x390] sm:$0x3]
    %v481 = vld [vmem:[%s7 + $0x398] sm:$0xff]
    %v482 = vld [vmem:[%s7 + $0x3a0] sm:$0xff]
    %v483 = vld [vmem:[%s7 + $0x3a8] sm:$0xff]
    %v484 = vld [vmem:[%s7 + $0x3b0] sm:$0xff]
    %v485 = vld [vmem:[%s7 + $0x3b8] sm:$0x3]
    %v490 = vunpack.c.l.b16 %v270
    %v491 = vunpack.c.l.b16 %v271
    %v492 = vunpack.c.l.b16 %v272
    %v493 = vunpack.c.l.b16 %v273
    %v494 = vpack.c.b16 %v491, %v490
    %v495 = vpack.c.b16 %v493, %v492
    %v499 = vsel %vm177, %v267, 0
    %v502 = vsel %vm177, %v268, 0
    %v505 = vsel %vm177, %v269, 0
    %507 = vmatprep.subr.bf16.mxu0 0
    %508 = vmatpush1.bf16.msra.mxu0 %v494
    %509 = vmatprep.subr.bf16.mxu0 0
    %510 = vmatpush1.bf16.msra.mxu0 %v495
    %511 = vmatprep.subr.bf16.mxu0 0
    %512 = vmatpush1.bf16.msra.mxu0 0
    %513 = vmatprep.subr.bf16.mxu0 0
    %514 = vmatpush1.bf16.msra.mxu0 0
    %515 = vmatprep.subr.bf16.mxu0 0
    %516 = vmatpush1.bf16.msra.mxu0 0
    %517 = vmatprep.subr.bf16.mxu0 0
    %518 = vmatpush1.bf16.msra.mxu0 0
    %519 = vmatprep.subr.bf16.mxu0 0
    %520 = vmatpush1.bf16.msra.mxu0 0
    %521 = vmatprep.subr.bf16.mxu0 0
    %522 = vmatpush1.bf16.msra.mxu0 0
    %523 = vmatprep.subr.bf16.mxu0 0
    %524 = vmatpush1.bf16.msra.mxu0 0
    %525 = vmatprep.subr.bf16.mxu0 0
    %526 = vmatpush1.bf16.msra.mxu0 0
    %527 = vmatprep.subr.bf16.mxu0 0
    %528 = vmatpush1.bf16.msra.mxu0 0
    %529 = vmatprep.subr.bf16.mxu0 0
    %530 = vmatpush1.bf16.msra.mxu0 0
    %531 = vmatprep.subr.bf16.mxu0 0
    %532 = vmatpush1.bf16.msra.mxu0 0
    %533 = vmatprep.subr.bf16.mxu0 0
    %534 = vmatpush1.bf16.msra.mxu0 0
    %535 = vmatprep.subr.bf16.mxu0 0
    %536 = vmatpush1.bf16.msra.mxu0 0
    %537 = vmatprep.subr.bf16.mxu0 0
    %538 = vmatpush1.bf16.msra.mxu0 0
    %539 = vmatprep.mubr.bf16.mxu0 0
    %540 = vmatmul.mubr.bf16.gmra.mrb[0].mxu0 %v499
    %v541 = vpop.f32.mrb[0].mxu0
    %v542 = vadd.f32 %v366, %v541
    %v543 = vpop.f32.mrb[0].mxu0
    %v544 = vpop.f32.mrb[0].mxu0
    %v545 = vadd.f32 %v367, %v544
    %v546 = vpop.f32.mrb[0].mxu0
    %547 = vmatprep.mubr.bf16.mxu0 0
    %548 = vmatmul.mubr.bf16.gmra.mrb[0].mxu0 %v502
    %v549 = vpop.f32.mrb[0].mxu0
    %v550 = vadd.f32 %v368, %v549
    %v551 = vpop.f32.mrb[0].mxu0
    %v552 = vpop.f32.mrb[0].mxu0
    %v553 = vadd.f32 %v369, %v552
    %v554 = vpop.f32.mrb[0].mxu0
    %555 = vmatprep.mubr.bf16.mxu0 0
    %556 = vmatmul.mubr.bf16.gmra.mrb[0].mxu0 %v505
    %v557 = vpop.f32.mrb[0].mxu0
    %v558 = vadd.f32 %v370, %v557
    %v559 = vpop.f32.mrb[0].mxu0
    %v560 = vpop.f32.mrb[0].mxu0
    %v561 = vpop.f32.mrb[0].mxu0
    %562 = vdwg.mxu0
    %v567 = vunpack.c.l.b16 %v274
    %v568 = vunpack.c.l.b16 %v275
    %v569 = vunpack.c.l.b16 %v276
    %v570 = vunpack.c.l.b16 %v277
    %v571 = vpack.c.b16 %v568, %v567
    %v572 = vpack.c.b16 %v570, %v569
    %575 = vmatprep.subr.bf16.mxu0 0
    %576 = vmatpush1.bf16.msra.mxu0 %v571
    %577 = vmatprep.subr.bf16.mxu0 0
    %578 = vmatpush1.bf16.msra.mxu0 %v572
    %579 = vmatprep.subr.bf16.mxu0 0
    %580 = vmatpush1.bf16.msra.mxu0 0
    %581 = vmatprep.subr.bf16.mxu0 0
    %582 = vmatpush1.bf16.msra.mxu0 0
    %583 = vmatprep.subr.bf16.mxu0 0
    %584 = vmatpush1.bf16.msra.mxu0 0
    %585 = vmatprep.subr.bf16.mxu0 0
    %586 = vmatpush1.bf16.msra.mxu0 0
    %587 = vmatprep.subr.bf16.mxu0 0
    %588 = vmatpush1.bf16.msra.mxu0 0
    %589 = vmatprep.subr.bf16.mxu0 0
    %590 = vmatpush1.bf16.msra.mxu0 0
    %591 = vmatprep.subr.bf16.mxu0 0
    %592 = vmatpush1.bf16.msra.mxu0 0
    %593 = vmatprep.subr.bf16.mxu0 0
    %594 = vmatpush1.bf16.msra.mxu0 0
    %595 = vmatprep.subr.bf16.mxu0 0
    %596 = vmatpush1.bf16.msra.mxu0 0
    %597 = vmatprep.subr.bf16.mxu0 0
    %598 = vmatpush1.bf16.msra.mxu0 0
    %599 = vmatprep.subr.bf16.mxu0 0
    %600 = vmatpush1.bf16.msra.mxu0 0
    %601 = vmatprep.subr.bf16.mxu0 0
    %602 = vmatpush1.bf16.msra.mxu0 0
    %603 = vmatprep.subr.bf16.mxu0 0
    %604 = vmatpush1.bf16.msra.mxu0 0
    %605 = vmatprep.subr.bf16.mxu0 0
    %606 = vmatpush1.bf16.msra.mxu0 0
    %607 = vmatprep.mubr.bf16.mxu0 0
    %608 = vmatmul.mubr.bf16.gmra.mrb[0].mxu0 %v499
    %v609 = vpop.f32.mrb[0].mxu0
    %v610 = vadd.f32 %v371, %v609
    %v611 = vpop.f32.mrb[0].mxu0
    %v612 = vpop.f32.mrb[0].mxu0
    %v613 = vadd.f32 %v372, %v612
    %v614 = vpop.f32.mrb[0].mxu0
    %615 = vmatprep.mubr.bf16.mxu0 0
    %616 = vmatmul.mubr.bf16.gmra.mrb[0].mxu0 %v502
    %v617 = vpop.f32.mrb[0].mxu0
    %v618 = vadd.f32 %v373, %v617
    %v619 = vpop.f32.mrb[0].mxu0
    %v620 = vpop.f32.mrb[0].mxu0
    %v621 = vadd.f32 %v374, %v620
    %v622 = vpop.f32.mrb[0].mxu0
    %623 = vmatprep.mubr.bf16.mxu0 0
    %624 = vmatmul.mubr.bf16.gmra.mrb[0].mxu0 %v505
    %v625 = vpop.f32.mrb[0].mxu0
    %v626 = vadd.f32 %v375, %v625
    %v627 = vpop.f32.mrb[0].mxu0
    %v628 = vpop.f32.mrb[0].mxu0
    %v629 = vpop.f32.mrb[0].mxu0
    %630 = vdwg.mxu0
    %v635 = vunpack.c.l.b16 %v278
    %v636 = vunpack.c.l.b16 %v279
    %v637 = vunpack.c.l.b16 %v280
    %v638 = vunpack.c.l.b16 %v281
    %v639 = vpack.c.b16 %v636, %v635
    %v640 = vpack.c.b16 %v638, %v637
    %643 = vmatprep.subr.bf16.mxu0 0
    %644 = vmatpush1.bf16.msra.mxu0 %v639
    %645 = vmatprep.subr.bf16.mxu0 0
    %646 = vmatpush1.bf16.msra.mxu0 %v640
    %647 = vmatprep.subr.bf16.mxu0 0
    %648 = vmatpush1.bf16.msra.mxu0 0
    %649 = vmatprep.subr.bf16.mxu0 0
    %650 = vmatpush1.bf16.msra.mxu0 0
    %651 = vmatprep.subr.bf16.mxu0 0
    %652 = vmatpush1.bf16.msra.mxu0 0
    %653 = vmatprep.subr.bf16.mxu0 0
    %654 = vmatpush1.bf16.msra.mxu0 0
    %655 = vmatprep.subr.bf16.mxu0 0
    %656 = vmatpush1.bf16.msra.mxu0 0
    %657 = vmatprep.subr.bf16.mxu0 0
    %658 = vmatpush1.bf16.msra.mxu0 0
    %659 = vmatprep.subr.bf16.mxu0 0
    %660 = vmatpush1.bf16.msra.mxu0 0
    %661 = vmatprep.subr.bf16.mxu0 0
    %662 = vmatpush1.bf16.msra.mxu0 0
    %663 = vmatprep.subr.bf16.mxu0 0
    %664 = vmatpush1.bf16.msra.mxu0 0
    %665 = vmatprep.subr.bf16.mxu0 0
    %666 = vmatpush1.bf16.msra.mxu0 0
    %667 = vmatprep.subr.bf16.mxu0 0
    %668 = vmatpush1.bf16.msra.mxu0 0
    %669 = vmatprep.subr.bf16.mxu0 0
    %670 = vmatpush1.bf16.msra.mxu0 0
    %671 = vmatprep.subr.bf16.mxu0 0
    %672 = vmatpush1.bf16.msra.mxu0 0
    %673 = vmatprep.subr.bf16.mxu0 0
    %674 = vmatpush1.bf16.msra.mxu0 0
    %675 = vmatprep.mubr.bf16.mxu0 0
    %676 = vmatmul.mubr.bf16.gmra.mrb[0].mxu0 %v499
    %v677 = vpop.f32.mrb[0].mxu0
    %v678 = vadd.f32 %v376, %v677
    %v679 = vpop.f32.mrb[0].mxu0
    %v680 = vpop.f32.mrb[0].mxu0
    %v681 = vadd.f32 %v377, %v680
    %v682 = vpop.f32.mrb[0].mxu0
    %683 = vmatprep.mubr.bf16.mxu0 0
    %684 = vmatmul.mubr.bf16.gmra.mrb[0].mxu0 %v502
    %v685 = vpop.f32.mrb[0].mxu0
    %v686 = vadd.f32 %v378, %v685
    %v687 = vpop.f32.mrb[0].mxu0
    %v688 = vpop.f32.mrb[0].mxu0
    %v689 = vadd.f32 %v379, %v688
    %v690 = vpop.f32.mrb[0].mxu0
    %691 = vmatprep.mubr.bf16.mxu0 0
    %692 = vmatmul.mubr.bf16.gmra.mrb[0].mxu0 %v505
    %v693 = vpop.f32.mrb[0].mxu0
    %v694 = vadd.f32 %v380, %v693
    %v695 = vpop.f32.mrb[0].mxu0
    %v696 = vpop.f32.mrb[0].mxu0
    %v697 = vpop.f32.mrb[0].mxu0
    %698 = vdwg.mxu0
    %v703 = vunpack.c.l.b16 %v282
    %v704 = vunpack.c.l.b16 %v283
    %v705 = vunpack.c.l.b16 %v284
    %v706 = vunpack.c.l.b16 %v285
    %v707 = vpack.c.b16 %v704, %v703
    %v708 = vpack.c.b16 %v706, %v705
    %711 = vmatprep.subr.bf16.mxu0 0
    %712 = vmatpush1.bf16.msra.mxu0 %v707
    %713 = vmatprep.subr.bf16.mxu0 0
    %714 = vmatpush1.bf16.msra.mxu0 %v708
    %715 = vmatprep.subr.bf16.mxu0 0
    %716 = vmatpush1.bf16.msra.mxu0 0
    %717 = vmatprep.subr.bf16.mxu0 0
    %718 = vmatpush1.bf16.msra.mxu0 0
    %719 = vmatprep.subr.bf16.mxu0 0
    %720 = vmatpush1.bf16.msra.mxu0 0
    %721 = vmatprep.subr.bf16.mxu0 0
    %722 = vmatpush1.bf16.msra.mxu0 0
    %723 = vmatprep.subr.bf16.mxu0 0
    %724 = vmatpush1.bf16.msra.mxu0 0
    %725 = vmatprep.subr.bf16.mxu0 0
    %726 = vmatpush1.bf16.msra.mxu0 0
    %727 = vmatprep.subr.bf16.mxu0 0
    %728 = vmatpush1.bf16.msra.mxu0 0
    %729 = vmatprep.subr.bf16.mxu0 0
    %730 = vmatpush1.bf16.msra.mxu0 0
    %731 = vmatprep.subr.bf16.mxu0 0
    %732 = vmatpush1.bf16.msra.mxu0 0
    %733 = vmatprep.subr.bf16.mxu0 0
    %734 = vmatpush1.bf16.msra.mxu0 0
    %735 = vmatprep.subr.bf16.mxu0 0
    %736 = vmatpush1.bf16.msra.mxu0 0
    %737 = vmatprep.subr.bf16.mxu0 0
    %738 = vmatpush1.bf16.msra.mxu0 0
    %739 = vmatprep.subr.bf16.mxu0 0
    %740 = vmatpush1.bf16.msra.mxu0 0
    %741 = vmatprep.subr.bf16.mxu0 0
    %742 = vmatpush1.bf16.msra.mxu0 0
    %743 = vmatprep.mubr.bf16.mxu0 0
    %744 = vmatmul.mubr.bf16.gmra.mrb[0].mxu0 %v499
    %v745 = vpop.f32.mrb[0].mxu0
    %v746 = vadd.f32 %v381, %v745
    %v747 = vpop.f32.mrb[0].mxu0
    %v748 = vpop.f32.mrb[0].mxu0
    %v749 = vadd.f32 %v382, %v748
    %v750 = vpop.f32.mrb[0].mxu0
    %751 = vmatprep.mubr.bf16.mxu0 0
    %752 = vmatmul.mubr.bf16.gmra.mrb[0].mxu0 %v502
    %v753 = vpop.f32.mrb[0].mxu0
    %v754 = vadd.f32 %v383, %v753
    %v755 = vpop.f32.mrb[0].mxu0
    %v756 = vpop.f32.mrb[0].mxu0
    %v757 = vadd.f32 %v384, %v756
    %v758 = vpop.f32.mrb[0].mxu0
    %759 = vmatprep.mubr.bf16.mxu0 0
    %760 = vmatmul.mubr.bf16.gmra.mrb[0].mxu0 %v505
    %v761 = vpop.f32.mrb[0].mxu0
    %v762 = vadd.f32 %v385, %v761
    %v763 = vpop.f32.mrb[0].mxu0
    %v764 = vpop.f32.mrb[0].mxu0
    %v765 = vpop.f32.mrb[0].mxu0
    %766 = vdwg.mxu0
    %v771 = vunpack.c.l.b16 %v286
    %v772 = vunpack.c.l.b16 %v287
    %v773 = vunpack.c.l.b16 %v288
    %v774 = vunpack.c.l.b16 %v289
    %v775 = vpack.c.b16 %v772, %v771
    %v776 = vpack.c.b16 %v774, %v773
    %779 = vmatprep.subr.bf16.mxu0 0
    %780 = vmatpush1.bf16.msra.mxu0 %v775
    %781 = vmatprep.subr.bf16.mxu0 0
    %782 = vmatpush1.bf16.msra.mxu0 %v776
    %783 = vmatprep.subr.bf16.mxu0 0
    %784 = vmatpush1.bf16.msra.mxu0 0
    %785 = vmatprep.subr.bf16.mxu0 0
    %786 = vmatpush1.bf16.msra.mxu0 0
    %787 = vmatprep.subr.bf16.mxu0 0
    %788 = vmatpush1.bf16.msra.mxu0 0
    %789 = vmatprep.subr.bf16.mxu0 0
    %790 = vmatpush1.bf16.msra.mxu0 0
    %791 = vmatprep.subr.bf16.mxu0 0
    %792 = vmatpush1.bf16.msra.mxu0 0
    %793 = vmatprep.subr.bf16.mxu0 0
    %794 = vmatpush1.bf16.msra.mxu0 0
    %795 = vmatprep.subr.bf16.mxu0 0
    %796 = vmatpush1.bf16.msra.mxu0 0
    %797 = vmatprep.subr.bf16.mxu0 0
    %798 = vmatpush1.bf16.msra.mxu0 0
    %799 = vmatprep.subr.bf16.mxu0 0
    %800 = vmatpush1.bf16.msra.mxu0 0
    %801 = vmatprep.subr.bf16.mxu0 0
    %802 = vmatpush1.bf16.msra.mxu0 0
    %803 = vmatprep.subr.bf16.mxu0 0
    %804 = vmatpush1.bf16.msra.mxu0 0
    %805 = vmatprep.subr.bf16.mxu0 0
    %806 = vmatpush1.bf16.msra.mxu0 0
    %807 = vmatprep.subr.bf16.mxu0 0
    %808 = vmatpush1.bf16.msra.mxu0 0
    %809 = vmatprep.subr.bf16.mxu0 0
    %810 = vmatpush1.bf16.msra.mxu0 0
    %811 = vmatprep.mubr.bf16.mxu0 0
    %812 = vmatmul.mubr.bf16.gmra.mrb[0].mxu0 %v499
    %v813 = vpop.f32.mrb[0].mxu0
    %v814 = vadd.f32 %v386, %v813
    %v815 = vpop.f32.mrb[0].mxu0
    %v816 = vpop.f32.mrb[0].mxu0
    %v817 = vadd.f32 %v387, %v816
    %v818 = vpop.f32.mrb[0].mxu0
    %819 = vmatprep.mubr.bf16.mxu0 0
    %820 = vmatmul.mubr.bf16.gmra.mrb[0].mxu0 %v502
    %v821 = vpop.f32.mrb[0].mxu0
    %v822 = vadd.f32 %v388, %v821
    %v823 = vpop.f32.mrb[0].mxu0
    %v824 = vpop.f32.mrb[0].mxu0
    %v825 = vadd.f32 %v389, %v824
    %v826 = vpop.f32.mrb[0].mxu0
    %827 = vmatprep.mubr.bf16.mxu0 0
    %828 = vmatmul.mubr.bf16.gmra.mrb[0].mxu0 %v505
    %v829 = vpop.f32.mrb[0].mxu0
    %v830 = vadd.f32 %v390, %v829
    %v831 = vpop.f32.mrb[0].mxu0
    %v832 = vpop.f32.mrb[0].mxu0
    %v833 = vpop.f32.mrb[0].mxu0
    %834 = vdwg.mxu0
    %v839 = vunpack.c.l.b16 %v290
    %v840 = vunpack.c.l.b16 %v291
    %v841 = vunpack.c.l.b16 %v292
    %v842 = vunpack.c.l.b16 %v293
    %v843 = vpack.c.b16 %v840, %v839
    %v844 = vpack.c.b16 %v842, %v841
    %847 = vmatprep.subr.bf16.mxu0 0
    %848 = vmatpush1.bf16.msra.mxu0 %v843
    %849 = vmatprep.subr.bf16.mxu0 0
    %850 = vmatpush1.bf16.msra.mxu0 %v844
    %851 = vmatprep.subr.bf16.mxu0 0
    %852 = vmatpush1.bf16.msra.mxu0 0
    %853 = vmatprep.subr.bf16.mxu0 0
    %854 = vmatpush1.bf16.msra.mxu0 0
    %855 = vmatprep.subr.bf16.mxu0 0
    %856 = vmatpush1.bf16.msra.mxu0 0
    %857 = vmatprep.subr.bf16.mxu0 0
    %858 = vmatpush1.bf16.msra.mxu0 0
    %859 = vmatprep.subr.bf16.mxu0 0
    %860 = vmatpush1.bf16.msra.mxu0 0
    %861 = vmatprep.subr.bf16.mxu0 0
    %862 = vmatpush1.bf16.msra.mxu0 0
    %863 = vmatprep.subr.bf16.mxu0 0
    %864 = vmatpush1.bf16.msra.mxu0 0
    %865 = vmatprep.subr.bf16.mxu0 0
    %866 = vmatpush1.bf16.msra.mxu0 0
    %867 = vmatprep.subr.bf16.mxu0 0
    %868 = vmatpush1.bf16.msra.mxu0 0
    %869 = vmatprep.subr.bf16.mxu0 0
    %870 = vmatpush1.bf16.msra.mxu0 0
    %871 = vmatprep.subr.bf16.mxu0 0
    %872 = vmatpush1.bf16.msra.mxu0 0
    %873 = vmatprep.subr.bf16.mxu0 0
    %874 = vmatpush1.bf16.msra.mxu0 0
    %875 = vmatprep.subr.bf16.mxu0 0
    %876 = vmatpush1.bf16.msra.mxu0 0
    %877 = vmatprep.subr.bf16.mxu0 0
    %878 = vmatpush1.bf16.msra.mxu0 0
    %879 = vmatprep.mubr.bf16.mxu0 0
    %880 = vmatmul.mubr.bf16.gmra.mrb[0].mxu0 %v499
    %v881 = vpop.f32.mrb[0].mxu0
    %v882 = vadd.f32 %v391, %v881
    %v883 = vpop.f32.mrb[0].mxu0
    %v884 = vpop.f32.mrb[0].mxu0
    %v885 = vadd.f32 %v392, %v884
    %v886 = vpop.f32.mrb[0].mxu0
    %887 = vmatprep.mubr.bf16.mxu0 0
    %888 = vmatmul.mubr.bf16.gmra.mrb[0].mxu0 %v502
    %v889 = vpop.f32.mrb[0].mxu0
    %v890 = vadd.f32 %v393, %v889
    %v891 = vpop.f32.mrb[0].mxu0
    %v892 = vpop.f32.mrb[0].mxu0
    %v893 = vadd.f32 %v394, %v892
    %v894 = vpop.f32.mrb[0].mxu0
    %895 = vmatprep.mubr.bf16.mxu0 0
    %896 = vmatmul.mubr.bf16.gmra.mrb[0].mxu0 %v505
    %v897 = vpop.f32.mrb[0].mxu0
    %v898 = vadd.f32 %v395, %v897
    %v899 = vpop.f32.mrb[0].mxu0
    %v900 = vpop.f32.mrb[0].mxu0
    %v901 = vpop.f32.mrb[0].mxu0
    %902 = vdwg.mxu0
    %v907 = vunpack.c.l.b16 %v294
    %v908 = vunpack.c.l.b16 %v295
    %v909 = vunpack.c.l.b16 %v296
    %v910 = vunpack.c.l.b16 %v297
    %v911 = vpack.c.b16 %v908, %v907
    %v912 = vpack.c.b16 %v910, %v909
    %915 = vmatprep.subr.bf16.mxu0 0
    %916 = vmatpush1.bf16.msra.mxu0 %v911
    %917 = vmatprep.subr.bf16.mxu0 0
    %918 = vmatpush1.bf16.msra.mxu0 %v912
    %919 = vmatprep.subr.bf16.mxu0 0
    %920 = vmatpush1.bf16.msra.mxu0 0
    %921 = vmatprep.subr.bf16.mxu0 0
    %922 = vmatpush1.bf16.msra.mxu0 0
    %923 = vmatprep.subr.bf16.mxu0 0
    %924 = vmatpush1.bf16.msra.mxu0 0
    %925 = vmatprep.subr.bf16.mxu0 0
    %926 = vmatpush1.bf16.msra.mxu0 0
    %927 = vmatprep.subr.bf16.mxu0 0
    %928 = vmatpush1.bf16.msra.mxu0 0
    %929 = vmatprep.subr.bf16.mxu0 0
    %930 = vmatpush1.bf16.msra.mxu0 0
    %931 = vmatprep.subr.bf16.mxu0 0
    %932 = vmatpush1.bf16.msra.mxu0 0
    %933 = vmatprep.subr.bf16.mxu0 0
    %934 = vmatpush1.bf16.msra.mxu0 0
    %935 = vmatprep.subr.bf16.mxu0 0
    %936 = vmatpush1.bf16.msra.mxu0 0
    %937 = vmatprep.subr.bf16.mxu0 0
    %938 = vmatpush1.bf16.msra.mxu0 0
    %939 = vmatprep.subr.bf16.mxu0 0
    %940 = vmatpush1.bf16.msra.mxu0 0
    %941 = vmatprep.subr.bf16.mxu0 0
    %942 = vmatpush1.bf16.msra.mxu0 0
    %943 = vmatprep.subr.bf16.mxu0 0
    %944 = vmatpush1.bf16.msra.mxu0 0
    %945 = vmatprep.subr.bf16.mxu0 0
    %946 = vmatpush1.bf16.msra.mxu0 0
    %947 = vmatprep.mubr.bf16.mxu0 0
    %948 = vmatmul.mubr.bf16.gmra.mrb[0].mxu0 %v499
    %v949 = vpop.f32.mrb[0].mxu0
    %v950 = vadd.f32 %v396, %v949
    %v951 = vpop.f32.mrb[0].mxu0
    %v952 = vpop.f32.mrb[0].mxu0
    %v953 = vadd.f32 %v397, %v952
    %v954 = vpop.f32.mrb[0].mxu0
    %955 = vmatprep.mubr.bf16.mxu0 0
    %956 = vmatmul.mubr.bf16.gmra.mrb[0].mxu0 %v502
    %v957 = vpop.f32.mrb[0].mxu0
    %v958 = vadd.f32 %v398, %v957
    %v959 = vpop.f32.mrb[0].mxu0
    %v960 = vpop.f32.mrb[0].mxu0
    %v961 = vadd.f32 %v399, %v960
    %v962 = vpop.f32.mrb[0].mxu0
    %963 = vmatprep.mubr.bf16.mxu0 0
    %964 = vmatmul.mubr.bf16.gmra.mrb[0].mxu0 %v505
    %v965 = vpop.f32.mrb[0].mxu0
    %v966 = vadd.f32 %v400, %v965
    %v967 = vpop.f32.mrb[0].mxu0
    %v968 = vpop.f32.mrb[0].mxu0
    %v969 = vpop.f32.mrb[0].mxu0
    %970 = vdwg.mxu0
    %v975 = vunpack.c.l.b16 %v298
    %v976 = vunpack.c.l.b16 %v299
    %v977 = vunpack.c.l.b16 %v300
    %v978 = vunpack.c.l.b16 %v301
    %v979 = vpack.c.b16 %v976, %v975
    %v980 = vpack.c.b16 %v978, %v977
    %983 = vmatprep.subr.bf16.mxu0 0
    %984 = vmatpush1.bf16.msra.mxu0 %v979
    %985 = vmatprep.subr.bf16.mxu0 0
    %986 = vmatpush1.bf16.msra.mxu0 %v980
    %987 = vmatprep.subr.bf16.mxu0 0
    %988 = vmatpush1.bf16.msra.mxu0 0
    %989 = vmatprep.subr.bf16.mxu0 0
    %990 = vmatpush1.bf16.msra.mxu0 0
    %991 = vmatprep.subr.bf16.mxu0 0
    %992 = vmatpush1.bf16.msra.mxu0 0
    %993 = vmatprep.subr.bf16.mxu0 0
    %994 = vmatpush1.bf16.msra.mxu0 0
    %995 = vmatprep.subr.bf16.mxu0 0
    %996 = vmatpush1.bf16.msra.mxu0 0
    %997 = vmatprep.subr.bf16.mxu0 0
    %998 = vmatpush1.bf16.msra.mxu0 0
    %999 = vmatprep.subr.bf16.mxu0 0
    %1000 = vmatpush1.bf16.msra.mxu0 0
    %1001 = vmatprep.subr.bf16.mxu0 0
    %1002 = vmatpush1.bf16.msra.mxu0 0
    %1003 = vmatprep.subr.bf16.mxu0 0
    %1004 = vmatpush1.bf16.msra.mxu0 0
    %1005 = vmatprep.subr.bf16.mxu0 0
    %1006 = vmatpush1.bf16.msra.mxu0 0
    %1007 = vmatprep.subr.bf16.mxu0 0
    %1008 = vmatpush1.bf16.msra.mxu0 0
    %1009 = vmatprep.subr.bf16.mxu0 0
    %1010 = vmatpush1.bf16.msra.mxu0 0
    %1011 = vmatprep.subr.bf16.mxu0 0
    %1012 = vmatpush1.bf16.msra.mxu0 0
    %1013 = vmatprep.subr.bf16.mxu0 0
    %1014 = vmatpush1.bf16.msra.mxu0 0
    %1015 = vmatprep.mubr.bf16.mxu0 0
    %1016 = vmatmul.mubr.bf16.gmra.mrb[0].mxu0 %v499
    %v1017 = vpop.f32.mrb[0].mxu0
    %v1018 = vadd.f32 %v401, %v1017
    %v1019 = vpop.f32.mrb[0].mxu0
    %v1020 = vpop.f32.mrb[0].mxu0
    %v1021 = vadd.f32 %v402, %v1020
    %v1022 = vpop.f32.mrb[0].mxu0
    %1023 = vmatprep.mubr.bf16.mxu0 0
    %1024 = vmatmul.mubr.bf16.gmra.mrb[0].mxu0 %v502
    %v1025 = vpop.f32.mrb[0].mxu0
    %v1026 = vadd.f32 %v403, %v1025
    %v1027 = vpop.f32.mrb[0].mxu0
    %v1028 = vpop.f32.mrb[0].mxu0
    %v1029 = vadd.f32 %v404, %v1028
    %v1030 = vpop.f32.mrb[0].mxu0
    %1031 = vmatprep.mubr.bf16.mxu0 0
    %1032 = vmatmul.mubr.bf16.gmra.mrb[0].mxu0 %v505
    %v1033 = vpop.f32.mrb[0].mxu0
    %v1034 = vadd.f32 %v405, %v1033
    %v1035 = vpop.f32.mrb[0].mxu0
    %v1036 = vpop.f32.mrb[0].mxu0
    %v1037 = vpop.f32.mrb[0].mxu0
    %1038 = vdwg.mxu0
    %v1043 = vunpack.c.l.b16 %v302
    %v1044 = vunpack.c.l.b16 %v303
    %v1045 = vunpack.c.l.b16 %v304
    %v1046 = vunpack.c.l.b16 %v305
    %v1047 = vpack.c.b16 %v1044, %v1043
    %v1048 = vpack.c.b16 %v1046, %v1045
    %1051 = vmatprep.subr.bf16.mxu0 0
    %1052 = vmatpush1.bf16.msra.mxu0 %v1047
    %1053 = vmatprep.subr.bf16.mxu0 0
    %1054 = vmatpush1.bf16.msra.mxu0 %v1048
    %1055 = vmatprep.subr.bf16.mxu0 0
    %1056 = vmatpush1.bf16.msra.mxu0 0
    %1057 = vmatprep.subr.bf16.mxu0 0
    %1058 = vmatpush1.bf16.msra.mxu0 0
    %1059 = vmatprep.subr.bf16.mxu0 0
    %1060 = vmatpush1.bf16.msra.mxu0 0
    %1061 = vmatprep.subr.bf16.mxu0 0
    %1062 = vmatpush1.bf16.msra.mxu0 0
    %1063 = vmatprep.subr.bf16.mxu0 0
    %1064 = vmatpush1.bf16.msra.mxu0 0
    %1065 = vmatprep.subr.bf16.mxu0 0
    %1066 = vmatpush1.bf16.msra.mxu0 0
    %1067 = vmatprep.subr.bf16.mxu0 0
    %1068 = vmatpush1.bf16.msra.mxu0 0
    %1069 = vmatprep.subr.bf16.mxu0 0
    %1070 = vmatpush1.bf16.msra.mxu0 0
    %1071 = vmatprep.subr.bf16.mxu0 0
    %1072 = vmatpush1.bf16.msra.mxu0 0
    %1073 = vmatprep.subr.bf16.mxu0 0
    %1074 = vmatpush1.bf16.msra.mxu0 0
    %1075 = vmatprep.subr.bf16.mxu0 0
    %1076 = vmatpush1.bf16.msra.mxu0 0
    %1077 = vmatprep.subr.bf16.mxu0 0
    %1078 = vmatpush1.bf16.msra.mxu0 0
    %1079 = vmatprep.subr.bf16.mxu0 0
    %1080 = vmatpush1.bf16.msra.mxu0 0
    %1081 = vmatprep.subr.bf16.mxu0 0
    %1082 = vmatpush1.bf16.msra.mxu0 0
    %1083 = vmatprep.mubr.bf16.mxu0 0
    %1084 = vmatmul.mubr.bf16.gmra.mrb[0].mxu0 %v499
    %v1085 = vpop.f32.mrb[0].mxu0
    %v1086 = vadd.f32 %v406, %v1085
    %v1087 = vpop.f32.mrb[0].mxu0
    %v1088 = vpop.f32.mrb[0].mxu0
    %v1089 = vadd.f32 %v407, %v1088
    %v1090 = vpop.f32.mrb[0].mxu0
    %1091 = vmatprep.mubr.bf16.mxu0 0
    %1092 = vmatmul.mubr.bf16.gmra.mrb[0].mxu0 %v502
    %v1093 = vpop.f32.mrb[0].mxu0
    %v1094 = vadd.f32 %v408, %v1093
    %v1095 = vpop.f32.mrb[0].mxu0
    %v1096 = vpop.f32.mrb[0].mxu0
    %v1097 = vadd.f32 %v409, %v1096
    %v1098 = vpop.f32.mrb[0].mxu0
    %1099 = vmatprep.mubr.bf16.mxu0 0
    %1100 = vmatmul.mubr.bf16.gmra.mrb[0].mxu0 %v505
    %v1101 = vpop.f32.mrb[0].mxu0
    %v1102 = vadd.f32 %v410, %v1101
    %v1103 = vpop.f32.mrb[0].mxu0
    %v1104 = vpop.f32.mrb[0].mxu0
    %v1105 = vpop.f32.mrb[0].mxu0
    %1106 = vdwg.mxu0
    %v1111 = vunpack.c.l.b16 %v306
    %v1112 = vunpack.c.l.b16 %v307
    %v1113 = vunpack.c.l.b16 %v308
    %v1114 = vunpack.c.l.b16 %v309
    %v1115 = vpack.c.b16 %v1112, %v1111
    %v1116 = vpack.c.b16 %v1114, %v1113
    %1119 = vmatprep.subr.bf16.mxu0 0
    %1120 = vmatpush1.bf16.msra.mxu0 %v1115
    %1121 = vmatprep.subr.bf16.mxu0 0
    %1122 = vmatpush1.bf16.msra.mxu0 %v1116
    %1123 = vmatprep.subr.bf16.mxu0 0
    %1124 = vmatpush1.bf16.msra.mxu0 0
    %1125 = vmatprep.subr.bf16.mxu0 0
    %1126 = vmatpush1.bf16.msra.mxu0 0
    %1127 = vmatprep.subr.bf16.mxu0 0
    %1128 = vmatpush1.bf16.msra.mxu0 0
    %1129 = vmatprep.subr.bf16.mxu0 0
    %1130 = vmatpush1.bf16.msra.mxu0 0
    %1131 = vmatprep.subr.bf16.mxu0 0
    %1132 = vmatpush1.bf16.msra.mxu0 0
    %1133 = vmatprep.subr.bf16.mxu0 0
    %1134 = vmatpush1.bf16.msra.mxu0 0
    %1135 = vmatprep.subr.bf16.mxu0 0
    %1136 = vmatpush1.bf16.msra.mxu0 0
    %1137 = vmatprep.subr.bf16.mxu0 0
    %1138 = vmatpush1.bf16.msra.mxu0 0
    %1139 = vmatprep.subr.bf16.mxu0 0
    %1140 = vmatpush1.bf16.msra.mxu0 0
    %1141 = vmatprep.subr.bf16.mxu0 0
    %1142 = vmatpush1.bf16.msra.mxu0 0
    %1143 = vmatprep.subr.bf16.mxu0 0
    %1144 = vmatpush1.bf16.msra.mxu0 0
    %1145 = vmatprep.subr.bf16.mxu0 0
    %1146 = vmatpush1.bf16.msra.mxu0 0
    %1147 = vmatprep.subr.bf16.mxu0 0
    %1148 = vmatpush1.bf16.msra.mxu0 0
    %1149 = vmatprep.subr.bf16.mxu0 0
    %1150 = vmatpush1.bf16.msra.mxu0 0
    %1151 = vmatprep.mubr.bf16.mxu0 0
    %1152 = vmatmul.mubr.bf16.gmra.mrb[0].mxu0 %v499
    %v1153 = vpop.f32.mrb[0].mxu0
    %v1154 = vadd.f32 %v411, %v1153
    %v1155 = vpop.f32.mrb[0].mxu0
    %v1156 = vpop.f32.mrb[0].mxu0
    %v1157 = vadd.f32 %v412, %v1156
    %v1158 = vpop.f32.mrb[0].mxu0
    %1159 = vmatprep.mubr.bf16.mxu0 0
    %1160 = vmatmul.mubr.bf16.gmra.mrb[0].mxu0 %v502
    %v1161 = vpop.f32.mrb[0].mxu0
    %v1162 = vadd.f32 %v413, %v1161
    %v1163 = vpop.f32.mrb[0].mxu0
    %v1164 = vpop.f32.mrb[0].mxu0
    %v1165 = vadd.f32 %v414, %v1164
    %v1166 = vpop.f32.mrb[0].mxu0
    %1167 = vmatprep.mubr.bf16.mxu0 0
    %1168 = vmatmul.mubr.bf16.gmra.mrb[0].mxu0 %v505
    %v1169 = vpop.f32.mrb[0].mxu0
    %v1170 = vadd.f32 %v415, %v1169
    %v1171 = vpop.f32.mrb[0].mxu0
    %v1172 = vpop.f32.mrb[0].mxu0
    %v1173 = vpop.f32.mrb[0].mxu0
    %1174 = vdwg.mxu0
    %v1179 = vunpack.c.l.b16 %v310
    %v1180 = vunpack.c.l.b16 %v311
    %v1181 = vunpack.c.l.b16 %v312
    %v1182 = vunpack.c.l.b16 %v313
    %v1183 = vpack.c.b16 %v1180, %v1179
    %v1184 = vpack.c.b16 %v1182, %v1181
    %1187 = vmatprep.subr.bf16.mxu0 0
    %1188 = vmatpush1.bf16.msra.mxu0 %v1183
    %1189 = vmatprep.subr.bf16.mxu0 0
    %1190 = vmatpush1.bf16.msra.mxu0 %v1184
    %1191 = vmatprep.subr.bf16.mxu0 0
    %1192 = vmatpush1.bf16.msra.mxu0 0
    %1193 = vmatprep.subr.bf16.mxu0 0
    %1194 = vmatpush1.bf16.msra.mxu0 0
    %1195 = vmatprep.subr.bf16.mxu0 0
    %1196 = vmatpush1.bf16.msra.mxu0 0
    %1197 = vmatprep.subr.bf16.mxu0 0
    %1198 = vmatpush1.bf16.msra.mxu0 0
    %1199 = vmatprep.subr.bf16.mxu0 0
    %1200 = vmatpush1.bf16.msra.mxu0 0
    %1201 = vmatprep.subr.bf16.mxu0 0
    %1202 = vmatpush1.bf16.msra.mxu0 0
    %1203 = vmatprep.subr.bf16.mxu0 0
    %1204 = vmatpush1.bf16.msra.mxu0 0
    %1205 = vmatprep.subr.bf16.mxu0 0
    %1206 = vmatpush1.bf16.msra.mxu0 0
    %1207 = vmatprep.subr.bf16.mxu0 0
    %1208 = vmatpush1.bf16.msra.mxu0 0
    %1209 = vmatprep.subr.bf16.mxu0 0
    %1210 = vmatpush1.bf16.msra.mxu0 0
    %1211 = vmatprep.subr.bf16.mxu0 0
    %1212 = vmatpush1.bf16.msra.mxu0 0
    %1213 = vmatprep.subr.bf16.mxu0 0
    %1214 = vmatpush1.bf16.msra.mxu0 0
    %1215 = vmatprep.subr.bf16.mxu0 0
    %1216 = vmatpush1.bf16.msra.mxu0 0
    %1217 = vmatprep.subr.bf16.mxu0 0
    %1218 = vmatpush1.bf16.msra.mxu0 0
    %1219 = vmatprep.mubr.bf16.mxu0 0
    %1220 = vmatmul.mubr.bf16.gmra.mrb[0].mxu0 %v499
    %v1221 = vpop.f32.mrb[0].mxu0
    %v1222 = vadd.f32 %v416, %v1221
    %v1223 = vpop.f32.mrb[0].mxu0
    %v1224 = vpop.f32.mrb[0].mxu0
    %v1225 = vadd.f32 %v417, %v1224
    %v1226 = vpop.f32.mrb[0].mxu0
    %1227 = vmatprep.mubr.bf16.mxu0 0
    %1228 = vmatmul.mubr.bf16.gmra.mrb[0].mxu0 %v502
    %v1229 = vpop.f32.mrb[0].mxu0
    %v1230 = vadd.f32 %v418, %v1229
    %v1231 = vpop.f32.mrb[0].mxu0
    %v1232 = vpop.f32.mrb[0].mxu0
    %v1233 = vadd.f32 %v419, %v1232
    %v1234 = vpop.f32.mrb[0].mxu0
    %1235 = vmatprep.mubr.bf16.mxu0 0
    %1236 = vmatmul.mubr.bf16.gmra.mrb[0].mxu0 %v505
    %v1237 = vpop.f32.mrb[0].mxu0
    %v1238 = vadd.f32 %v420, %v1237
    %v1239 = vpop.f32.mrb[0].mxu0
    %v1240 = vpop.f32.mrb[0].mxu0
    %v1241 = vpop.f32.mrb[0].mxu0
    %1242 = vdwg.mxu0
    %v1247 = vunpack.c.l.b16 %v314
    %v1248 = vunpack.c.l.b16 %v315
    %v1249 = vunpack.c.l.b16 %v316
    %v1250 = vunpack.c.l.b16 %v317
    %v1251 = vpack.c.b16 %v1248, %v1247
    %v1252 = vpack.c.b16 %v1250, %v1249
    %1255 = vmatprep.subr.bf16.mxu0 0
    %1256 = vmatpush1.bf16.msra.mxu0 %v1251
    %1257 = vmatprep.subr.bf16.mxu0 0
    %1258 = vmatpush1.bf16.msra.mxu0 %v1252
    %1259 = vmatprep.subr.bf16.mxu0 0
    %1260 = vmatpush1.bf16.msra.mxu0 0
    %1261 = vmatprep.subr.bf16.mxu0 0
    %1262 = vmatpush1.bf16.msra.mxu0 0
    %1263 = vmatprep.subr.bf16.mxu0 0
    %1264 = vmatpush1.bf16.msra.mxu0 0
    %1265 = vmatprep.subr.bf16.mxu0 0
    %1266 = vmatpush1.bf16.msra.mxu0 0
    %1267 = vmatprep.subr.bf16.mxu0 0
    %1268 = vmatpush1.bf16.msra.mxu0 0
    %1269 = vmatprep.subr.bf16.mxu0 0
    %1270 = vmatpush1.bf16.msra.mxu0 0
    %1271 = vmatprep.subr.bf16.mxu0 0
    %1272 = vmatpush1.bf16.msra.mxu0 0
    %1273 = vmatprep.subr.bf16.mxu0 0
    %1274 = vmatpush1.bf16.msra.mxu0 0
    %1275 = vmatprep.subr.bf16.mxu0 0
    %1276 = vmatpush1.bf16.msra.mxu0 0
    %1277 = vmatprep.subr.bf16.mxu0 0
    %1278 = vmatpush1.bf16.msra.mxu0 0
    %1279 = vmatprep.subr.bf16.mxu0 0
    %1280 = vmatpush1.bf16.msra.mxu0 0
    %1281 = vmatprep.subr.bf16.mxu0 0
    %1282 = vmatpush1.bf16.msra.mxu0 0
    %1283 = vmatprep.subr.bf16.mxu0 0
    %1284 = vmatpush1.bf16.msra.mxu0 0
    %1285 = vmatprep.subr.bf16.mxu0 0
    %1286 = vmatpush1.bf16.msra.mxu0 0
    %1287 = vmatprep.mubr.bf16.mxu0 0
    %1288 = vmatmul.mubr.bf16.gmra.mrb[0].mxu0 %v499
    %v1289 = vpop.f32.mrb[0].mxu0
    %v1290 = vadd.f32 %v421, %v1289
    %v1291 = vpop.f32.mrb[0].mxu0
    %v1292 = vpop.f32.mrb[0].mxu0
    %v1293 = vadd.f32 %v422, %v1292
    %v1294 = vpop.f32.mrb[0].mxu0
    %1295 = vmatprep.mubr.bf16.mxu0 0
    %1296 = vmatmul.mubr.bf16.gmra.mrb[0].mxu0 %v502
    %v1297 = vpop.f32.mrb[0].mxu0
    %v1298 = vadd.f32 %v423, %v1297
    %v1299 = vpop.f32.mrb[0].mxu0
    %v1300 = vpop.f32.mrb[0].mxu0
    %v1301 = vadd.f32 %v424, %v1300
    %v1302 = vpop.f32.mrb[0].mxu0
    %1303 = vmatprep.mubr.bf16.mxu0 0
    %1304 = vmatmul.mubr.bf16.gmra.mrb[0].mxu0 %v505
    %v1305 = vpop.f32.mrb[0].mxu0
    %v1306 = vadd.f32 %v425, %v1305
    %v1307 = vpop.f32.mrb[0].mxu0
    %v1308 = vpop.f32.mrb[0].mxu0
    %v1309 = vpop.f32.mrb[0].mxu0
    %1310 = vdwg.mxu0
    %v1315 = vunpack.c.l.b16 %v318
    %v1316 = vunpack.c.l.b16 %v319
    %v1317 = vunpack.c.l.b16 %v320
    %v1318 = vunpack.c.l.b16 %v321
    %v1319 = vpack.c.b16 %v1316, %v1315
    %v1320 = vpack.c.b16 %v1318, %v1317
    %1323 = vmatprep.subr.bf16.mxu0 0
    %1324 = vmatpush1.bf16.msra.mxu0 %v1319
    %1325 = vmatprep.subr.bf16.mxu0 0
    %1326 = vmatpush1.bf16.msra.mxu0 %v1320
    %1327 = vmatprep.subr.bf16.mxu0 0
    %1328 = vmatpush1.bf16.msra.mxu0 0
    %1329 = vmatprep.subr.bf16.mxu0 0
    %1330 = vmatpush1.bf16.msra.mxu0 0
    %1331 = vmatprep.subr.bf16.mxu0 0
    %1332 = vmatpush1.bf16.msra.mxu0 0
    %1333 = vmatprep.subr.bf16.mxu0 0
    %1334 = vmatpush1.bf16.msra.mxu0 0
    %1335 = vmatprep.subr.bf16.mxu0 0
    %1336 = vmatpush1.bf16.msra.mxu0 0
    %1337 = vmatprep.subr.bf16.mxu0 0
    %1338 = vmatpush1.bf16.msra.mxu0 0
    %1339 = vmatprep.subr.bf16.mxu0 0
    %1340 = vmatpush1.bf16.msra.mxu0 0
    %1341 = vmatprep.subr.bf16.mxu0 0
    %1342 = vmatpush1.bf16.msra.mxu0 0
    %1343 = vmatprep.subr.bf16.mxu0 0
    %1344 = vmatpush1.bf16.msra.mxu0 0
    %1345 = vmatprep.subr.bf16.mxu0 0
    %1346 = vmatpush1.bf16.msra.mxu0 0
    %1347 = vmatprep.subr.bf16.mxu0 0
    %1348 = vmatpush1.bf16.msra.mxu0 0
    %1349 = vmatprep.subr.bf16.mxu0 0
    %1350 = vmatpush1.bf16.msra.mxu0 0
    %1351 = vmatprep.subr.bf16.mxu0 0
    %1352 = vmatpush1.bf16.msra.mxu0 0
    %1353 = vmatprep.subr.bf16.mxu0 0
    %1354 = vmatpush1.bf16.msra.mxu0 0
    %1355 = vmatprep.mubr.bf16.mxu0 0
    %1356 = vmatmul.mubr.bf16.gmra.mrb[0].mxu0 %v499
    %v1357 = vpop.f32.mrb[0].mxu0
    %v1358 = vadd.f32 %v426, %v1357
    %v1359 = vpop.f32.mrb[0].mxu0
    %v1360 = vpop.f32.mrb[0].mxu0
    %v1361 = vadd.f32 %v427, %v1360
    %v1362 = vpop.f32.mrb[0].mxu0
    %1363 = vmatprep.mubr.bf16.mxu0 0
    %1364 = vmatmul.mubr.bf16.gmra.mrb[0].mxu0 %v502
    %v1365 = vpop.f32.mrb[0].mxu0
    %v1366 = vadd.f32 %v428, %v1365
    %v1367 = vpop.f32.mrb[0].mxu0
    %v1368 = vpop.f32.mrb[0].mxu0
    %v1369 = vadd.f32 %v429, %v1368
    %v1370 = vpop.f32.mrb[0].mxu0
    %1371 = vmatprep.mubr.bf16.mxu0 0
    %1372 = vmatmul.mubr.bf16.gmra.mrb[0].mxu0 %v505
    %v1373 = vpop.f32.mrb[0].mxu0
    %v1374 = vadd.f32 %v430, %v1373
    %v1375 = vpop.f32.mrb[0].mxu0
    %v1376 = vpop.f32.mrb[0].mxu0
    %v1377 = vpop.f32.mrb[0].mxu0
    %1378 = vdwg.mxu0
    %v1383 = vunpack.c.l.b16 %v322
    %v1384 = vunpack.c.l.b16 %v323
    %v1385 = vunpack.c.l.b16 %v324
    %v1386 = vunpack.c.l.b16 %v325
    %v1387 = vpack.c.b16 %v1384, %v1383
    %v1388 = vpack.c.b16 %v1386, %v1385
    %1391 = vmatprep.subr.bf16.mxu0 0
    %1392 = vmatpush1.bf16.msra.mxu0 %v1387
    %1393 = vmatprep.subr.bf16.mxu0 0
    %1394 = vmatpush1.bf16.msra.mxu0 %v1388
    %1395 = vmatprep.subr.bf16.mxu0 0
    %1396 = vmatpush1.bf16.msra.mxu0 0
    %1397 = vmatprep.subr.bf16.mxu0 0
    %1398 = vmatpush1.bf16.msra.mxu0 0
    %1399 = vmatprep.subr.bf16.mxu0 0
    %1400 = vmatpush1.bf16.msra.mxu0 0
    %1401 = vmatprep.subr.bf16.mxu0 0
    %1402 = vmatpush1.bf16.msra.mxu0 0
    %1403 = vmatprep.subr.bf16.mxu0 0
    %1404 = vmatpush1.bf16.msra.mxu0 0
    %1405 = vmatprep.subr.bf16.mxu0 0
    %1406 = vmatpush1.bf16.msra.mxu0 0
    %1407 = vmatprep.subr.bf16.mxu0 0
    %1408 = vmatpush1.bf16.msra.mxu0 0
    %1409 = vmatprep.subr.bf16.mxu0 0
    %1410 = vmatpush1.bf16.msra.mxu0 0
    %1411 = vmatprep.subr.bf16.mxu0 0
    %1412 = vmatpush1.bf16.msra.mxu0 0
    %1413 = vmatprep.subr.bf16.mxu0 0
    %1414 = vmatpush1.bf16.msra.mxu0 0
    %1415 = vmatprep.subr.bf16.mxu0 0
    %1416 = vmatpush1.bf16.msra.mxu0 0
    %1417 = vmatprep.subr.bf16.mxu0 0
    %1418 = vmatpush1.bf16.msra.mxu0 0
    %1419 = vmatprep.subr.bf16.mxu0 0
    %1420 = vmatpush1.bf16.msra.mxu0 0
    %1421 = vmatprep.subr.bf16.mxu0 0
    %1422 = vmatpush1.bf16.msra.mxu0 0
    %1423 = vmatprep.mubr.bf16.mxu0 0
    %1424 = vmatmul.mubr.bf16.gmra.mrb[0].mxu0 %v499
    %v1425 = vpop.f32.mrb[0].mxu0
    %v1426 = vadd.f32 %v431, %v1425
    %v1427 = vpop.f32.mrb[0].mxu0
    %v1428 = vpop.f32.mrb[0].mxu0
    %v1429 = vadd.f32 %v432, %v1428
    %v1430 = vpop.f32.mrb[0].mxu0
    %1431 = vmatprep.mubr.bf16.mxu0 0
    %1432 = vmatmul.mubr.bf16.gmra.mrb[0].mxu0 %v502
    %v1433 = vpop.f32.mrb[0].mxu0
    %v1434 = vadd.f32 %v433, %v1433
    %v1435 = vpop.f32.mrb[0].mxu0
    %v1436 = vpop.f32.mrb[0].mxu0
    %v1437 = vadd.f32 %v434, %v1436
    %v1438 = vpop.f32.mrb[0].mxu0
    %1439 = vmatprep.mubr.bf16.mxu0 0
    %1440 = vmatmul.mubr.bf16.gmra.mrb[0].mxu0 %v505
    %v1441 = vpop.f32.mrb[0].mxu0
    %v1442 = vadd.f32 %v435, %v1441
    %v1443 = vpop.f32.mrb[0].mxu0
    %v1444 = vpop.f32.mrb[0].mxu0
    %v1445 = vpop.f32.mrb[0].mxu0
    %1446 = vdwg.mxu0
    %v1451 = vunpack.c.l.b16 %v326
    %v1452 = vunpack.c.l.b16 %v327
    %v1453 = vunpack.c.l.b16 %v328
    %v1454 = vunpack.c.l.b16 %v329
    %v1455 = vpack.c.b16 %v1452, %v1451
    %v1456 = vpack.c.b16 %v1454, %v1453
    %1459 = vmatprep.subr.bf16.mxu0 0
    %1460 = vmatpush1.bf16.msra.mxu0 %v1455
    %1461 = vmatprep.subr.bf16.mxu0 0
    %1462 = vmatpush1.bf16.msra.mxu0 %v1456
    %1463 = vmatprep.subr.bf16.mxu0 0
    %1464 = vmatpush1.bf16.msra.mxu0 0
    %1465 = vmatprep.subr.bf16.mxu0 0
    %1466 = vmatpush1.bf16.msra.mxu0 0
    %1467 = vmatprep.subr.bf16.mxu0 0
    %1468 = vmatpush1.bf16.msra.mxu0 0
    %1469 = vmatprep.subr.bf16.mxu0 0
    %1470 = vmatpush1.bf16.msra.mxu0 0
    %1471 = vmatprep.subr.bf16.mxu0 0
    %1472 = vmatpush1.bf16.msra.mxu0 0
    %1473 = vmatprep.subr.bf16.mxu0 0
    %1474 = vmatpush1.bf16.msra.mxu0 0
    %1475 = vmatprep.subr.bf16.mxu0 0
    %1476 = vmatpush1.bf16.msra.mxu0 0
    %1477 = vmatprep.subr.bf16.mxu0 0
    %1478 = vmatpush1.bf16.msra.mxu0 0
    %1479 = vmatprep.subr.bf16.mxu0 0
    %1480 = vmatpush1.bf16.msra.mxu0 0
    %1481 = vmatprep.subr.bf16.mxu0 0
    %1482 = vmatpush1.bf16.msra.mxu0 0
    %1483 = vmatprep.subr.bf16.mxu0 0
    %1484 = vmatpush1.bf16.msra.mxu0 0
    %1485 = vmatprep.subr.bf16.mxu0 0
    %1486 = vmatpush1.bf16.msra.mxu0 0
    %1487 = vmatprep.subr.bf16.mxu0 0
    %1488 = vmatpush1.bf16.msra.mxu0 0
    %1489 = vmatprep.subr.bf16.mxu0 0
    %1490 = vmatpush1.bf16.msra.mxu0 0
    %1491 = vmatprep.mubr.bf16.mxu0 0
    %1492 = vmatmul.mubr.bf16.gmra.mrb[0].mxu0 %v499
    %v1493 = vpop.f32.mrb[0].mxu0
    %v1494 = vadd.f32 %v436, %v1493
    %v1495 = vpop.f32.mrb[0].mxu0
    %v1496 = vpop.f32.mrb[0].mxu0
    %v1497 = vadd.f32 %v437, %v1496
    %v1498 = vpop.f32.mrb[0].mxu0
    %1499 = vmatprep.mubr.bf16.mxu0 0
    %1500 = vmatmul.mubr.bf16.gmra.mrb[0].mxu0 %v502
    %v1501 = vpop.f32.mrb[0].mxu0
    %v1502 = vadd.f32 %v438, %v1501
    %v1503 = vpop.f32.mrb[0].mxu0
    %v1504 = vpop.f32.mrb[0].mxu0
    %v1505 = vadd.f32 %v439, %v1504
    %v1506 = vpop.f32.mrb[0].mxu0
    %1507 = vmatprep.mubr.bf16.mxu0 0
    %1508 = vmatmul.mubr.bf16.gmra.mrb[0].mxu0 %v505
    %v1509 = vpop.f32.mrb[0].mxu0
    %v1510 = vadd.f32 %v440, %v1509
    %v1511 = vpop.f32.mrb[0].mxu0
    %v1512 = vpop.f32.mrb[0].mxu0
    %v1513 = vpop.f32.mrb[0].mxu0
    %1514 = vdwg.mxu0
    %v1519 = vunpack.c.l.b16 %v330
    %v1520 = vunpack.c.l.b16 %v331
    %v1521 = vunpack.c.l.b16 %v332
    %v1522 = vunpack.c.l.b16 %v333
    %v1523 = vpack.c.b16 %v1520, %v1519
    %v1524 = vpack.c.b16 %v1522, %v1521
    %1527 = vmatprep.subr.bf16.mxu0 0
    %1528 = vmatpush1.bf16.msra.mxu0 %v1523
    %1529 = vmatprep.subr.bf16.mxu0 0
    %1530 = vmatpush1.bf16.msra.mxu0 %v1524
    %1531 = vmatprep.subr.bf16.mxu0 0
    %1532 = vmatpush1.bf16.msra.mxu0 0
    %1533 = vmatprep.subr.bf16.mxu0 0
    %1534 = vmatpush1.bf16.msra.mxu0 0
    %1535 = vmatprep.subr.bf16.mxu0 0
    %1536 = vmatpush1.bf16.msra.mxu0 0
    %1537 = vmatprep.subr.bf16.mxu0 0
    %1538 = vmatpush1.bf16.msra.mxu0 0
    %1539 = vmatprep.subr.bf16.mxu0 0
    %1540 = vmatpush1.bf16.msra.mxu0 0
    %1541 = vmatprep.subr.bf16.mxu0 0
    %1542 = vmatpush1.bf16.msra.mxu0 0
    %1543 = vmatprep.subr.bf16.mxu0 0
    %1544 = vmatpush1.bf16.msra.mxu0 0
    %1545 = vmatprep.subr.bf16.mxu0 0
    %1546 = vmatpush1.bf16.msra.mxu0 0
    %1547 = vmatprep.subr.bf16.mxu0 0
    %1548 = vmatpush1.bf16.msra.mxu0 0
    %1549 = vmatprep.subr.bf16.mxu0 0
    %1550 = vmatpush1.bf16.msra.mxu0 0
    %1551 = vmatprep.subr.bf16.mxu0 0
    %1552 = vmatpush1.bf16.msra.mxu0 0
    %1553 = vmatprep.subr.bf16.mxu0 0
    %1554 = vmatpush1.bf16.msra.mxu0 0
    %1555 = vmatprep.subr.bf16.mxu0 0
    %1556 = vmatpush1.bf16.msra.mxu0 0
    %1557 = vmatprep.subr.bf16.mxu0 0
    %1558 = vmatpush1.bf16.msra.mxu0 0
    %1559 = vmatprep.mubr.bf16.mxu0 0
    %1560 = vmatmul.mubr.bf16.gmra.mrb[0].mxu0 %v499
    %v1561 = vpop.f32.mrb[0].mxu0
    %v1562 = vadd.f32 %v441, %v1561
    %v1563 = vpop.f32.mrb[0].mxu0
    %v1564 = vpop.f32.mrb[0].mxu0
    %v1565 = vadd.f32 %v442, %v1564
    %v1566 = vpop.f32.mrb[0].mxu0
    %1567 = vmatprep.mubr.bf16.mxu0 0
    %1568 = vmatmul.mubr.bf16.gmra.mrb[0].mxu0 %v502
    %v1569 = vpop.f32.mrb[0].mxu0
    %v1570 = vadd.f32 %v443, %v1569
    %v1571 = vpop.f32.mrb[0].mxu0
    %v1572 = vpop.f32.mrb[0].mxu0
    %v1573 = vadd.f32 %v444, %v1572
    %v1574 = vpop.f32.mrb[0].mxu0
    %1575 = vmatprep.mubr.bf16.mxu0 0
    %1576 = vmatmul.mubr.bf16.gmra.mrb[0].mxu0 %v505
    %v1577 = vpop.f32.mrb[0].mxu0
    %v1578 = vadd.f32 %v445, %v1577
    %v1579 = vpop.f32.mrb[0].mxu0
    %v1580 = vpop.f32.mrb[0].mxu0
    %v1581 = vpop.f32.mrb[0].mxu0
    %1582 = vdwg.mxu0
    %v1587 = vunpack.c.l.b16 %v334
    %v1588 = vunpack.c.l.b16 %v335
    %v1589 = vunpack.c.l.b16 %v336
    %v1590 = vunpack.c.l.b16 %v337
    %v1591 = vpack.c.b16 %v1588, %v1587
    %v1592 = vpack.c.b16 %v1590, %v1589
    %1595 = vmatprep.subr.bf16.mxu0 0
    %1596 = vmatpush1.bf16.msra.mxu0 %v1591
    %1597 = vmatprep.subr.bf16.mxu0 0
    %1598 = vmatpush1.bf16.msra.mxu0 %v1592
    %1599 = vmatprep.subr.bf16.mxu0 0
    %1600 = vmatpush1.bf16.msra.mxu0 0
    %1601 = vmatprep.subr.bf16.mxu0 0
    %1602 = vmatpush1.bf16.msra.mxu0 0
    %1603 = vmatprep.subr.bf16.mxu0 0
    %1604 = vmatpush1.bf16.msra.mxu0 0
    %1605 = vmatprep.subr.bf16.mxu0 0
    %1606 = vmatpush1.bf16.msra.mxu0 0
    %1607 = vmatprep.subr.bf16.mxu0 0
    %1608 = vmatpush1.bf16.msra.mxu0 0
    %1609 = vmatprep.subr.bf16.mxu0 0
    %1610 = vmatpush1.bf16.msra.mxu0 0
    %1611 = vmatprep.subr.bf16.mxu0 0
    %1612 = vmatpush1.bf16.msra.mxu0 0
    %1613 = vmatprep.subr.bf16.mxu0 0
    %1614 = vmatpush1.bf16.msra.mxu0 0
    %1615 = vmatprep.subr.bf16.mxu0 0
    %1616 = vmatpush1.bf16.msra.mxu0 0
    %1617 = vmatprep.subr.bf16.mxu0 0
    %1618 = vmatpush1.bf16.msra.mxu0 0
    %1619 = vmatprep.subr.bf16.mxu0 0
    %1620 = vmatpush1.bf16.msra.mxu0 0
    %1621 = vmatprep.subr.bf16.mxu0 0
    %1622 = vmatpush1.bf16.msra.mxu0 0
    %1623 = vmatprep.subr.bf16.mxu0 0
    %1624 = vmatpush1.bf16.msra.mxu0 0
    %1625 = vmatprep.subr.bf16.mxu0 0
    %1626 = vmatpush1.bf16.msra.mxu0 0
    %1627 = vmatprep.mubr.bf16.mxu0 0
    %1628 = vmatmul.mubr.bf16.gmra.mrb[0].mxu0 %v499
    %v1629 = vpop.f32.mrb[0].mxu0
    %v1630 = vadd.f32 %v446, %v1629
    %v1631 = vpop.f32.mrb[0].mxu0
    %v1632 = vpop.f32.mrb[0].mxu0
    %v1633 = vadd.f32 %v447, %v1632
    %v1634 = vpop.f32.mrb[0].mxu0
    %1635 = vmatprep.mubr.bf16.mxu0 0
    %1636 = vmatmul.mubr.bf16.gmra.mrb[0].mxu0 %v502
    %v1637 = vpop.f32.mrb[0].mxu0
    %v1638 = vadd.f32 %v448, %v1637
    %v1639 = vpop.f32.mrb[0].mxu0
    %v1640 = vpop.f32.mrb[0].mxu0
    %v1641 = vadd.f32 %v449, %v1640
    %v1642 = vpop.f32.mrb[0].mxu0
    %1643 = vmatprep.mubr.bf16.mxu0 0
    %1644 = vmatmul.mubr.bf16.gmra.mrb[0].mxu0 %v505
    %v1645 = vpop.f32.mrb[0].mxu0
    %v1646 = vadd.f32 %v450, %v1645
    %v1647 = vpop.f32.mrb[0].mxu0
    %v1648 = vpop.f32.mrb[0].mxu0
    %v1649 = vpop.f32.mrb[0].mxu0
    %1650 = vdwg.mxu0
    %v1655 = vunpack.c.l.b16 %v338
    %v1656 = vunpack.c.l.b16 %v339
    %v1657 = vunpack.c.l.b16 %v340
    %v1658 = vunpack.c.l.b16 %v341
    %v1659 = vpack.c.b16 %v1656, %v1655
    %v1660 = vpack.c.b16 %v1658, %v1657
    %1663 = vmatprep.subr.bf16.mxu0 0
    %1664 = vmatpush1.bf16.msra.mxu0 %v1659
    %1665 = vmatprep.subr.bf16.mxu0 0
    %1666 = vmatpush1.bf16.msra.mxu0 %v1660
    %1667 = vmatprep.subr.bf16.mxu0 0
    %1668 = vmatpush1.bf16.msra.mxu0 0
    %1669 = vmatprep.subr.bf16.mxu0 0
    %1670 = vmatpush1.bf16.msra.mxu0 0
    %1671 = vmatprep.subr.bf16.mxu0 0
    %1672 = vmatpush1.bf16.msra.mxu0 0
    %1673 = vmatprep.subr.bf16.mxu0 0
    %1674 = vmatpush1.bf16.msra.mxu0 0
    %1675 = vmatprep.subr.bf16.mxu0 0
    %1676 = vmatpush1.bf16.msra.mxu0 0
    %1677 = vmatprep.subr.bf16.mxu0 0
    %1678 = vmatpush1.bf16.msra.mxu0 0
    %1679 = vmatprep.subr.bf16.mxu0 0
    %1680 = vmatpush1.bf16.msra.mxu0 0
    %1681 = vmatprep.subr.bf16.mxu0 0
    %1682 = vmatpush1.bf16.msra.mxu0 0
    %1683 = vmatprep.subr.bf16.mxu0 0
    %1684 = vmatpush1.bf16.msra.mxu0 0
    %1685 = vmatprep.subr.bf16.mxu0 0
    %1686 = vmatpush1.bf16.msra.mxu0 0
    %1687 = vmatprep.subr.bf16.mxu0 0
    %1688 = vmatpush1.bf16.msra.mxu0 0
    %1689 = vmatprep.subr.bf16.mxu0 0
    %1690 = vmatpush1.bf16.msra.mxu0 0
    %1691 = vmatprep.subr.bf16.mxu0 0
    %1692 = vmatpush1.bf16.msra.mxu0 0
    %1693 = vmatprep.subr.bf16.mxu0 0
    %1694 = vmatpush1.bf16.msra.mxu0 0
    %1695 = vmatprep.mubr.bf16.mxu0 0
    %1696 = vmatmul.mubr.bf16.gmra.mrb[0].mxu0 %v499
    %v1697 = vpop.f32.mrb[0].mxu0
    %v1698 = vadd.f32 %v451, %v1697
    %v1699 = vpop.f32.mrb[0].mxu0
    %v1700 = vpop.f32.mrb[0].mxu0
    %v1701 = vadd.f32 %v452, %v1700
    %v1702 = vpop.f32.mrb[0].mxu0
    %1703 = vmatprep.mubr.bf16.mxu0 0
    %1704 = vmatmul.mubr.bf16.gmra.mrb[0].mxu0 %v502
    %v1705 = vpop.f32.mrb[0].mxu0
    %v1706 = vadd.f32 %v453, %v1705
    %v1707 = vpop.f32.mrb[0].mxu0
    %v1708 = vpop.f32.mrb[0].mxu0
    %v1709 = vadd.f32 %v454, %v1708
    %v1710 = vpop.f32.mrb[0].mxu0
    %1711 = vmatprep.mubr.bf16.mxu0 0
    %1712 = vmatmul.mubr.bf16.gmra.mrb[0].mxu0 %v505
    %v1713 = vpop.f32.mrb[0].mxu0
    %v1714 = vadd.f32 %v455, %v1713
    %v1715 = vpop.f32.mrb[0].mxu0
    %v1716 = vpop.f32.mrb[0].mxu0
    %v1717 = vpop.f32.mrb[0].mxu0
    %1718 = vdwg.mxu0
    %v1723 = vunpack.c.l.b16 %v342
    %v1724 = vunpack.c.l.b16 %v343
    %v1725 = vunpack.c.l.b16 %v344
    %v1726 = vunpack.c.l.b16 %v345
    %v1727 = vpack.c.b16 %v1724, %v1723
    %v1728 = vpack.c.b16 %v1726, %v1725
    %1731 = vmatprep.subr.bf16.mxu0 0
    %1732 = vmatpush1.bf16.msra.mxu0 %v1727
    %1733 = vmatprep.subr.bf16.mxu0 0
    %1734 = vmatpush1.bf16.msra.mxu0 %v1728
    %1735 = vmatprep.subr.bf16.mxu0 0
    %1736 = vmatpush1.bf16.msra.mxu0 0
    %1737 = vmatprep.subr.bf16.mxu0 0
    %1738 = vmatpush1.bf16.msra.mxu0 0
    %1739 = vmatprep.subr.bf16.mxu0 0
    %1740 = vmatpush1.bf16.msra.mxu0 0
    %1741 = vmatprep.subr.bf16.mxu0 0
    %1742 = vmatpush1.bf16.msra.mxu0 0
    %1743 = vmatprep.subr.bf16.mxu0 0
    %1744 = vmatpush1.bf16.msra.mxu0 0
    %1745 = vmatprep.subr.bf16.mxu0 0
    %1746 = vmatpush1.bf16.msra.mxu0 0
    %1747 = vmatprep.subr.bf16.mxu0 0
    %1748 = vmatpush1.bf16.msra.mxu0 0
    %1749 = vmatprep.subr.bf16.mxu0 0
    %1750 = vmatpush1.bf16.msra.mxu0 0
    %1751 = vmatprep.subr.bf16.mxu0 0
    %1752 = vmatpush1.bf16.msra.mxu0 0
    %1753 = vmatprep.subr.bf16.mxu0 0
    %1754 = vmatpush1.bf16.msra.mxu0 0
    %1755 = vmatprep.subr.bf16.mxu0 0
    %1756 = vmatpush1.bf16.msra.mxu0 0
    %1757 = vmatprep.subr.bf16.mxu0 0
    %1758 = vmatpush1.bf16.msra.mxu0 0
    %1759 = vmatprep.subr.bf16.mxu0 0
    %1760 = vmatpush1.bf16.msra.mxu0 0
    %1761 = vmatprep.subr.bf16.mxu0 0
    %1762 = vmatpush1.bf16.msra.mxu0 0
    %1763 = vmatprep.mubr.bf16.mxu0 0
    %1764 = vmatmul.mubr.bf16.gmra.mrb[0].mxu0 %v499
    %v1765 = vpop.f32.mrb[0].mxu0
    %v1766 = vadd.f32 %v456, %v1765
    %v1767 = vpop.f32.mrb[0].mxu0
    %v1768 = vpop.f32.mrb[0].mxu0
    %v1769 = vadd.f32 %v457, %v1768
    %v1770 = vpop.f32.mrb[0].mxu0
    %1771 = vmatprep.mubr.bf16.mxu0 0
    %1772 = vmatmul.mubr.bf16.gmra.mrb[0].mxu0 %v502
    %v1773 = vpop.f32.mrb[0].mxu0
    %v1774 = vadd.f32 %v458, %v1773
    %v1775 = vpop.f32.mrb[0].mxu0
    %v1776 = vpop.f32.mrb[0].mxu0
    %v1777 = vadd.f32 %v459, %v1776
    %v1778 = vpop.f32.mrb[0].mxu0
    %1779 = vmatprep.mubr.bf16.mxu0 0
    %1780 = vmatmul.mubr.bf16.gmra.mrb[0].mxu0 %v505
    %v1781 = vpop.f32.mrb[0].mxu0
    %v1782 = vadd.f32 %v460, %v1781
    %v1783 = vpop.f32.mrb[0].mxu0
    %v1784 = vpop.f32.mrb[0].mxu0
    %v1785 = vpop.f32.mrb[0].mxu0
    %1786 = vdwg.mxu0
    %v1791 = vunpack.c.l.b16 %v346
    %v1792 = vunpack.c.l.b16 %v347
    %v1793 = vunpack.c.l.b16 %v348
    %v1794 = vunpack.c.l.b16 %v349
    %v1795 = vpack.c.b16 %v1792, %v1791
    %v1796 = vpack.c.b16 %v1794, %v1793
    %1799 = vmatprep.subr.bf16.mxu0 0
    %1800 = vmatpush1.bf16.msra.mxu0 %v1795
    %1801 = vmatprep.subr.bf16.mxu0 0
    %1802 = vmatpush1.bf16.msra.mxu0 %v1796
    %1803 = vmatprep.subr.bf16.mxu0 0
    %1804 = vmatpush1.bf16.msra.mxu0 0
    %1805 = vmatprep.subr.bf16.mxu0 0
    %1806 = vmatpush1.bf16.msra.mxu0 0
    %1807 = vmatprep.subr.bf16.mxu0 0
    %1808 = vmatpush1.bf16.msra.mxu0 0
    %1809 = vmatprep.subr.bf16.mxu0 0
    %1810 = vmatpush1.bf16.msra.mxu0 0
    %1811 = vmatprep.subr.bf16.mxu0 0
    %1812 = vmatpush1.bf16.msra.mxu0 0
    %1813 = vmatprep.subr.bf16.mxu0 0
    %1814 = vmatpush1.bf16.msra.mxu0 0
    %1815 = vmatprep.subr.bf16.mxu0 0
    %1816 = vmatpush1.bf16.msra.mxu0 0
    %1817 = vmatprep.subr.bf16.mxu0 0
    %1818 = vmatpush1.bf16.msra.mxu0 0
    %1819 = vmatprep.subr.bf16.mxu0 0
    %1820 = vmatpush1.bf16.msra.mxu0 0
    %1821 = vmatprep.subr.bf16.mxu0 0
    %1822 = vmatpush1.bf16.msra.mxu0 0
    %1823 = vmatprep.subr.bf16.mxu0 0
    %1824 = vmatpush1.bf16.msra.mxu0 0
    %1825 = vmatprep.subr.bf16.mxu0 0
    %1826 = vmatpush1.bf16.msra.mxu0 0
    %1827 = vmatprep.subr.bf16.mxu0 0
    %1828 = vmatpush1.bf16.msra.mxu0 0
    %1829 = vmatprep.subr.bf16.mxu0 0
    %1830 = vmatpush1.bf16.msra.mxu0 0
    %1831 = vmatprep.mubr.bf16.mxu0 0
    %1832 = vmatmul.mubr.bf16.gmra.mrb[0].mxu0 %v499
    %v1833 = vpop.f32.mrb[0].mxu0
    %v1834 = vadd.f32 %v461, %v1833
    %v1835 = vpop.f32.mrb[0].mxu0
    %v1836 = vpop.f32.mrb[0].mxu0
    %v1837 = vadd.f32 %v462, %v1836
    %v1838 = vpop.f32.mrb[0].mxu0
    %1839 = vmatprep.mubr.bf16.mxu0 0
    %1840 = vmatmul.mubr.bf16.gmra.mrb[0].mxu0 %v502
    %v1841 = vpop.f32.mrb[0].mxu0
    %v1842 = vadd.f32 %v463, %v1841
    %v1843 = vpop.f32.mrb[0].mxu0
    %v1844 = vpop.f32.mrb[0].mxu0
    %v1845 = vadd.f32 %v464, %v1844
    %v1846 = vpop.f32.mrb[0].mxu0
    %1847 = vmatprep.mubr.bf16.mxu0 0
    %1848 = vmatmul.mubr.bf16.gmra.mrb[0].mxu0 %v505
    %v1849 = vpop.f32.mrb[0].mxu0
    %v1850 = vadd.f32 %v465, %v1849
    %v1851 = vpop.f32.mrb[0].mxu0
    %v1852 = vpop.f32.mrb[0].mxu0
    %v1853 = vpop.f32.mrb[0].mxu0
    %1854 = vdwg.mxu0
    %v1859 = vunpack.c.l.b16 %v350
    %v1860 = vunpack.c.l.b16 %v351
    %v1861 = vunpack.c.l.b16 %v352
    %v1862 = vunpack.c.l.b16 %v353
    %v1863 = vpack.c.b16 %v1860, %v1859
    %v1864 = vpack.c.b16 %v1862, %v1861
    %1867 = vmatprep.subr.bf16.mxu0 0
    %1868 = vmatpush1.bf16.msra.mxu0 %v1863
    %1869 = vmatprep.subr.bf16.mxu0 0
    %1870 = vmatpush1.bf16.msra.mxu0 %v1864
    %1871 = vmatprep.subr.bf16.mxu0 0
    %1872 = vmatpush1.bf16.msra.mxu0 0
    %1873 = vmatprep.subr.bf16.mxu0 0
    %1874 = vmatpush1.bf16.msra.mxu0 0
    %1875 = vmatprep.subr.bf16.mxu0 0
    %1876 = vmatpush1.bf16.msra.mxu0 0
    %1877 = vmatprep.subr.bf16.mxu0 0
    %1878 = vmatpush1.bf16.msra.mxu0 0
    %1879 = vmatprep.subr.bf16.mxu0 0
    %1880 = vmatpush1.bf16.msra.mxu0 0
    %1881 = vmatprep.subr.bf16.mxu0 0
    %1882 = vmatpush1.bf16.msra.mxu0 0
    %1883 = vmatprep.subr.bf16.mxu0 0
    %1884 = vmatpush1.bf16.msra.mxu0 0
    %1885 = vmatprep.subr.bf16.mxu0 0
    %1886 = vmatpush1.bf16.msra.mxu0 0
    %1887 = vmatprep.subr.bf16.mxu0 0
    %1888 = vmatpush1.bf16.msra.mxu0 0
    %1889 = vmatprep.subr.bf16.mxu0 0
    %1890 = vmatpush1.bf16.msra.mxu0 0
    %1891 = vmatprep.subr.bf16.mxu0 0
    %1892 = vmatpush1.bf16.msra.mxu0 0
    %1893 = vmatprep.subr.bf16.mxu0 0
    %1894 = vmatpush1.bf16.msra.mxu0 0
    %1895 = vmatprep.subr.bf16.mxu0 0
    %1896 = vmatpush1.bf16.msra.mxu0 0
    %1897 = vmatprep.subr.bf16.mxu0 0
    %1898 = vmatpush1.bf16.msra.mxu0 0
    %1899 = vmatprep.mubr.bf16.mxu0 0
    %1900 = vmatmul.mubr.bf16.gmra.mrb[0].mxu0 %v499
    %v1901 = vpop.f32.mrb[0].mxu0
    %v1902 = vadd.f32 %v466, %v1901
    %v1903 = vpop.f32.mrb[0].mxu0
    %v1904 = vpop.f32.mrb[0].mxu0
    %v1905 = vadd.f32 %v467, %v1904
    %v1906 = vpop.f32.mrb[0].mxu0
    %1907 = vmatprep.mubr.bf16.mxu0 0
    %1908 = vmatmul.mubr.bf16.gmra.mrb[0].mxu0 %v502
    %v1909 = vpop.f32.mrb[0].mxu0
    %v1910 = vadd.f32 %v468, %v1909
    %v1911 = vpop.f32.mrb[0].mxu0
    %v1912 = vpop.f32.mrb[0].mxu0
    %v1913 = vadd.f32 %v469, %v1912
    %v1914 = vpop.f32.mrb[0].mxu0
    %1915 = vmatprep.mubr.bf16.mxu0 0
    %1916 = vmatmul.mubr.bf16.gmra.mrb[0].mxu0 %v505
    %v1917 = vpop.f32.mrb[0].mxu0
    %v1918 = vadd.f32 %v470, %v1917
    %v1919 = vpop.f32.mrb[0].mxu0
    %v1920 = vpop.f32.mrb[0].mxu0
    %v1921 = vpop.f32.mrb[0].mxu0
    %1922 = vdwg.mxu0
    %v1927 = vunpack.c.l.b16 %v354
    %v1928 = vunpack.c.l.b16 %v355
    %v1929 = vunpack.c.l.b16 %v356
    %v1930 = vunpack.c.l.b16 %v357
    %v1931 = vpack.c.b16 %v1928, %v1927
    %v1932 = vpack.c.b16 %v1930, %v1929
    %1935 = vmatprep.subr.bf16.mxu0 0
    %1936 = vmatpush1.bf16.msra.mxu0 %v1931
    %1937 = vmatprep.subr.bf16.mxu0 0
    %1938 = vmatpush1.bf16.msra.mxu0 %v1932
    %1939 = vmatprep.subr.bf16.mxu0 0
    %1940 = vmatpush1.bf16.msra.mxu0 0
    %1941 = vmatprep.subr.bf16.mxu0 0
    %1942 = vmatpush1.bf16.msra.mxu0 0
    %1943 = vmatprep.subr.bf16.mxu0 0
    %1944 = vmatpush1.bf16.msra.mxu0 0
    %1945 = vmatprep.subr.bf16.mxu0 0
    %1946 = vmatpush1.bf16.msra.mxu0 0
    %1947 = vmatprep.subr.bf16.mxu0 0
    %1948 = vmatpush1.bf16.msra.mxu0 0
    %1949 = vmatprep.subr.bf16.mxu0 0
    %1950 = vmatpush1.bf16.msra.mxu0 0
    %1951 = vmatprep.subr.bf16.mxu0 0
    %1952 = vmatpush1.bf16.msra.mxu0 0
    %1953 = vmatprep.subr.bf16.mxu0 0
    %1954 = vmatpush1.bf16.msra.mxu0 0
    %1955 = vmatprep.subr.bf16.mxu0 0
    %1956 = vmatpush1.bf16.msra.mxu0 0
    %1957 = vmatprep.subr.bf16.mxu0 0
    %1958 = vmatpush1.bf16.msra.mxu0 0
    %1959 = vmatprep.subr.bf16.mxu0 0
    %1960 = vmatpush1.bf16.msra.mxu0 0
    %1961 = vmatprep.subr.bf16.mxu0 0
    %1962 = vmatpush1.bf16.msra.mxu0 0
    %1963 = vmatprep.subr.bf16.mxu0 0
    %1964 = vmatpush1.bf16.msra.mxu0 0
    %1965 = vmatprep.subr.bf16.mxu0 0
    %1966 = vmatpush1.bf16.msra.mxu0 0
    %1967 = vmatprep.mubr.bf16.mxu0 0
    %1968 = vmatmul.mubr.bf16.gmra.mrb[0].mxu0 %v499
    %v1969 = vpop.f32.mrb[0].mxu0
    %v1970 = vadd.f32 %v471, %v1969
    %v1971 = vpop.f32.mrb[0].mxu0
    %v1972 = vpop.f32.mrb[0].mxu0
    %v1973 = vadd.f32 %v472, %v1972
    %v1974 = vpop.f32.mrb[0].mxu0
    %1975 = vmatprep.mubr.bf16.mxu0 0
    %1976 = vmatmul.mubr.bf16.gmra.mrb[0].mxu0 %v502
    %v1977 = vpop.f32.mrb[0].mxu0
    %v1978 = vadd.f32 %v473, %v1977
    %v1979 = vpop.f32.mrb[0].mxu0
    %v1980 = vpop.f32.mrb[0].mxu0
    %v1981 = vadd.f32 %v474, %v1980
    %v1982 = vpop.f32.mrb[0].mxu0
    %1983 = vmatprep.mubr.bf16.mxu0 0
    %1984 = vmatmul.mubr.bf16.gmra.mrb[0].mxu0 %v505
    %v1985 = vpop.f32.mrb[0].mxu0
    %v1986 = vadd.f32 %v475, %v1985
    %v1987 = vpop.f32.mrb[0].mxu0
    %v1988 = vpop.f32.mrb[0].mxu0
    %v1989 = vpop.f32.mrb[0].mxu0
    %1990 = vdwg.mxu0
    %v1995 = vunpack.c.l.b16 %v358
    %v1996 = vunpack.c.l.b16 %v359
    %v1997 = vunpack.c.l.b16 %v360
    %v1998 = vunpack.c.l.b16 %v361
    %v1999 = vpack.c.b16 %v1996, %v1995
    %v2000 = vpack.c.b16 %v1998, %v1997
    %2003 = vmatprep.subr.bf16.mxu0 0
    %2004 = vmatpush1.bf16.msra.mxu0 %v1999
    %2005 = vmatprep.subr.bf16.mxu0 0
    %2006 = vmatpush1.bf16.msra.mxu0 %v2000
    %2007 = vmatprep.subr.bf16.mxu0 0
    %2008 = vmatpush1.bf16.msra.mxu0 0
    %2009 = vmatprep.subr.bf16.mxu0 0
    %2010 = vmatpush1.bf16.msra.mxu0 0
    %2011 = vmatprep.subr.bf16.mxu0 0
    %2012 = vmatpush1.bf16.msra.mxu0 0
    %2013 = vmatprep.subr.bf16.mxu0 0
    %2014 = vmatpush1.bf16.msra.mxu0 0
    %2015 = vmatprep.subr.bf16.mxu0 0
    %2016 = vmatpush1.bf16.msra.mxu0 0
    %2017 = vmatprep.subr.bf16.mxu0 0
    %2018 = vmatpush1.bf16.msra.mxu0 0
    %2019 = vmatprep.subr.bf16.mxu0 0
    %2020 = vmatpush1.bf16.msra.mxu0 0
    %2021 = vmatprep.subr.bf16.mxu0 0
    %2022 = vmatpush1.bf16.msra.mxu0 0
    %2023 = vmatprep.subr.bf16.mxu0 0
    %2024 = vmatpush1.bf16.msra.mxu0 0
    %2025 = vmatprep.subr.bf16.mxu0 0
    %2026 = vmatpush1.bf16.msra.mxu0 0
    %2027 = vmatprep.subr.bf16.mxu0 0
    %2028 = vmatpush1.bf16.msra.mxu0 0
    %2029 = vmatprep.subr.bf16.mxu0 0
    %2030 = vmatpush1.bf16.msra.mxu0 0
    %2031 = vmatprep.subr.bf16.mxu0 0
    %2032 = vmatpush1.bf16.msra.mxu0 0
    %2033 = vmatprep.subr.bf16.mxu0 0
    %2034 = vmatpush1.bf16.msra.mxu0 0
    %2035 = vmatprep.mubr.bf16.mxu0 0
    %2036 = vmatmul.mubr.bf16.gmra.mrb[0].mxu0 %v499
    %v2037 = vpop.f32.mrb[0].mxu0
    %v2038 = vadd.f32 %v476, %v2037
    %v2039 = vpop.f32.mrb[0].mxu0
    %v2040 = vpop.f32.mrb[0].mxu0
    %v2041 = vadd.f32 %v477, %v2040
    %v2042 = vpop.f32.mrb[0].mxu0
    %2043 = vmatprep.mubr.bf16.mxu0 0
    %2044 = vmatmul.mubr.bf16.gmra.mrb[0].mxu0 %v502
    %v2045 = vpop.f32.mrb[0].mxu0
    %v2046 = vadd.f32 %v478, %v2045
    %v2047 = vpop.f32.mrb[0].mxu0
    %v2048 = vpop.f32.mrb[0].mxu0
    %v2049 = vadd.f32 %v479, %v2048
    %v2050 = vpop.f32.mrb[0].mxu0
    %2051 = vmatprep.mubr.bf16.mxu0 0
    %2052 = vmatmul.mubr.bf16.gmra.mrb[0].mxu0 %v505
    %v2053 = vpop.f32.mrb[0].mxu0
    %v2054 = vadd.f32 %v480, %v2053
    %v2055 = vpop.f32.mrb[0].mxu0
    %v2056 = vpop.f32.mrb[0].mxu0
    %v2057 = vpop.f32.mrb[0].mxu0
    %2058 = vdwg.mxu0
    %v2063 = vunpack.c.l.b16 %v362
    %v2064 = vunpack.c.l.b16 %v363
    %v2065 = vunpack.c.l.b16 %v364
    %v2066 = vunpack.c.l.b16 %v365
    %v2067 = vpack.c.b16 %v2064, %v2063
    %v2068 = vpack.c.b16 %v2066, %v2065
    %2071 = vmatprep.subr.bf16.mxu0 0
    %2072 = vmatpush1.bf16.msra.mxu0 %v2067
    %2073 = vmatprep.subr.bf16.mxu0 0
    %2074 = vmatpush1.bf16.msra.mxu0 %v2068
    %2075 = vmatprep.subr.bf16.mxu0 0
    %2076 = vmatpush1.bf16.msra.mxu0 0
    %2077 = vmatprep.subr.bf16.mxu0 0
    %2078 = vmatpush1.bf16.msra.mxu0 0
    %2079 = vmatprep.subr.bf16.mxu0 0
    %2080 = vmatpush1.bf16.msra.mxu0 0
    %2081 = vmatprep.subr.bf16.mxu0 0
    %2082 = vmatpush1.bf16.msra.mxu0 0
    %2083 = vmatprep.subr.bf16.mxu0 0
    %2084 = vmatpush1.bf16.msra.mxu0 0
    %2085 = vmatprep.subr.bf16.mxu0 0
    %2086 = vmatpush1.bf16.msra.mxu0 0
    %2087 = vmatprep.subr.bf16.mxu0 0
    %2088 = vmatpush1.bf16.msra.mxu0 0
    %2089 = vmatprep.subr.bf16.mxu0 0
    %2090 = vmatpush1.bf16.msra.mxu0 0
    %2091 = vmatprep.subr.bf16.mxu0 0
    %2092 = vmatpush1.bf16.msra.mxu0 0
    %2093 = vmatprep.subr.bf16.mxu0 0
    %2094 = vmatpush1.bf16.msra.mxu0 0
    %2095 = vmatprep.subr.bf16.mxu0 0
    %2096 = vmatpush1.bf16.msra.mxu0 0
    %2097 = vmatprep.subr.bf16.mxu0 0
    %2098 = vmatpush1.bf16.msra.mxu0 0
    %2099 = vmatprep.subr.bf16.mxu0 0
    %2100 = vmatpush1.bf16.msra.mxu0 0
    %2101 = vmatprep.subr.bf16.mxu0 0
    %2102 = vmatpush1.bf16.msra.mxu0 0
    %2103 = vmatprep.mubr.bf16.mxu0 0
    %2104 = vmatmul.mubr.bf16.gmra.mrb[0].mxu0 %v499
    %v2105 = vpop.f32.mrb[0].mxu0
    %v2106 = vadd.f32 %v481, %v2105
    %v2107 = vpop.f32.mrb[0].mxu0
    %v2108 = vpop.f32.mrb[0].mxu0
    %v2109 = vadd.f32 %v482, %v2108
    %v2110 = vpop.f32.mrb[0].mxu0
    %2111 = vmatprep.mubr.bf16.mxu0 0
    %2112 = vmatmul.mubr.bf16.gmra.mrb[0].mxu0 %v502
    %v2113 = vpop.f32.mrb[0].mxu0
    %v2114 = vadd.f32 %v483, %v2113
    %v2115 = vpop.f32.mrb[0].mxu0
    %v2116 = vpop.f32.mrb[0].mxu0
    %v2117 = vadd.f32 %v484, %v2116
    %v2118 = vpop.f32.mrb[0].mxu0
    %2119 = vmatprep.mubr.bf16.mxu0 0
    %2120 = vmatmul.mubr.bf16.gmra.mrb[0].mxu0 %v505
    %v2121 = vpop.f32.mrb[0].mxu0
    %v2122 = vadd.f32 %v485, %v2121
    %v2123 = vpop.f32.mrb[0].mxu0
    %v2124 = vpop.f32.mrb[0].mxu0
    %v2125 = vpop.f32.mrb[0].mxu0
    %2126 = vdwg.mxu0
    %v2127 = vpack.c.bf16 %v545, %v542
    %v2128 = vpack.c.bf16 %v553, %v550
    %v2129 = vpack.c.bf16 %v558, %v558
    %v2130 = vpack.c.bf16 %v613, %v610
    %v2131 = vpack.c.bf16 %v621, %v618
    %v2132 = vpack.c.bf16 %v626, %v626
    %v2133 = vpack.c.bf16 %v681, %v678
    %v2134 = vpack.c.bf16 %v689, %v686
    %v2135 = vpack.c.bf16 %v694, %v694
    %v2136 = vpack.c.bf16 %v749, %v746
    %v2137 = vpack.c.bf16 %v757, %v754
    %v2138 = vpack.c.bf16 %v762, %v762
    %v2139 = vpack.c.bf16 %v817, %v814
    %v2140 = vpack.c.bf16 %v825, %v822
    %v2141 = vpack.c.bf16 %v830, %v830
    %v2142 = vpack.c.bf16 %v885, %v882
    %v2143 = vpack.c.bf16 %v893, %v890
    %v2144 = vpack.c.bf16 %v898, %v898
    %v2145 = vpack.c.bf16 %v953, %v950
    %v2146 = vpack.c.bf16 %v961, %v958
    %v2147 = vpack.c.bf16 %v966, %v966
    %v2148 = vpack.c.bf16 %v1021, %v1018
    %v2149 = vpack.c.bf16 %v1029, %v1026
    %v2150 = vpack.c.bf16 %v1034, %v1034
    %v2151 = vpack.c.bf16 %v1089, %v1086
    %v2152 = vpack.c.bf16 %v1097, %v1094
    %v2153 = vpack.c.bf16 %v1102, %v1102
    %v2154 = vpack.c.bf16 %v1157, %v1154
    %v2155 = vpack.c.bf16 %v1165, %v1162
    %v2156 = vpack.c.bf16 %v1170, %v1170
    %v2157 = vpack.c.bf16 %v1225, %v1222
    %v2158 = vpack.c.bf16 %v1233, %v1230
    %v2159 = vpack.c.bf16 %v1238, %v1238
    %v2160 = vpack.c.bf16 %v1293, %v1290
    %v2161 = vpack.c.bf16 %v1301, %v1298
    %v2162 = vpack.c.bf16 %v1306, %v1306
    %v2163 = vpack.c.bf16 %v1361, %v1358
    %v2164 = vpack.c.bf16 %v1369, %v1366
    %v2165 = vpack.c.bf16 %v1374, %v1374
    %v2166 = vpack.c.bf16 %v1429, %v1426
    %v2167 = vpack.c.bf16 %v1437, %v1434
    %v2168 = vpack.c.bf16 %v1442, %v1442
    %v2169 = vpack.c.bf16 %v1497, %v1494
    %v2170 = vpack.c.bf16 %v1505, %v1502
    %v2171 = vpack.c.bf16 %v1510, %v1510
    %v2172 = vpack.c.bf16 %v1565, %v1562
    %v2173 = vpack.c.bf16 %v1573, %v1570
    %v2174 = vpack.c.bf16 %v1578, %v1578
    %vm2175 = vcmask 31744
    %v2177 = vsel %vm2175, %v2127, 0
    %v2180 = vsel %vm2175, %v2128, 0
    %v2183 = vsel %vm2175, %v2129, 0
    %v2186 = vsel %vm2175, %v2151, 0
    %v2189 = vsel %vm2175, %v2152, 0
    %v2192 = vsel %vm2175, %v2153, 0
    %2194 = vmatprep.subr.bf16.mxu0 0
    %2195 = vmatpush1.bf16.xpose.msra.mxu0 %v2186
    %2196 = vmatprep.subr.bf16.mxu0 0
    %2197 = vmatpush1.bf16.xpose.msra.mxu0 %v2189
    %2198 = vmatprep.subr.bf16.mxu0 0
    %2199 = vmatpush1.bf16.xpose.msra.mxu0 %v2192
    %2200 = vmatprep.subr.bf16.mxu0 0
    %2201 = vmatpush1.bf16.xpose.msra.mxu0 0
    %2202 = vmatprep.subr.bf16.mxu0 0
    %2203 = vmatpush1.bf16.xpose.msra.mxu0 0
    %2204 = vmatprep.subr.bf16.mxu0 0
    %2205 = vmatpush1.bf16.xpose.msra.mxu0 0
    %2206 = vmatprep.subr.bf16.mxu0 0
    %2207 = vmatpush1.bf16.xpose.msra.mxu0 0
    %2208 = vmatprep.subr.bf16.mxu0 0
    %2209 = vmatpush1.bf16.xpose.msra.mxu0 0
    %2210 = vmatprep.subr.bf16.mxu0 0
    %2211 = vmatpush1.bf16.xpose.msra.mxu0 0
    %2212 = vmatprep.subr.bf16.mxu0 0
    %2213 = vmatpush1.bf16.xpose.msra.mxu0 0
    %2214 = vmatprep.subr.bf16.mxu0 0
    %2215 = vmatpush1.bf16.xpose.msra.mxu0 0
    %2216 = vmatprep.subr.bf16.mxu0 0
    %2217 = vmatpush1.bf16.xpose.msra.mxu0 0
    %2218 = vmatprep.subr.bf16.mxu0 0
    %2219 = vmatpush1.bf16.xpose.msra.mxu0 0
    %2220 = vmatprep.subr.bf16.mxu0 0
    %2221 = vmatpush1.bf16.xpose.msra.mxu0 0
    %2222 = vmatprep.subr.bf16.mxu0 0
    %2223 = vmatpush1.bf16.xpose.msra.mxu0 0
    %2224 = vmatprep.subr.bf16.mxu0 0
    %2225 = vmatpush1.bf16.xpose.msra.mxu0 0
    %2226 = vmatprep.mubr.bf16.mxu0 0
    %2227 = vmatmul.mubr.bf16.gmra.mrb[0].mxu0 %v2177
    %v2228 = vpop.f32.mrb[0].mxu0
    %v2229 = vadd.f32 0.0, %v2228
    %v2230 = vpop.f32.mrb[0].mxu0
    %v2231 = vpop.f32.mrb[0].mxu0
    %v2232 = vadd.f32 0.0, %v2231
    %v2233 = vpop.f32.mrb[0].mxu0
    %2234 = vmatprep.mubr.bf16.mxu0 0
    %2235 = vmatmul.mubr.bf16.gmra.mrb[0].mxu0 %v2180
    %v2236 = vpop.f32.mrb[0].mxu0
    %v2237 = vadd.f32 0.0, %v2236
    %v2238 = vpop.f32.mrb[0].mxu0
    %v2239 = vpop.f32.mrb[0].mxu0
    %v2240 = vadd.f32 0.0, %v2239
    %v2241 = vpop.f32.mrb[0].mxu0
    %2242 = vmatprep.mubr.bf16.mxu0 0
    %2243 = vmatmul.mubr.bf16.gmra.mrb[0].mxu0 %v2183
    %v2244 = vpop.f32.mrb[0].mxu0
    %v2245 = vadd.f32 0.0, %v2244
    %v2246 = vpop.f32.mrb[0].mxu0
    %v2247 = vpop.f32.mrb[0].mxu0
    %v2248 = vpop.f32.mrb[0].mxu0
    %2249 = vdwg.mxu0
    %v2251 = vsel %vm2175, %v2130, 0
    %v2254 = vsel %vm2175, %v2131, 0
    %v2257 = vsel %vm2175, %v2132, 0
    %v2260 = vsel %vm2175, %v2154, 0
    %v2263 = vsel %vm2175, %v2155, 0
    %v2266 = vsel %vm2175, %v2156, 0
    %2268 = vmatprep.subr.bf16.mxu0 0
    %2269 = vmatpush1.bf16.xpose.msra.mxu0 %v2260
    %2270 = vmatprep.subr.bf16.mxu0 0
    %2271 = vmatpush1.bf16.xpose.msra.mxu0 %v2263
    %2272 = vmatprep.subr.bf16.mxu0 0
    %2273 = vmatpush1.bf16.xpose.msra.mxu0 %v2266
    %2274 = vmatprep.subr.bf16.mxu0 0
    %2275 = vmatpush1.bf16.xpose.msra.mxu0 0
    %2276 = vmatprep.subr.bf16.mxu0 0
    %2277 = vmatpush1.bf16.xpose.msra.mxu0 0
    %2278 = vmatprep.subr.bf16.mxu0 0
    %2279 = vmatpush1.bf16.xpose.msra.mxu0 0
    %2280 = vmatprep.subr.bf16.mxu0 0
    %2281 = vmatpush1.bf16.xpose.msra.mxu0 0
    %2282 = vmatprep.subr.bf16.mxu0 0
    %2283 = vmatpush1.bf16.xpose.msra.mxu0 0
    %2284 = vmatprep.subr.bf16.mxu0 0
    %2285 = vmatpush1.bf16.xpose.msra.mxu0 0
    %2286 = vmatprep.subr.bf16.mxu0 0
    %2287 = vmatpush1.bf16.xpose.msra.mxu0 0
    %2288 = vmatprep.subr.bf16.mxu0 0
    %2289 = vmatpush1.bf16.xpose.msra.mxu0 0
    %2290 = vmatprep.subr.bf16.mxu0 0
    %2291 = vmatpush1.bf16.xpose.msra.mxu0 0
    %2292 = vmatprep.subr.bf16.mxu0 0
    %2293 = vmatpush1.bf16.xpose.msra.mxu0 0
    %2294 = vmatprep.subr.bf16.mxu0 0
    %2295 = vmatpush1.bf16.xpose.msra.mxu0 0
    %2296 = vmatprep.subr.bf16.mxu0 0
    %2297 = vmatpush1.bf16.xpose.msra.mxu0 0
    %2298 = vmatprep.subr.bf16.mxu0 0
    %2299 = vmatpush1.bf16.xpose.msra.mxu0 0
    %2300 = vmatprep.mubr.bf16.mxu0 0
    %2301 = vmatmul.mubr.bf16.gmra.mrb[0].mxu0 %v2251
    %v2302 = vpop.f32.mrb[0].mxu0
    %v2303 = vadd.f32 0.0, %v2302
    %v2304 = vpop.f32.mrb[0].mxu0
    %v2305 = vpop.f32.mrb[0].mxu0
    %v2306 = vadd.f32 0.0, %v2305
    %v2307 = vpop.f32.mrb[0].mxu0
    %2308 = vmatprep.mubr.bf16.mxu0 0
    %2309 = vmatmul.mubr.bf16.gmra.mrb[0].mxu0 %v2254
    %v2310 = vpop.f32.mrb[0].mxu0
    %v2311 = vadd.f32 0.0, %v2310
    %v2312 = vpop.f32.mrb[0].mxu0
    %v2313 = vpop.f32.mrb[0].mxu0
    %v2314 = vadd.f32 0.0, %v2313
    %v2315 = vpop.f32.mrb[0].mxu0
    %2316 = vmatprep.mubr.bf16.mxu0 0
    %2317 = vmatmul.mubr.bf16.gmra.mrb[0].mxu0 %v2257
    %v2318 = vpop.f32.mrb[0].mxu0
    %v2319 = vadd.f32 0.0, %v2318
    %v2320 = vpop.f32.mrb[0].mxu0
    %v2321 = vpop.f32.mrb[0].mxu0
    %v2322 = vpop.f32.mrb[0].mxu0
    %2323 = vdwg.mxu0
    %v2325 = vsel %vm2175, %v2133, 0
    %v2328 = vsel %vm2175, %v2134, 0
    %v2331 = vsel %vm2175, %v2135, 0
    %v2334 = vsel %vm2175, %v2157, 0
    %v2337 = vsel %vm2175, %v2158, 0
    %v2340 = vsel %vm2175, %v2159, 0
    %2342 = vmatprep.subr.bf16.mxu0 0
    %2343 = vmatpush1.bf16.xpose.msra.mxu0 %v2334
    %2344 = vmatprep.subr.bf16.mxu0 0
    %2345 = vmatpush1.bf16.xpose.msra.mxu0 %v2337
    %2346 = vmatprep.subr.bf16.mxu0 0
    %2347 = vmatpush1.bf16.xpose.msra.mxu0 %v2340
    %2348 = vmatprep.subr.bf16.mxu0 0
    %2349 = vmatpush1.bf16.xpose.msra.mxu0 0
    %2350 = vmatprep.subr.bf16.mxu0 0
    %2351 = vmatpush1.bf16.xpose.msra.mxu0 0
    %2352 = vmatprep.subr.bf16.mxu0 0
    %2353 = vmatpush1.bf16.xpose.msra.mxu0 0
    %2354 = vmatprep.subr.bf16.mxu0 0
    %2355 = vmatpush1.bf16.xpose.msra.mxu0 0
    %2356 = vmatprep.subr.bf16.mxu0 0
    %2357 = vmatpush1.bf16.xpose.msra.mxu0 0
    %2358 = vmatprep.subr.bf16.mxu0 0
    %2359 = vmatpush1.bf16.xpose.msra.mxu0 0
    %2360 = vmatprep.subr.bf16.mxu0 0
    %2361 = vmatpush1.bf16.xpose.msra.mxu0 0
    %2362 = vmatprep.subr.bf16.mxu0 0
    %2363 = vmatpush1.bf16.xpose.msra.mxu0 0
    %2364 = vmatprep.subr.bf16.mxu0 0
    %2365 = vmatpush1.bf16.xpose.msra.mxu0 0
    %2366 = vmatprep.subr.bf16.mxu0 0
    %2367 = vmatpush1.bf16.xpose.msra.mxu0 0
    %2368 = vmatprep.subr.bf16.mxu0 0
    %2369 = vmatpush1.bf16.xpose.msra.mxu0 0
    %2370 = vmatprep.subr.bf16.mxu0 0
    %2371 = vmatpush1.bf16.xpose.msra.mxu0 0
    %2372 = vmatprep.subr.bf16.mxu0 0
    %2373 = vmatpush1.bf16.xpose.msra.mxu0 0
    %2374 = vmatprep.mubr.bf16.mxu0 0
    %2375 = vmatmul.mubr.bf16.gmra.mrb[0].mxu0 %v2325
    %v2376 = vpop.f32.mrb[0].mxu0
    %v2377 = vadd.f32 0.0, %v2376
    %v2378 = vpop.f32.mrb[0].mxu0
    %v2379 = vpop.f32.mrb[0].mxu0
    %v2380 = vadd.f32 0.0, %v2379
    %v2381 = vpop.f32.mrb[0].mxu0
    %2382 = vmatprep.mubr.bf16.mxu0 0
    %2383 = vmatmul.mubr.bf16.gmra.mrb[0].mxu0 %v2328
    %v2384 = vpop.f32.mrb[0].mxu0
    %v2385 = vadd.f32 0.0, %v2384
    %v2386 = vpop.f32.mrb[0].mxu0
    %v2387 = vpop.f32.mrb[0].mxu0
    %v2388 = vadd.f32 0.0, %v2387
    %v2389 = vpop.f32.mrb[0].mxu0
    %2390 = vmatprep.mubr.bf16.mxu0 0
    %2391 = vmatmul.mubr.bf16.gmra.mrb[0].mxu0 %v2331
    %v2392 = vpop.f32.mrb[0].mxu0
    %v2393 = vadd.f32 0.0, %v2392
    %v2394 = vpop.f32.mrb[0].mxu0
    %v2395 = vpop.f32.mrb[0].mxu0
    %v2396 = vpop.f32.mrb[0].mxu0
    %2397 = vdwg.mxu0
    %v2399 = vsel %vm2175, %v2136, 0
    %v2402 = vsel %vm2175, %v2137, 0
    %v2405 = vsel %vm2175, %v2138, 0
    %v2408 = vsel %vm2175, %v2160, 0
    %v2411 = vsel %vm2175, %v2161, 0
    %v2414 = vsel %vm2175, %v2162, 0
    %2416 = vmatprep.subr.bf16.mxu0 0
    %2417 = vmatpush1.bf16.xpose.msra.mxu0 %v2408
    %2418 = vmatprep.subr.bf16.mxu0 0
    %2419 = vmatpush1.bf16.xpose.msra.mxu0 %v2411
    %2420 = vmatprep.subr.bf16.mxu0 0
    %2421 = vmatpush1.bf16.xpose.msra.mxu0 %v2414
    %2422 = vmatprep.subr.bf16.mxu0 0
    %2423 = vmatpush1.bf16.xpose.msra.mxu0 0
    %2424 = vmatprep.subr.bf16.mxu0 0
    %2425 = vmatpush1.bf16.xpose.msra.mxu0 0
    %2426 = vmatprep.subr.bf16.mxu0 0
    %2427 = vmatpush1.bf16.xpose.msra.mxu0 0
    %2428 = vmatprep.subr.bf16.mxu0 0
    %2429 = vmatpush1.bf16.xpose.msra.mxu0 0
    %2430 = vmatprep.subr.bf16.mxu0 0
    %2431 = vmatpush1.bf16.xpose.msra.mxu0 0
    %2432 = vmatprep.subr.bf16.mxu0 0
    %2433 = vmatpush1.bf16.xpose.msra.mxu0 0
    %2434 = vmatprep.subr.bf16.mxu0 0
    %2435 = vmatpush1.bf16.xpose.msra.mxu0 0
    %2436 = vmatprep.subr.bf16.mxu0 0
    %2437 = vmatpush1.bf16.xpose.msra.mxu0 0
    %2438 = vmatprep.subr.bf16.mxu0 0
    %2439 = vmatpush1.bf16.xpose.msra.mxu0 0
    %2440 = vmatprep.subr.bf16.mxu0 0
    %2441 = vmatpush1.bf16.xpose.msra.mxu0 0
    %2442 = vmatprep.subr.bf16.mxu0 0
    %2443 = vmatpush1.bf16.xpose.msra.mxu0 0
    %2444 = vmatprep.subr.bf16.mxu0 0
    %2445 = vmatpush1.bf16.xpose.msra.mxu0 0
    %2446 = vmatprep.subr.bf16.mxu0 0
    %2447 = vmatpush1.bf16.xpose.msra.mxu0 0
    %2448 = vmatprep.mubr.bf16.mxu0 0
    %2449 = vmatmul.mubr.bf16.gmra.mrb[0].mxu0 %v2399
    %v2450 = vpop.f32.mrb[0].mxu0
    %v2451 = vadd.f32 0.0, %v2450
    %v2452 = vpop.f32.mrb[0].mxu0
    %v2453 = vpop.f32.mrb[0].mxu0
    %v2454 = vadd.f32 0.0, %v2453
    %v2455 = vpop.f32.mrb[0].mxu0
    %2456 = vmatprep.mubr.bf16.mxu0 0
    %2457 = vmatmul.mubr.bf16.gmra.mrb[0].mxu0 %v2402
    %v2458 = vpop.f32.mrb[0].mxu0
    %v2459 = vadd.f32 0.0, %v2458
    %v2460 = vpop.f32.mrb[0].mxu0
    %v2461 = vpop.f32.mrb[0].mxu0
    %v2462 = vadd.f32 0.0, %v2461
    %v2463 = vpop.f32.mrb[0].mxu0
    %2464 = vmatprep.mubr.bf16.mxu0 0
    %2465 = vmatmul.mubr.bf16.gmra.mrb[0].mxu0 %v2405
    %v2466 = vpop.f32.mrb[0].mxu0
    %v2467 = vadd.f32 0.0, %v2466
    %v2468 = vpop.f32.mrb[0].mxu0
    %v2469 = vpop.f32.mrb[0].mxu0
    %v2470 = vpop.f32.mrb[0].mxu0
    %2471 = vdwg.mxu0
    %v2473 = vsel %vm2175, %v2139, 0
    %v2476 = vsel %vm2175, %v2140, 0
    %v2479 = vsel %vm2175, %v2141, 0
    %v2482 = vsel %vm2175, %v2163, 0
    %v2485 = vsel %vm2175, %v2164, 0
    %v2488 = vsel %vm2175, %v2165, 0
    %2490 = vmatprep.subr.bf16.mxu0 0
    %2491 = vmatpush1.bf16.xpose.msra.mxu0 %v2482
    %2492 = vmatprep.subr.bf16.mxu0 0
    %2493 = vmatpush1.bf16.xpose.msra.mxu0 %v2485
    %2494 = vmatprep.subr.bf16.mxu0 0
    %2495 = vmatpush1.bf16.xpose.msra.mxu0 %v2488
    %2496 = vmatprep.subr.bf16.mxu0 0
    %2497 = vmatpush1.bf16.xpose.msra.mxu0 0
    %2498 = vmatprep.subr.bf16.mxu0 0
    %2499 = vmatpush1.bf16.xpose.msra.mxu0 0
    %2500 = vmatprep.subr.bf16.mxu0 0
    %2501 = vmatpush1.bf16.xpose.msra.mxu0 0
    %2502 = vmatprep.subr.bf16.mxu0 0
    %2503 = vmatpush1.bf16.xpose.msra.mxu0 0
    %2504 = vmatprep.subr.bf16.mxu0 0
    %2505 = vmatpush1.bf16.xpose.msra.mxu0 0
    %2506 = vmatprep.subr.bf16.mxu0 0
    %2507 = vmatpush1.bf16.xpose.msra.mxu0 0
    %2508 = vmatprep.subr.bf16.mxu0 0
    %2509 = vmatpush1.bf16.xpose.msra.mxu0 0
    %2510 = vmatprep.subr.bf16.mxu0 0
    %2511 = vmatpush1.bf16.xpose.msra.mxu0 0
    %2512 = vmatprep.subr.bf16.mxu0 0
    %2513 = vmatpush1.bf16.xpose.msra.mxu0 0
    %2514 = vmatprep.subr.bf16.mxu0 0
    %2515 = vmatpush1.bf16.xpose.msra.mxu0 0
    %2516 = vmatprep.subr.bf16.mxu0 0
    %2517 = vmatpush1.bf16.xpose.msra.mxu0 0
    %2518 = vmatprep.subr.bf16.mxu0 0
    %2519 = vmatpush1.bf16.xpose.msra.mxu0 0
    %2520 = vmatprep.subr.bf16.mxu0 0
    %2521 = vmatpush1.bf16.xpose.msra.mxu0 0
    %2522 = vmatprep.mubr.bf16.mxu0 0
    %2523 = vmatmul.mubr.bf16.gmra.mrb[0].mxu0 %v2473
    %v2524 = vpop.f32.mrb[0].mxu0
    %v2525 = vadd.f32 0.0, %v2524
    %v2526 = vpop.f32.mrb[0].mxu0
    %v2527 = vpop.f32.mrb[0].mxu0
    %v2528 = vadd.f32 0.0, %v2527
    %v2529 = vpop.f32.mrb[0].mxu0
    %2530 = vmatprep.mubr.bf16.mxu0 0
    %2531 = vmatmul.mubr.bf16.gmra.mrb[0].mxu0 %v2476
    %v2532 = vpop.f32.mrb[0].mxu0
    %v2533 = vadd.f32 0.0, %v2532
    %v2534 = vpop.f32.mrb[0].mxu0
    %v2535 = vpop.f32.mrb[0].mxu0
    %v2536 = vadd.f32 0.0, %v2535
    %v2537 = vpop.f32.mrb[0].mxu0
    %2538 = vmatprep.mubr.bf16.mxu0 0
    %2539 = vmatmul.mubr.bf16.gmra.mrb[0].mxu0 %v2479
    %v2540 = vpop.f32.mrb[0].mxu0
    %v2541 = vadd.f32 0.0, %v2540
    %v2542 = vpop.f32.mrb[0].mxu0
    %v2543 = vpop.f32.mrb[0].mxu0
    %v2544 = vpop.f32.mrb[0].mxu0
    %2545 = vdwg.mxu0
    %v2547 = vsel %vm2175, %v2142, 0
    %v2550 = vsel %vm2175, %v2143, 0
    %v2553 = vsel %vm2175, %v2144, 0
    %v2556 = vsel %vm2175, %v2166, 0
    %v2559 = vsel %vm2175, %v2167, 0
    %v2562 = vsel %vm2175, %v2168, 0
    %2564 = vmatprep.subr.bf16.mxu0 0
    %2565 = vmatpush1.bf16.xpose.msra.mxu0 %v2556
    %2566 = vmatprep.subr.bf16.mxu0 0
    %2567 = vmatpush1.bf16.xpose.msra.mxu0 %v2559
    %2568 = vmatprep.subr.bf16.mxu0 0
    %2569 = vmatpush1.bf16.xpose.msra.mxu0 %v2562
    %2570 = vmatprep.subr.bf16.mxu0 0
    %2571 = vmatpush1.bf16.xpose.msra.mxu0 0
    %2572 = vmatprep.subr.bf16.mxu0 0
    %2573 = vmatpush1.bf16.xpose.msra.mxu0 0
    %2574 = vmatprep.subr.bf16.mxu0 0
    %2575 = vmatpush1.bf16.xpose.msra.mxu0 0
    %2576 = vmatprep.subr.bf16.mxu0 0
    %2577 = vmatpush1.bf16.xpose.msra.mxu0 0
    %2578 = vmatprep.subr.bf16.mxu0 0
    %2579 = vmatpush1.bf16.xpose.msra.mxu0 0
    %2580 = vmatprep.subr.bf16.mxu0 0
    %2581 = vmatpush1.bf16.xpose.msra.mxu0 0
    %2582 = vmatprep.subr.bf16.mxu0 0
    %2583 = vmatpush1.bf16.xpose.msra.mxu0 0
    %2584 = vmatprep.subr.bf16.mxu0 0
    %2585 = vmatpush1.bf16.xpose.msra.mxu0 0
    %2586 = vmatprep.subr.bf16.mxu0 0
    %2587 = vmatpush1.bf16.xpose.msra.mxu0 0
    %2588 = vmatprep.subr.bf16.mxu0 0
    %2589 = vmatpush1.bf16.xpose.msra.mxu0 0
    %2590 = vmatprep.subr.bf16.mxu0 0
    %2591 = vmatpush1.bf16.xpose.msra.mxu0 0
    %2592 = vmatprep.subr.bf16.mxu0 0
    %2593 = vmatpush1.bf16.xpose.msra.mxu0 0
    %2594 = vmatprep.subr.bf16.mxu0 0
    %2595 = vmatpush1.bf16.xpose.msra.mxu0 0
    %2596 = vmatprep.mubr.bf16.mxu0 0
    %2597 = vmatmul.mubr.bf16.gmra.mrb[0].mxu0 %v2547
    %v2598 = vpop.f32.mrb[0].mxu0
    %v2599 = vadd.f32 0.0, %v2598
    %v2600 = vpop.f32.mrb[0].mxu0
    %v2601 = vpop.f32.mrb[0].mxu0
    %v2602 = vadd.f32 0.0, %v2601
    %v2603 = vpop.f32.mrb[0].mxu0
    %2604 = vmatprep.mubr.bf16.mxu0 0
    %2605 = vmatmul.mubr.bf16.gmra.mrb[0].mxu0 %v2550
    %v2606 = vpop.f32.mrb[0].mxu0
    %v2607 = vadd.f32 0.0, %v2606
    %v2608 = vpop.f32.mrb[0].mxu0
    %v2609 = vpop.f32.mrb[0].mxu0
    %v2610 = vadd.f32 0.0, %v2609
    %v2611 = vpop.f32.mrb[0].mxu0
    %2612 = vmatprep.mubr.bf16.mxu0 0
    %2613 = vmatmul.mubr.bf16.gmra.mrb[0].mxu0 %v2553
    %v2614 = vpop.f32.mrb[0].mxu0
    %v2615 = vadd.f32 0.0, %v2614
    %v2616 = vpop.f32.mrb[0].mxu0
    %v2617 = vpop.f32.mrb[0].mxu0
    %v2618 = vpop.f32.mrb[0].mxu0
    %2619 = vdwg.mxu0
    %v2621 = vsel %vm2175, %v2145, 0
    %v2624 = vsel %vm2175, %v2146, 0
    %v2627 = vsel %vm2175, %v2147, 0
    %v2630 = vsel %vm2175, %v2169, 0
    %v2633 = vsel %vm2175, %v2170, 0
    %v2636 = vsel %vm2175, %v2171, 0
    %2638 = vmatprep.subr.bf16.mxu0 0
    %2639 = vmatpush1.bf16.xpose.msra.mxu0 %v2630
    %2640 = vmatprep.subr.bf16.mxu0 0
    %2641 = vmatpush1.bf16.xpose.msra.mxu0 %v2633
    %2642 = vmatprep.subr.bf16.mxu0 0
    %2643 = vmatpush1.bf16.xpose.msra.mxu0 %v2636
    %2644 = vmatprep.subr.bf16.mxu0 0
    %2645 = vmatpush1.bf16.xpose.msra.mxu0 0
    %2646 = vmatprep.subr.bf16.mxu0 0
    %2647 = vmatpush1.bf16.xpose.msra.mxu0 0
    %2648 = vmatprep.subr.bf16.mxu0 0
    %2649 = vmatpush1.bf16.xpose.msra.mxu0 0
    %2650 = vmatprep.subr.bf16.mxu0 0
    %2651 = vmatpush1.bf16.xpose.msra.mxu0 0
    %2652 = vmatprep.subr.bf16.mxu0 0
    %2653 = vmatpush1.bf16.xpose.msra.mxu0 0
    %2654 = vmatprep.subr.bf16.mxu0 0
    %2655 = vmatpush1.bf16.xpose.msra.mxu0 0
    %2656 = vmatprep.subr.bf16.mxu0 0
    %2657 = vmatpush1.bf16.xpose.msra.mxu0 0
    %2658 = vmatprep.subr.bf16.mxu0 0
    %2659 = vmatpush1.bf16.xpose.msra.mxu0 0
    %2660 = vmatprep.subr.bf16.mxu0 0
    %2661 = vmatpush1.bf16.xpose.msra.mxu0 0
    %2662 = vmatprep.subr.bf16.mxu0 0
    %2663 = vmatpush1.bf16.xpose.msra.mxu0 0
    %2664 = vmatprep.subr.bf16.mxu0 0
    %2665 = vmatpush1.bf16.xpose.msra.mxu0 0
    %2666 = vmatprep.subr.bf16.mxu0 0
    %2667 = vmatpush1.bf16.xpose.msra.mxu0 0
    %2668 = vmatprep.subr.bf16.mxu0 0
    %2669 = vmatpush1.bf16.xpose.msra.mxu0 0
    %2670 = vmatprep.mubr.bf16.mxu0 0
    %2671 = vmatmul.mubr.bf16.gmra.mrb[0].mxu0 %v2621
    %v2672 = vpop.f32.mrb[0].mxu0
    %v2673 = vadd.f32 0.0, %v2672
    %v2674 = vpop.f32.mrb[0].mxu0
    %v2675 = vpop.f32.mrb[0].mxu0
    %v2676 = vadd.f32 0.0, %v2675
    %v2677 = vpop.f32.mrb[0].mxu0
    %2678 = vmatprep.mubr.bf16.mxu0 0
    %2679 = vmatmul.mubr.bf16.gmra.mrb[0].mxu0 %v2624
    %v2680 = vpop.f32.mrb[0].mxu0
    %v2681 = vadd.f32 0.0, %v2680
    %v2682 = vpop.f32.mrb[0].mxu0
    %v2683 = vpop.f32.mrb[0].mxu0
    %v2684 = vadd.f32 0.0, %v2683
    %v2685 = vpop.f32.mrb[0].mxu0
    %2686 = vmatprep.mubr.bf16.mxu0 0
    %2687 = vmatmul.mubr.bf16.gmra.mrb[0].mxu0 %v2627
    %v2688 = vpop.f32.mrb[0].mxu0
    %v2689 = vadd.f32 0.0, %v2688
    %v2690 = vpop.f32.mrb[0].mxu0
    %v2691 = vpop.f32.mrb[0].mxu0
    %v2692 = vpop.f32.mrb[0].mxu0
    %2693 = vdwg.mxu0
    %v2695 = vsel %vm2175, %v2148, 0
    %v2698 = vsel %vm2175, %v2149, 0
    %v2701 = vsel %vm2175, %v2150, 0
    %v2704 = vsel %vm2175, %v2172, 0
    %v2707 = vsel %vm2175, %v2173, 0
    %v2710 = vsel %vm2175, %v2174, 0
    %2712 = vmatprep.subr.bf16.mxu0 0
    %2713 = vmatpush1.bf16.xpose.msra.mxu0 %v2704
    %2714 = vmatprep.subr.bf16.mxu0 0
    %2715 = vmatpush1.bf16.xpose.msra.mxu0 %v2707
    %2716 = vmatprep.subr.bf16.mxu0 0
    %2717 = vmatpush1.bf16.xpose.msra.mxu0 %v2710
    %2718 = vmatprep.subr.bf16.mxu0 0
    %2719 = vmatpush1.bf16.xpose.msra.mxu0 0
    %2720 = vmatprep.subr.bf16.mxu0 0
    %2721 = vmatpush1.bf16.xpose.msra.mxu0 0
    %2722 = vmatprep.subr.bf16.mxu0 0
    %2723 = vmatpush1.bf16.xpose.msra.mxu0 0
    %2724 = vmatprep.subr.bf16.mxu0 0
    %2725 = vmatpush1.bf16.xpose.msra.mxu0 0
    %2726 = vmatprep.subr.bf16.mxu0 0
    %2727 = vmatpush1.bf16.xpose.msra.mxu0 0
    %2728 = vmatprep.subr.bf16.mxu0 0
    %2729 = vmatpush1.bf16.xpose.msra.mxu0 0
    %2730 = vmatprep.subr.bf16.mxu0 0
    %2731 = vmatpush1.bf16.xpose.msra.mxu0 0
    %2732 = vmatprep.subr.bf16.mxu0 0
    %2733 = vmatpush1.bf16.xpose.msra.mxu0 0
    %2734 = vmatprep.subr.bf16.mxu0 0
    %2735 = vmatpush1.bf16.xpose.msra.mxu0 0
    %2736 = vmatprep.subr.bf16.mxu0 0
    %2737 = vmatpush1.bf16.xpose.msra.mxu0 0
    %2738 = vmatprep.subr.bf16.mxu0 0
    %2739 = vmatpush1.bf16.xpose.msra.mxu0 0
    %2740 = vmatprep.subr.bf16.mxu0 0
    %2741 = vmatpush1.bf16.xpose.msra.mxu0 0
    %2742 = vmatprep.subr.bf16.mxu0 0
    %2743 = vmatpush1.bf16.xpose.msra.mxu0 0
    %2744 = vmatprep.mubr.bf16.mxu0 0
    %2745 = vmatmul.mubr.bf16.gmra.mrb[0].mxu0 %v2695
    %v2746 = vpop.f32.mrb[0].mxu0
    %v2747 = vadd.f32 0.0, %v2746
    %v2748 = vpop.f32.mrb[0].mxu0
    %v2749 = vpop.f32.mrb[0].mxu0
    %v2750 = vadd.f32 0.0, %v2749
    %v2751 = vpop.f32.mrb[0].mxu0
    %2752 = vmatprep.mubr.bf16.mxu0 0
    %2753 = vmatmul.mubr.bf16.gmra.mrb[0].mxu0 %v2698
    %v2754 = vpop.f32.mrb[0].mxu0
    %v2755 = vadd.f32 0.0, %v2754
    %v2756 = vpop.f32.mrb[0].mxu0
    %v2757 = vpop.f32.mrb[0].mxu0
    %v2758 = vadd.f32 0.0, %v2757
    %v2759 = vpop.f32.mrb[0].mxu0
    %2760 = vmatprep.mubr.bf16.mxu0 0
    %2761 = vmatmul.mubr.bf16.gmra.mrb[0].mxu0 %v2701
    %v2762 = vpop.f32.mrb[0].mxu0
    %v2763 = vadd.f32 0.0, %v2762
    %v2764 = vpop.f32.mrb[0].mxu0
    %v2765 = vpop.f32.mrb[0].mxu0
    %v2766 = vpop.f32.mrb[0].mxu0
    %2767 = vdwg.mxu0
    %v2768 = vmul.f32 %v2229, 0.609375
    %v2769 = vmul.f32 %v2232, 0.609375
    %v2770 = vmul.f32 %v2237, 0.609375
    %v2771 = vmul.f32 %v2240, 0.609375
    %v2772 = vmul.f32 %v2245, 0.609375
    %v2773 = vmul.f32 %v2303, 0.609375
    %v2774 = vmul.f32 %v2306, 0.609375
    %v2775 = vmul.f32 %v2311, 0.609375
    %v2776 = vmul.f32 %v2314, 0.609375
    %v2777 = vmul.f32 %v2319, 0.609375
    %v2778 = vmul.f32 %v2377, 0.609375
    %v2779 = vmul.f32 %v2380, 0.609375
    %v2780 = vmul.f32 %v2385, 0.609375
    %v2781 = vmul.f32 %v2388, 0.609375
    %v2782 = vmul.f32 %v2393, 0.609375
    %v2783 = vmul.f32 %v2451, 0.609375
    %v2784 = vmul.f32 %v2454, 0.609375
    %v2785 = vmul.f32 %v2459, 0.609375
    %v2786 = vmul.f32 %v2462, 0.609375
    %v2787 = vmul.f32 %v2467, 0.609375
    %v2788 = vmul.f32 %v2525, 0.609375
    %v2789 = vmul.f32 %v2528, 0.609375
    %v2790 = vmul.f32 %v2533, 0.609375
    %v2791 = vmul.f32 %v2536, 0.609375
    %v2792 = vmul.f32 %v2541, 0.609375
    %v2793 = vmul.f32 %v2599, 0.609375
    %v2794 = vmul.f32 %v2602, 0.609375
    %v2795 = vmul.f32 %v2607, 0.609375
    %v2796 = vmul.f32 %v2610, 0.609375
    %v2797 = vmul.f32 %v2615, 0.609375
    %v2798 = vmul.f32 %v2673, 0.609375
    %v2799 = vmul.f32 %v2676, 0.609375
    %v2800 = vmul.f32 %v2681, 0.609375
    %v2801 = vmul.f32 %v2684, 0.609375
    %v2802 = vmul.f32 %v2689, 0.609375
    %v2803 = vmul.f32 %v2747, 0.609375
    %v2804 = vmul.f32 %v2750, 0.609375
    %v2805 = vmul.f32 %v2755, 0.609375
    %v2806 = vmul.f32 %v2758, 0.609375
    %v2807 = vmul.f32 %v2763, 0.609375
    %v2808 = vadd.f32 %v2768, %v170
    %v2809 = vadd.f32 %v2769, %v171
    %v2810 = vadd.f32 %v2770, %v172
    %v2811 = vadd.f32 %v2771, %v173
    %v2812 = vadd.f32 %v2772, %v174
    %v2813 = vadd.f32 %v2773, %v170
    %v2814 = vadd.f32 %v2774, %v171
    %v2815 = vadd.f32 %v2775, %v172
    %v2816 = vadd.f32 %v2776, %v173
    %v2817 = vadd.f32 %v2777, %v174
    %v2818 = vadd.f32 %v2778, %v170
    %v2819 = vadd.f32 %v2779, %v171
    %v2820 = vadd.f32 %v2780, %v172
    %v2821 = vadd.f32 %v2781, %v173
    %v2822 = vadd.f32 %v2782, %v174
    %v2823 = vadd.f32 %v2783, %v170
    %v2824 = vadd.f32 %v2784, %v171
    %v2825 = vadd.f32 %v2785, %v172
    %v2826 = vadd.f32 %v2786, %v173
    %v2827 = vadd.f32 %v2787, %v174
    %v2828 = vadd.f32 %v2788, %v170
    %v2829 = vadd.f32 %v2789, %v171
    %v2830 = vadd.f32 %v2790, %v172
    %v2831 = vadd.f32 %v2791, %v173
    %v2832 = vadd.f32 %v2792, %v174
    %v2833 = vadd.f32 %v2793, %v170
    %v2834 = vadd.f32 %v2794, %v171
    %v2835 = vadd.f32 %v2795, %v172
    %v2836 = vadd.f32 %v2796, %v173
    %v2837 = vadd.f32 %v2797, %v174
    %v2838 = vadd.f32 %v2798, %v170
    %v2839 = vadd.f32 %v2799, %v171
    %v2840 = vadd.f32 %v2800, %v172
    %v2841 = vadd.f32 %v2801, %v173
    %v2842 = vadd.f32 %v2802, %v174
    %v2843 = vadd.f32 %v2803, %v170
    %v2844 = vadd.f32 %v2804, %v171
    %v2845 = vadd.f32 %v2805, %v172
    %v2846 = vadd.f32 %v2806, %v173
    %v2847 = vadd.f32 %v2807, %v174
    %vm2848 = vcmask 277504
    %v2849 = vsel %vm2848, %v2808, -inf
    %2850 = vmax.xlane.f32.xlu0 %v2849
    %v2851 = vpop.xlane.xlu0 %2850
    %v2852 = vsel %vm2848, %v2809, -inf
    %2853 = vmax.xlane.f32.xlu0 %v2852
    %v2854 = vpop.xlane.xlu0 %2853
    %v2855 = vsel %vm2848, %v2810, -inf
    %2856 = vmax.xlane.f32.xlu0 %v2855
    %v2857 = vpop.xlane.xlu0 %2856
    %v2858 = vsel %vm2848, %v2811, -inf
    %2859 = vmax.xlane.f32.xlu0 %v2858
    %v2860 = vpop.xlane.xlu0 %2859
    %vm2861 = vcmask 271360
    %v2862 = vsel %vm2861, %v2812, -inf
    %2863 = vmax.xlane.f32.xlu0 %v2862
    %v2864 = vpop.xlane.xlu0 %2863
    %v2865 = vsel %vm2848, %v2813, -inf
    %2866 = vmax.xlane.f32.xlu0 %v2865
    %v2867 = vpop.xlane.xlu0 %2866
    %v2868 = vsel %vm2848, %v2814, -inf
    %2869 = vmax.xlane.f32.xlu0 %v2868
    %v2870 = vpop.xlane.xlu0 %2869
    %v2871 = vsel %vm2848, %v2815, -inf
    %2872 = vmax.xlane.f32.xlu0 %v2871
    %v2873 = vpop.xlane.xlu0 %2872
    %v2874 = vsel %vm2848, %v2816, -inf
    %2875 = vmax.xlane.f32.xlu0 %v2874
    %v2876 = vpop.xlane.xlu0 %2875
    %v2877 = vsel %vm2861, %v2817, -inf
    %2878 = vmax.xlane.f32.xlu0 %v2877
    %v2879 = vpop.xlane.xlu0 %2878
    %v2880 = vsel %vm2848, %v2818, -inf
    %2881 = vmax.xlane.f32.xlu0 %v2880
    %v2882 = vpop.xlane.xlu0 %2881
    %v2883 = vsel %vm2848, %v2819, -inf
    %2884 = vmax.xlane.f32.xlu0 %v2883
    %v2885 = vpop.xlane.xlu0 %2884
    %v2886 = vsel %vm2848, %v2820, -inf
    %2887 = vmax.xlane.f32.xlu0 %v2886
    %v2888 = vpop.xlane.xlu0 %2887
    %v2889 = vsel %vm2848, %v2821, -inf
    %2890 = vmax.xlane.f32.xlu0 %v2889
    %v2891 = vpop.xlane.xlu0 %2890
    %v2892 = vsel %vm2861, %v2822, -inf
    %2893 = vmax.xlane.f32.xlu0 %v2892
    %v2894 = vpop.xlane.xlu0 %2893
    %v2895 = vsel %vm2848, %v2823, -inf
    %2896 = vmax.xlane.f32.xlu0 %v2895
    %v2897 = vpop.xlane.xlu0 %2896
    %v2898 = vsel %vm2848, %v2824, -inf
    %2899 = vmax.xlane.f32.xlu0 %v2898
    %v2900 = vpop.xlane.xlu0 %2899
    %v2901 = vsel %vm2848, %v2825, -inf
    %2902 = vmax.xlane.f32.xlu0 %v2901
    %v2903 = vpop.xlane.xlu0 %2902
    %v2904 = vsel %vm2848, %v2826, -inf
    %2905 = vmax.xlane.f32.xlu0 %v2904
    %v2906 = vpop.xlane.xlu0 %2905
    %v2907 = vsel %vm2861, %v2827, -inf
    %2908 = vmax.xlane.f32.xlu0 %v2907
    %v2909 = vpop.xlane.xlu0 %2908
    %v2910 = vsel %vm2848, %v2828, -inf
    %2911 = vmax.xlane.f32.xlu0 %v2910
    %v2912 = vpop.xlane.xlu0 %2911
    %v2913 = vsel %vm2848, %v2829, -inf
    %2914 = vmax.xlane.f32.xlu0 %v2913
    %v2915 = vpop.xlane.xlu0 %2914
    %v2916 = vsel %vm2848, %v2830, -inf
    %2917 = vmax.xlane.f32.xlu0 %v2916
    %v2918 = vpop.xlane.xlu0 %2917
    %v2919 = vsel %vm2848, %v2831, -inf
    %2920 = vmax.xlane.f32.xlu0 %v2919
    %v2921 = vpop.xlane.xlu0 %2920
    %v2922 = vsel %vm2861, %v2832, -inf
    %2923 = vmax.xlane.f32.xlu0 %v2922
    %v2924 = vpop.xlane.xlu0 %2923
    %v2925 = vsel %vm2848, %v2833, -inf
    %2926 = vmax.xlane.f32.xlu0 %v2925
    %v2927 = vpop.xlane.xlu0 %2926
    %v2928 = vsel %vm2848, %v2834, -inf
    %2929 = vmax.xlane.f32.xlu0 %v2928
    %v2930 = vpop.xlane.xlu0 %2929
    %v2931 = vsel %vm2848, %v2835, -inf
    %2932 = vmax.xlane.f32.xlu0 %v2931
    %v2933 = vpop.xlane.xlu0 %2932
    %v2934 = vsel %vm2848, %v2836, -inf
    %2935 = vmax.xlane.f32.xlu0 %v2934
    %v2936 = vpop.xlane.xlu0 %2935
    %v2937 = vsel %vm2861, %v2837, -inf
    %2938 = vmax.xlane.f32.xlu0 %v2937
    %v2939 = vpop.xlane.xlu0 %2938
    %v2940 = vsel %vm2848, %v2838, -inf
    %2941 = vmax.xlane.f32.xlu0 %v2940
    %v2942 = vpop.xlane.xlu0 %2941
    %v2943 = vsel %vm2848, %v2839, -inf
    %2944 = vmax.xlane.f32.xlu0 %v2943
    %v2945 = vpop.xlane.xlu0 %2944
    %v2946 = vsel %vm2848, %v2840, -inf
    %2947 = vmax.xlane.f32.xlu0 %v2946
    %v2948 = vpop.xlane.xlu0 %2947
    %v2949 = vsel %vm2848, %v2841, -inf
    %2950 = vmax.xlane.f32.xlu0 %v2949
    %v2951 = vpop.xlane.xlu0 %2950
    %v2952 = vsel %vm2861, %v2842, -inf
    %2953 = vmax.xlane.f32.xlu0 %v2952
    %v2954 = vpop.xlane.xlu0 %2953
    %v2955 = vsel %vm2848, %v2843, -inf
    %2956 = vmax.xlane.f32.xlu0 %v2955
    %v2957 = vpop.xlane.xlu0 %2956
    %v2958 = vsel %vm2848, %v2844, -inf
    %2959 = vmax.xlane.f32.xlu0 %v2958
    %v2960 = vpop.xlane.xlu0 %2959
    %v2961 = vsel %vm2848, %v2845, -inf
    %2962 = vmax.xlane.f32.xlu0 %v2961
    %v2963 = vpop.xlane.xlu0 %2962
    %v2964 = vsel %vm2848, %v2846, -inf
    %2965 = vmax.xlane.f32.xlu0 %v2964
    %v2966 = vpop.xlane.xlu0 %2965
    %v2967 = vsel %vm2861, %v2847, -inf
    %2968 = vmax.xlane.f32.xlu0 %v2967
    %v2969 = vpop.xlane.xlu0 %2968
    %v2970 = vsub.f32 %v2808, %v2851
    %v2971 = vsub.f32 %v2809, %v2854
    %v2972 = vsub.f32 %v2810, %v2857
    %v2973 = vsub.f32 %v2811, %v2860
    %v2974 = vsub.f32 %v2812, %v2864
    %v2975 = vsub.f32 %v2813, %v2867
    %v2976 = vsub.f32 %v2814, %v2870
    %v2977 = vsub.f32 %v2815, %v2873
    %v2978 = vsub.f32 %v2816, %v2876
    %v2979 = vsub.f32 %v2817, %v2879
    %v2980 = vsub.f32 %v2818, %v2882
    %v2981 = vsub.f32 %v2819, %v2885
    %v2982 = vsub.f32 %v2820, %v2888
    %v2983 = vsub.f32 %v2821, %v2891
    %v2984 = vsub.f32 %v2822, %v2894
    %v2985 = vsub.f32 %v2823, %v2897
    %v2986 = vsub.f32 %v2824, %v2900
    %v2987 = vsub.f32 %v2825, %v2903
    %v2988 = vsub.f32 %v2826, %v2906
    %v2989 = vsub.f32 %v2827, %v2909
    %v2990 = vsub.f32 %v2828, %v2912
    %v2991 = vsub.f32 %v2829, %v2915
    %v2992 = vsub.f32 %v2830, %v2918
    %v2993 = vsub.f32 %v2831, %v2921
    %v2994 = vsub.f32 %v2832, %v2924
    %v2995 = vsub.f32 %v2833, %v2927
    %v2996 = vsub.f32 %v2834, %v2930
    %v2997 = vsub.f32 %v2835, %v2933
    %v2998 = vsub.f32 %v2836, %v2936
    %v2999 = vsub.f32 %v2837, %v2939
    %v3000 = vsub.f32 %v2838, %v2942
    %v3001 = vsub.f32 %v2839, %v2945
    %v3002 = vsub.f32 %v2840, %v2948
    %v3003 = vsub.f32 %v2841, %v2951
    %v3004 = vsub.f32 %v2842, %v2954
    %v3005 = vsub.f32 %v2843, %v2957
    %v3006 = vsub.f32 %v2844, %v2960
    %v3007 = vsub.f32 %v2845, %v2963
    %v3008 = vsub.f32 %v2846, %v2966
    %v3009 = vsub.f32 %v2847, %v2969
    %v3010 = vmul.f32 %v2970, 1.442695
    %v3011 = vpow.pop %v3010
    %v3012 = vmul.f32 %v2971, 1.442695
    %v3013 = vpow.pop %v3012
    %v3014 = vmul.f32 %v2972, 1.442695
    %v3015 = vpow.pop %v3014
    %v3016 = vmul.f32 %v2973, 1.442695
    %v3017 = vpow.pop %v3016
    %v3018 = vmul.f32 %v2974, 1.442695
    %v3019 = vpow.pop %v3018
    %v3020 = vmul.f32 %v2975, 1.442695
    %v3021 = vpow.pop %v3020
    %v3022 = vmul.f32 %v2976, 1.442695
    %v3023 = vpow.pop %v3022
    %v3024 = vmul.f32 %v2977, 1.442695
    %v3025 = vpow.pop %v3024
    %v3026 = vmul.f32 %v2978, 1.442695
    %v3027 = vpow.pop %v3026
    %v3028 = vmul.f32 %v2979, 1.442695
    %v3029 = vpow.pop %v3028
    %v3030 = vmul.f32 %v2980, 1.442695
    %v3031 = vpow.pop %v3030
    %v3032 = vmul.f32 %v2981, 1.442695
    %v3033 = vpow.pop %v3032
    %v3034 = vmul.f32 %v2982, 1.442695
    %v3035 = vpow.pop %v3034
    %v3036 = vmul.f32 %v2983, 1.442695
    %v3037 = vpow.pop %v3036
    %v3038 = vmul.f32 %v2984, 1.442695
    %v3039 = vpow.pop %v3038
    %v3040 = vmul.f32 %v2985, 1.442695
    %v3041 = vpow.pop %v3040
    %v3042 = vmul.f32 %v2986, 1.442695
    %v3043 = vpow.pop %v3042
    %v3044 = vmul.f32 %v2987, 1.442695
    %v3045 = vpow.pop %v3044
    %v3046 = vmul.f32 %v2988, 1.442695
    %v3047 = vpow.pop %v3046
    %v3048 = vmul.f32 %v2989, 1.442695
    %v3049 = vpow.pop %v3048
    %v3050 = vmul.f32 %v2990, 1.442695
    %v3051 = vpow.pop %v3050
    %v3052 = vmul.f32 %v2991, 1.442695
    %v3053 = vpow.pop %v3052
    %v3054 = vmul.f32 %v2992, 1.442695
    %v3055 = vpow.pop %v3054
    %v3056 = vmul.f32 %v2993, 1.442695
    %v3057 = vpow.pop %v3056
    %v3058 = vmul.f32 %v2994, 1.442695
    %v3059 = vpow.pop %v3058
    %v3060 = vmul.f32 %v2995, 1.442695
    %v3061 = vpow.pop %v3060
    %v3062 = vmul.f32 %v2996, 1.442695
    %v3063 = vpow.pop %v3062
    %v3064 = vmul.f32 %v2997, 1.442695
    %v3065 = vpow.pop %v3064
    %v3066 = vmul.f32 %v2998, 1.442695
    %v3067 = vpow.pop %v3066
    %v3068 = vmul.f32 %v2999, 1.442695
    %v3069 = vpow.pop %v3068
    %v3070 = vmul.f32 %v3000, 1.442695
    %v3071 = vpow.pop %v3070
    %v3072 = vmul.f32 %v3001, 1.442695
    %v3073 = vpow.pop %v3072
    %v3074 = vmul.f32 %v3002, 1.442695
    %v3075 = vpow.pop %v3074
    %v3076 = vmul.f32 %v3003, 1.442695
    %v3077 = vpow.pop %v3076
    %v3078 = vmul.f32 %v3004, 1.442695
    %v3079 = vpow.pop %v3078
    %v3080 = vmul.f32 %v3005, 1.442695
    %v3081 = vpow.pop %v3080
    %v3082 = vmul.f32 %v3006, 1.442695
    %v3083 = vpow.pop %v3082
    %v3084 = vmul.f32 %v3007, 1.442695
    %v3085 = vpow.pop %v3084
    %v3086 = vmul.f32 %v3008, 1.442695
    %v3087 = vpow.pop %v3086
    %v3088 = vmul.f32 %v3009, 1.442695
    %v3089 = vpow.pop %v3088
    %v3090 = vsel %vm2848, %v3011, 0.0
    %3091 = vadd.xlane.f32.xlu0 %v3090
    %v3092 = vpop.xlane.xlu0 %3091
    %v3093 = vsel %vm2848, %v3013, 0.0
    %3094 = vadd.xlane.f32.xlu0 %v3093
    %v3095 = vpop.xlane.xlu0 %3094
    %v3096 = vsel %vm2848, %v3015, 0.0
    %3097 = vadd.xlane.f32.xlu0 %v3096
    %v3098 = vpop.xlane.xlu0 %3097
    %v3099 = vsel %vm2848, %v3017, 0.0
    %3100 = vadd.xlane.f32.xlu0 %v3099
    %v3101 = vpop.xlane.xlu0 %3100
    %v3102 = vsel %vm2861, %v3019, 0.0
    %3103 = vadd.xlane.f32.xlu0 %v3102
    %v3104 = vpop.xlane.xlu0 %3103
    %v3105 = vsel %vm2848, %v3021, 0.0
    %3106 = vadd.xlane.f32.xlu0 %v3105
    %v3107 = vpop.xlane.xlu0 %3106
    %v3108 = vsel %vm2848, %v3023, 0.0
    %3109 = vadd.xlane.f32.xlu0 %v3108
    %v3110 = vpop.xlane.xlu0 %3109
    %v3111 = vsel %vm2848, %v3025, 0.0
    %3112 = vadd.xlane.f32.xlu0 %v3111
    %v3113 = vpop.xlane.xlu0 %3112
    %v3114 = vsel %vm2848, %v3027, 0.0
    %3115 = vadd.xlane.f32.xlu0 %v3114
    %v3116 = vpop.xlane.xlu0 %3115
    %v3117 = vsel %vm2861, %v3029, 0.0
    %3118 = vadd.xlane.f32.xlu0 %v3117
    %v3119 = vpop.xlane.xlu0 %3118
    %v3120 = vsel %vm2848, %v3031, 0.0
    %3121 = vadd.xlane.f32.xlu0 %v3120
    %v3122 = vpop.xlane.xlu0 %3121
    %v3123 = vsel %vm2848, %v3033, 0.0
    %3124 = vadd.xlane.f32.xlu0 %v3123
    %v3125 = vpop.xlane.xlu0 %3124
    %v3126 = vsel %vm2848, %v3035, 0.0
    %3127 = vadd.xlane.f32.xlu0 %v3126
    %v3128 = vpop.xlane.xlu0 %3127
    %v3129 = vsel %vm2848, %v3037, 0.0
    %3130 = vadd.xlane.f32.xlu0 %v3129
    %v3131 = vpop.xlane.xlu0 %3130
    %v3132 = vsel %vm2861, %v3039, 0.0
    %3133 = vadd.xlane.f32.xlu0 %v3132
    %v3134 = vpop.xlane.xlu0 %3133
    %v3135 = vsel %vm2848, %v3041, 0.0
    %3136 = vadd.xlane.f32.xlu0 %v3135
    %v3137 = vpop.xlane.xlu0 %3136
    %v3138 = vsel %vm2848, %v3043, 0.0
    %3139 = vadd.xlane.f32.xlu0 %v3138
    %v3140 = vpop.xlane.xlu0 %3139
    %v3141 = vsel %vm2848, %v3045, 0.0
    %3142 = vadd.xlane.f32.xlu0 %v3141
    %v3143 = vpop.xlane.xlu0 %3142
    %v3144 = vsel %vm2848, %v3047, 0.0
    %3145 = vadd.xlane.f32.xlu0 %v3144
    %v3146 = vpop.xlane.xlu0 %3145
    %v3147 = vsel %vm2861, %v3049, 0.0
    %3148 = vadd.xlane.f32.xlu0 %v3147
    %v3149 = vpop.xlane.xlu0 %3148
    %v3150 = vsel %vm2848, %v3051, 0.0
    %3151 = vadd.xlane.f32.xlu0 %v3150
    %v3152 = vpop.xlane.xlu0 %3151
    %v3153 = vsel %vm2848, %v3053, 0.0
    %3154 = vadd.xlane.f32.xlu0 %v3153
    %v3155 = vpop.xlane.xlu0 %3154
    %v3156 = vsel %vm2848, %v3055, 0.0
    %3157 = vadd.xlane.f32.xlu0 %v3156
    %v3158 = vpop.xlane.xlu0 %3157
    %v3159 = vsel %vm2848, %v3057, 0.0
    %3160 = vadd.xlane.f32.xlu0 %v3159
    %v3161 = vpop.xlane.xlu0 %3160
    %v3162 = vsel %vm2861, %v3059, 0.0
    %3163 = vadd.xlane.f32.xlu0 %v3162
    %v3164 = vpop.xlane.xlu0 %3163
    %v3165 = vsel %vm2848, %v3061, 0.0
    %3166 = vadd.xlane.f32.xlu0 %v3165
    %v3167 = vpop.xlane.xlu0 %3166
    %v3168 = vsel %vm2848, %v3063, 0.0
    %3169 = vadd.xlane.f32.xlu0 %v3168
    %v3170 = vpop.xlane.xlu0 %3169
    %v3171 = vsel %vm2848, %v3065, 0.0
    %3172 = vadd.xlane.f32.xlu0 %v3171
    %v3173 = vpop.xlane.xlu0 %3172
    %v3174 = vsel %vm2848, %v3067, 0.0
    %3175 = vadd.xlane.f32.xlu0 %v3174
    %v3176 = vpop.xlane.xlu0 %3175
    %v3177 = vsel %vm2861, %v3069, 0.0
    %3178 = vadd.xlane.f32.xlu0 %v3177
    %v3179 = vpop.xlane.xlu0 %3178
    %v3180 = vsel %vm2848, %v3071, 0.0
    %3181 = vadd.xlane.f32.xlu0 %v3180
    %v3182 = vpop.xlane.xlu0 %3181
    %v3183 = vsel %vm2848, %v3073, 0.0
    %3184 = vadd.xlane.f32.xlu0 %v3183
    %v3185 = vpop.xlane.xlu0 %3184
    %v3186 = vsel %vm2848, %v3075, 0.0
    %3187 = vadd.xlane.f32.xlu0 %v3186
    %v3188 = vpop.xlane.xlu0 %3187
    %v3189 = vsel %vm2848, %v3077, 0.0
    %3190 = vadd.xlane.f32.xlu0 %v3189
    %v3191 = vpop.xlane.xlu0 %3190
    %v3192 = vsel %vm2861, %v3079, 0.0
    %3193 = vadd.xlane.f32.xlu0 %v3192
    %v3194 = vpop.xlane.xlu0 %3193
    %v3195 = vsel %vm2848, %v3081, 0.0
    %3196 = vadd.xlane.f32.xlu0 %v3195
    %v3197 = vpop.xlane.xlu0 %3196
    %v3198 = vsel %vm2848, %v3083, 0.0
    %3199 = vadd.xlane.f32.xlu0 %v3198
    %v3200 = vpop.xlane.xlu0 %3199
    %v3201 = vsel %vm2848, %v3085, 0.0
    %3202 = vadd.xlane.f32.xlu0 %v3201
    %v3203 = vpop.xlane.xlu0 %3202
    %v3204 = vsel %vm2848, %v3087, 0.0
    %3205 = vadd.xlane.f32.xlu0 %v3204
    %v3206 = vpop.xlane.xlu0 %3205
    %v3207 = vsel %vm2861, %v3089, 0.0
    %3208 = vadd.xlane.f32.xlu0 %v3207
    %v3209 = vpop.xlane.xlu0 %3208
    %v3210 = vrcp.pop %v3092
    %v3211 = vrcp.pop %v3095
    %v3212 = vrcp.pop %v3098
    %v3213 = vrcp.pop %v3101
    %v3214 = vrcp.pop %v3104
    %v3215 = vrcp.pop %v3107
    %v3216 = vrcp.pop %v3110
    %v3217 = vrcp.pop %v3113
    %v3218 = vrcp.pop %v3116
    %v3219 = vrcp.pop %v3119
    %v3220 = vrcp.pop %v3122
    %v3221 = vrcp.pop %v3125
    %v3222 = vrcp.pop %v3128
    %v3223 = vrcp.pop %v3131
    %v3224 = vrcp.pop %v3134
    %v3225 = vrcp.pop %v3137
    %v3226 = vrcp.pop %v3140
    %v3227 = vrcp.pop %v3143
    %v3228 = vrcp.pop %v3146
    %v3229 = vrcp.pop %v3149
    %v3230 = vrcp.pop %v3152
    %v3231 = vrcp.pop %v3155
    %v3232 = vrcp.pop %v3158
    %v3233 = vrcp.pop %v3161
    %v3234 = vrcp.pop %v3164
    %v3235 = vrcp.pop %v3167
    %v3236 = vrcp.pop %v3170
    %v3237 = vrcp.pop %v3173
    %v3238 = vrcp.pop %v3176
    %v3239 = vrcp.pop %v3179
    %v3240 = vrcp.pop %v3182
    %v3241 = vrcp.pop %v3185
    %v3242 = vrcp.pop %v3188
    %v3243 = vrcp.pop %v3191
    %v3244 = vrcp.pop %v3194
    %v3245 = vrcp.pop %v3197
    %v3246 = vrcp.pop %v3200
    %v3247 = vrcp.pop %v3203
    %v3248 = vrcp.pop %v3206
    %v3249 = vrcp.pop %v3209
    %v3250 = vmul.f32 %v3011, %v3210
    %v3251 = vmul.f32 %v3013, %v3211
    %v3252 = vmul.f32 %v3015, %v3212
    %v3253 = vmul.f32 %v3017, %v3213
    %v3254 = vmul.f32 %v3019, %v3214
    %v3255 = vmul.f32 %v3021, %v3215
    %v3256 = vmul.f32 %v3023, %v3216
    %v3257 = vmul.f32 %v3025, %v3217
    %v3258 = vmul.f32 %v3027, %v3218
    %v3259 = vmul.f32 %v3029, %v3219
    %v3260 = vmul.f32 %v3031, %v3220
    %v3261 = vmul.f32 %v3033, %v3221
    %v3262 = vmul.f32 %v3035, %v3222
    %v3263 = vmul.f32 %v3037, %v3223
    %v3264 = vmul.f32 %v3039, %v3224
    %v3265 = vmul.f32 %v3041, %v3225
    %v3266 = vmul.f32 %v3043, %v3226
    %v3267 = vmul.f32 %v3045, %v3227
    %v3268 = vmul.f32 %v3047, %v3228
    %v3269 = vmul.f32 %v3049, %v3229
    %v3270 = vmul.f32 %v3051, %v3230
    %v3271 = vmul.f32 %v3053, %v3231
    %v3272 = vmul.f32 %v3055, %v3232
    %v3273 = vmul.f32 %v3057, %v3233
    %v3274 = vmul.f32 %v3059, %v3234
    %v3275 = vmul.f32 %v3061, %v3235
    %v3276 = vmul.f32 %v3063, %v3236
    %v3277 = vmul.f32 %v3065, %v3237
    %v3278 = vmul.f32 %v3067, %v3238
    %v3279 = vmul.f32 %v3069, %v3239
    %v3280 = vmul.f32 %v3071, %v3240
    %v3281 = vmul.f32 %v3073, %v3241
    %v3282 = vmul.f32 %v3075, %v3242
    %v3283 = vmul.f32 %v3077, %v3243
    %v3284 = vmul.f32 %v3079, %v3244
    %v3285 = vmul.f32 %v3081, %v3245
    %v3286 = vmul.f32 %v3083, %v3246
    %v3287 = vmul.f32 %v3085, %v3247
    %v3288 = vmul.f32 %v3087, %v3248
    %v3289 = vmul.f32 %v3089, %v3249
    %v3290 = vpack.c.bf16 %v3251, %v3250
    %v3291 = vpack.c.bf16 %v3253, %v3252
    %v3292 = vpack.c.bf16 %v3254, %v3254
    %v3293 = vpack.c.bf16 %v3256, %v3255
    %v3294 = vpack.c.bf16 %v3258, %v3257
    %v3295 = vpack.c.bf16 %v3259, %v3259
    %v3296 = vpack.c.bf16 %v3261, %v3260
    %v3297 = vpack.c.bf16 %v3263, %v3262
    %v3298 = vpack.c.bf16 %v3264, %v3264
    %v3299 = vpack.c.bf16 %v3266, %v3265
    %v3300 = vpack.c.bf16 %v3268, %v3267
    %v3301 = vpack.c.bf16 %v3269, %v3269
    %v3302 = vpack.c.bf16 %v3271, %v3270
    %v3303 = vpack.c.bf16 %v3273, %v3272
    %v3304 = vpack.c.bf16 %v3274, %v3274
    %v3305 = vpack.c.bf16 %v3276, %v3275
    %v3306 = vpack.c.bf16 %v3278, %v3277
    %v3307 = vpack.c.bf16 %v3279, %v3279
    %v3308 = vpack.c.bf16 %v3281, %v3280
    %v3309 = vpack.c.bf16 %v3283, %v3282
    %v3310 = vpack.c.bf16 %v3284, %v3284
    %v3311 = vpack.c.bf16 %v3286, %v3285
    %v3312 = vpack.c.bf16 %v3288, %v3287
    %v3313 = vpack.c.bf16 %v3289, %v3289
    %v3314 = vpack.c.bf16 %v1633, %v1630
    %v3315 = vpack.c.bf16 %v1641, %v1638
    %v3316 = vpack.c.bf16 %v1646, %v1646
    %v3317 = vpack.c.bf16 %v1701, %v1698
    %v3318 = vpack.c.bf16 %v1709, %v1706
    %v3319 = vpack.c.bf16 %v1714, %v1714
    %v3320 = vpack.c.bf16 %v1769, %v1766
    %v3321 = vpack.c.bf16 %v1777, %v1774
    %v3322 = vpack.c.bf16 %v1782, %v1782
    %v3323 = vpack.c.bf16 %v1837, %v1834
    %v3324 = vpack.c.bf16 %v1845, %v1842
    %v3325 = vpack.c.bf16 %v1850, %v1850
    %v3326 = vpack.c.bf16 %v1905, %v1902
    %v3327 = vpack.c.bf16 %v1913, %v1910
    %v3328 = vpack.c.bf16 %v1918, %v1918
    %v3329 = vpack.c.bf16 %v1973, %v1970
    %v3330 = vpack.c.bf16 %v1981, %v1978
    %v3331 = vpack.c.bf16 %v1986, %v1986
    %v3332 = vpack.c.bf16 %v2041, %v2038
    %v3333 = vpack.c.bf16 %v2049, %v2046
    %v3334 = vpack.c.bf16 %v2054, %v2054
    %v3335 = vpack.c.bf16 %v2109, %v2106
    %v3336 = vpack.c.bf16 %v2117, %v2114
    %v3337 = vpack.c.bf16 %v2122, %v2122
    %v3339 = vsel %vm2848, %v3290, 0
    %v3342 = vsel %vm2848, %v3291, 0
    %v3345 = vsel %vm2848, %v3292, 0
    %vm3347 = vcmask 1040384
    %v3349 = vsel %vm3347, %v3316, 0
    %3351 = vmatprep.subr.bf16.mxu0 0
    %3352 = vmatpush1.bf16.msra.mxu0 %v3314
    %3353 = vmatprep.subr.bf16.mxu0 0
    %3354 = vmatpush1.bf16.msra.mxu0 %v3315
    %3355 = vmatprep.subr.bf16.mxu0 0
    %3356 = vmatpush1.bf16.msra.mxu0 %v3349
    %3357 = vmatprep.subr.bf16.mxu0 0
    %3358 = vmatpush1.bf16.msra.mxu0 0
    %3359 = vmatprep.subr.bf16.mxu0 0
    %3360 = vmatpush1.bf16.msra.mxu0 0
    %3361 = vmatprep.subr.bf16.mxu0 0
    %3362 = vmatpush1.bf16.msra.mxu0 0
    %3363 = vmatprep.subr.bf16.mxu0 0
    %3364 = vmatpush1.bf16.msra.mxu0 0
    %3365 = vmatprep.subr.bf16.mxu0 0
    %3366 = vmatpush1.bf16.msra.mxu0 0
    %3367 = vmatprep.subr.bf16.mxu0 0
    %3368 = vmatpush1.bf16.msra.mxu0 0
    %3369 = vmatprep.subr.bf16.mxu0 0
    %3370 = vmatpush1.bf16.msra.mxu0 0
    %3371 = vmatprep.subr.bf16.mxu0 0
    %3372 = vmatpush1.bf16.msra.mxu0 0
    %3373 = vmatprep.subr.bf16.mxu0 0
    %3374 = vmatpush1.bf16.msra.mxu0 0
    %3375 = vmatprep.subr.bf16.mxu0 0
    %3376 = vmatpush1.bf16.msra.mxu0 0
    %3377 = vmatprep.subr.bf16.mxu0 0
    %3378 = vmatpush1.bf16.msra.mxu0 0
    %3379 = vmatprep.subr.bf16.mxu0 0
    %3380 = vmatpush1.bf16.msra.mxu0 0
    %3381 = vmatprep.subr.bf16.mxu0 0
    %3382 = vmatpush1.bf16.msra.mxu0 0
    %3383 = vmatprep.mubr.bf16.mxu0 0
    %3384 = vmatmul.mubr.bf16.gmra.mrb[0].mxu0 %v3339
    %v3385 = vpop.f32.mrb[0].mxu0
    %v3386 = vadd.f32 0.0, %v3385
    %v3387 = vpop.f32.mrb[0].mxu0
    %v3388 = vpop.f32.mrb[0].mxu0
    %v3389 = vadd.f32 0.0, %v3388
    %v3390 = vpop.f32.mrb[0].mxu0
    %3391 = vmatprep.mubr.bf16.mxu0 0
    %3392 = vmatmul.mubr.bf16.gmra.mrb[0].mxu0 %v3342
    %v3393 = vpop.f32.mrb[0].mxu0
    %v3394 = vadd.f32 0.0, %v3393
    %v3395 = vpop.f32.mrb[0].mxu0
    %v3396 = vpop.f32.mrb[0].mxu0
    %v3397 = vadd.f32 0.0, %v3396
    %v3398 = vpop.f32.mrb[0].mxu0
    %3399 = vmatprep.mubr.bf16.mxu0 0
    %3400 = vmatmul.mubr.bf16.gmra.mrb[0].mxu0 %v3345
    %v3401 = vpop.f32.mrb[0].mxu0
    %v3402 = vadd.f32 0.0, %v3401
    %v3403 = vpop.f32.mrb[0].mxu0
    %v3404 = vpop.f32.mrb[0].mxu0
    %v3405 = vpop.f32.mrb[0].mxu0
    %3406 = vdwg.mxu0
    %v3408 = vsel %vm2848, %v3293, 0
    %v3411 = vsel %vm2848, %v3294, 0
    %v3414 = vsel %vm2848, %v3295, 0
    %v3417 = vsel %vm3347, %v3319, 0
    %3419 = vmatprep.subr.bf16.mxu0 0
    %3420 = vmatpush1.bf16.msra.mxu0 %v3317
    %3421 = vmatprep.subr.bf16.mxu0 0
    %3422 = vmatpush1.bf16.msra.mxu0 %v3318
    %3423 = vmatprep.subr.bf16.mxu0 0
    %3424 = vmatpush1.bf16.msra.mxu0 %v3417
    %3425 = vmatprep.subr.bf16.mxu0 0
    %3426 = vmatpush1.bf16.msra.mxu0 0
    %3427 = vmatprep.subr.bf16.mxu0 0
    %3428 = vmatpush1.bf16.msra.mxu0 0
    %3429 = vmatprep.subr.bf16.mxu0 0
    %3430 = vmatpush1.bf16.msra.mxu0 0
    %3431 = vmatprep.subr.bf16.mxu0 0
    %3432 = vmatpush1.bf16.msra.mxu0 0
    %3433 = vmatprep.subr.bf16.mxu0 0
    %3434 = vmatpush1.bf16.msra.mxu0 0
    %3435 = vmatprep.subr.bf16.mxu0 0
    %3436 = vmatpush1.bf16.msra.mxu0 0
    %3437 = vmatprep.subr.bf16.mxu0 0
    %3438 = vmatpush1.bf16.msra.mxu0 0
    %3439 = vmatprep.subr.bf16.mxu0 0
    %3440 = vmatpush1.bf16.msra.mxu0 0
    %3441 = vmatprep.subr.bf16.mxu0 0
    %3442 = vmatpush1.bf16.msra.mxu0 0
    %3443 = vmatprep.subr.bf16.mxu0 0
    %3444 = vmatpush1.bf16.msra.mxu0 0
    %3445 = vmatprep.subr.bf16.mxu0 0
    %3446 = vmatpush1.bf16.msra.mxu0 0
    %3447 = vmatprep.subr.bf16.mxu0 0
    %3448 = vmatpush1.bf16.msra.mxu0 0
    %3449 = vmatprep.subr.bf16.mxu0 0
    %3450 = vmatpush1.bf16.msra.mxu0 0
    %3451 = vmatprep.mubr.bf16.mxu0 0
    %3452 = vmatmul.mubr.bf16.gmra.mrb[0].mxu0 %v3408
    %v3453 = vpop.f32.mrb[0].mxu0
    %v3454 = vadd.f32 0.0, %v3453
    %v3455 = vpop.f32.mrb[0].mxu0
    %v3456 = vpop.f32.mrb[0].mxu0
    %v3457 = vadd.f32 0.0, %v3456
    %v3458 = vpop.f32.mrb[0].mxu0
    %3459 = vmatprep.mubr.bf16.mxu0 0
    %3460 = vmatmul.mubr.bf16.gmra.mrb[0].mxu0 %v3411
    %v3461 = vpop.f32.mrb[0].mxu0
    %v3462 = vadd.f32 0.0, %v3461
    %v3463 = vpop.f32.mrb[0].mxu0
    %v3464 = vpop.f32.mrb[0].mxu0
    %v3465 = vadd.f32 0.0, %v3464
    %v3466 = vpop.f32.mrb[0].mxu0
    %3467 = vmatprep.mubr.bf16.mxu0 0
    %3468 = vmatmul.mubr.bf16.gmra.mrb[0].mxu0 %v3414
    %v3469 = vpop.f32.mrb[0].mxu0
    %v3470 = vadd.f32 0.0, %v3469
    %v3471 = vpop.f32.mrb[0].mxu0
    %v3472 = vpop.f32.mrb[0].mxu0
    %v3473 = vpop.f32.mrb[0].mxu0
    %3474 = vdwg.mxu0
    %v3476 = vsel %vm2848, %v3296, 0
    %v3479 = vsel %vm2848, %v3297, 0
    %v3482 = vsel %vm2848, %v3298, 0
    %v3485 = vsel %vm3347, %v3322, 0
    %3487 = vmatprep.subr.bf16.mxu0 0
    %3488 = vmatpush1.bf16.msra.mxu0 %v3320
    %3489 = vmatprep.subr.bf16.mxu0 0
    %3490 = vmatpush1.bf16.msra.mxu0 %v3321
    %3491 = vmatprep.subr.bf16.mxu0 0
    %3492 = vmatpush1.bf16.msra.mxu0 %v3485
    %3493 = vmatprep.subr.bf16.mxu0 0
    %3494 = vmatpush1.bf16.msra.mxu0 0
    %3495 = vmatprep.subr.bf16.mxu0 0
    %3496 = vmatpush1.bf16.msra.mxu0 0
    %3497 = vmatprep.subr.bf16.mxu0 0
    %3498 = vmatpush1.bf16.msra.mxu0 0
    %3499 = vmatprep.subr.bf16.mxu0 0
    %3500 = vmatpush1.bf16.msra.mxu0 0
    %3501 = vmatprep.subr.bf16.mxu0 0
    %3502 = vmatpush1.bf16.msra.mxu0 0
    %3503 = vmatprep.subr.bf16.mxu0 0
    %3504 = vmatpush1.bf16.msra.mxu0 0
    %3505 = vmatprep.subr.bf16.mxu0 0
    %3506 = vmatpush1.bf16.msra.mxu0 0
    %3507 = vmatprep.subr.bf16.mxu0 0
    %3508 = vmatpush1.bf16.msra.mxu0 0
    %3509 = vmatprep.subr.bf16.mxu0 0
    %3510 = vmatpush1.bf16.msra.mxu0 0
    %3511 = vmatprep.subr.bf16.mxu0 0
    %3512 = vmatpush1.bf16.msra.mxu0 0
    %3513 = vmatprep.subr.bf16.mxu0 0
    %3514 = vmatpush1.bf16.msra.mxu0 0
    %3515 = vmatprep.subr.bf16.mxu0 0
    %3516 = vmatpush1.bf16.msra.mxu0 0
    %3517 = vmatprep.subr.bf16.mxu0 0
    %3518 = vmatpush1.bf16.msra.mxu0 0
    %3519 = vmatprep.mubr.bf16.mxu0 0
    %3520 = vmatmul.mubr.bf16.gmra.mrb[0].mxu0 %v3476
    %v3521 = vpop.f32.mrb[0].mxu0
    %v3522 = vadd.f32 0.0, %v3521
    %v3523 = vpop.f32.mrb[0].mxu0
    %v3524 = vpop.f32.mrb[0].mxu0
    %v3525 = vadd.f32 0.0, %v3524
    %v3526 = vpop.f32.mrb[0].mxu0
    %3527 = vmatprep.mubr.bf16.mxu0 0
    %3528 = vmatmul.mubr.bf16.gmra.mrb[0].mxu0 %v3479
    %v3529 = vpop.f32.mrb[0].mxu0
    %v3530 = vadd.f32 0.0, %v3529
    %v3531 = vpop.f32.mrb[0].mxu0
    %v3532 = vpop.f32.mrb[0].mxu0
    %v3533 = vadd.f32 0.0, %v3532
    %v3534 = vpop.f32.mrb[0].mxu0
    %3535 = vmatprep.mubr.bf16.mxu0 0
    %3536 = vmatmul.mubr.bf16.gmra.mrb[0].mxu0 %v3482
    %v3537 = vpop.f32.mrb[0].mxu0
    %v3538 = vadd.f32 0.0, %v3537
    %v3539 = vpop.f32.mrb[0].mxu0
    %v3540 = vpop.f32.mrb[0].mxu0
    %v3541 = vpop.f32.mrb[0].mxu0
    %3542 = vdwg.mxu0
    %v3544 = vsel %vm2848, %v3299, 0
    %v3547 = vsel %vm2848, %v3300, 0
    %v3550 = vsel %vm2848, %v3301, 0
    %v3553 = vsel %vm3347, %v3325, 0
    %3555 = vmatprep.subr.bf16.mxu0 0
    %3556 = vmatpush1.bf16.msra.mxu0 %v3323
    %3557 = vmatprep.subr.bf16.mxu0 0
    %3558 = vmatpush1.bf16.msra.mxu0 %v3324
    %3559 = vmatprep.subr.bf16.mxu0 0
    %3560 = vmatpush1.bf16.msra.mxu0 %v3553
    %3561 = vmatprep.subr.bf16.mxu0 0
    %3562 = vmatpush1.bf16.msra.mxu0 0
    %3563 = vmatprep.subr.bf16.mxu0 0
    %3564 = vmatpush1.bf16.msra.mxu0 0
    %3565 = vmatprep.subr.bf16.mxu0 0
    %3566 = vmatpush1.bf16.msra.mxu0 0
    %3567 = vmatprep.subr.bf16.mxu0 0
    %3568 = vmatpush1.bf16.msra.mxu0 0
    %3569 = vmatprep.subr.bf16.mxu0 0
    %3570 = vmatpush1.bf16.msra.mxu0 0
    %3571 = vmatprep.subr.bf16.mxu0 0
    %3572 = vmatpush1.bf16.msra.mxu0 0
    %3573 = vmatprep.subr.bf16.mxu0 0
    %3574 = vmatpush1.bf16.msra.mxu0 0
    %3575 = vmatprep.subr.bf16.mxu0 0
    %3576 = vmatpush1.bf16.msra.mxu0 0
    %3577 = vmatprep.subr.bf16.mxu0 0
    %3578 = vmatpush1.bf16.msra.mxu0 0
    %3579 = vmatprep.subr.bf16.mxu0 0
    %3580 = vmatpush1.bf16.msra.mxu0 0
    %3581 = vmatprep.subr.bf16.mxu0 0
    %3582 = vmatpush1.bf16.msra.mxu0 0
    %3583 = vmatprep.subr.bf16.mxu0 0
    %3584 = vmatpush1.bf16.msra.mxu0 0
    %3585 = vmatprep.subr.bf16.mxu0 0
    %3586 = vmatpush1.bf16.msra.mxu0 0
    %3587 = vmatprep.mubr.bf16.mxu0 0
    %3588 = vmatmul.mubr.bf16.gmra.mrb[0].mxu0 %v3544
    %v3589 = vpop.f32.mrb[0].mxu0
    %v3590 = vadd.f32 0.0, %v3589
    %v3591 = vpop.f32.mrb[0].mxu0
    %v3592 = vpop.f32.mrb[0].mxu0
    %v3593 = vadd.f32 0.0, %v3592
    %v3594 = vpop.f32.mrb[0].mxu0
    %3595 = vmatprep.mubr.bf16.mxu0 0
    %3596 = vmatmul.mubr.bf16.gmra.mrb[0].mxu0 %v3547
    %v3597 = vpop.f32.mrb[0].mxu0
    %v3598 = vadd.f32 0.0, %v3597
    %v3599 = vpop.f32.mrb[0].mxu0
    %v3600 = vpop.f32.mrb[0].mxu0
    %v3601 = vadd.f32 0.0, %v3600
    %v3602 = vpop.f32.mrb[0].mxu0
    %3603 = vmatprep.mubr.bf16.mxu0 0
    %3604 = vmatmul.mubr.bf16.gmra.mrb[0].mxu0 %v3550
    %v3605 = vpop.f32.mrb[0].mxu0
    %v3606 = vadd.f32 0.0, %v3605
    %v3607 = vpop.f32.mrb[0].mxu0
    %v3608 = vpop.f32.mrb[0].mxu0
    %v3609 = vpop.f32.mrb[0].mxu0
    %3610 = vdwg.mxu0
    %v3612 = vsel %vm2848, %v3302, 0
    %v3615 = vsel %vm2848, %v3303, 0
    %v3618 = vsel %vm2848, %v3304, 0
    %v3621 = vsel %vm3347, %v3328, 0
    %3623 = vmatprep.subr.bf16.mxu0 0
    %3624 = vmatpush1.bf16.msra.mxu0 %v3326
    %3625 = vmatprep.subr.bf16.mxu0 0
    %3626 = vmatpush1.bf16.msra.mxu0 %v3327
    %3627 = vmatprep.subr.bf16.mxu0 0
    %3628 = vmatpush1.bf16.msra.mxu0 %v3621
    %3629 = vmatprep.subr.bf16.mxu0 0
    %3630 = vmatpush1.bf16.msra.mxu0 0
    %3631 = vmatprep.subr.bf16.mxu0 0
    %3632 = vmatpush1.bf16.msra.mxu0 0
    %3633 = vmatprep.subr.bf16.mxu0 0
    %3634 = vmatpush1.bf16.msra.mxu0 0
    %3635 = vmatprep.subr.bf16.mxu0 0
    %3636 = vmatpush1.bf16.msra.mxu0 0
    %3637 = vmatprep.subr.bf16.mxu0 0
    %3638 = vmatpush1.bf16.msra.mxu0 0
    %3639 = vmatprep.subr.bf16.mxu0 0
    %3640 = vmatpush1.bf16.msra.mxu0 0
    %3641 = vmatprep.subr.bf16.mxu0 0
    %3642 = vmatpush1.bf16.msra.mxu0 0
    %3643 = vmatprep.subr.bf16.mxu0 0
    %3644 = vmatpush1.bf16.msra.mxu0 0
    %3645 = vmatprep.subr.bf16.mxu0 0
    %3646 = vmatpush1.bf16.msra.mxu0 0
    %3647 = vmatprep.subr.bf16.mxu0 0
    %3648 = vmatpush1.bf16.msra.mxu0 0
    %3649 = vmatprep.subr.bf16.mxu0 0
    %3650 = vmatpush1.bf16.msra.mxu0 0
    %3651 = vmatprep.subr.bf16.mxu0 0
    %3652 = vmatpush1.bf16.msra.mxu0 0
    %3653 = vmatprep.subr.bf16.mxu0 0
    %3654 = vmatpush1.bf16.msra.mxu0 0
    %3655 = vmatprep.mubr.bf16.mxu0 0
    %3656 = vmatmul.mubr.bf16.gmra.mrb[0].mxu0 %v3612
    %v3657 = vpop.f32.mrb[0].mxu0
    %v3658 = vadd.f32 0.0, %v3657
    %v3659 = vpop.f32.mrb[0].mxu0
    %v3660 = vpop.f32.mrb[0].mxu0
    %v3661 = vadd.f32 0.0, %v3660
    %v3662 = vpop.f32.mrb[0].mxu0
    %3663 = vmatprep.mubr.bf16.mxu0 0
    %3664 = vmatmul.mubr.bf16.gmra.mrb[0].mxu0 %v3615
    %v3665 = vpop.f32.mrb[0].mxu0
    %v3666 = vadd.f32 0.0, %v3665
    %v3667 = vpop.f32.mrb[0].mxu0
    %v3668 = vpop.f32.mrb[0].mxu0
    %v3669 = vadd.f32 0.0, %v3668
    %v3670 = vpop.f32.mrb[0].mxu0
    %3671 = vmatprep.mubr.bf16.mxu0 0
    %3672 = vmatmul.mubr.bf16.gmra.mrb[0].mxu0 %v3618
    %v3673 = vpop.f32.mrb[0].mxu0
    %v3674 = vadd.f32 0.0, %v3673
    %v3675 = vpop.f32.mrb[0].mxu0
    %v3676 = vpop.f32.mrb[0].mxu0
    %v3677 = vpop.f32.mrb[0].mxu0
    %3678 = vdwg.mxu0
    %v3680 = vsel %vm2848, %v3305, 0
    %v3683 = vsel %vm2848, %v3306, 0
    %v3686 = vsel %vm2848, %v3307, 0
    %v3689 = vsel %vm3347, %v3331, 0
    %3691 = vmatprep.subr.bf16.mxu0 0
    %3692 = vmatpush1.bf16.msra.mxu0 %v3329
    %3693 = vmatprep.subr.bf16.mxu0 0
    %3694 = vmatpush1.bf16.msra.mxu0 %v3330
    %3695 = vmatprep.subr.bf16.mxu0 0
    %3696 = vmatpush1.bf16.msra.mxu0 %v3689
    %3697 = vmatprep.subr.bf16.mxu0 0
    %3698 = vmatpush1.bf16.msra.mxu0 0
    %3699 = vmatprep.subr.bf16.mxu0 0
    %3700 = vmatpush1.bf16.msra.mxu0 0
    %3701 = vmatprep.subr.bf16.mxu0 0
    %3702 = vmatpush1.bf16.msra.mxu0 0
    %3703 = vmatprep.subr.bf16.mxu0 0
    %3704 = vmatpush1.bf16.msra.mxu0 0
    %3705 = vmatprep.subr.bf16.mxu0 0
    %3706 = vmatpush1.bf16.msra.mxu0 0
    %3707 = vmatprep.subr.bf16.mxu0 0
    %3708 = vmatpush1.bf16.msra.mxu0 0
    %3709 = vmatprep.subr.bf16.mxu0 0
    %3710 = vmatpush1.bf16.msra.mxu0 0
    %3711 = vmatprep.subr.bf16.mxu0 0
    %3712 = vmatpush1.bf16.msra.mxu0 0
    %3713 = vmatprep.subr.bf16.mxu0 0
    %3714 = vmatpush1.bf16.msra.mxu0 0
    %3715 = vmatprep.subr.bf16.mxu0 0
    %3716 = vmatpush1.bf16.msra.mxu0 0
    %3717 = vmatprep.subr.bf16.mxu0 0
    %3718 = vmatpush1.bf16.msra.mxu0 0
    %3719 = vmatprep.subr.bf16.mxu0 0
    %3720 = vmatpush1.bf16.msra.mxu0 0
    %3721 = vmatprep.subr.bf16.mxu0 0
    %3722 = vmatpush1.bf16.msra.mxu0 0
    %3723 = vmatprep.mubr.bf16.mxu0 0
    %3724 = vmatmul.mubr.bf16.gmra.mrb[0].mxu0 %v3680
    %v3725 = vpop.f32.mrb[0].mxu0
    %v3726 = vadd.f32 0.0, %v3725
    %v3727 = vpop.f32.mrb[0].mxu0
    %v3728 = vpop.f32.mrb[0].mxu0
    %v3729 = vadd.f32 0.0, %v3728
    %v3730 = vpop.f32.mrb[0].mxu0
    %3731 = vmatprep.mubr.bf16.mxu0 0
    %3732 = vmatmul.mubr.bf16.gmra.mrb[0].mxu0 %v3683
    %v3733 = vpop.f32.mrb[0].mxu0
    %v3734 = vadd.f32 0.0, %v3733
    %v3735 = vpop.f32.mrb[0].mxu0
    %v3736 = vpop.f32.mrb[0].mxu0
    %v3737 = vadd.f32 0.0, %v3736
    %v3738 = vpop.f32.mrb[0].mxu0
    %3739 = vmatprep.mubr.bf16.mxu0 0
    %3740 = vmatmul.mubr.bf16.gmra.mrb[0].mxu0 %v3686
    %v3741 = vpop.f32.mrb[0].mxu0
    %v3742 = vadd.f32 0.0, %v3741
    %v3743 = vpop.f32.mrb[0].mxu0
    %v3744 = vpop.f32.mrb[0].mxu0
    %v3745 = vpop.f32.mrb[0].mxu0
    %3746 = vdwg.mxu0
    %v3748 = vsel %vm2848, %v3308, 0
    %v3751 = vsel %vm2848, %v3309, 0
    %v3754 = vsel %vm2848, %v3310, 0
    %v3757 = vsel %vm3347, %v3334, 0
    %3759 = vmatprep.subr.bf16.mxu0 0
    %3760 = vmatpush1.bf16.msra.mxu0 %v3332
    %3761 = vmatprep.subr.bf16.mxu0 0
    %3762 = vmatpush1.bf16.msra.mxu0 %v3333
    %3763 = vmatprep.subr.bf16.mxu0 0
    %3764 = vmatpush1.bf16.msra.mxu0 %v3757
    %3765 = vmatprep.subr.bf16.mxu0 0
    %3766 = vmatpush1.bf16.msra.mxu0 0
    %3767 = vmatprep.subr.bf16.mxu0 0
    %3768 = vmatpush1.bf16.msra.mxu0 0
    %3769 = vmatprep.subr.bf16.mxu0 0
    %3770 = vmatpush1.bf16.msra.mxu0 0
    %3771 = vmatprep.subr.bf16.mxu0 0
    %3772 = vmatpush1.bf16.msra.mxu0 0
    %3773 = vmatprep.subr.bf16.mxu0 0
    %3774 = vmatpush1.bf16.msra.mxu0 0
    %3775 = vmatprep.subr.bf16.mxu0 0
    %3776 = vmatpush1.bf16.msra.mxu0 0
    %3777 = vmatprep.subr.bf16.mxu0 0
    %3778 = vmatpush1.bf16.msra.mxu0 0
    %3779 = vmatprep.subr.bf16.mxu0 0
    %3780 = vmatpush1.bf16.msra.mxu0 0
    %3781 = vmatprep.subr.bf16.mxu0 0
    %3782 = vmatpush1.bf16.msra.mxu0 0
    %3783 = vmatprep.subr.bf16.mxu0 0
    %3784 = vmatpush1.bf16.msra.mxu0 0
    %3785 = vmatprep.subr.bf16.mxu0 0
    %3786 = vmatpush1.bf16.msra.mxu0 0
    %3787 = vmatprep.subr.bf16.mxu0 0
    %3788 = vmatpush1.bf16.msra.mxu0 0
    %3789 = vmatprep.subr.bf16.mxu0 0
    %3790 = vmatpush1.bf16.msra.mxu0 0
    %3791 = vmatprep.mubr.bf16.mxu0 0
    %3792 = vmatmul.mubr.bf16.gmra.mrb[0].mxu0 %v3748
    %v3793 = vpop.f32.mrb[0].mxu0
    %v3794 = vadd.f32 0.0, %v3793
    %v3795 = vpop.f32.mrb[0].mxu0
    %v3796 = vpop.f32.mrb[0].mxu0
    %v3797 = vadd.f32 0.0, %v3796
    %v3798 = vpop.f32.mrb[0].mxu0
    %3799 = vmatprep.mubr.bf16.mxu0 0
    %3800 = vmatmul.mubr.bf16.gmra.mrb[0].mxu0 %v3751
    %v3801 = vpop.f32.mrb[0].mxu0
    %v3802 = vadd.f32 0.0, %v3801
    %v3803 = vpop.f32.mrb[0].mxu0
    %v3804 = vpop.f32.mrb[0].mxu0
    %v3805 = vadd.f32 0.0, %v3804
    %v3806 = vpop.f32.mrb[0].mxu0
    %3807 = vmatprep.mubr.bf16.mxu0 0
    %3808 = vmatmul.mubr.bf16.gmra.mrb[0].mxu0 %v3754
    %v3809 = vpop.f32.mrb[0].mxu0
    %v3810 = vadd.f32 0.0, %v3809
    %v3811 = vpop.f32.mrb[0].mxu0
    %v3812 = vpop.f32.mrb[0].mxu0
    %v3813 = vpop.f32.mrb[0].mxu0
    %3814 = vdwg.mxu0
    %v3816 = vsel %vm2848, %v3311, 0
    %v3819 = vsel %vm2848, %v3312, 0
    %v3822 = vsel %vm2848, %v3313, 0
    %v3825 = vsel %vm3347, %v3337, 0
    %3827 = vmatprep.subr.bf16.mxu0 0
    %3828 = vmatpush1.bf16.msra.mxu0 %v3335
    %3829 = vmatprep.subr.bf16.mxu0 0
    %3830 = vmatpush1.bf16.msra.mxu0 %v3336
    %3831 = vmatprep.subr.bf16.mxu0 0
    %3832 = vmatpush1.bf16.msra.mxu0 %v3825
    %3833 = vmatprep.subr.bf16.mxu0 0
    %3834 = vmatpush1.bf16.msra.mxu0 0
    %3835 = vmatprep.subr.bf16.mxu0 0
    %3836 = vmatpush1.bf16.msra.mxu0 0
    %3837 = vmatprep.subr.bf16.mxu0 0
    %3838 = vmatpush1.bf16.msra.mxu0 0
    %3839 = vmatprep.subr.bf16.mxu0 0
    %3840 = vmatpush1.bf16.msra.mxu0 0
    %3841 = vmatprep.subr.bf16.mxu0 0
    %3842 = vmatpush1.bf16.msra.mxu0 0
    %3843 = vmatprep.subr.bf16.mxu0 0
    %3844 = vmatpush1.bf16.msra.mxu0 0
    %3845 = vmatprep.subr.bf16.mxu0 0
    %3846 = vmatpush1.bf16.msra.mxu0 0
    %3847 = vmatprep.subr.bf16.mxu0 0
    %3848 = vmatpush1.bf16.msra.mxu0 0
    %3849 = vmatprep.subr.bf16.mxu0 0
    %3850 = vmatpush1.bf16.msra.mxu0 0
    %3851 = vmatprep.subr.bf16.mxu0 0
    %3852 = vmatpush1.bf16.msra.mxu0 0
    %3853 = vmatprep.subr.bf16.mxu0 0
    %3854 = vmatpush1.bf16.msra.mxu0 0
    %3855 = vmatprep.subr.bf16.mxu0 0
    %3856 = vmatpush1.bf16.msra.mxu0 0
    %3857 = vmatprep.subr.bf16.mxu0 0
    %3858 = vmatpush1.bf16.msra.mxu0 0
    %3859 = vmatprep.mubr.bf16.mxu0 0
    %3860 = vmatmul.mubr.bf16.gmra.mrb[0].mxu0 %v3816
    %v3861 = vpop.f32.mrb[0].mxu0
    %v3862 = vadd.f32 0.0, %v3861
    %v3863 = vpop.f32.mrb[0].mxu0
    %v3864 = vpop.f32.mrb[0].mxu0
    %v3865 = vadd.f32 0.0, %v3864
    %v3866 = vpop.f32.mrb[0].mxu0
    %3867 = vmatprep.mubr.bf16.mxu0 0
    %3868 = vmatmul.mubr.bf16.gmra.mrb[0].mxu0 %v3819
    %v3869 = vpop.f32.mrb[0].mxu0
    %v3870 = vadd.f32 0.0, %v3869
    %v3871 = vpop.f32.mrb[0].mxu0
    %v3872 = vpop.f32.mrb[0].mxu0
    %v3873 = vadd.f32 0.0, %v3872
    %v3874 = vpop.f32.mrb[0].mxu0
    %3875 = vmatprep.mubr.bf16.mxu0 0
    %3876 = vmatmul.mubr.bf16.gmra.mrb[0].mxu0 %v3822
    %v3877 = vpop.f32.mrb[0].mxu0
    %v3878 = vadd.f32 0.0, %v3877
    %v3879 = vpop.f32.mrb[0].mxu0
    %v3880 = vpop.f32.mrb[0].mxu0
    %v3881 = vpop.f32.mrb[0].mxu0
    %3882 = vdwg.mxu0
    %v3883 = vpack.c.bf16 %v3389, %v3386
    %v3884 = vpack.c.bf16 %v3397, %v3394
    %v3885 = vpack.c.bf16 %v3402, %v3402
    %v3886 = vpack.c.bf16 %v3457, %v3454
    %v3887 = vpack.c.bf16 %v3465, %v3462
    %v3888 = vpack.c.bf16 %v3470, %v3470
    %v3889 = vpack.c.bf16 %v3525, %v3522
    %v3890 = vpack.c.bf16 %v3533, %v3530
    %v3891 = vpack.c.bf16 %v3538, %v3538
    %v3892 = vpack.c.bf16 %v3593, %v3590
    %v3893 = vpack.c.bf16 %v3601, %v3598
    %v3894 = vpack.c.bf16 %v3606, %v3606
    %v3895 = vpack.c.bf16 %v3661, %v3658
    %v3896 = vpack.c.bf16 %v3669, %v3666
    %v3897 = vpack.c.bf16 %v3674, %v3674
    %v3898 = vpack.c.bf16 %v3729, %v3726
    %v3899 = vpack.c.bf16 %v3737, %v3734
    %v3900 = vpack.c.bf16 %v3742, %v3742
    %v3901 = vpack.c.bf16 %v3797, %v3794
    %v3902 = vpack.c.bf16 %v3805, %v3802
    %v3903 = vpack.c.bf16 %v3810, %v3810
    %v3904 = vpack.c.bf16 %v3865, %v3862
    %v3905 = vpack.c.bf16 %v3873, %v3870
    %v3906 = vpack.c.bf16 %v3878, %v3878
    %v3907 = vld [vmem:[%s8] sm:$0x3]
    %v3908 = vld [vmem:[%s8 + $0x2] sm:$0x3]
    %v3909 = vld [vmem:[%s8 + $0x4] sm:$0x3]
    %v3910 = vld [vmem:[%s8 + $0x6] sm:$0x3]
    %v3911 = vld [vmem:[%s8 + $0x8] sm:$0x3]
    %v3912 = vld [vmem:[%s8 + $0xa] sm:$0x3]
    %v3913 = vld [vmem:[%s8 + $0xc] sm:$0x3]
    %v3914 = vld [vmem:[%s8 + $0xe] sm:$0x3]
    %v3916 = vsel %vm2175, %v3883, 0
    %v3919 = vsel %vm2175, %v3884, 0
    %v3922 = vsel %vm2175, %v3885, 0
    %vm3924 = vcmask 1041408
    %v3926 = vsel %vm3924, %v3907, 0
    %3928 = vmatprep.subr.bf16.mxu0 0
    %3929 = vmatpush1.bf16.msra.mxu0 %v3926
    %3930 = vmatprep.subr.bf16.mxu0 0
    %3931 = vmatpush1.bf16.msra.mxu0 0
    %3932 = vmatprep.subr.bf16.mxu0 0
    %3933 = vmatpush1.bf16.msra.mxu0 0
    %3934 = vmatprep.subr.bf16.mxu0 0
    %3935 = vmatpush1.bf16.msra.mxu0 0
    %3936 = vmatprep.subr.bf16.mxu0 0
    %3937 = vmatpush1.bf16.msra.mxu0 0
    %3938 = vmatprep.subr.bf16.mxu0 0
    %3939 = vmatpush1.bf16.msra.mxu0 0
    %3940 = vmatprep.subr.bf16.mxu0 0
    %3941 = vmatpush1.bf16.msra.mxu0 0
    %3942 = vmatprep.subr.bf16.mxu0 0
    %3943 = vmatpush1.bf16.msra.mxu0 0
    %3944 = vmatprep.subr.bf16.mxu0 0
    %3945 = vmatpush1.bf16.msra.mxu0 0
    %3946 = vmatprep.subr.bf16.mxu0 0
    %3947 = vmatpush1.bf16.msra.mxu0 0
    %3948 = vmatprep.subr.bf16.mxu0 0
    %3949 = vmatpush1.bf16.msra.mxu0 0
    %3950 = vmatprep.subr.bf16.mxu0 0
    %3951 = vmatpush1.bf16.msra.mxu0 0
    %3952 = vmatprep.subr.bf16.mxu0 0
    %3953 = vmatpush1.bf16.msra.mxu0 0
    %3954 = vmatprep.subr.bf16.mxu0 0
    %3955 = vmatpush1.bf16.msra.mxu0 0
    %3956 = vmatprep.subr.bf16.mxu0 0
    %3957 = vmatpush1.bf16.msra.mxu0 0
    %3958 = vmatprep.subr.bf16.mxu0 0
    %3959 = vmatpush1.bf16.msra.mxu0 0
    %3960 = vmatprep.mubr.bf16.mxu0 0
    %3961 = vmatmul.mubr.bf16.gmra.mrb[0].mxu0 %v3916
    %v3962 = vpop.f32.mrb[0].mxu0
    %v3963 = vadd.f32 0.0, %v3962
    %v3964 = vpop.f32.mrb[0].mxu0
    %v3965 = vpop.f32.mrb[0].mxu0
    %v3966 = vadd.f32 0.0, %v3965
    %v3967 = vpop.f32.mrb[0].mxu0
    %3968 = vmatprep.mubr.bf16.mxu0 0
    %3969 = vmatmul.mubr.bf16.gmra.mrb[0].mxu0 %v3919
    %v3970 = vpop.f32.mrb[0].mxu0
    %v3971 = vadd.f32 0.0, %v3970
    %v3972 = vpop.f32.mrb[0].mxu0
    %v3973 = vpop.f32.mrb[0].mxu0
    %v3974 = vadd.f32 0.0, %v3973
    %v3975 = vpop.f32.mrb[0].mxu0
    %3976 = vmatprep.mubr.bf16.mxu0 0
    %3977 = vmatmul.mubr.bf16.gmra.mrb[0].mxu0 %v3922
    %v3978 = vpop.f32.mrb[0].mxu0
    %v3979 = vadd.f32 0.0, %v3978
    %v3980 = vpop.f32.mrb[0].mxu0
    %v3981 = vpop.f32.mrb[0].mxu0
    %v3982 = vpop.f32.mrb[0].mxu0
    %3983 = vdwg.mxu0
    %v3985 = vsel %vm2175, %v3886, 0
    %v3988 = vsel %vm2175, %v3887, 0
    %v3991 = vsel %vm2175, %v3888, 0
    %v3994 = vsel %vm3924, %v3908, 0
    %3996 = vmatprep.subr.bf16.mxu0 0
    %3997 = vmatpush1.bf16.msra.mxu0 %v3994
    %3998 = vmatprep.subr.bf16.mxu0 0
    %3999 = vmatpush1.bf16.msra.mxu0 0
    %4000 = vmatprep.subr.bf16.mxu0 0
    %4001 = vmatpush1.bf16.msra.mxu0 0
    %4002 = vmatprep.subr.bf16.mxu0 0
    %4003 = vmatpush1.bf16.msra.mxu0 0
    %4004 = vmatprep.subr.bf16.mxu0 0
    %4005 = vmatpush1.bf16.msra.mxu0 0
    %4006 = vmatprep.subr.bf16.mxu0 0
    %4007 = vmatpush1.bf16.msra.mxu0 0
    %4008 = vmatprep.subr.bf16.mxu0 0
    %4009 = vmatpush1.bf16.msra.mxu0 0
    %4010 = vmatprep.subr.bf16.mxu0 0
    %4011 = vmatpush1.bf16.msra.mxu0 0
    %4012 = vmatprep.subr.bf16.mxu0 0
    %4013 = vmatpush1.bf16.msra.mxu0 0
    %4014 = vmatprep.subr.bf16.mxu0 0
    %4015 = vmatpush1.bf16.msra.mxu0 0
    %4016 = vmatprep.subr.bf16.mxu0 0
    %4017 = vmatpush1.bf16.msra.mxu0 0
    %4018 = vmatprep.subr.bf16.mxu0 0
    %4019 = vmatpush1.bf16.msra.mxu0 0
    %4020 = vmatprep.subr.bf16.mxu0 0
    %4021 = vmatpush1.bf16.msra.mxu0 0
    %4022 = vmatprep.subr.bf16.mxu0 0
    %4023 = vmatpush1.bf16.msra.mxu0 0
    %4024 = vmatprep.subr.bf16.mxu0 0
    %4025 = vmatpush1.bf16.msra.mxu0 0
    %4026 = vmatprep.subr.bf16.mxu0 0
    %4027 = vmatpush1.bf16.msra.mxu0 0
    %4028 = vmatprep.mubr.bf16.mxu0 0
    %4029 = vmatmul.mubr.bf16.gmra.mrb[0].mxu0 %v3985
    %v4030 = vpop.f32.mrb[0].mxu0
    %v4031 = vadd.f32 0.0, %v4030
    %v4032 = vpop.f32.mrb[0].mxu0
    %v4033 = vpop.f32.mrb[0].mxu0
    %v4034 = vadd.f32 0.0, %v4033
    %v4035 = vpop.f32.mrb[0].mxu0
    %4036 = vmatprep.mubr.bf16.mxu0 0
    %4037 = vmatmul.mubr.bf16.gmra.mrb[0].mxu0 %v3988
    %v4038 = vpop.f32.mrb[0].mxu0
    %v4039 = vadd.f32 0.0, %v4038
    %v4040 = vpop.f32.mrb[0].mxu0
    %v4041 = vpop.f32.mrb[0].mxu0
    %v4042 = vadd.f32 0.0, %v4041
    %v4043 = vpop.f32.mrb[0].mxu0
    %4044 = vmatprep.mubr.bf16.mxu0 0
    %4045 = vmatmul.mubr.bf16.gmra.mrb[0].mxu0 %v3991
    %v4046 = vpop.f32.mrb[0].mxu0
    %v4047 = vadd.f32 0.0, %v4046
    %v4048 = vpop.f32.mrb[0].mxu0
    %v4049 = vpop.f32.mrb[0].mxu0
    %v4050 = vpop.f32.mrb[0].mxu0
    %4051 = vdwg.mxu0
    %v4053 = vsel %vm2175, %v3889, 0
    %v4056 = vsel %vm2175, %v3890, 0
    %v4059 = vsel %vm2175, %v3891, 0
    %v4062 = vsel %vm3924, %v3909, 0
    %4064 = vmatprep.subr.bf16.mxu0 0
    %4065 = vmatpush1.bf16.msra.mxu0 %v4062
    %4066 = vmatprep.subr.bf16.mxu0 0
    %4067 = vmatpush1.bf16.msra.mxu0 0
    %4068 = vmatprep.subr.bf16.mxu0 0
    %4069 = vmatpush1.bf16.msra.mxu0 0
    %4070 = vmatprep.subr.bf16.mxu0 0
    %4071 = vmatpush1.bf16.msra.mxu0 0
    %4072 = vmatprep.subr.bf16.mxu0 0
    %4073 = vmatpush1.bf16.msra.mxu0 0
    %4074 = vmatprep.subr.bf16.mxu0 0
    %4075 = vmatpush1.bf16.msra.mxu0 0
    %4076 = vmatprep.subr.bf16.mxu0 0
    %4077 = vmatpush1.bf16.msra.mxu0 0
    %4078 = vmatprep.subr.bf16.mxu0 0
    %4079 = vmatpush1.bf16.msra.mxu0 0
    %4080 = vmatprep.subr.bf16.mxu0 0
    %4081 = vmatpush1.bf16.msra.mxu0 0
    %4082 = vmatprep.subr.bf16.mxu0 0
    %4083 = vmatpush1.bf16.msra.mxu0 0
    %4084 = vmatprep.subr.bf16.mxu0 0
    %4085 = vmatpush1.bf16.msra.mxu0 0
    %4086 = vmatprep.subr.bf16.mxu0 0
    %4087 = vmatpush1.bf16.msra.mxu0 0
    %4088 = vmatprep.subr.bf16.mxu0 0
    %4089 = vmatpush1.bf16.msra.mxu0 0
    %4090 = vmatprep.subr.bf16.mxu0 0
    %4091 = vmatpush1.bf16.msra.mxu0 0
    %4092 = vmatprep.subr.bf16.mxu0 0
    %4093 = vmatpush1.bf16.msra.mxu0 0
    %4094 = vmatprep.subr.bf16.mxu0 0
    %4095 = vmatpush1.bf16.msra.mxu0 0
    %4096 = vmatprep.mubr.bf16.mxu0 0
    %4097 = vmatmul.mubr.bf16.gmra.mrb[0].mxu0 %v4053
    %v4098 = vpop.f32.mrb[0].mxu0
    %v4099 = vadd.f32 0.0, %v4098
    %v4100 = vpop.f32.mrb[0].mxu0
    %v4101 = vpop.f32.mrb[0].mxu0
    %v4102 = vadd.f32 0.0, %v4101
    %v4103 = vpop.f32.mrb[0].mxu0
    %4104 = vmatprep.mubr.bf16.mxu0 0
    %4105 = vmatmul.mubr.bf16.gmra.mrb[0].mxu0 %v4056
    %v4106 = vpop.f32.mrb[0].mxu0
    %v4107 = vadd.f32 0.0, %v4106
    %v4108 = vpop.f32.mrb[0].mxu0
    %v4109 = vpop.f32.mrb[0].mxu0
    %v4110 = vadd.f32 0.0, %v4109
    %v4111 = vpop.f32.mrb[0].mxu0
    %4112 = vmatprep.mubr.bf16.mxu0 0
    %4113 = vmatmul.mubr.bf16.gmra.mrb[0].mxu0 %v4059
    %v4114 = vpop.f32.mrb[0].mxu0
    %v4115 = vadd.f32 0.0, %v4114
    %v4116 = vpop.f32.mrb[0].mxu0
    %v4117 = vpop.f32.mrb[0].mxu0
    %v4118 = vpop.f32.mrb[0].mxu0
    %4119 = vdwg.mxu0
    %v4121 = vsel %vm2175, %v3892, 0
    %v4124 = vsel %vm2175, %v3893, 0
    %v4127 = vsel %vm2175, %v3894, 0
    %v4130 = vsel %vm3924, %v3910, 0
    %4132 = vmatprep.subr.bf16.mxu0 0
    %4133 = vmatpush1.bf16.msra.mxu0 %v4130
    %4134 = vmatprep.subr.bf16.mxu0 0
    %4135 = vmatpush1.bf16.msra.mxu0 0
    %4136 = vmatprep.subr.bf16.mxu0 0
    %4137 = vmatpush1.bf16.msra.mxu0 0
    %4138 = vmatprep.subr.bf16.mxu0 0
    %4139 = vmatpush1.bf16.msra.mxu0 0
    %4140 = vmatprep.subr.bf16.mxu0 0
    %4141 = vmatpush1.bf16.msra.mxu0 0
    %4142 = vmatprep.subr.bf16.mxu0 0
    %4143 = vmatpush1.bf16.msra.mxu0 0
    %4144 = vmatprep.subr.bf16.mxu0 0
    %4145 = vmatpush1.bf16.msra.mxu0 0
    %4146 = vmatprep.subr.bf16.mxu0 0
    %4147 = vmatpush1.bf16.msra.mxu0 0
    %4148 = vmatprep.subr.bf16.mxu0 0
    %4149 = vmatpush1.bf16.msra.mxu0 0
    %4150 = vmatprep.subr.bf16.mxu0 0
    %4151 = vmatpush1.bf16.msra.mxu0 0
    %4152 = vmatprep.subr.bf16.mxu0 0
    %4153 = vmatpush1.bf16.msra.mxu0 0
    %4154 = vmatprep.subr.bf16.mxu0 0
    %4155 = vmatpush1.bf16.msra.mxu0 0
    %4156 = vmatprep.subr.bf16.mxu0 0
    %4157 = vmatpush1.bf16.msra.mxu0 0
    %4158 = vmatprep.subr.bf16.mxu0 0
    %4159 = vmatpush1.bf16.msra.mxu0 0
    %4160 = vmatprep.subr.bf16.mxu0 0
    %4161 = vmatpush1.bf16.msra.mxu0 0
    %4162 = vmatprep.subr.bf16.mxu0 0
    %4163 = vmatpush1.bf16.msra.mxu0 0
    %4164 = vmatprep.mubr.bf16.mxu0 0
    %4165 = vmatmul.mubr.bf16.gmra.mrb[0].mxu0 %v4121
    %v4166 = vpop.f32.mrb[0].mxu0
    %v4167 = vadd.f32 0.0, %v4166
    %v4168 = vpop.f32.mrb[0].mxu0
    %v4169 = vpop.f32.mrb[0].mxu0
    %v4170 = vadd.f32 0.0, %v4169
    %v4171 = vpop.f32.mrb[0].mxu0
    %4172 = vmatprep.mubr.bf16.mxu0 0
    %4173 = vmatmul.mubr.bf16.gmra.mrb[0].mxu0 %v4124
    %v4174 = vpop.f32.mrb[0].mxu0
    %v4175 = vadd.f32 0.0, %v4174
    %v4176 = vpop.f32.mrb[0].mxu0
    %v4177 = vpop.f32.mrb[0].mxu0
    %v4178 = vadd.f32 0.0, %v4177
    %v4179 = vpop.f32.mrb[0].mxu0
    %4180 = vmatprep.mubr.bf16.mxu0 0
    %4181 = vmatmul.mubr.bf16.gmra.mrb[0].mxu0 %v4127
    %v4182 = vpop.f32.mrb[0].mxu0
    %v4183 = vadd.f32 0.0, %v4182
    %v4184 = vpop.f32.mrb[0].mxu0
    %v4185 = vpop.f32.mrb[0].mxu0
    %v4186 = vpop.f32.mrb[0].mxu0
    %4187 = vdwg.mxu0
    %v4189 = vsel %vm2175, %v3895, 0
    %v4192 = vsel %vm2175, %v3896, 0
    %v4195 = vsel %vm2175, %v3897, 0
    %v4198 = vsel %vm3924, %v3911, 0
    %4200 = vmatprep.subr.bf16.mxu0 0
    %4201 = vmatpush1.bf16.msra.mxu0 %v4198
    %4202 = vmatprep.subr.bf16.mxu0 0
    %4203 = vmatpush1.bf16.msra.mxu0 0
    %4204 = vmatprep.subr.bf16.mxu0 0
    %4205 = vmatpush1.bf16.msra.mxu0 0
    %4206 = vmatprep.subr.bf16.mxu0 0
    %4207 = vmatpush1.bf16.msra.mxu0 0
    %4208 = vmatprep.subr.bf16.mxu0 0
    %4209 = vmatpush1.bf16.msra.mxu0 0
    %4210 = vmatprep.subr.bf16.mxu0 0
    %4211 = vmatpush1.bf16.msra.mxu0 0
    %4212 = vmatprep.subr.bf16.mxu0 0
    %4213 = vmatpush1.bf16.msra.mxu0 0
    %4214 = vmatprep.subr.bf16.mxu0 0
    %4215 = vmatpush1.bf16.msra.mxu0 0
    %4216 = vmatprep.subr.bf16.mxu0 0
    %4217 = vmatpush1.bf16.msra.mxu0 0
    %4218 = vmatprep.subr.bf16.mxu0 0
    %4219 = vmatpush1.bf16.msra.mxu0 0
    %4220 = vmatprep.subr.bf16.mxu0 0
    %4221 = vmatpush1.bf16.msra.mxu0 0
    %4222 = vmatprep.subr.bf16.mxu0 0
    %4223 = vmatpush1.bf16.msra.mxu0 0
    %4224 = vmatprep.subr.bf16.mxu0 0
    %4225 = vmatpush1.bf16.msra.mxu0 0
    %4226 = vmatprep.subr.bf16.mxu0 0
    %4227 = vmatpush1.bf16.msra.mxu0 0
    %4228 = vmatprep.subr.bf16.mxu0 0
    %4229 = vmatpush1.bf16.msra.mxu0 0
    %4230 = vmatprep.subr.bf16.mxu0 0
    %4231 = vmatpush1.bf16.msra.mxu0 0
    %4232 = vmatprep.mubr.bf16.mxu0 0
    %4233 = vmatmul.mubr.bf16.gmra.mrb[0].mxu0 %v4189
    %v4234 = vpop.f32.mrb[0].mxu0
    %v4235 = vadd.f32 0.0, %v4234
    %v4236 = vpop.f32.mrb[0].mxu0
    %v4237 = vpop.f32.mrb[0].mxu0
    %v4238 = vadd.f32 0.0, %v4237
    %v4239 = vpop.f32.mrb[0].mxu0
    %4240 = vmatprep.mubr.bf16.mxu0 0
    %4241 = vmatmul.mubr.bf16.gmra.mrb[0].mxu0 %v4192
    %v4242 = vpop.f32.mrb[0].mxu0
    %v4243 = vadd.f32 0.0, %v4242
    %v4244 = vpop.f32.mrb[0].mxu0
    %v4245 = vpop.f32.mrb[0].mxu0
    %v4246 = vadd.f32 0.0, %v4245
    %v4247 = vpop.f32.mrb[0].mxu0
    %4248 = vmatprep.mubr.bf16.mxu0 0
    %4249 = vmatmul.mubr.bf16.gmra.mrb[0].mxu0 %v4195
    %v4250 = vpop.f32.mrb[0].mxu0
    %v4251 = vadd.f32 0.0, %v4250
    %v4252 = vpop.f32.mrb[0].mxu0
    %v4253 = vpop.f32.mrb[0].mxu0
    %v4254 = vpop.f32.mrb[0].mxu0
    %4255 = vdwg.mxu0
    %v4257 = vsel %vm2175, %v3898, 0
    %v4260 = vsel %vm2175, %v3899, 0
    %v4263 = vsel %vm2175, %v3900, 0
    %v4266 = vsel %vm3924, %v3912, 0
    %4268 = vmatprep.subr.bf16.mxu0 0
    %4269 = vmatpush1.bf16.msra.mxu0 %v4266
    %4270 = vmatprep.subr.bf16.mxu0 0
    %4271 = vmatpush1.bf16.msra.mxu0 0
    %4272 = vmatprep.subr.bf16.mxu0 0
    %4273 = vmatpush1.bf16.msra.mxu0 0
    %4274 = vmatprep.subr.bf16.mxu0 0
    %4275 = vmatpush1.bf16.msra.mxu0 0
    %4276 = vmatprep.subr.bf16.mxu0 0
    %4277 = vmatpush1.bf16.msra.mxu0 0
    %4278 = vmatprep.subr.bf16.mxu0 0
    %4279 = vmatpush1.bf16.msra.mxu0 0
    %4280 = vmatprep.subr.bf16.mxu0 0
    %4281 = vmatpush1.bf16.msra.mxu0 0
    %4282 = vmatprep.subr.bf16.mxu0 0
    %4283 = vmatpush1.bf16.msra.mxu0 0
    %4284 = vmatprep.subr.bf16.mxu0 0
    %4285 = vmatpush1.bf16.msra.mxu0 0
    %4286 = vmatprep.subr.bf16.mxu0 0
    %4287 = vmatpush1.bf16.msra.mxu0 0
    %4288 = vmatprep.subr.bf16.mxu0 0
    %4289 = vmatpush1.bf16.msra.mxu0 0
    %4290 = vmatprep.subr.bf16.mxu0 0
    %4291 = vmatpush1.bf16.msra.mxu0 0
    %4292 = vmatprep.subr.bf16.mxu0 0
    %4293 = vmatpush1.bf16.msra.mxu0 0
    %4294 = vmatprep.subr.bf16.mxu0 0
    %4295 = vmatpush1.bf16.msra.mxu0 0
    %4296 = vmatprep.subr.bf16.mxu0 0
    %4297 = vmatpush1.bf16.msra.mxu0 0
    %4298 = vmatprep.subr.bf16.mxu0 0
    %4299 = vmatpush1.bf16.msra.mxu0 0
    %4300 = vmatprep.mubr.bf16.mxu0 0
    %4301 = vmatmul.mubr.bf16.gmra.mrb[0].mxu0 %v4257
    %v4302 = vpop.f32.mrb[0].mxu0
    %v4303 = vadd.f32 0.0, %v4302
    %v4304 = vpop.f32.mrb[0].mxu0
    %v4305 = vpop.f32.mrb[0].mxu0
    %v4306 = vadd.f32 0.0, %v4305
    %v4307 = vpop.f32.mrb[0].mxu0
    %4308 = vmatprep.mubr.bf16.mxu0 0
    %4309 = vmatmul.mubr.bf16.gmra.mrb[0].mxu0 %v4260
    %v4310 = vpop.f32.mrb[0].mxu0
    %v4311 = vadd.f32 0.0, %v4310
    %v4312 = vpop.f32.mrb[0].mxu0
    %v4313 = vpop.f32.mrb[0].mxu0
    %v4314 = vadd.f32 0.0, %v4313
    %v4315 = vpop.f32.mrb[0].mxu0
    %4316 = vmatprep.mubr.bf16.mxu0 0
    %4317 = vmatmul.mubr.bf16.gmra.mrb[0].mxu0 %v4263
    %v4318 = vpop.f32.mrb[0].mxu0
    %v4319 = vadd.f32 0.0, %v4318
    %v4320 = vpop.f32.mrb[0].mxu0
    %v4321 = vpop.f32.mrb[0].mxu0
    %v4322 = vpop.f32.mrb[0].mxu0
    %4323 = vdwg.mxu0
    %v4325 = vsel %vm2175, %v3901, 0
    %v4328 = vsel %vm2175, %v3902, 0
    %v4331 = vsel %vm2175, %v3903, 0
    %v4334 = vsel %vm3924, %v3913, 0
    %4336 = vmatprep.subr.bf16.mxu0 0
    %4337 = vmatpush1.bf16.msra.mxu0 %v4334
    %4338 = vmatprep.subr.bf16.mxu0 0
    %4339 = vmatpush1.bf16.msra.mxu0 0
    %4340 = vmatprep.subr.bf16.mxu0 0
    %4341 = vmatpush1.bf16.msra.mxu0 0
    %4342 = vmatprep.subr.bf16.mxu0 0
    %4343 = vmatpush1.bf16.msra.mxu0 0
    %4344 = vmatprep.subr.bf16.mxu0 0
    %4345 = vmatpush1.bf16.msra.mxu0 0
    %4346 = vmatprep.subr.bf16.mxu0 0
    %4347 = vmatpush1.bf16.msra.mxu0 0
    %4348 = vmatprep.subr.bf16.mxu0 0
    %4349 = vmatpush1.bf16.msra.mxu0 0
    %4350 = vmatprep.subr.bf16.mxu0 0
    %4351 = vmatpush1.bf16.msra.mxu0 0
    %4352 = vmatprep.subr.bf16.mxu0 0
    %4353 = vmatpush1.bf16.msra.mxu0 0
    %4354 = vmatprep.subr.bf16.mxu0 0
    %4355 = vmatpush1.bf16.msra.mxu0 0
    %4356 = vmatprep.subr.bf16.mxu0 0
    %4357 = vmatpush1.bf16.msra.mxu0 0
    %4358 = vmatprep.subr.bf16.mxu0 0
    %4359 = vmatpush1.bf16.msra.mxu0 0
    %4360 = vmatprep.subr.bf16.mxu0 0
    %4361 = vmatpush1.bf16.msra.mxu0 0
    %4362 = vmatprep.subr.bf16.mxu0 0
    %4363 = vmatpush1.bf16.msra.mxu0 0
    %4364 = vmatprep.subr.bf16.mxu0 0
    %4365 = vmatpush1.bf16.msra.mxu0 0
    %4366 = vmatprep.subr.bf16.mxu0 0
    %4367 = vmatpush1.bf16.msra.mxu0 0
    %4368 = vmatprep.mubr.bf16.mxu0 0
    %4369 = vmatmul.mubr.bf16.gmra.mrb[0].mxu0 %v4325
    %v4370 = vpop.f32.mrb[0].mxu0
    %v4371 = vadd.f32 0.0, %v4370
    %v4372 = vpop.f32.mrb[0].mxu0
    %v4373 = vpop.f32.mrb[0].mxu0
    %v4374 = vadd.f32 0.0, %v4373
    %v4375 = vpop.f32.mrb[0].mxu0
    %4376 = vmatprep.mubr.bf16.mxu0 0
    %4377 = vmatmul.mubr.bf16.gmra.mrb[0].mxu0 %v4328
    %v4378 = vpop.f32.mrb[0].mxu0
    %v4379 = vadd.f32 0.0, %v4378
    %v4380 = vpop.f32.mrb[0].mxu0
    %v4381 = vpop.f32.mrb[0].mxu0
    %v4382 = vadd.f32 0.0, %v4381
    %v4383 = vpop.f32.mrb[0].mxu0
    %4384 = vmatprep.mubr.bf16.mxu0 0
    %4385 = vmatmul.mubr.bf16.gmra.mrb[0].mxu0 %v4331
    %v4386 = vpop.f32.mrb[0].mxu0
    %v4387 = vadd.f32 0.0, %v4386
    %v4388 = vpop.f32.mrb[0].mxu0
    %v4389 = vpop.f32.mrb[0].mxu0
    %v4390 = vpop.f32.mrb[0].mxu0
    %4391 = vdwg.mxu0
    %v4393 = vsel %vm2175, %v3904, 0
    %v4396 = vsel %vm2175, %v3905, 0
    %v4399 = vsel %vm2175, %v3906, 0
    %v4402 = vsel %vm3924, %v3914, 0
    %4404 = vmatprep.subr.bf16.mxu0 0
    %4405 = vmatpush1.bf16.msra.mxu0 %v4402
    %4406 = vmatprep.subr.bf16.mxu0 0
    %4407 = vmatpush1.bf16.msra.mxu0 0
    %4408 = vmatprep.subr.bf16.mxu0 0
    %4409 = vmatpush1.bf16.msra.mxu0 0
    %4410 = vmatprep.subr.bf16.mxu0 0
    %4411 = vmatpush1.bf16.msra.mxu0 0
    %4412 = vmatprep.subr.bf16.mxu0 0
    %4413 = vmatpush1.bf16.msra.mxu0 0
    %4414 = vmatprep.subr.bf16.mxu0 0
    %4415 = vmatpush1.bf16.msra.mxu0 0
    %4416 = vmatprep.subr.bf16.mxu0 0
    %4417 = vmatpush1.bf16.msra.mxu0 0
    %4418 = vmatprep.subr.bf16.mxu0 0
    %4419 = vmatpush1.bf16.msra.mxu0 0
    %4420 = vmatprep.subr.bf16.mxu0 0
    %4421 = vmatpush1.bf16.msra.mxu0 0
    %4422 = vmatprep.subr.bf16.mxu0 0
    %4423 = vmatpush1.bf16.msra.mxu0 0
    %4424 = vmatprep.subr.bf16.mxu0 0
    %4425 = vmatpush1.bf16.msra.mxu0 0
    %4426 = vmatprep.subr.bf16.mxu0 0
    %4427 = vmatpush1.bf16.msra.mxu0 0
    %4428 = vmatprep.subr.bf16.mxu0 0
    %4429 = vmatpush1.bf16.msra.mxu0 0
    %4430 = vmatprep.subr.bf16.mxu0 0
    %4431 = vmatpush1.bf16.msra.mxu0 0
    %4432 = vmatprep.subr.bf16.mxu0 0
    %4433 = vmatpush1.bf16.msra.mxu0 0
    %4434 = vmatprep.subr.bf16.mxu0 0
    %4435 = vmatpush1.bf16.msra.mxu0 0
    %4436 = vmatprep.mubr.bf16.mxu0 0
    %4437 = vmatmul.mubr.bf16.gmra.mrb[0].mxu0 %v4393
    %v4438 = vpop.f32.mrb[0].mxu0
    %v4439 = vadd.f32 0.0, %v4438
    %v4440 = vpop.f32.mrb[0].mxu0
    %v4441 = vpop.f32.mrb[0].mxu0
    %v4442 = vadd.f32 0.0, %v4441
    %v4443 = vpop.f32.mrb[0].mxu0
    %4444 = vmatprep.mubr.bf16.mxu0 0
    %4445 = vmatmul.mubr.bf16.gmra.mrb[0].mxu0 %v4396
    %v4446 = vpop.f32.mrb[0].mxu0
    %v4447 = vadd.f32 0.0, %v4446
    %v4448 = vpop.f32.mrb[0].mxu0
    %v4449 = vpop.f32.mrb[0].mxu0
    %v4450 = vadd.f32 0.0, %v4449
    %v4451 = vpop.f32.mrb[0].mxu0
    %4452 = vmatprep.mubr.bf16.mxu0 0
    %4453 = vmatmul.mubr.bf16.gmra.mrb[0].mxu0 %v4399
    %v4454 = vpop.f32.mrb[0].mxu0
    %v4455 = vadd.f32 0.0, %v4454
    %v4456 = vpop.f32.mrb[0].mxu0
    %v4457 = vpop.f32.mrb[0].mxu0
    %v4458 = vpop.f32.mrb[0].mxu0
    %4459 = vdwg.mxu0
    %v4460 = vsel %vm177, %v3963, 0.0
    %v4461 = vsel %vm177, %v4031, 0.0
    %v4462 = vadd.f32 %v4460, %v4461
    %v4463 = vsel %vm177, %v4099, 0.0
    %v4464 = vadd.f32 %v4462, %v4463
    %v4465 = vsel %vm177, %v4167, 0.0
    %v4466 = vadd.f32 %v4464, %v4465
    %v4467 = vsel %vm177, %v4235, 0.0
    %v4468 = vadd.f32 %v4466, %v4467
    %v4469 = vsel %vm177, %v4303, 0.0
    %v4470 = vadd.f32 %v4468, %v4469
    %v4471 = vsel %vm177, %v4371, 0.0
    %v4472 = vadd.f32 %v4470, %v4471
    %v4473 = vsel %vm177, %v4439, 0.0
    %v4474 = vadd.f32 %v4472, %v4473
    %v4475 = vsel %vm177, %v3966, 0.0
    %v4476 = vsel %vm177, %v4034, 0.0
    %v4477 = vadd.f32 %v4475, %v4476
    %v4478 = vsel %vm177, %v4102, 0.0
    %v4479 = vadd.f32 %v4477, %v4478
    %v4480 = vsel %vm177, %v4170, 0.0
    %v4481 = vadd.f32 %v4479, %v4480
    %v4482 = vsel %vm177, %v4238, 0.0
    %v4483 = vadd.f32 %v4481, %v4482
    %v4484 = vsel %vm177, %v4306, 0.0
    %v4485 = vadd.f32 %v4483, %v4484
    %v4486 = vsel %vm177, %v4374, 0.0
    %v4487 = vadd.f32 %v4485, %v4486
    %v4488 = vsel %vm177, %v4442, 0.0
    %v4489 = vadd.f32 %v4487, %v4488
    %v4490 = vsel %vm177, %v3971, 0.0
    %v4491 = vsel %vm177, %v4039, 0.0
    %v4492 = vadd.f32 %v4490, %v4491
    %v4493 = vsel %vm177, %v4107, 0.0
    %v4494 = vadd.f32 %v4492, %v4493
    %v4495 = vsel %vm177, %v4175, 0.0
    %v4496 = vadd.f32 %v4494, %v4495
    %v4497 = vsel %vm177, %v4243, 0.0
    %v4498 = vadd.f32 %v4496, %v4497
    %v4499 = vsel %vm177, %v4311, 0.0
    %v4500 = vadd.f32 %v4498, %v4499
    %v4501 = vsel %vm177, %v4379, 0.0
    %v4502 = vadd.f32 %v4500, %v4501
    %v4503 = vsel %vm177, %v4447, 0.0
    %v4504 = vadd.f32 %v4502, %v4503
    %v4505 = vsel %vm177, %v3974, 0.0
    %v4506 = vsel %vm177, %v4042, 0.0
    %v4507 = vadd.f32 %v4505, %v4506
    %v4508 = vsel %vm177, %v4110, 0.0
    %v4509 = vadd.f32 %v4507, %v4508
    %v4510 = vsel %vm177, %v4178, 0.0
    %v4511 = vadd.f32 %v4509, %v4510
    %v4512 = vsel %vm177, %v4246, 0.0
    %v4513 = vadd.f32 %v4511, %v4512
    %v4514 = vsel %vm177, %v4314, 0.0
    %v4515 = vadd.f32 %v4513, %v4514
    %v4516 = vsel %vm177, %v4382, 0.0
    %v4517 = vadd.f32 %v4515, %v4516
    %v4518 = vsel %vm177, %v4450, 0.0
    %v4519 = vadd.f32 %v4517, %v4518
    %v4520 = vsel %vm190, %v3979, 0.0
    %v4521 = vsel %vm190, %v4047, 0.0
    %v4522 = vadd.f32 %v4520, %v4521
    %v4523 = vsel %vm190, %v4115, 0.0
    %v4524 = vadd.f32 %v4522, %v4523
    %v4525 = vsel %vm190, %v4183, 0.0
    %v4526 = vadd.f32 %v4524, %v4525
    %v4527 = vsel %vm190, %v4251, 0.0
    %v4528 = vadd.f32 %v4526, %v4527
    %v4529 = vsel %vm190, %v4319, 0.0
    %v4530 = vadd.f32 %v4528, %v4529
    %v4531 = vsel %vm190, %v4387, 0.0
    %v4532 = vadd.f32 %v4530, %v4531
    %v4533 = vsel %vm190, %v4455, 0.0
    %v4534 = vadd.f32 %v4532, %v4533
    %v4535 = vld [vmem:[%s9] sm:$0x1]
    %v4537 = vlaneseq
    %v4538 = vshrl.u32 %v4537, 7
    %v4539 = vsub.s32 0, %v4538
    %v4540 = vrot.slane %v4535, %v4539
    %v4542 = vadd.f32 %v4474, %v4540
    %v4543 = vadd.f32 %v4489, %v4540
    %v4544 = vadd.f32 %v4504, %v4540
    %v4545 = vadd.f32 %v4519, %v4540
    %v4546 = vadd.f32 %v4534, %v4540
    %v4547 = vadd.f32 %v4542, %v149
    %v4548 = vadd.f32 %v4543, %v152
    %v4549 = vadd.f32 %v4544, %v157
    %v4550 = vadd.f32 %v4545, %v160
    %v4551 = vadd.f32 %v4546, %v165
    %v4552 = vld [vmem:[%s10] sm:$0x1]
    %v4553 = vld [vmem:[%s11] sm:$0x1]
    %v4554 = vsel %vm177, %v4547, 0.0
    %4555 = vadd.xlane.f32.xlu0 %v4554
    %v4556 = vpop.xlane.xlu0 %4555
    %v4557 = vsel %vm177, %v4548, 0.0
    %4558 = vadd.xlane.f32.xlu0 %v4557
    %v4559 = vpop.xlane.xlu0 %4558
    %v4560 = vsel %vm177, %v4549, 0.0
    %4561 = vadd.xlane.f32.xlu0 %v4560
    %v4562 = vpop.xlane.xlu0 %4561
    %v4563 = vsel %vm177, %v4550, 0.0
    %4564 = vadd.xlane.f32.xlu0 %v4563
    %v4565 = vpop.xlane.xlu0 %4564
    %v4566 = vsel %vm190, %v4551, 0.0
    %4567 = vadd.xlane.f32.xlu0 %v4566
    %v4568 = vpop.xlane.xlu0 %4567
    %v4569 = vmul.f32 %v4556, %v194
    %v4570 = vmul.f32 %v4559, %v194
    %v4571 = vmul.f32 %v4562, %v194
    %v4572 = vmul.f32 %v4565, %v194
    %v4573 = vmul.f32 %v4568, %v194
    %v4574 = vsub.f32 %v4547, %v4569
    %v4575 = vsub.f32 %v4548, %v4570
    %v4576 = vsub.f32 %v4549, %v4571
    %v4577 = vsub.f32 %v4550, %v4572
    %v4578 = vsub.f32 %v4551, %v4573
    %v4579 = vmul.f32 %v4574, %v4574
    %v4580 = vmul.f32 %v4575, %v4575
    %v4581 = vmul.f32 %v4576, %v4576
    %v4582 = vmul.f32 %v4577, %v4577
    %v4583 = vmul.f32 %v4578, %v4578
    %v4584 = vsel %vm177, %v4579, 0.0
    %4585 = vadd.xlane.f32.xlu0 %v4584
    %v4586 = vpop.xlane.xlu0 %4585
    %v4587 = vsel %vm177, %v4580, 0.0
    %4588 = vadd.xlane.f32.xlu0 %v4587
    %v4589 = vpop.xlane.xlu0 %4588
    %v4590 = vsel %vm177, %v4581, 0.0
    %4591 = vadd.xlane.f32.xlu0 %v4590
    %v4592 = vpop.xlane.xlu0 %4591
    %v4593 = vsel %vm177, %v4582, 0.0
    %4594 = vadd.xlane.f32.xlu0 %v4593
    %v4595 = vpop.xlane.xlu0 %4594
    %v4596 = vsel %vm190, %v4583, 0.0
    %4597 = vadd.xlane.f32.xlu0 %v4596
    %v4598 = vpop.xlane.xlu0 %4597
    %v4599 = vmul.f32 %v4586, %v194
    %v4600 = vmul.f32 %v4589, %v194
    %v4601 = vmul.f32 %v4592, %v194
    %v4602 = vmul.f32 %v4595, %v194
    %v4603 = vmul.f32 %v4598, %v194
    %v4604 = vadd.f32 %v4599, 1e-05
    %v4605 = vadd.f32 %v4600, 1e-05
    %v4606 = vadd.f32 %v4601, 1e-05
    %v4607 = vadd.f32 %v4602, 1e-05
    %v4608 = vadd.f32 %v4603, 1e-05
    %v4609 = vrsqrt.pop %v4604
    %v4610 = vrsqrt.pop %v4605
    %v4611 = vrsqrt.pop %v4606
    %v4612 = vrsqrt.pop %v4607
    %v4613 = vrsqrt.pop %v4608
    %v4614 = vmul.f32 %v4574, %v4609
    %v4615 = vmul.f32 %v4575, %v4610
    %v4616 = vmul.f32 %v4576, %v4611
    %v4617 = vmul.f32 %v4577, %v4612
    %v4618 = vmul.f32 %v4578, %v4613
    %v4620 = vlaneseq
    %v4621 = vshrl.u32 %v4620, 7
    %v4622 = vsub.s32 0, %v4621
    %v4623 = vrot.slane %v4552, %v4622
    %v4625 = vmul.f32 %v4614, %v4623
    %v4626 = vmul.f32 %v4615, %v4623
    %v4627 = vmul.f32 %v4616, %v4623
    %v4628 = vmul.f32 %v4617, %v4623
    %v4629 = vmul.f32 %v4618, %v4623
    %v4631 = vlaneseq
    %v4632 = vshrl.u32 %v4631, 7
    %v4633 = vsub.s32 0, %v4632
    %v4634 = vrot.slane %v4553, %v4633
    %v4636 = vadd.f32 %v4625, %v4634
    %v4637 = vadd.f32 %v4626, %v4634
    %v4638 = vadd.f32 %v4627, %v4634
    %v4639 = vadd.f32 %v4628, %v4634
    %v4640 = vadd.f32 %v4629, %v4634
    %v4641 = vpack.c.bf16 %v4637, %v4636
    %v4642 = vpack.c.bf16 %v4639, %v4638
    %v4643 = vpack.c.bf16 %v4640, %v4640
    %v4644 = vld [vmem:[%s12] sm:$0xf]
    %v4645 = vld [vmem:[%s12 + $0x4] sm:$0xf]
    %v4646 = vld [vmem:[%s12 + $0x8] sm:$0xf]
    %v4647 = vld [vmem:[%s12 + $0xc] sm:$0xf]
    %v4648 = vld [vmem:[%s13] sm:$0x1]
    %v4650 = vlaneseq
    %v4651 = vshrl.u32 %v4650, 7
    %v4652 = vsub.s32 0, %v4651
    %v4653 = vrot.slane %v4648, %v4652
    %v4659 = vunpack.c.l.b16 %v4644
    %v4660 = vunpack.c.l.b16 %v4645
    %v4661 = vunpack.c.l.b16 %v4646
    %v4662 = vunpack.c.l.b16 %v4647
    %v4663 = vpack.c.b16 %v4660, %v4659
    %v4664 = vpack.c.b16 %v4662, %v4661
    %v4668 = vsel %vm177, %v4641, 0
    %v4671 = vsel %vm177, %v4642, 0
    %v4674 = vsel %vm177, %v4643, 0
    %4676 = vmatprep.subr.bf16.mxu0 0
    %4677 = vmatpush1.bf16.msra.mxu0 %v4663
    %4678 = vmatprep.subr.bf16.mxu0 0
    %4679 = vmatpush1.bf16.msra.mxu0 %v4664
    %4680 = vmatprep.subr.bf16.mxu0 0
    %4681 = vmatpush1.bf16.msra.mxu0 0
    %4682 = vmatprep.subr.bf16.mxu0 0
    %4683 = vmatpush1.bf16.msra.mxu0 0
    %4684 = vmatprep.subr.bf16.mxu0 0
    %4685 = vmatpush1.bf16.msra.mxu0 0
    %4686 = vmatprep.subr.bf16.mxu0 0
    %4687 = vmatpush1.bf16.msra.mxu0 0
    %4688 = vmatprep.subr.bf16.mxu0 0
    %4689 = vmatpush1.bf16.msra.mxu0 0
    %4690 = vmatprep.subr.bf16.mxu0 0
    %4691 = vmatpush1.bf16.msra.mxu0 0
    %4692 = vmatprep.subr.bf16.mxu0 0
    %4693 = vmatpush1.bf16.msra.mxu0 0
    %4694 = vmatprep.subr.bf16.mxu0 0
    %4695 = vmatpush1.bf16.msra.mxu0 0
    %4696 = vmatprep.subr.bf16.mxu0 0
    %4697 = vmatpush1.bf16.msra.mxu0 0
    %4698 = vmatprep.subr.bf16.mxu0 0
    %4699 = vmatpush1.bf16.msra.mxu0 0
    %4700 = vmatprep.subr.bf16.mxu0 0
    %4701 = vmatpush1.bf16.msra.mxu0 0
    %4702 = vmatprep.subr.bf16.mxu0 0
    %4703 = vmatpush1.bf16.msra.mxu0 0
    %4704 = vmatprep.subr.bf16.mxu0 0
    %4705 = vmatpush1.bf16.msra.mxu0 0
    %4706 = vmatprep.subr.bf16.mxu0 0
    %4707 = vmatpush1.bf16.msra.mxu0 0
    %4708 = vmatprep.mubr.bf16.mxu0 0
    %4709 = vmatmul.mubr.bf16.gmra.mrb[0].mxu0 %v4668
    %v4710 = vpop.f32.mrb[0].mxu0
    %v4711 = vadd.f32 %v4653, %v4710
    %v4712 = vpop.f32.mrb[0].mxu0
    %v4713 = vpop.f32.mrb[0].mxu0
    %v4714 = vadd.f32 %v4653, %v4713
    %v4715 = vpop.f32.mrb[0].mxu0
    %4716 = vmatprep.mubr.bf16.mxu0 0
    %4717 = vmatmul.mubr.bf16.gmra.mrb[0].mxu0 %v4671
    %v4718 = vpop.f32.mrb[0].mxu0
    %v4719 = vadd.f32 %v4653, %v4718
    %v4720 = vpop.f32.mrb[0].mxu0
    %v4721 = vpop.f32.mrb[0].mxu0
    %v4722 = vadd.f32 %v4653, %v4721
    %v4723 = vpop.f32.mrb[0].mxu0
    %4724 = vmatprep.mubr.bf16.mxu0 0
    %4725 = vmatmul.mubr.bf16.gmra.mrb[0].mxu0 %v4674
    %v4726 = vpop.f32.mrb[0].mxu0
    %v4727 = vadd.f32 %v4653, %v4726
    %v4728 = vpop.f32.mrb[0].mxu0
    %v4729 = vpop.f32.mrb[0].mxu0
    %v4730 = vpop.f32.mrb[0].mxu0
    %4731 = vdwg.mxu0
    %v4732 = vmul.f32 %v4711, 0.5
    %v4733 = vmul.f32 %v4714, 0.5
    %v4734 = vmul.f32 %v4719, 0.5
    %v4735 = vmul.f32 %v4722, 0.5
    %v4736 = vmul.f32 %v4727, 0.5
    %v4737 = vmul.f32 %v4711, 0.70710677
    %v4738 = vmul.f32 %v4714, 0.70710677
    %v4739 = vmul.f32 %v4719, 0.70710677
    %v4740 = vmul.f32 %v4722, 0.70710677
    %v4741 = vmul.f32 %v4727, 0.70710677
    %v4742 = vmax.f32 %v4737, -4.0
    %v4743 = vmax.f32 %v4738, -4.0
    %v4744 = vmax.f32 %v4739, -4.0
    %v4745 = vmax.f32 %v4740, -4.0
    %v4746 = vmax.f32 %v4741, -4.0
    %v4747 = vmin.f32 %v4742, 4.0
    %v4748 = vmin.f32 %v4743, 4.0
    %v4749 = vmin.f32 %v4744, 4.0
    %v4750 = vmin.f32 %v4745, 4.0
    %v4751 = vmin.f32 %v4746, 4.0
    %v4752 = vmul.f32 %v4747, %v4747
    %v4753 = vmul.f32 %v4748, %v4748
    %v4754 = vmul.f32 %v4749, %v4749
    %v4755 = vmul.f32 %v4750, %v4750
    %v4756 = vmul.f32 %v4751, %v4751
    %v4757 = vmul.f32 %v4752, -2.7261424e-10
    %v4758 = vmul.f32 %v4753, -2.7261424e-10
    %v4759 = vmul.f32 %v4754, -2.7261424e-10
    %v4760 = vmul.f32 %v4755, -2.7261424e-10
    %v4761 = vmul.f32 %v4756, -2.7261424e-10
    %v4762 = vadd.f32 %v4757, 2.7706815e-08
    %v4763 = vadd.f32 %v4758, 2.7706815e-08
    %v4764 = vadd.f32 %v4759, 2.7706815e-08
    %v4765 = vadd.f32 %v4760, 2.7706815e-08
    %v4766 = vadd.f32 %v4761, 2.7706815e-08
    %v4767 = vmul.f32 %v4762, %v4752
    %v4768 = vmul.f32 %v4763, %v4753
    %v4769 = vmul.f32 %v4764, %v4754
    %v4770 = vmul.f32 %v4765, %v4755
    %v4771 = vmul.f32 %v4766, %v4756
    %v4772 = vadd.f32 %v4767, -2.101024e-06
    %v4773 = vadd.f32 %v4768, -2.101024e-06
    %v4774 = vadd.f32 %v4769, -2.101024e-06
    %v4775 = vadd.f32 %v4770, -2.101024e-06
    %v4776 = vadd.f32 %v4771, -2.101024e-06
    %v4777 = vmul.f32 %v4772, %v4752
    %v4778 = vmul.f32 %v4773, %v4753
    %v4779 = vmul.f32 %v4774, %v4754
    %v4780 = vmul.f32 %v4775, %v4755
    %v4781 = vmul.f32 %v4776, %v4756
    %v4782 = vadd.f32 %v4777, -5.6925062e-05
    %v4783 = vadd.f32 %v4778, -5.6925062e-05
    %v4784 = vadd.f32 %v4779, -5.6925062e-05
    %v4785 = vadd.f32 %v4780, -5.6925062e-05
    %v4786 = vadd.f32 %v4781, -5.6925062e-05
    %v4787 = vmul.f32 %v4782, %v4752
    %v4788 = vmul.f32 %v4783, %v4753
    %v4789 = vmul.f32 %v4784, %v4754
    %v4790 = vmul.f32 %v4785, %v4755
    %v4791 = vmul.f32 %v4786, %v4756
    %v4792 = vadd.f32 %v4787, -0.00073499064
    %v4793 = vadd.f32 %v4788, -0.00073499064
    %v4794 = vadd.f32 %v4789, -0.00073499064
    %v4795 = vadd.f32 %v4790, -0.00073499064
    %v4796 = vadd.f32 %v4791, -0.00073499064
    %v4797 = vmul.f32 %v4792, %v4752
    %v4798 = vmul.f32 %v4793, %v4753
    %v4799 = vmul.f32 %v4794, %v4754
    %v4800 = vmul.f32 %v4795, %v4755
    %v4801 = vmul.f32 %v4796, %v4756
    %v4802 = vadd.f32 %v4797, -0.0029546
    %v4803 = vadd.f32 %v4798, -0.0029546
    %v4804 = vadd.f32 %v4799, -0.0029546
    %v4805 = vadd.f32 %v4800, -0.0029546
    %v4806 = vadd.f32 %v4801, -0.0029546
    %v4807 = vmul.f32 %v4802, %v4752
    %v4808 = vmul.f32 %v4803, %v4753
    %v4809 = vmul.f32 %v4804, %v4754
    %v4810 = vmul.f32 %v4805, %v4755
    %v4811 = vmul.f32 %v4806, %v4756
    %v4812 = vadd.f32 %v4807, -0.016096033
    %v4813 = vadd.f32 %v4808, -0.016096033
    %v4814 = vadd.f32 %v4809, -0.016096033
    %v4815 = vadd.f32 %v4810, -0.016096033
    %v4816 = vadd.f32 %v4811, -0.016096033
    %v4817 = vmul.f32 %v4812, %v4747
    %v4818 = vmul.f32 %v4813, %v4748
    %v4819 = vmul.f32 %v4814, %v4749
    %v4820 = vmul.f32 %v4815, %v4750
    %v4821 = vmul.f32 %v4816, %v4751
    %v4822 = vmul.f32 %v4752, -1.45660715e-05
    %v4823 = vmul.f32 %v4753, -1.45660715e-05
    %v4824 = vmul.f32 %v4754, -1.45660715e-05
    %v4825 = vmul.f32 %v4755, -1.45660715e-05
    %v4826 = vmul.f32 %v4756, -1.45660715e-05
    %v4827 = vadd.f32 %v4822, -0.00021337405
    %v4828 = vadd.f32 %v4823, -0.00021337405
    %v4829 = vadd.f32 %v4824, -0.00021337405
    %v4830 = vadd.f32 %v4825, -0.00021337405
    %v4831 = vadd.f32 %v4826, -0.00021337405
    %v4832 = vmul.f32 %v4827, %v4752
    %v4833 = vmul.f32 %v4828, %v4753
    %v4834 = vmul.f32 %v4829, %v4754
    %v4835 = vmul.f32 %v4830, %v4755
    %v4836 = vmul.f32 %v4831, %v4756
    %v4837 = vadd.f32 %v4832, -0.001682827
    %v4838 = vadd.f32 %v4833, -0.001682827
    %v4839 = vadd.f32 %v4834, -0.001682827
    %v4840 = vadd.f32 %v4835, -0.001682827
    %v4841 = vadd.f32 %v4836, -0.001682827
    %v4842 = vmul.f32 %v4837, %v4752
    %v4843 = vmul.f32 %v4838, %v4753
    %v4844 = vmul.f32 %v4839, %v4754
    %v4845 = vmul.f32 %v4840, %v4755
    %v4846 = vmul.f32 %v4841, %v4756
    %v4847 = vadd.f32 %v4842, -0.0073733293
    %v4848 = vadd.f32 %v4843, -0.0073733293
    %v4849 = vadd.f32 %v4844, -0.0073733293
    %v4850 = vadd.f32 %v4845, -0.0073733293
    %v4851 = vadd.f32 %v4846, -0.0073733293
    %v4852 = vmul.f32 %v4847, %v4752
    %v4853 = vmul.f32 %v4848, %v4753
    %v4854 = vmul.f32 %v4849, %v4754
    %v4855 = vmul.f32 %v4850, %v4755
    %v4856 = vmul.f32 %v4851, %v4756
    %v4857 = vadd.f32 %v4852, -0.014264739
    %v4858 = vadd.f32 %v4853, -0.014264739
    %v4859 = vadd.f32 %v4854, -0.014264739
    %v4860 = vadd.f32 %v4855, -0.014264739
    %v4861 = vadd.f32 %v4856, -0.014264739
    %v4862 = vrcp.pop %v4857
    %v4863 = vmul.f32 %v4817, %v4862
    %v4864 = vrcp.pop %v4858
    %v4865 = vmul.f32 %v4818, %v4864
    %v4866 = vrcp.pop %v4859
    %v4867 = vmul.f32 %v4819, %v4866
    %v4868 = vrcp.pop %v4860
    %v4869 = vmul.f32 %v4820, %v4868
    %v4870 = vrcp.pop %v4861
    %v4871 = vmul.f32 %v4821, %v4870
    %v4872 = vadd.f32 %v4863, 1.0
    %v4873 = vadd.f32 %v4865, 1.0
    %v4874 = vadd.f32 %v4867, 1.0
    %v4875 = vadd.f32 %v4869, 1.0
    %v4876 = vadd.f32 %v4871, 1.0
    %v4877 = vmul.f32 %v4732, %v4872
    %v4878 = vmul.f32 %v4733, %v4873
    %v4879 = vmul.f32 %v4734, %v4874
    %v4880 = vmul.f32 %v4735, %v4875
    %v4881 = vmul.f32 %v4736, %v4876
    %v4882 = vpack.c.bf16 %v4878, %v4877
    %v4883 = vpack.c.bf16 %v4880, %v4879
    %v4884 = vpack.c.bf16 %v4881, %v4881
    %v4885 = vld [vmem:[%s14] sm:$0xf]
    %v4886 = vld [vmem:[%s14 + $0x4] sm:$0xf]
    %v4887 = vld [vmem:[%s14 + $0x8] sm:$0xf]
    %v4888 = vld [vmem:[%s14 + $0xc] sm:$0xf]
    %v4889 = vld [vmem:[%s14 + $0x10] sm:$0xf]
    %v4890 = vld [vmem:[%s14 + $0x14] sm:$0xf]
    %v4891 = vld [vmem:[%s14 + $0x18] sm:$0xf]
    %v4892 = vld [vmem:[%s14 + $0x1c] sm:$0xf]
    %v4893 = vld [vmem:[%s15] sm:$0x1]
    %v4895 = vlaneseq
    %v4896 = vshrl.u32 %v4895, 7
    %v4897 = vsub.s32 0, %v4896
    %v4898 = vrot.slane %v4893, %v4897
    %v4908 = vunpack.c.l.b16 %v4885
    %v4909 = vunpack.c.l.b16 %v4886
    %v4910 = vunpack.c.l.b16 %v4887
    %v4911 = vunpack.c.l.b16 %v4888
    %v4912 = vunpack.c.l.b16 %v4889
    %v4913 = vunpack.c.l.b16 %v4890
    %v4914 = vunpack.c.l.b16 %v4891
    %v4915 = vunpack.c.l.b16 %v4892
    %v4916 = vpack.c.b16 %v4909, %v4908
    %v4917 = vpack.c.b16 %v4911, %v4910
    %v4918 = vpack.c.b16 %v4913, %v4912
    %v4919 = vpack.c.b16 %v4915, %v4914
    %vm4924 = vcmask 523264
    %v4926 = vsel %vm4924, %v4882, 0
    %v4929 = vsel %vm4924, %v4883, 0
    %v4932 = vsel %vm4924, %v4884, 0
    %4934 = vmatprep.subr.bf16.mxu0 0
    %4935 = vmatpush1.bf16.msra.mxu0 %v4916
    %4936 = vmatprep.subr.bf16.mxu0 0
    %4937 = vmatpush1.bf16.msra.mxu0 %v4917
    %4938 = vmatprep.subr.bf16.mxu0 0
    %4939 = vmatpush1.bf16.msra.mxu0 %v4918
    %4940 = vmatprep.subr.bf16.mxu0 0
    %4941 = vmatpush1.bf16.msra.mxu0 %v4919
    %4942 = vmatprep.subr.bf16.mxu0 0
    %4943 = vmatpush1.bf16.msra.mxu0 0
    %4944 = vmatprep.subr.bf16.mxu0 0
    %4945 = vmatpush1.bf16.msra.mxu0 0
    %4946 = vmatprep.subr.bf16.mxu0 0
    %4947 = vmatpush1.bf16.msra.mxu0 0
    %4948 = vmatprep.subr.bf16.mxu0 0
    %4949 = vmatpush1.bf16.msra.mxu0 0
    %4950 = vmatprep.subr.bf16.mxu0 0
    %4951 = vmatpush1.bf16.msra.mxu0 0
    %4952 = vmatprep.subr.bf16.mxu0 0
    %4953 = vmatpush1.bf16.msra.mxu0 0
    %4954 = vmatprep.subr.bf16.mxu0 0
    %4955 = vmatpush1.bf16.msra.mxu0 0
    %4956 = vmatprep.subr.bf16.mxu0 0
    %4957 = vmatpush1.bf16.msra.mxu0 0
    %4958 = vmatprep.subr.bf16.mxu0 0
    %4959 = vmatpush1.bf16.msra.mxu0 0
    %4960 = vmatprep.subr.bf16.mxu0 0
    %4961 = vmatpush1.bf16.msra.mxu0 0
    %4962 = vmatprep.subr.bf16.mxu0 0
    %4963 = vmatpush1.bf16.msra.mxu0 0
    %4964 = vmatprep.subr.bf16.mxu0 0
    %4965 = vmatpush1.bf16.msra.mxu0 0
    %4966 = vmatprep.mubr.bf16.mxu0 0
    %4967 = vmatmul.mubr.bf16.gmra.mrb[0].mxu0 %v4926
    %v4968 = vpop.f32.mrb[0].mxu0
    %v4969 = vadd.f32 %v4898, %v4968
    %v4970 = vpop.f32.mrb[0].mxu0
    %v4971 = vpop.f32.mrb[0].mxu0
    %v4972 = vadd.f32 %v4898, %v4971
    %v4973 = vpop.f32.mrb[0].mxu0
    %4974 = vmatprep.mubr.bf16.mxu0 0
    %4975 = vmatmul.mubr.bf16.gmra.mrb[0].mxu0 %v4929
    %v4976 = vpop.f32.mrb[0].mxu0
    %v4977 = vadd.f32 %v4898, %v4976
    %v4978 = vpop.f32.mrb[0].mxu0
    %v4979 = vpop.f32.mrb[0].mxu0
    %v4980 = vadd.f32 %v4898, %v4979
    %v4981 = vpop.f32.mrb[0].mxu0
    %4982 = vmatprep.mubr.bf16.mxu0 0
    %4983 = vmatmul.mubr.bf16.gmra.mrb[0].mxu0 %v4932
    %v4984 = vpop.f32.mrb[0].mxu0
    %v4985 = vadd.f32 %v4898, %v4984
    %v4986 = vpop.f32.mrb[0].mxu0
    %v4987 = vpop.f32.mrb[0].mxu0
    %v4988 = vpop.f32.mrb[0].mxu0
    %4989 = vdwg.mxu0
    %v4990 = vmul.f32 %v4969, 0.5
    %v4991 = vmul.f32 %v4972, 0.5
    %v4992 = vmul.f32 %v4977, 0.5
    %v4993 = vmul.f32 %v4980, 0.5
    %v4994 = vmul.f32 %v4985, 0.5
    %v4995 = vmul.f32 %v4969, 0.70710677
    %v4996 = vmul.f32 %v4972, 0.70710677
    %v4997 = vmul.f32 %v4977, 0.70710677
    %v4998 = vmul.f32 %v4980, 0.70710677
    %v4999 = vmul.f32 %v4985, 0.70710677
    %v5000 = vmax.f32 %v4995, -4.0
    %v5001 = vmax.f32 %v4996, -4.0
    %v5002 = vmax.f32 %v4997, -4.0
    %v5003 = vmax.f32 %v4998, -4.0
    %v5004 = vmax.f32 %v4999, -4.0
    %v5005 = vmin.f32 %v5000, 4.0
    %v5006 = vmin.f32 %v5001, 4.0
    %v5007 = vmin.f32 %v5002, 4.0
    %v5008 = vmin.f32 %v5003, 4.0
    %v5009 = vmin.f32 %v5004, 4.0
    %v5010 = vmul.f32 %v5005, %v5005
    %v5011 = vmul.f32 %v5006, %v5006
    %v5012 = vmul.f32 %v5007, %v5007
    %v5013 = vmul.f32 %v5008, %v5008
    %v5014 = vmul.f32 %v5009, %v5009
    %v5015 = vmul.f32 %v5010, -2.7261424e-10
    %v5016 = vmul.f32 %v5011, -2.7261424e-10
    %v5017 = vmul.f32 %v5012, -2.7261424e-10
    %v5018 = vmul.f32 %v5013, -2.7261424e-10
    %v5019 = vmul.f32 %v5014, -2.7261424e-10
    %v5020 = vadd.f32 %v5015, 2.7706815e-08
    %v5021 = vadd.f32 %v5016, 2.7706815e-08
    %v5022 = vadd.f32 %v5017, 2.7706815e-08
    %v5023 = vadd.f32 %v5018, 2.7706815e-08
    %v5024 = vadd.f32 %v5019, 2.7706815e-08
    %v5025 = vmul.f32 %v5020, %v5010
    %v5026 = vmul.f32 %v5021, %v5011
    %v5027 = vmul.f32 %v5022, %v5012
    %v5028 = vmul.f32 %v5023, %v5013
    %v5029 = vmul.f32 %v5024, %v5014
    %v5030 = vadd.f32 %v5025, -2.101024e-06
    %v5031 = vadd.f32 %v5026, -2.101024e-06
    %v5032 = vadd.f32 %v5027, -2.101024e-06
    %v5033 = vadd.f32 %v5028, -2.101024e-06
    %v5034 = vadd.f32 %v5029, -2.101024e-06
    %v5035 = vmul.f32 %v5030, %v5010
    %v5036 = vmul.f32 %v5031, %v5011
    %v5037 = vmul.f32 %v5032, %v5012
    %v5038 = vmul.f32 %v5033, %v5013
    %v5039 = vmul.f32 %v5034, %v5014
    %v5040 = vadd.f32 %v5035, -5.6925062e-05
    %v5041 = vadd.f32 %v5036, -5.6925062e-05
    %v5042 = vadd.f32 %v5037, -5.6925062e-05
    %v5043 = vadd.f32 %v5038, -5.6925062e-05
    %v5044 = vadd.f32 %v5039, -5.6925062e-05
    %v5045 = vmul.f32 %v5040, %v5010
    %v5046 = vmul.f32 %v5041, %v5011
    %v5047 = vmul.f32 %v5042, %v5012
    %v5048 = vmul.f32 %v5043, %v5013
    %v5049 = vmul.f32 %v5044, %v5014
    %v5050 = vadd.f32 %v5045, -0.00073499064
    %v5051 = vadd.f32 %v5046, -0.00073499064
    %v5052 = vadd.f32 %v5047, -0.00073499064
    %v5053 = vadd.f32 %v5048, -0.00073499064
    %v5054 = vadd.f32 %v5049, -0.00073499064
    %v5055 = vmul.f32 %v5050, %v5010
    %v5056 = vmul.f32 %v5051, %v5011
    %v5057 = vmul.f32 %v5052, %v5012
    %v5058 = vmul.f32 %v5053, %v5013
    %v5059 = vmul.f32 %v5054, %v5014
    %v5060 = vadd.f32 %v5055, -0.0029546
    %v5061 = vadd.f32 %v5056, -0.0029546
    %v5062 = vadd.f32 %v5057, -0.0029546
    %v5063 = vadd.f32 %v5058, -0.0029546
    %v5064 = vadd.f32 %v5059, -0.0029546
    %v5065 = vmul.f32 %v5060, %v5010
    %v5066 = vmul.f32 %v5061, %v5011
    %v5067 = vmul.f32 %v5062, %v5012
    %v5068 = vmul.f32 %v5063, %v5013
    %v5069 = vmul.f32 %v5064, %v5014
    %v5070 = vadd.f32 %v5065, -0.016096033
    %v5071 = vadd.f32 %v5066, -0.016096033
    %v5072 = vadd.f32 %v5067, -0.016096033
    %v5073 = vadd.f32 %v5068, -0.016096033
    %v5074 = vadd.f32 %v5069, -0.016096033
    %v5075 = vmul.f32 %v5070, %v5005
    %v5076 = vmul.f32 %v5071, %v5006
    %v5077 = vmul.f32 %v5072, %v5007
    %v5078 = vmul.f32 %v5073, %v5008
    %v5079 = vmul.f32 %v5074, %v5009
    %v5080 = vmul.f32 %v5010, -1.45660715e-05
    %v5081 = vmul.f32 %v5011, -1.45660715e-05
    %v5082 = vmul.f32 %v5012, -1.45660715e-05
    %v5083 = vmul.f32 %v5013, -1.45660715e-05
    %v5084 = vmul.f32 %v5014, -1.45660715e-05
    %v5085 = vadd.f32 %v5080, -0.00021337405
    %v5086 = vadd.f32 %v5081, -0.00021337405
    %v5087 = vadd.f32 %v5082, -0.00021337405
    %v5088 = vadd.f32 %v5083, -0.00021337405
    %v5089 = vadd.f32 %v5084, -0.00021337405
    %v5090 = vmul.f32 %v5085, %v5010
    %v5091 = vmul.f32 %v5086, %v5011
    %v5092 = vmul.f32 %v5087, %v5012
    %v5093 = vmul.f32 %v5088, %v5013
    %v5094 = vmul.f32 %v5089, %v5014
    %v5095 = vadd.f32 %v5090, -0.001682827
    %v5096 = vadd.f32 %v5091, -0.001682827
    %v5097 = vadd.f32 %v5092, -0.001682827
    %v5098 = vadd.f32 %v5093, -0.001682827
    %v5099 = vadd.f32 %v5094, -0.001682827
    %v5100 = vmul.f32 %v5095, %v5010
    %v5101 = vmul.f32 %v5096, %v5011
    %v5102 = vmul.f32 %v5097, %v5012
    %v5103 = vmul.f32 %v5098, %v5013
    %v5104 = vmul.f32 %v5099, %v5014
    %v5105 = vadd.f32 %v5100, -0.0073733293
    %v5106 = vadd.f32 %v5101, -0.0073733293
    %v5107 = vadd.f32 %v5102, -0.0073733293
    %v5108 = vadd.f32 %v5103, -0.0073733293
    %v5109 = vadd.f32 %v5104, -0.0073733293
    %v5110 = vmul.f32 %v5105, %v5010
    %v5111 = vmul.f32 %v5106, %v5011
    %v5112 = vmul.f32 %v5107, %v5012
    %v5113 = vmul.f32 %v5108, %v5013
    %v5114 = vmul.f32 %v5109, %v5014
    %v5115 = vadd.f32 %v5110, -0.014264739
    %v5116 = vadd.f32 %v5111, -0.014264739
    %v5117 = vadd.f32 %v5112, -0.014264739
    %v5118 = vadd.f32 %v5113, -0.014264739
    %v5119 = vadd.f32 %v5114, -0.014264739
    %v5120 = vrcp.pop %v5115
    %v5121 = vmul.f32 %v5075, %v5120
    %v5122 = vrcp.pop %v5116
    %v5123 = vmul.f32 %v5076, %v5122
    %v5124 = vrcp.pop %v5117
    %v5125 = vmul.f32 %v5077, %v5124
    %v5126 = vrcp.pop %v5118
    %v5127 = vmul.f32 %v5078, %v5126
    %v5128 = vrcp.pop %v5119
    %v5129 = vmul.f32 %v5079, %v5128
    %v5130 = vadd.f32 %v5121, 1.0
    %v5131 = vadd.f32 %v5123, 1.0
    %v5132 = vadd.f32 %v5125, 1.0
    %v5133 = vadd.f32 %v5127, 1.0
    %v5134 = vadd.f32 %v5129, 1.0
    %v5135 = vmul.f32 %v4990, %v5130
    %v5136 = vmul.f32 %v4991, %v5131
    %v5137 = vmul.f32 %v4992, %v5132
    %v5138 = vmul.f32 %v4993, %v5133
    %v5139 = vmul.f32 %v4994, %v5134
    %v5140 = vadd.f32 %v5135, %v4547
    %v5141 = vadd.f32 %v5136, %v4548
    %v5142 = vadd.f32 %v5137, %v4549
    %v5143 = vadd.f32 %v5138, %v4550
    %v5144 = vadd.f32 %v5139, %v4551
    %s5145 = scalar_lea.vmem %s4, 1
    %v5146 = vld [vmem:[%s5145] sm:$0x1]
    %s5147 = scalar_lea.vmem %s5, 1
    %v5148 = vld [vmem:[%s5147] sm:$0x1]
    %v5149 = vsel %vm177, %v5140, 0.0
    %5150 = vadd.xlane.f32.xlu0 %v5149
    %v5151 = vpop.xlane.xlu0 %5150
    %v5152 = vsel %vm177, %v5141, 0.0
    %5153 = vadd.xlane.f32.xlu0 %v5152
    %v5154 = vpop.xlane.xlu0 %5153
    %v5155 = vsel %vm177, %v5142, 0.0
    %5156 = vadd.xlane.f32.xlu0 %v5155
    %v5157 = vpop.xlane.xlu0 %5156
    %v5158 = vsel %vm177, %v5143, 0.0
    %5159 = vadd.xlane.f32.xlu0 %v5158
    %v5160 = vpop.xlane.xlu0 %5159
    %v5161 = vsel %vm190, %v5144, 0.0
    %5162 = vadd.xlane.f32.xlu0 %v5161
    %v5163 = vpop.xlane.xlu0 %5162
    %v5164 = vmul.f32 %v5151, %v194
    %v5165 = vmul.f32 %v5154, %v194
    %v5166 = vmul.f32 %v5157, %v194
    %v5167 = vmul.f32 %v5160, %v194
    %v5168 = vmul.f32 %v5163, %v194
    %v5169 = vsub.f32 %v5140, %v5164
    %v5170 = vsub.f32 %v5141, %v5165
    %v5171 = vsub.f32 %v5142, %v5166
    %v5172 = vsub.f32 %v5143, %v5167
    %v5173 = vsub.f32 %v5144, %v5168
    %v5174 = vmul.f32 %v5169, %v5169
    %v5175 = vmul.f32 %v5170, %v5170
    %v5176 = vmul.f32 %v5171, %v5171
    %v5177 = vmul.f32 %v5172, %v5172
    %v5178 = vmul.f32 %v5173, %v5173
    %v5179 = vsel %vm177, %v5174, 0.0
    %5180 = vadd.xlane.f32.xlu0 %v5179
    %v5181 = vpop.xlane.xlu0 %5180
    %v5182 = vsel %vm177, %v5175, 0.0
    %5183 = vadd.xlane.f32.xlu0 %v5182
    %v5184 = vpop.xlane.xlu0 %5183
    %v5185 = vsel %vm177, %v5176, 0.0
    %5186 = vadd.xlane.f32.xlu0 %v5185
    %v5187 = vpop.xlane.xlu0 %5186
    %v5188 = vsel %vm177, %v5177, 0.0
    %5189 = vadd.xlane.f32.xlu0 %v5188
    %v5190 = vpop.xlane.xlu0 %5189
    %v5191 = vsel %vm190, %v5178, 0.0
    %5192 = vadd.xlane.f32.xlu0 %v5191
    %v5193 = vpop.xlane.xlu0 %5192
    %v5194 = vmul.f32 %v5181, %v194
    %v5195 = vmul.f32 %v5184, %v194
    %v5196 = vmul.f32 %v5187, %v194
    %v5197 = vmul.f32 %v5190, %v194
    %v5198 = vmul.f32 %v5193, %v194
    %v5199 = vadd.f32 %v5194, 1e-05
    %v5200 = vadd.f32 %v5195, 1e-05
    %v5201 = vadd.f32 %v5196, 1e-05
    %v5202 = vadd.f32 %v5197, 1e-05
    %v5203 = vadd.f32 %v5198, 1e-05
    %v5204 = vrsqrt.pop %v5199
    %v5205 = vrsqrt.pop %v5200
    %v5206 = vrsqrt.pop %v5201
    %v5207 = vrsqrt.pop %v5202
    %v5208 = vrsqrt.pop %v5203
    %v5209 = vmul.f32 %v5169, %v5204
    %v5210 = vmul.f32 %v5170, %v5205
    %v5211 = vmul.f32 %v5171, %v5206
    %v5212 = vmul.f32 %v5172, %v5207
    %v5213 = vmul.f32 %v5173, %v5208
    %v5215 = vlaneseq
    %v5216 = vshrl.u32 %v5215, 7
    %v5217 = vsub.s32 0, %v5216
    %v5218 = vrot.slane %v5146, %v5217
    %v5220 = vmul.f32 %v5209, %v5218
    %v5221 = vmul.f32 %v5210, %v5218
    %v5222 = vmul.f32 %v5211, %v5218
    %v5223 = vmul.f32 %v5212, %v5218
    %v5224 = vmul.f32 %v5213, %v5218
    %v5226 = vlaneseq
    %v5227 = vshrl.u32 %v5226, 7
    %v5228 = vsub.s32 0, %v5227
    %v5229 = vrot.slane %v5148, %v5228
    %v5231 = vadd.f32 %v5220, %v5229
    %v5232 = vadd.f32 %v5221, %v5229
    %v5233 = vadd.f32 %v5222, %v5229
    %v5234 = vadd.f32 %v5223, %v5229
    %v5235 = vadd.f32 %v5224, %v5229
    %v5236 = vpack.c.bf16 %v5232, %v5231
    %v5237 = vpack.c.bf16 %v5234, %v5233
    %v5238 = vpack.c.bf16 %v5235, %v5235
    %s5239 = scalar_lea.vmem %s6, 384
    %v5240 = vld [vmem:[%s5239] sm:$0xf]
    %v5241 = vld [vmem:[%s5239 + $0x4] sm:$0xf]
    %v5242 = vld [vmem:[%s5239 + $0x8] sm:$0xf]
    %v5243 = vld [vmem:[%s5239 + $0xc] sm:$0xf]
    %v5244 = vld [vmem:[%s5239 + $0x10] sm:$0xf]
    %v5245 = vld [vmem:[%s5239 + $0x14] sm:$0xf]
    %v5246 = vld [vmem:[%s5239 + $0x18] sm:$0xf]
    %v5247 = vld [vmem:[%s5239 + $0x1c] sm:$0xf]
    %v5248 = vld [vmem:[%s5239 + $0x20] sm:$0xf]
    %v5249 = vld [vmem:[%s5239 + $0x24] sm:$0xf]
    %v5250 = vld [vmem:[%s5239 + $0x28] sm:$0xf]
    %v5251 = vld [vmem:[%s5239 + $0x2c] sm:$0xf]
    %v5252 = vld [vmem:[%s5239 + $0x30] sm:$0xf]
    %v5253 = vld [vmem:[%s5239 + $0x34] sm:$0xf]
    %v5254 = vld [vmem:[%s5239 + $0x38] sm:$0xf]
    %v5255 = vld [vmem:[%s5239 + $0x3c] sm:$0xf]
    %v5256 = vld [vmem:[%s5239 + $0x40] sm:$0xf]
    %v5257 = vld [vmem:[%s5239 + $0x44] sm:$0xf]
    %v5258 = vld [vmem:[%s5239 + $0x48] sm:$0xf]
    %v5259 = vld [vmem:[%s5239 + $0x4c] sm:$0xf]
    %v5260 = vld [vmem:[%s5239 + $0x50] sm:$0xf]
    %v5261 = vld [vmem:[%s5239 + $0x54] sm:$0xf]
    %v5262 = vld [vmem:[%s5239 + $0x58] sm:$0xf]
    %v5263 = vld [vmem:[%s5239 + $0x5c] sm:$0xf]
    %v5264 = vld [vmem:[%s5239 + $0x60] sm:$0xf]
    %v5265 = vld [vmem:[%s5239 + $0x64] sm:$0xf]
    %v5266 = vld [vmem:[%s5239 + $0x68] sm:$0xf]
    %v5267 = vld [vmem:[%s5239 + $0x6c] sm:$0xf]
    %v5268 = vld [vmem:[%s5239 + $0x70] sm:$0xf]
    %v5269 = vld [vmem:[%s5239 + $0x74] sm:$0xf]
    %v5270 = vld [vmem:[%s5239 + $0x78] sm:$0xf]
    %v5271 = vld [vmem:[%s5239 + $0x7c] sm:$0xf]
    %v5272 = vld [vmem:[%s5239 + $0x80] sm:$0xf]
    %v5273 = vld [vmem:[%s5239 + $0x84] sm:$0xf]
    %v5274 = vld [vmem:[%s5239 + $0x88] sm:$0xf]
    %v5275 = vld [vmem:[%s5239 + $0x8c] sm:$0xf]
    %v5276 = vld [vmem:[%s5239 + $0x90] sm:$0xf]
    %v5277 = vld [vmem:[%s5239 + $0x94] sm:$0xf]
    %v5278 = vld [vmem:[%s5239 + $0x98] sm:$0xf]
    %v5279 = vld [vmem:[%s5239 + $0x9c] sm:$0xf]
    %v5280 = vld [vmem:[%s5239 + $0xa0] sm:$0xf]
    %v5281 = vld [vmem:[%s5239 + $0xa4] sm:$0xf]
    %v5282 = vld [vmem:[%s5239 + $0xa8] sm:$0xf]
    %v5283 = vld [vmem:[%s5239 + $0xac] sm:$0xf]
    %v5284 = vld [vmem:[%s5239 + $0xb0] sm:$0xf]
    %v5285 = vld [vmem:[%s5239 + $0xb4] sm:$0xf]
    %v5286 = vld [vmem:[%s5239 + $0xb8] sm:$0xf]
    %v5287 = vld [vmem:[%s5239 + $0xbc] sm:$0xf]
    %v5288 = vld [vmem:[%s5239 + $0xc0] sm:$0xf]
    %v5289 = vld [vmem:[%s5239 + $0xc4] sm:$0xf]
    %v5290 = vld [vmem:[%s5239 + $0xc8] sm:$0xf]
    %v5291 = vld [vmem:[%s5239 + $0xcc] sm:$0xf]
    %v5292 = vld [vmem:[%s5239 + $0xd0] sm:$0xf]
    %v5293 = vld [vmem:[%s5239 + $0xd4] sm:$0xf]
    %v5294 = vld [vmem:[%s5239 + $0xd8] sm:$0xf]
    %v5295 = vld [vmem:[%s5239 + $0xdc] sm:$0xf]
    %v5296 = vld [vmem:[%s5239 + $0xe0] sm:$0xf]
    %v5297 = vld [vmem:[%s5239 + $0xe4] sm:$0xf]
    %v5298 = vld [vmem:[%s5239 + $0xe8] sm:$0xf]
    %v5299 = vld [vmem:[%s5239 + $0xec] sm:$0xf]
    %v5300 = vld [vmem:[%s5239 + $0xf0] sm:$0xf]
    %v5301 = vld [vmem:[%s5239 + $0xf4] sm:$0xf]
    %v5302 = vld [vmem:[%s5239 + $0xf8] sm:$0xf]
    %v5303 = vld [vmem:[%s5239 + $0xfc] sm:$0xf]
    %v5304 = vld [vmem:[%s5239 + $0x100] sm:$0xf]
    %v5305 = vld [vmem:[%s5239 + $0x104] sm:$0xf]
    %v5306 = vld [vmem:[%s5239 + $0x108] sm:$0xf]
    %v5307 = vld [vmem:[%s5239 + $0x10c] sm:$0xf]
    %v5308 = vld [vmem:[%s5239 + $0x110] sm:$0xf]
    %v5309 = vld [vmem:[%s5239 + $0x114] sm:$0xf]
    %v5310 = vld [vmem:[%s5239 + $0x118] sm:$0xf]
    %v5311 = vld [vmem:[%s5239 + $0x11c] sm:$0xf]
    %v5312 = vld [vmem:[%s5239 + $0x120] sm:$0xf]
    %v5313 = vld [vmem:[%s5239 + $0x124] sm:$0xf]
    %v5314 = vld [vmem:[%s5239 + $0x128] sm:$0xf]
    %v5315 = vld [vmem:[%s5239 + $0x12c] sm:$0xf]
    %v5316 = vld [vmem:[%s5239 + $0x130] sm:$0xf]
    %v5317 = vld [vmem:[%s5239 + $0x134] sm:$0xf]
    %v5318 = vld [vmem:[%s5239 + $0x138] sm:$0xf]
    %v5319 = vld [vmem:[%s5239 + $0x13c] sm:$0xf]
    %v5320 = vld [vmem:[%s5239 + $0x140] sm:$0xf]
    %v5321 = vld [vmem:[%s5239 + $0x144] sm:$0xf]
    %v5322 = vld [vmem:[%s5239 + $0x148] sm:$0xf]
    %v5323 = vld [vmem:[%s5239 + $0x14c] sm:$0xf]
    %v5324 = vld [vmem:[%s5239 + $0x150] sm:$0xf]
    %v5325 = vld [vmem:[%s5239 + $0x154] sm:$0xf]
    %v5326 = vld [vmem:[%s5239 + $0x158] sm:$0xf]
    %v5327 = vld [vmem:[%s5239 + $0x15c] sm:$0xf]
    %v5328 = vld [vmem:[%s5239 + $0x160] sm:$0xf]
    %v5329 = vld [vmem:[%s5239 + $0x164] sm:$0xf]
    %v5330 = vld [vmem:[%s5239 + $0x168] sm:$0xf]
    %v5331 = vld [vmem:[%s5239 + $0x16c] sm:$0xf]
    %v5332 = vld [vmem:[%s5239 + $0x170] sm:$0xf]
    %v5333 = vld [vmem:[%s5239 + $0x174] sm:$0xf]
    %v5334 = vld [vmem:[%s5239 + $0x178] sm:$0xf]
    %v5335 = vld [vmem:[%s5239 + $0x17c] sm:$0xf]
    %s5336 = scalar_lea.vmem %s7, 960
    %v5337 = vld [vmem:[%s5336] sm:$0xff]
    %v5338 = vld [vmem:[%s5336 + $0x8] sm:$0xff]
    %v5339 = vld [vmem:[%s5336 + $0x10] sm:$0xff]
    %v5340 = vld [vmem:[%s5336 + $0x18] sm:$0xff]
    %v5341 = vld [vmem:[%s5336 + $0x20] sm:$0x3]
    %v5342 = vld [vmem:[%s5336 + $0x28] sm:$0xff]
    %v5343 = vld [vmem:[%s5336 + $0x30] sm:$0xff]
    %v5344 = vld [vmem:[%s5336 + $0x38] sm:$0xff]
    %v5345 = vld [vmem:[%s5336 + $0x40] sm:$0xff]
    %v5346 = vld [vmem:[%s5336 + $0x48] sm:$0x3]
    %v5347 = vld [vmem:[%s5336 + $0x50] sm:$0xff]
    %v5348 = vld [vmem:[%s5336 + $0x58] sm:$0xff]
    %v5349 = vld [vmem:[%s5336 + $0x60] sm:$0xff]
    %v5350 = vld [vmem:[%s5336 + $0x68] sm:$0xff]
    %v5351 = vld [vmem:[%s5336 + $0x70] sm:$0x3]
    %v5352 = vld [vmem:[%s5336 + $0x78] sm:$0xff]
    %v5353 = vld [vmem:[%s5336 + $0x80] sm:$0xff]
    %v5354 = vld [vmem:[%s5336 + $0x88] sm:$0xff]
    %v5355 = vld [vmem:[%s5336 + $0x90] sm:$0xff]
    %v5356 = vld [vmem:[%s5336 + $0x98] sm:$0x3]
    %v5357 = vld [vmem:[%s5336 + $0xa0] sm:$0xff]
    %v5358 = vld [vmem:[%s5336 + $0xa8] sm:$0xff]
    %v5359 = vld [vmem:[%s5336 + $0xb0] sm:$0xff]
    %v5360 = vld [vmem:[%s5336 + $0xb8] sm:$0xff]
    %v5361 = vld [vmem:[%s5336 + $0xc0] sm:$0x3]
    %v5362 = vld [vmem:[%s5336 + $0xc8] sm:$0xff]
    %v5363 = vld [vmem:[%s5336 + $0xd0] sm:$0xff]
    %v5364 = vld [vmem:[%s5336 + $0xd8] sm:$0xff]
    %v5365 = vld [vmem:[%s5336 + $0xe0] sm:$0xff]
    %v5366 = vld [vmem:[%s5336 + $0xe8] sm:$0x3]
    %v5367 = vld [vmem:[%s5336 + $0xf0] sm:$0xff]
    %v5368 = vld [vmem:[%s5336 + $0xf8] sm:$0xff]
    %v5369 = vld [vmem:[%s5336 + $0x100] sm:$0xff]
    %v5370 = vld [vmem:[%s5336 + $0x108] sm:$0xff]
    %v5371 = vld [vmem:[%s5336 + $0x110] sm:$0x3]
    %v5372 = vld [vmem:[%s5336 + $0x118] sm:$0xff]
    %v5373 = vld [vmem:[%s5336 + $0x120] sm:$0xff]
    %v5374 = vld [vmem:[%s5336 + $0x128] sm:$0xff]
    %v5375 = vld [vmem:[%s5336 + $0x130] sm:$0xff]
    %v5376 = vld [vmem:[%s5336 + $0x138] sm:$0x3]
    %v5377 = vld [vmem:[%s5336 + $0x140] sm:$0xff]
    %v5378 = vld [vmem:[%s5336 + $0x148] sm:$0xff]
    %v5379 = vld [vmem:[%s5336 + $0x150] sm:$0xff]
    %v5380 = vld [vmem:[%s5336 + $0x158] sm:$0xff]
    %v5381 = vld [vmem:[%s5336 + $0x160] sm:$0x3]
    %v5382 = vld [vmem:[%s5336 + $0x168] sm:$0xff]
    %v5383 = vld [vmem:[%s5336 + $0x170] sm:$0xff]
    %v5384 = vld [vmem:[%s5336 + $0x178] sm:$0xff]
    %v5385 = vld [vmem:[%s5336 + $0x180] sm:$0xff]
    %v5386 = vld [vmem:[%s5336 + $0x188] sm:$0x3]
    %v5387 = vld [vmem:[%s5336 + $0x190] sm:$0xff]
    %v5388 = vld [vmem:[%s5336 + $0x198] sm:$0xff]
    %v5389 = vld [vmem:[%s5336 + $0x1a0] sm:$0xff]
    %v5390 = vld [vmem:[%s5336 + $0x1a8] sm:$0xff]
    %v5391 = vld [vmem:[%s5336 + $0x1b0] sm:$0x3]
    %v5392 = vld [vmem:[%s5336 + $0x1b8] sm:$0xff]
    %v5393 = vld [vmem:[%s5336 + $0x1c0] sm:$0xff]
    %v5394 = vld [vmem:[%s5336 + $0x1c8] sm:$0xff]
    %v5395 = vld [vmem:[%s5336 + $0x1d0] sm:$0xff]
    %v5396 = vld [vmem:[%s5336 + $0x1d8] sm:$0x3]
    %v5397 = vld [vmem:[%s5336 + $0x1e0] sm:$0xff]
    %v5398 = vld [vmem:[%s5336 + $0x1e8] sm:$0xff]
    %v5399 = vld [vmem:[%s5336 + $0x1f0] sm:$0xff]
    %v5400 = vld [vmem:[%s5336 + $0x1f8] sm:$0xff]
    %v5401 = vld [vmem:[%s5336 + $0x200] sm:$0x3]
    %v5402 = vld [vmem:[%s5336 + $0x208] sm:$0xff]
    %v5403 = vld [vmem:[%s5336 + $0x210] sm:$0xff]
    %v5404 = vld [vmem:[%s5336 + $0x218] sm:$0xff]
    %v5405 = vld [vmem:[%s5336 + $0x220] sm:$0xff]
    %v5406 = vld [vmem:[%s5336 + $0x228] sm:$0x3]
    %v5407 = vld [vmem:[%s5336 + $0x230] sm:$0xff]
    %v5408 = vld [vmem:[%s5336 + $0x238] sm:$0xff]
    %v5409 = vld [vmem:[%s5336 + $0x240] sm:$0xff]
    %v5410 = vld [vmem:[%s5336 + $0x248] sm:$0xff]
    %v5411 = vld [vmem:[%s5336 + $0x250] sm:$0x3]
    %v5412 = vld [vmem:[%s5336 + $0x258] sm:$0xff]
    %v5413 = vld [vmem:[%s5336 + $0x260] sm:$0xff]
    %v5414 = vld [vmem:[%s5336 + $0x268] sm:$0xff]
    %v5415 = vld [vmem:[%s5336 + $0x270] sm:$0xff]
    %v5416 = vld [vmem:[%s5336 + $0x278] sm:$0x3]
    %v5417 = vld [vmem:[%s5336 + $0x280] sm:$0xff]
    %v5418 = vld [vmem:[%s5336 + $0x288] sm:$0xff]
    %v5419 = vld [vmem:[%s5336 + $0x290] sm:$0xff]
    %v5420 = vld [vmem:[%s5336 + $0x298] sm:$0xff]
    %v5421 = vld [vmem:[%s5336 + $0x2a0] sm:$0x3]
    %v5422 = vld [vmem:[%s5336 + $0x2a8] sm:$0xff]
    %v5423 = vld [vmem:[%s5336 + $0x2b0] sm:$0xff]
    %v5424 = vld [vmem:[%s5336 + $0x2b8] sm:$0xff]
    %v5425 = vld [vmem:[%s5336 + $0x2c0] sm:$0xff]
    %v5426 = vld [vmem:[%s5336 + $0x2c8] sm:$0x3]
    %v5427 = vld [vmem:[%s5336 + $0x2d0] sm:$0xff]
    %v5428 = vld [vmem:[%s5336 + $0x2d8] sm:$0xff]
    %v5429 = vld [vmem:[%s5336 + $0x2e0] sm:$0xff]
    %v5430 = vld [vmem:[%s5336 + $0x2e8] sm:$0xff]
    %v5431 = vld [vmem:[%s5336 + $0x2f0] sm:$0x3]
    %v5432 = vld [vmem:[%s5336 + $0x2f8] sm:$0xff]
    %v5433 = vld [vmem:[%s5336 + $0x300] sm:$0xff]
    %v5434 = vld [vmem:[%s5336 + $0x308] sm:$0xff]
    %v5435 = vld [vmem:[%s5336 + $0x310] sm:$0xff]
    %v5436 = vld [vmem:[%s5336 + $0x318] sm:$0x3]
    %v5437 = vld [vmem:[%s5336 + $0x320] sm:$0xff]
    %v5438 = vld [vmem:[%s5336 + $0x328] sm:$0xff]
    %v5439 = vld [vmem:[%s5336 + $0x330] sm:$0xff]
    %v5440 = vld [vmem:[%s5336 + $0x338] sm:$0xff]
    %v5441 = vld [vmem:[%s5336 + $0x340] sm:$0x3]
    %v5442 = vld [vmem:[%s5336 + $0x348] sm:$0xff]
    %v5443 = vld [vmem:[%s5336 + $0x350] sm:$0xff]
    %v5444 = vld [vmem:[%s5336 + $0x358] sm:$0xff]
    %v5445 = vld [vmem:[%s5336 + $0x360] sm:$0xff]
    %v5446 = vld [vmem:[%s5336 + $0x368] sm:$0x3]
    %v5447 = vld [vmem:[%s5336 + $0x370] sm:$0xff]
    %v5448 = vld [vmem:[%s5336 + $0x378] sm:$0xff]
    %v5449 = vld [vmem:[%s5336 + $0x380] sm:$0xff]
    %v5450 = vld [vmem:[%s5336 + $0x388] sm:$0xff]
    %v5451 = vld [vmem:[%s5336 + $0x390] sm:$0x3]
    %v5452 = vld [vmem:[%s5336 + $0x398] sm:$0xff]
    %v5453 = vld [vmem:[%s5336 + $0x3a0] sm:$0xff]
    %v5454 = vld [vmem:[%s5336 + $0x3a8] sm:$0xff]
    %v5455 = vld [vmem:[%s5336 + $0x3b0] sm:$0xff]
    %v5456 = vld [vmem:[%s5336 + $0x3b8] sm:$0x3]
    %v5461 = vunpack.c.l.b16 %v5240
    %v5462 = vunpack.c.l.b16 %v5241
    %v5463 = vunpack.c.l.b16 %v5242
    %v5464 = vunpack.c.l.b16 %v5243
    %v5465 = vpack.c.b16 %v5462, %v5461
    %v5466 = vpack.c.b16 %v5464, %v5463
    %v5470 = vsel %vm177, %v5236, 0
    %v5473 = vsel %vm177, %v5237, 0
    %v5476 = vsel %vm177, %v5238, 0
    %5478 = vmatprep.subr.bf16.mxu0 0
    %5479 = vmatpush1.bf16.msra.mxu0 %v5465
    %5480 = vmatprep.subr.bf16.mxu0 0
    %5481 = vmatpush1.bf16.msra.mxu0 %v5466
    %5482 = vmatprep.subr.bf16.mxu0 0
    %5483 = vmatpush1.bf16.msra.mxu0 0
    %5484 = vmatprep.subr.bf16.mxu0 0
    %5485 = vmatpush1.bf16.msra.mxu0 0
    %5486 = vmatprep.subr.bf16.mxu0 0
    %5487 = vmatpush1.bf16.msra.mxu0 0
    %5488 = vmatprep.subr.bf16.mxu0 0
    %5489 = vmatpush1.bf16.msra.mxu0 0
    %5490 = vmatprep.subr.bf16.mxu0 0
    %5491 = vmatpush1.bf16.msra.mxu0 0
    %5492 = vmatprep.subr.bf16.mxu0 0
    %5493 = vmatpush1.bf16.msra.mxu0 0
    %5494 = vmatprep.subr.bf16.mxu0 0
    %5495 = vmatpush1.bf16.msra.mxu0 0
    %5496 = vmatprep.subr.bf16.mxu0 0
    %5497 = vmatpush1.bf16.msra.mxu0 0
    %5498 = vmatprep.subr.bf16.mxu0 0
    %5499 = vmatpush1.bf16.msra.mxu0 0
    %5500 = vmatprep.subr.bf16.mxu0 0
    %5501 = vmatpush1.bf16.msra.mxu0 0
    %5502 = vmatprep.subr.bf16.mxu0 0
    %5503 = vmatpush1.bf16.msra.mxu0 0
    %5504 = vmatprep.subr.bf16.mxu0 0
    %5505 = vmatpush1.bf16.msra.mxu0 0
    %5506 = vmatprep.subr.bf16.mxu0 0
    %5507 = vmatpush1.bf16.msra.mxu0 0
    %5508 = vmatprep.subr.bf16.mxu0 0
    %5509 = vmatpush1.bf16.msra.mxu0 0
    %5510 = vmatprep.mubr.bf16.mxu0 0
    %5511 = vmatmul.mubr.bf16.gmra.mrb[0].mxu0 %v5470
    %v5512 = vpop.f32.mrb[0].mxu0
    %v5513 = vadd.f32 %v5337, %v5512
    %v5514 = vpop.f32.mrb[0].mxu0
    %v5515 = vpop.f32.mrb[0].mxu0
    %v5516 = vadd.f32 %v5338, %v5515
    %v5517 = vpop.f32.mrb[0].mxu0
    %5518 = vmatprep.mubr.bf16.mxu0 0
    %5519 = vmatmul.mubr.bf16.gmra.mrb[0].mxu0 %v5473
    %v5520 = vpop.f32.mrb[0].mxu0
    %v5521 = vadd.f32 %v5339, %v5520
    %v5522 = vpop.f32.mrb[0].mxu0
    %v5523 = vpop.f32.mrb[0].mxu0
    %v5524 = vadd.f32 %v5340, %v5523
    %v5525 = vpop.f32.mrb[0].mxu0
    %5526 = vmatprep.mubr.bf16.mxu0 0
    %5527 = vmatmul.mubr.bf16.gmra.mrb[0].mxu0 %v5476
    %v5528 = vpop.f32.mrb[0].mxu0
    %v5529 = vadd.f32 %v5341, %v5528
    %v5530 = vpop.f32.mrb[0].mxu0
    %v5531 = vpop.f32.mrb[0].mxu0
    %v5532 = vpop.f32.mrb[0].mxu0
    %5533 = vdwg.mxu0
    %v5538 = vunpack.c.l.b16 %v5244
    %v5539 = vunpack.c.l.b16 %v5245
    %v5540 = vunpack.c.l.b16 %v5246
    %v5541 = vunpack.c.l.b16 %v5247
    %v5542 = vpack.c.b16 %v5539, %v5538
    %v5543 = vpack.c.b16 %v5541, %v5540
    %5546 = vmatprep.subr.bf16.mxu0 0
    %5547 = vmatpush1.bf16.msra.mxu0 %v5542
    %5548 = vmatprep.subr.bf16.mxu0 0
    %5549 = vmatpush1.bf16.msra.mxu0 %v5543
    %5550 = vmatprep.subr.bf16.mxu0 0
    %5551 = vmatpush1.bf16.msra.mxu0 0
    %5552 = vmatprep.subr.bf16.mxu0 0
    %5553 = vmatpush1.bf16.msra.mxu0 0
    %5554 = vmatprep.subr.bf16.mxu0 0
    %5555 = vmatpush1.bf16.msra.mxu0 0
    %5556 = vmatprep.subr.bf16.mxu0 0
    %5557 = vmatpush1.bf16.msra.mxu0 0
    %5558 = vmatprep.subr.bf16.mxu0 0
    %5559 = vmatpush1.bf16.msra.mxu0 0
    %5560 = vmatprep.subr.bf16.mxu0 0
    %5561 = vmatpush1.bf16.msra.mxu0 0
    %5562 = vmatprep.subr.bf16.mxu0 0
    %5563 = vmatpush1.bf16.msra.mxu0 0
    %5564 = vmatprep.subr.bf16.mxu0 0
    %5565 = vmatpush1.bf16.msra.mxu0 0
    %5566 = vmatprep.subr.bf16.mxu0 0
    %5567 = vmatpush1.bf16.msra.mxu0 0
    %5568 = vmatprep.subr.bf16.mxu0 0
    %5569 = vmatpush1.bf16.msra.mxu0 0
    %5570 = vmatprep.subr.bf16.mxu0 0
    %5571 = vmatpush1.bf16.msra.mxu0 0
    %5572 = vmatprep.subr.bf16.mxu0 0
    %5573 = vmatpush1.bf16.msra.mxu0 0
    %5574 = vmatprep.subr.bf16.mxu0 0
    %5575 = vmatpush1.bf16.msra.mxu0 0
    %5576 = vmatprep.subr.bf16.mxu0 0
    %5577 = vmatpush1.bf16.msra.mxu0 0
    %5578 = vmatprep.mubr.bf16.mxu0 0
    %5579 = vmatmul.mubr.bf16.gmra.mrb[0].mxu0 %v5470
    %v5580 = vpop.f32.mrb[0].mxu0
    %v5581 = vadd.f32 %v5342, %v5580
    %v5582 = vpop.f32.mrb[0].mxu0
    %v5583 = vpop.f32.mrb[0].mxu0
    %v5584 = vadd.f32 %v5343, %v5583
    %v5585 = vpop.f32.mrb[0].mxu0
    %5586 = vmatprep.mubr.bf16.mxu0 0
    %5587 = vmatmul.mubr.bf16.gmra.mrb[0].mxu0 %v5473
    %v5588 = vpop.f32.mrb[0].mxu0
    %v5589 = vadd.f32 %v5344, %v5588
    %v5590 = vpop.f32.mrb[0].mxu0
    %v5591 = vpop.f32.mrb[0].mxu0
    %v5592 = vadd.f32 %v5345, %v5591
    %v5593 = vpop.f32.mrb[0].mxu0
    %5594 = vmatprep.mubr.bf16.mxu0 0
    %5595 = vmatmul.mubr.bf16.gmra.mrb[0].mxu0 %v5476
    %v5596 = vpop.f32.mrb[0].mxu0
    %v5597 = vadd.f32 %v5346, %v5596
    %v5598 = vpop.f32.mrb[0].mxu0
    %v5599 = vpop.f32.mrb[0].mxu0
    %v5600 = vpop.f32.mrb[0].mxu0
    %5601 = vdwg.mxu0
    %v5606 = vunpack.c.l.b16 %v5248
    %v5607 = vunpack.c.l.b16 %v5249
    %v5608 = vunpack.c.l.b16 %v5250
    %v5609 = vunpack.c.l.b16 %v5251
    %v5610 = vpack.c.b16 %v5607, %v5606
    %v5611 = vpack.c.b16 %v5609, %v5608
    %5614 = vmatprep.subr.bf16.mxu0 0
    %5615 = vmatpush1.bf16.msra.mxu0 %v5610
    %5616 = vmatprep.subr.bf16.mxu0 0
    %5617 = vmatpush1.bf16.msra.mxu0 %v5611
    %5618 = vmatprep.subr.bf16.mxu0 0
    %5619 = vmatpush1.bf16.msra.mxu0 0
    %5620 = vmatprep.subr.bf16.mxu0 0
    %5621 = vmatpush1.bf16.msra.mxu0 0
    %5622 = vmatprep.subr.bf16.mxu0 0
    %5623 = vmatpush1.bf16.msra.mxu0 0
    %5624 = vmatprep.subr.bf16.mxu0 0
    %5625 = vmatpush1.bf16.msra.mxu0 0
    %5626 = vmatprep.subr.bf16.mxu0 0
    %5627 = vmatpush1.bf16.msra.mxu0 0
    %5628 = vmatprep.subr.bf16.mxu0 0
    %5629 = vmatpush1.bf16.msra.mxu0 0
    %5630 = vmatprep.subr.bf16.mxu0 0
    %5631 = vmatpush1.bf16.msra.mxu0 0
    %5632 = vmatprep.subr.bf16.mxu0 0
    %5633 = vmatpush1.bf16.msra.mxu0 0
    %5634 = vmatprep.subr.bf16.mxu0 0
    %5635 = vmatpush1.bf16.msra.mxu0 0
    %5636 = vmatprep.subr.bf16.mxu0 0
    %5637 = vmatpush1.bf16.msra.mxu0 0
    %5638 = vmatprep.subr.bf16.mxu0 0
    %5639 = vmatpush1.bf16.msra.mxu0 0
    %5640 = vmatprep.subr.bf16.mxu0 0
    %5641 = vmatpush1.bf16.msra.mxu0 0
    %5642 = vmatprep.subr.bf16.mxu0 0
    %5643 = vmatpush1.bf16.msra.mxu0 0
    %5644 = vmatprep.subr.bf16.mxu0 0
    %5645 = vmatpush1.bf16.msra.mxu0 0
    %5646 = vmatprep.mubr.bf16.mxu0 0
    %5647 = vmatmul.mubr.bf16.gmra.mrb[0].mxu0 %v5470
    %v5648 = vpop.f32.mrb[0].mxu0
    %v5649 = vadd.f32 %v5347, %v5648
    %v5650 = vpop.f32.mrb[0].mxu0
    %v5651 = vpop.f32.mrb[0].mxu0
    %v5652 = vadd.f32 %v5348, %v5651
    %v5653 = vpop.f32.mrb[0].mxu0
    %5654 = vmatprep.mubr.bf16.mxu0 0
    %5655 = vmatmul.mubr.bf16.gmra.mrb[0].mxu0 %v5473
    %v5656 = vpop.f32.mrb[0].mxu0
    %v5657 = vadd.f32 %v5349, %v5656
    %v5658 = vpop.f32.mrb[0].mxu0
    %v5659 = vpop.f32.mrb[0].mxu0
    %v5660 = vadd.f32 %v5350, %v5659
    %v5661 = vpop.f32.mrb[0].mxu0
    %5662 = vmatprep.mubr.bf16.mxu0 0
    %5663 = vmatmul.mubr.bf16.gmra.mrb[0].mxu0 %v5476
    %v5664 = vpop.f32.mrb[0].mxu0
    %v5665 = vadd.f32 %v5351, %v5664
    %v5666 = vpop.f32.mrb[0].mxu0
    %v5667 = vpop.f32.mrb[0].mxu0
    %v5668 = vpop.f32.mrb[0].mxu0
    %5669 = vdwg.mxu0
    %v5674 = vunpack.c.l.b16 %v5252
    %v5675 = vunpack.c.l.b16 %v5253
    %v5676 = vunpack.c.l.b16 %v5254
    %v5677 = vunpack.c.l.b16 %v5255
    %v5678 = vpack.c.b16 %v5675, %v5674
    %v5679 = vpack.c.b16 %v5677, %v5676
    %5682 = vmatprep.subr.bf16.mxu0 0
    %5683 = vmatpush1.bf16.msra.mxu0 %v5678
    %5684 = vmatprep.subr.bf16.mxu0 0
    %5685 = vmatpush1.bf16.msra.mxu0 %v5679
    %5686 = vmatprep.subr.bf16.mxu0 0
    %5687 = vmatpush1.bf16.msra.mxu0 0
    %5688 = vmatprep.subr.bf16.mxu0 0
    %5689 = vmatpush1.bf16.msra.mxu0 0
    %5690 = vmatprep.subr.bf16.mxu0 0
    %5691 = vmatpush1.bf16.msra.mxu0 0
    %5692 = vmatprep.subr.bf16.mxu0 0
    %5693 = vmatpush1.bf16.msra.mxu0 0
    %5694 = vmatprep.subr.bf16.mxu0 0
    %5695 = vmatpush1.bf16.msra.mxu0 0
    %5696 = vmatprep.subr.bf16.mxu0 0
    %5697 = vmatpush1.bf16.msra.mxu0 0
    %5698 = vmatprep.subr.bf16.mxu0 0
    %5699 = vmatpush1.bf16.msra.mxu0 0
    %5700 = vmatprep.subr.bf16.mxu0 0
    %5701 = vmatpush1.bf16.msra.mxu0 0
    %5702 = vmatprep.subr.bf16.mxu0 0
    %5703 = vmatpush1.bf16.msra.mxu0 0
    %5704 = vmatprep.subr.bf16.mxu0 0
    %5705 = vmatpush1.bf16.msra.mxu0 0
    %5706 = vmatprep.subr.bf16.mxu0 0
    %5707 = vmatpush1.bf16.msra.mxu0 0
    %5708 = vmatprep.subr.bf16.mxu0 0
    %5709 = vmatpush1.bf16.msra.mxu0 0
    %5710 = vmatprep.subr.bf16.mxu0 0
    %5711 = vmatpush1.bf16.msra.mxu0 0
    %5712 = vmatprep.subr.bf16.mxu0 0
    %5713 = vmatpush1.bf16.msra.mxu0 0
    %5714 = vmatprep.mubr.bf16.mxu0 0
    %5715 = vmatmul.mubr.bf16.gmra.mrb[0].mxu0 %v5470
    %v5716 = vpop.f32.mrb[0].mxu0
    %v5717 = vadd.f32 %v5352, %v5716
    %v5718 = vpop.f32.mrb[0].mxu0
    %v5719 = vpop.f32.mrb[0].mxu0
    %v5720 = vadd.f32 %v5353, %v5719
    %v5721 = vpop.f32.mrb[0].mxu0
    %5722 = vmatprep.mubr.bf16.mxu0 0
    %5723 = vmatmul.mubr.bf16.gmra.mrb[0].mxu0 %v5473
    %v5724 = vpop.f32.mrb[0].mxu0
    %v5725 = vadd.f32 %v5354, %v5724
    %v5726 = vpop.f32.mrb[0].mxu0
    %v5727 = vpop.f32.mrb[0].mxu0
    %v5728 = vadd.f32 %v5355, %v5727
    %v5729 = vpop.f32.mrb[0].mxu0
    %5730 = vmatprep.mubr.bf16.mxu0 0
    %5731 = vmatmul.mubr.bf16.gmra.mrb[0].mxu0 %v5476
    %v5732 = vpop.f32.mrb[0].mxu0
    %v5733 = vadd.f32 %v5356, %v5732
    %v5734 = vpop.f32.mrb[0].mxu0
    %v5735 = vpop.f32.mrb[0].mxu0
    %v5736 = vpop.f32.mrb[0].mxu0
    %5737 = vdwg.mxu0
    %v5742 = vunpack.c.l.b16 %v5256
    %v5743 = vunpack.c.l.b16 %v5257
    %v5744 = vunpack.c.l.b16 %v5258
    %v5745 = vunpack.c.l.b16 %v5259
    %v5746 = vpack.c.b16 %v5743, %v5742
    %v5747 = vpack.c.b16 %v5745, %v5744
    %5750 = vmatprep.subr.bf16.mxu0 0
    %5751 = vmatpush1.bf16.msra.mxu0 %v5746
    %5752 = vmatprep.subr.bf16.mxu0 0
    %5753 = vmatpush1.bf16.msra.mxu0 %v5747
    %5754 = vmatprep.subr.bf16.mxu0 0
    %5755 = vmatpush1.bf16.msra.mxu0 0
    %5756 = vmatprep.subr.bf16.mxu0 0
    %5757 = vmatpush1.bf16.msra.mxu0 0
    %5758 = vmatprep.subr.bf16.mxu0 0
    %5759 = vmatpush1.bf16.msra.mxu0 0
    %5760 = vmatprep.subr.bf16.mxu0 0
    %5761 = vmatpush1.bf16.msra.mxu0 0
    %5762 = vmatprep.subr.bf16.mxu0 0
    %5763 = vmatpush1.bf16.msra.mxu0 0
    %5764 = vmatprep.subr.bf16.mxu0 0
    %5765 = vmatpush1.bf16.msra.mxu0 0
    %5766 = vmatprep.subr.bf16.mxu0 0
    %5767 = vmatpush1.bf16.msra.mxu0 0
    %5768 = vmatprep.subr.bf16.mxu0 0
    %5769 = vmatpush1.bf16.msra.mxu0 0
    %5770 = vmatprep.subr.bf16.mxu0 0
    %5771 = vmatpush1.bf16.msra.mxu0 0
    %5772 = vmatprep.subr.bf16.mxu0 0
    %5773 = vmatpush1.bf16.msra.mxu0 0
    %5774 = vmatprep.subr.bf16.mxu0 0
    %5775 = vmatpush1.bf16.msra.mxu0 0
    %5776 = vmatprep.subr.bf16.mxu0 0
    %5777 = vmatpush1.bf16.msra.mxu0 0
    %5778 = vmatprep.subr.bf16.mxu0 0
    %5779 = vmatpush1.bf16.msra.mxu0 0
    %5780 = vmatprep.subr.bf16.mxu0 0
    %5781 = vmatpush1.bf16.msra.mxu0 0
    %5782 = vmatprep.mubr.bf16.mxu0 0
    %5783 = vmatmul.mubr.bf16.gmra.mrb[0].mxu0 %v5470
    %v5784 = vpop.f32.mrb[0].mxu0
    %v5785 = vadd.f32 %v5357, %v5784
    %v5786 = vpop.f32.mrb[0].mxu0
    %v5787 = vpop.f32.mrb[0].mxu0
    %v5788 = vadd.f32 %v5358, %v5787
    %v5789 = vpop.f32.mrb[0].mxu0
    %5790 = vmatprep.mubr.bf16.mxu0 0
    %5791 = vmatmul.mubr.bf16.gmra.mrb[0].mxu0 %v5473
    %v5792 = vpop.f32.mrb[0].mxu0
    %v5793 = vadd.f32 %v5359, %v5792
    %v5794 = vpop.f32.mrb[0].mxu0
    %v5795 = vpop.f32.mrb[0].mxu0
    %v5796 = vadd.f32 %v5360, %v5795
    %v5797 = vpop.f32.mrb[0].mxu0
    %5798 = vmatprep.mubr.bf16.mxu0 0
    %5799 = vmatmul.mubr.bf16.gmra.mrb[0].mxu0 %v5476
    %v5800 = vpop.f32.mrb[0].mxu0
    %v5801 = vadd.f32 %v5361, %v5800
    %v5802 = vpop.f32.mrb[0].mxu0
    %v5803 = vpop.f32.mrb[0].mxu0
    %v5804 = vpop.f32.mrb[0].mxu0
    %5805 = vdwg.mxu0
    %v5810 = vunpack.c.l.b16 %v5260
    %v5811 = vunpack.c.l.b16 %v5261
    %v5812 = vunpack.c.l.b16 %v5262
    %v5813 = vunpack.c.l.b16 %v5263
    %v5814 = vpack.c.b16 %v5811, %v5810
    %v5815 = vpack.c.b16 %v5813, %v5812
    %5818 = vmatprep.subr.bf16.mxu0 0
    %5819 = vmatpush1.bf16.msra.mxu0 %v5814
    %5820 = vmatprep.subr.bf16.mxu0 0
    %5821 = vmatpush1.bf16.msra.mxu0 %v5815
    %5822 = vmatprep.subr.bf16.mxu0 0
    %5823 = vmatpush1.bf16.msra.mxu0 0
    %5824 = vmatprep.subr.bf16.mxu0 0
    %5825 = vmatpush1.bf16.msra.mxu0 0
    %5826 = vmatprep.subr.bf16.mxu0 0
    %5827 = vmatpush1.bf16.msra.mxu0 0
    %5828 = vmatprep.subr.bf16.mxu0 0
    %5829 = vmatpush1.bf16.msra.mxu0 0
    %5830 = vmatprep.subr.bf16.mxu0 0
    %5831 = vmatpush1.bf16.msra.mxu0 0
    %5832 = vmatprep.subr.bf16.mxu0 0
    %5833 = vmatpush1.bf16.msra.mxu0 0
    %5834 = vmatprep.subr.bf16.mxu0 0
    %5835 = vmatpush1.bf16.msra.mxu0 0
    %5836 = vmatprep.subr.bf16.mxu0 0
    %5837 = vmatpush1.bf16.msra.mxu0 0
    %5838 = vmatprep.subr.bf16.mxu0 0
    %5839 = vmatpush1.bf16.msra.mxu0 0
    %5840 = vmatprep.subr.bf16.mxu0 0
    %5841 = vmatpush1.bf16.msra.mxu0 0
    %5842 = vmatprep.subr.bf16.mxu0 0
    %5843 = vmatpush1.bf16.msra.mxu0 0
    %5844 = vmatprep.subr.bf16.mxu0 0
    %5845 = vmatpush1.bf16.msra.mxu0 0
    %5846 = vmatprep.subr.bf16.mxu0 0
    %5847 = vmatpush1.bf16.msra.mxu0 0
    %5848 = vmatprep.subr.bf16.mxu0 0
    %5849 = vmatpush1.bf16.msra.mxu0 0
    %5850 = vmatprep.mubr.bf16.mxu0 0
    %5851 = vmatmul.mubr.bf16.gmra.mrb[0].mxu0 %v5470
    %v5852 = vpop.f32.mrb[0].mxu0
    %v5853 = vadd.f32 %v5362, %v5852
    %v5854 = vpop.f32.mrb[0].mxu0
    %v5855 = vpop.f32.mrb[0].mxu0
    %v5856 = vadd.f32 %v5363, %v5855
    %v5857 = vpop.f32.mrb[0].mxu0
    %5858 = vmatprep.mubr.bf16.mxu0 0
    %5859 = vmatmul.mubr.bf16.gmra.mrb[0].mxu0 %v5473
    %v5860 = vpop.f32.mrb[0].mxu0
    %v5861 = vadd.f32 %v5364, %v5860
    %v5862 = vpop.f32.mrb[0].mxu0
    %v5863 = vpop.f32.mrb[0].mxu0
    %v5864 = vadd.f32 %v5365, %v5863
    %v5865 = vpop.f32.mrb[0].mxu0
    %5866 = vmatprep.mubr.bf16.mxu0 0
    %5867 = vmatmul.mubr.bf16.gmra.mrb[0].mxu0 %v5476
    %v5868 = vpop.f32.mrb[0].mxu0
    %v5869 = vadd.f32 %v5366, %v5868
    %v5870 = vpop.f32.mrb[0].mxu0
    %v5871 = vpop.f32.mrb[0].mxu0
    %v5872 = vpop.f32.mrb[0].mxu0
    %5873 = vdwg.mxu0
    %v5878 = vunpack.c.l.b16 %v5264
    %v5879 = vunpack.c.l.b16 %v5265
    %v5880 = vunpack.c.l.b16 %v5266
    %v5881 = vunpack.c.l.b16 %v5267
    %v5882 = vpack.c.b16 %v5879, %v5878
    %v5883 = vpack.c.b16 %v5881, %v5880
    %5886 = vmatprep.subr.bf16.mxu0 0
    %5887 = vmatpush1.bf16.msra.mxu0 %v5882
    %5888 = vmatprep.subr.bf16.mxu0 0
    %5889 = vmatpush1.bf16.msra.mxu0 %v5883
    %5890 = vmatprep.subr.bf16.mxu0 0
    %5891 = vmatpush1.bf16.msra.mxu0 0
    %5892 = vmatprep.subr.bf16.mxu0 0
    %5893 = vmatpush1.bf16.msra.mxu0 0
    %5894 = vmatprep.subr.bf16.mxu0 0
    %5895 = vmatpush1.bf16.msra.mxu0 0
    %5896 = vmatprep.subr.bf16.mxu0 0
    %5897 = vmatpush1.bf16.msra.mxu0 0
    %5898 = vmatprep.subr.bf16.mxu0 0
    %5899 = vmatpush1.bf16.msra.mxu0 0
    %5900 = vmatprep.subr.bf16.mxu0 0
    %5901 = vmatpush1.bf16.msra.mxu0 0
    %5902 = vmatprep.subr.bf16.mxu0 0
    %5903 = vmatpush1.bf16.msra.mxu0 0
    %5904 = vmatprep.subr.bf16.mxu0 0
    %5905 = vmatpush1.bf16.msra.mxu0 0
    %5906 = vmatprep.subr.bf16.mxu0 0
    %5907 = vmatpush1.bf16.msra.mxu0 0
    %5908 = vmatprep.subr.bf16.mxu0 0
    %5909 = vmatpush1.bf16.msra.mxu0 0
    %5910 = vmatprep.subr.bf16.mxu0 0
    %5911 = vmatpush1.bf16.msra.mxu0 0
    %5912 = vmatprep.subr.bf16.mxu0 0
    %5913 = vmatpush1.bf16.msra.mxu0 0
    %5914 = vmatprep.subr.bf16.mxu0 0
    %5915 = vmatpush1.bf16.msra.mxu0 0
    %5916 = vmatprep.subr.bf16.mxu0 0
    %5917 = vmatpush1.bf16.msra.mxu0 0
    %5918 = vmatprep.mubr.bf16.mxu0 0
    %5919 = vmatmul.mubr.bf16.gmra.mrb[0].mxu0 %v5470
    %v5920 = vpop.f32.mrb[0].mxu0
    %v5921 = vadd.f32 %v5367, %v5920
    %v5922 = vpop.f32.mrb[0].mxu0
    %v5923 = vpop.f32.mrb[0].mxu0
    %v5924 = vadd.f32 %v5368, %v5923
    %v5925 = vpop.f32.mrb[0].mxu0
    %5926 = vmatprep.mubr.bf16.mxu0 0
    %5927 = vmatmul.mubr.bf16.gmra.mrb[0].mxu0 %v5473
    %v5928 = vpop.f32.mrb[0].mxu0
    %v5929 = vadd.f32 %v5369, %v5928
    %v5930 = vpop.f32.mrb[0].mxu0
    %v5931 = vpop.f32.mrb[0].mxu0
    %v5932 = vadd.f32 %v5370, %v5931
    %v5933 = vpop.f32.mrb[0].mxu0
    %5934 = vmatprep.mubr.bf16.mxu0 0
    %5935 = vmatmul.mubr.bf16.gmra.mrb[0].mxu0 %v5476
    %v5936 = vpop.f32.mrb[0].mxu0
    %v5937 = vadd.f32 %v5371, %v5936
    %v5938 = vpop.f32.mrb[0].mxu0
    %v5939 = vpop.f32.mrb[0].mxu0
    %v5940 = vpop.f32.mrb[0].mxu0
    %5941 = vdwg.mxu0
    %v5946 = vunpack.c.l.b16 %v5268
    %v5947 = vunpack.c.l.b16 %v5269
    %v5948 = vunpack.c.l.b16 %v5270
    %v5949 = vunpack.c.l.b16 %v5271
    %v5950 = vpack.c.b16 %v5947, %v5946
    %v5951 = vpack.c.b16 %v5949, %v5948
    %5954 = vmatprep.subr.bf16.mxu0 0
    %5955 = vmatpush1.bf16.msra.mxu0 %v5950
    %5956 = vmatprep.subr.bf16.mxu0 0
    %5957 = vmatpush1.bf16.msra.mxu0 %v5951
    %5958 = vmatprep.subr.bf16.mxu0 0
    %5959 = vmatpush1.bf16.msra.mxu0 0
    %5960 = vmatprep.subr.bf16.mxu0 0
    %5961 = vmatpush1.bf16.msra.mxu0 0
    %5962 = vmatprep.subr.bf16.mxu0 0
    %5963 = vmatpush1.bf16.msra.mxu0 0
    %5964 = vmatprep.subr.bf16.mxu0 0
    %5965 = vmatpush1.bf16.msra.mxu0 0
    %5966 = vmatprep.subr.bf16.mxu0 0
    %5967 = vmatpush1.bf16.msra.mxu0 0
    %5968 = vmatprep.subr.bf16.mxu0 0
    %5969 = vmatpush1.bf16.msra.mxu0 0
    %5970 = vmatprep.subr.bf16.mxu0 0
    %5971 = vmatpush1.bf16.msra.mxu0 0
    %5972 = vmatprep.subr.bf16.mxu0 0
    %5973 = vmatpush1.bf16.msra.mxu0 0
    %5974 = vmatprep.subr.bf16.mxu0 0
    %5975 = vmatpush1.bf16.msra.mxu0 0
    %5976 = vmatprep.subr.bf16.mxu0 0
    %5977 = vmatpush1.bf16.msra.mxu0 0
    %5978 = vmatprep.subr.bf16.mxu0 0
    %5979 = vmatpush1.bf16.msra.mxu0 0
    %5980 = vmatprep.subr.bf16.mxu0 0
    %5981 = vmatpush1.bf16.msra.mxu0 0
    %5982 = vmatprep.subr.bf16.mxu0 0
    %5983 = vmatpush1.bf16.msra.mxu0 0
    %5984 = vmatprep.subr.bf16.mxu0 0
    %5985 = vmatpush1.bf16.msra.mxu0 0
    %5986 = vmatprep.mubr.bf16.mxu0 0
    %5987 = vmatmul.mubr.bf16.gmra.mrb[0].mxu0 %v5470
    %v5988 = vpop.f32.mrb[0].mxu0
    %v5989 = vadd.f32 %v5372, %v5988
    %v5990 = vpop.f32.mrb[0].mxu0
    %v5991 = vpop.f32.mrb[0].mxu0
    %v5992 = vadd.f32 %v5373, %v5991
    %v5993 = vpop.f32.mrb[0].mxu0
    %5994 = vmatprep.mubr.bf16.mxu0 0
    %5995 = vmatmul.mubr.bf16.gmra.mrb[0].mxu0 %v5473
    %v5996 = vpop.f32.mrb[0].mxu0
    %v5997 = vadd.f32 %v5374, %v5996
    %v5998 = vpop.f32.mrb[0].mxu0
    %v5999 = vpop.f32.mrb[0].mxu0
    %v6000 = vadd.f32 %v5375, %v5999
    %v6001 = vpop.f32.mrb[0].mxu0
    %6002 = vmatprep.mubr.bf16.mxu0 0
    %6003 = vmatmul.mubr.bf16.gmra.mrb[0].mxu0 %v5476
    %v6004 = vpop.f32.mrb[0].mxu0
    %v6005 = vadd.f32 %v5376, %v6004
    %v6006 = vpop.f32.mrb[0].mxu0
    %v6007 = vpop.f32.mrb[0].mxu0
    %v6008 = vpop.f32.mrb[0].mxu0
    %6009 = vdwg.mxu0
    %v6014 = vunpack.c.l.b16 %v5272
    %v6015 = vunpack.c.l.b16 %v5273
    %v6016 = vunpack.c.l.b16 %v5274
    %v6017 = vunpack.c.l.b16 %v5275
    %v6018 = vpack.c.b16 %v6015, %v6014
    %v6019 = vpack.c.b16 %v6017, %v6016
    %6022 = vmatprep.subr.bf16.mxu0 0
    %6023 = vmatpush1.bf16.msra.mxu0 %v6018
    %6024 = vmatprep.subr.bf16.mxu0 0
    %6025 = vmatpush1.bf16.msra.mxu0 %v6019
    %6026 = vmatprep.subr.bf16.mxu0 0
    %6027 = vmatpush1.bf16.msra.mxu0 0
    %6028 = vmatprep.subr.bf16.mxu0 0
    %6029 = vmatpush1.bf16.msra.mxu0 0
    %6030 = vmatprep.subr.bf16.mxu0 0
    %6031 = vmatpush1.bf16.msra.mxu0 0
    %6032 = vmatprep.subr.bf16.mxu0 0
    %6033 = vmatpush1.bf16.msra.mxu0 0
    %6034 = vmatprep.subr.bf16.mxu0 0
    %6035 = vmatpush1.bf16.msra.mxu0 0
    %6036 = vmatprep.subr.bf16.mxu0 0
    %6037 = vmatpush1.bf16.msra.mxu0 0
    %6038 = vmatprep.subr.bf16.mxu0 0
    %6039 = vmatpush1.bf16.msra.mxu0 0
    %6040 = vmatprep.subr.bf16.mxu0 0
    %6041 = vmatpush1.bf16.msra.mxu0 0
    %6042 = vmatprep.subr.bf16.mxu0 0
    %6043 = vmatpush1.bf16.msra.mxu0 0
    %6044 = vmatprep.subr.bf16.mxu0 0
    %6045 = vmatpush1.bf16.msra.mxu0 0
    %6046 = vmatprep.subr.bf16.mxu0 0
    %6047 = vmatpush1.bf16.msra.mxu0 0
    %6048 = vmatprep.subr.bf16.mxu0 0
    %6049 = vmatpush1.bf16.msra.mxu0 0
    %6050 = vmatprep.subr.bf16.mxu0 0
    %6051 = vmatpush1.bf16.msra.mxu0 0
    %6052 = vmatprep.subr.bf16.mxu0 0
    %6053 = vmatpush1.bf16.msra.mxu0 0
    %6054 = vmatprep.mubr.bf16.mxu0 0
    %6055 = vmatmul.mubr.bf16.gmra.mrb[0].mxu0 %v5470
    %v6056 = vpop.f32.mrb[0].mxu0
    %v6057 = vadd.f32 %v5377, %v6056
    %v6058 = vpop.f32.mrb[0].mxu0
    %v6059 = vpop.f32.mrb[0].mxu0
    %v6060 = vadd.f32 %v5378, %v6059
    %v6061 = vpop.f32.mrb[0].mxu0
    %6062 = vmatprep.mubr.bf16.mxu0 0
    %6063 = vmatmul.mubr.bf16.gmra.mrb[0].mxu0 %v5473
    %v6064 = vpop.f32.mrb[0].mxu0
    %v6065 = vadd.f32 %v5379, %v6064
    %v6066 = vpop.f32.mrb[0].mxu0
    %v6067 = vpop.f32.mrb[0].mxu0
    %v6068 = vadd.f32 %v5380, %v6067
    %v6069 = vpop.f32.mrb[0].mxu0
    %6070 = vmatprep.mubr.bf16.mxu0 0
    %6071 = vmatmul.mubr.bf16.gmra.mrb[0].mxu0 %v5476
    %v6072 = vpop.f32.mrb[0].mxu0
    %v6073 = vadd.f32 %v5381, %v6072
    %v6074 = vpop.f32.mrb[0].mxu0
    %v6075 = vpop.f32.mrb[0].mxu0
    %v6076 = vpop.f32.mrb[0].mxu0
    %6077 = vdwg.mxu0
    %v6082 = vunpack.c.l.b16 %v5276
    %v6083 = vunpack.c.l.b16 %v5277
    %v6084 = vunpack.c.l.b16 %v5278
    %v6085 = vunpack.c.l.b16 %v5279
    %v6086 = vpack.c.b16 %v6083, %v6082
    %v6087 = vpack.c.b16 %v6085, %v6084
    %6090 = vmatprep.subr.bf16.mxu0 0
    %6091 = vmatpush1.bf16.msra.mxu0 %v6086
    %6092 = vmatprep.subr.bf16.mxu0 0
    %6093 = vmatpush1.bf16.msra.mxu0 %v6087
    %6094 = vmatprep.subr.bf16.mxu0 0
    %6095 = vmatpush1.bf16.msra.mxu0 0
    %6096 = vmatprep.subr.bf16.mxu0 0
    %6097 = vmatpush1.bf16.msra.mxu0 0
    %6098 = vmatprep.subr.bf16.mxu0 0
    %6099 = vmatpush1.bf16.msra.mxu0 0
    %6100 = vmatprep.subr.bf16.mxu0 0
    %6101 = vmatpush1.bf16.msra.mxu0 0
    %6102 = vmatprep.subr.bf16.mxu0 0
    %6103 = vmatpush1.bf16.msra.mxu0 0
    %6104 = vmatprep.subr.bf16.mxu0 0
    %6105 = vmatpush1.bf16.msra.mxu0 0
    %6106 = vmatprep.subr.bf16.mxu0 0
    %6107 = vmatpush1.bf16.msra.mxu0 0
    %6108 = vmatprep.subr.bf16.mxu0 0
    %6109 = vmatpush1.bf16.msra.mxu0 0
    %6110 = vmatprep.subr.bf16.mxu0 0
    %6111 = vmatpush1.bf16.msra.mxu0 0
    %6112 = vmatprep.subr.bf16.mxu0 0
    %6113 = vmatpush1.bf16.msra.mxu0 0
    %6114 = vmatprep.subr.bf16.mxu0 0
    %6115 = vmatpush1.bf16.msra.mxu0 0
    %6116 = vmatprep.subr.bf16.mxu0 0
    %6117 = vmatpush1.bf16.msra.mxu0 0
    %6118 = vmatprep.subr.bf16.mxu0 0
    %6119 = vmatpush1.bf16.msra.mxu0 0
    %6120 = vmatprep.subr.bf16.mxu0 0
    %6121 = vmatpush1.bf16.msra.mxu0 0
    %6122 = vmatprep.mubr.bf16.mxu0 0
    %6123 = vmatmul.mubr.bf16.gmra.mrb[0].mxu0 %v5470
    %v6124 = vpop.f32.mrb[0].mxu0
    %v6125 = vadd.f32 %v5382, %v6124
    %v6126 = vpop.f32.mrb[0].mxu0
    %v6127 = vpop.f32.mrb[0].mxu0
    %v6128 = vadd.f32 %v5383, %v6127
    %v6129 = vpop.f32.mrb[0].mxu0
    %6130 = vmatprep.mubr.bf16.mxu0 0
    %6131 = vmatmul.mubr.bf16.gmra.mrb[0].mxu0 %v5473
    %v6132 = vpop.f32.mrb[0].mxu0
    %v6133 = vadd.f32 %v5384, %v6132
    %v6134 = vpop.f32.mrb[0].mxu0
    %v6135 = vpop.f32.mrb[0].mxu0
    %v6136 = vadd.f32 %v5385, %v6135
    %v6137 = vpop.f32.mrb[0].mxu0
    %6138 = vmatprep.mubr.bf16.mxu0 0
    %6139 = vmatmul.mubr.bf16.gmra.mrb[0].mxu0 %v5476
    %v6140 = vpop.f32.mrb[0].mxu0
    %v6141 = vadd.f32 %v5386, %v6140
    %v6142 = vpop.f32.mrb[0].mxu0
    %v6143 = vpop.f32.mrb[0].mxu0
    %v6144 = vpop.f32.mrb[0].mxu0
    %6145 = vdwg.mxu0
    %v6150 = vunpack.c.l.b16 %v5280
    %v6151 = vunpack.c.l.b16 %v5281
    %v6152 = vunpack.c.l.b16 %v5282
    %v6153 = vunpack.c.l.b16 %v5283
    %v6154 = vpack.c.b16 %v6151, %v6150
    %v6155 = vpack.c.b16 %v6153, %v6152
    %6158 = vmatprep.subr.bf16.mxu0 0
    %6159 = vmatpush1.bf16.msra.mxu0 %v6154
    %6160 = vmatprep.subr.bf16.mxu0 0
    %6161 = vmatpush1.bf16.msra.mxu0 %v6155
    %6162 = vmatprep.subr.bf16.mxu0 0
    %6163 = vmatpush1.bf16.msra.mxu0 0
    %6164 = vmatprep.subr.bf16.mxu0 0
    %6165 = vmatpush1.bf16.msra.mxu0 0
    %6166 = vmatprep.subr.bf16.mxu0 0
    %6167 = vmatpush1.bf16.msra.mxu0 0
    %6168 = vmatprep.subr.bf16.mxu0 0
    %6169 = vmatpush1.bf16.msra.mxu0 0
    %6170 = vmatprep.subr.bf16.mxu0 0
    %6171 = vmatpush1.bf16.msra.mxu0 0
    %6172 = vmatprep.subr.bf16.mxu0 0
    %6173 = vmatpush1.bf16.msra.mxu0 0
    %6174 = vmatprep.subr.bf16.mxu0 0
    %6175 = vmatpush1.bf16.msra.mxu0 0
    %6176 = vmatprep.subr.bf16.mxu0 0
    %6177 = vmatpush1.bf16.msra.mxu0 0
    %6178 = vmatprep.subr.bf16.mxu0 0
    %6179 = vmatpush1.bf16.msra.mxu0 0
    %6180 = vmatprep.subr.bf16.mxu0 0
    %6181 = vmatpush1.bf16.msra.mxu0 0
    %6182 = vmatprep.subr.bf16.mxu0 0
    %6183 = vmatpush1.bf16.msra.mxu0 0
    %6184 = vmatprep.subr.bf16.mxu0 0
    %6185 = vmatpush1.bf16.msra.mxu0 0
    %6186 = vmatprep.subr.bf16.mxu0 0
    %6187 = vmatpush1.bf16.msra.mxu0 0
    %6188 = vmatprep.subr.bf16.mxu0 0
    %6189 = vmatpush1.bf16.msra.mxu0 0
    %6190 = vmatprep.mubr.bf16.mxu0 0
    %6191 = vmatmul.mubr.bf16.gmra.mrb[0].mxu0 %v5470
    %v6192 = vpop.f32.mrb[0].mxu0
    %v6193 = vadd.f32 %v5387, %v6192
    %v6194 = vpop.f32.mrb[0].mxu0
    %v6195 = vpop.f32.mrb[0].mxu0
    %v6196 = vadd.f32 %v5388, %v6195
    %v6197 = vpop.f32.mrb[0].mxu0
    %6198 = vmatprep.mubr.bf16.mxu0 0
    %6199 = vmatmul.mubr.bf16.gmra.mrb[0].mxu0 %v5473
    %v6200 = vpop.f32.mrb[0].mxu0
    %v6201 = vadd.f32 %v5389, %v6200
    %v6202 = vpop.f32.mrb[0].mxu0
    %v6203 = vpop.f32.mrb[0].mxu0
    %v6204 = vadd.f32 %v5390, %v6203
    %v6205 = vpop.f32.mrb[0].mxu0
    %6206 = vmatprep.mubr.bf16.mxu0 0
    %6207 = vmatmul.mubr.bf16.gmra.mrb[0].mxu0 %v5476
    %v6208 = vpop.f32.mrb[0].mxu0
    %v6209 = vadd.f32 %v5391, %v6208
    %v6210 = vpop.f32.mrb[0].mxu0
    %v6211 = vpop.f32.mrb[0].mxu0
    %v6212 = vpop.f32.mrb[0].mxu0
    %6213 = vdwg.mxu0
    %v6218 = vunpack.c.l.b16 %v5284
    %v6219 = vunpack.c.l.b16 %v5285
    %v6220 = vunpack.c.l.b16 %v5286
    %v6221 = vunpack.c.l.b16 %v5287
    %v6222 = vpack.c.b16 %v6219, %v6218
    %v6223 = vpack.c.b16 %v6221, %v6220
    %6226 = vmatprep.subr.bf16.mxu0 0
    %6227 = vmatpush1.bf16.msra.mxu0 %v6222
    %6228 = vmatprep.subr.bf16.mxu0 0
    %6229 = vmatpush1.bf16.msra.mxu0 %v6223
    %6230 = vmatprep.subr.bf16.mxu0 0
    %6231 = vmatpush1.bf16.msra.mxu0 0
    %6232 = vmatprep.subr.bf16.mxu0 0
    %6233 = vmatpush1.bf16.msra.mxu0 0
    %6234 = vmatprep.subr.bf16.mxu0 0
    %6235 = vmatpush1.bf16.msra.mxu0 0
    %6236 = vmatprep.subr.bf16.mxu0 0
    %6237 = vmatpush1.bf16.msra.mxu0 0
    %6238 = vmatprep.subr.bf16.mxu0 0
    %6239 = vmatpush1.bf16.msra.mxu0 0
    %6240 = vmatprep.subr.bf16.mxu0 0
    %6241 = vmatpush1.bf16.msra.mxu0 0
    %6242 = vmatprep.subr.bf16.mxu0 0
    %6243 = vmatpush1.bf16.msra.mxu0 0
    %6244 = vmatprep.subr.bf16.mxu0 0
    %6245 = vmatpush1.bf16.msra.mxu0 0
    %6246 = vmatprep.subr.bf16.mxu0 0
    %6247 = vmatpush1.bf16.msra.mxu0 0
    %6248 = vmatprep.subr.bf16.mxu0 0
    %6249 = vmatpush1.bf16.msra.mxu0 0
    %6250 = vmatprep.subr.bf16.mxu0 0
    %6251 = vmatpush1.bf16.msra.mxu0 0
    %6252 = vmatprep.subr.bf16.mxu0 0
    %6253 = vmatpush1.bf16.msra.mxu0 0
    %6254 = vmatprep.subr.bf16.mxu0 0
    %6255 = vmatpush1.bf16.msra.mxu0 0
    %6256 = vmatprep.subr.bf16.mxu0 0
    %6257 = vmatpush1.bf16.msra.mxu0 0
    %6258 = vmatprep.mubr.bf16.mxu0 0
    %6259 = vmatmul.mubr.bf16.gmra.mrb[0].mxu0 %v5470
    %v6260 = vpop.f32.mrb[0].mxu0
    %v6261 = vadd.f32 %v5392, %v6260
    %v6262 = vpop.f32.mrb[0].mxu0
    %v6263 = vpop.f32.mrb[0].mxu0
    %v6264 = vadd.f32 %v5393, %v6263
    %v6265 = vpop.f32.mrb[0].mxu0
    %6266 = vmatprep.mubr.bf16.mxu0 0
    %6267 = vmatmul.mubr.bf16.gmra.mrb[0].mxu0 %v5473
    %v6268 = vpop.f32.mrb[0].mxu0
    %v6269 = vadd.f32 %v5394, %v6268
    %v6270 = vpop.f32.mrb[0].mxu0
    %v6271 = vpop.f32.mrb[0].mxu0
    %v6272 = vadd.f32 %v5395, %v6271
    %v6273 = vpop.f32.mrb[0].mxu0
    %6274 = vmatprep.mubr.bf16.mxu0 0
    %6275 = vmatmul.mubr.bf16.gmra.mrb[0].mxu0 %v5476
    %v6276 = vpop.f32.mrb[0].mxu0
    %v6277 = vadd.f32 %v5396, %v6276
    %v6278 = vpop.f32.mrb[0].mxu0
    %v6279 = vpop.f32.mrb[0].mxu0
    %v6280 = vpop.f32.mrb[0].mxu0
    %6281 = vdwg.mxu0
    %v6286 = vunpack.c.l.b16 %v5288
    %v6287 = vunpack.c.l.b16 %v5289
    %v6288 = vunpack.c.l.b16 %v5290
    %v6289 = vunpack.c.l.b16 %v5291
    %v6290 = vpack.c.b16 %v6287, %v6286
    %v6291 = vpack.c.b16 %v6289, %v6288
    %6294 = vmatprep.subr.bf16.mxu0 0
    %6295 = vmatpush1.bf16.msra.mxu0 %v6290
    %6296 = vmatprep.subr.bf16.mxu0 0
    %6297 = vmatpush1.bf16.msra.mxu0 %v6291
    %6298 = vmatprep.subr.bf16.mxu0 0
    %6299 = vmatpush1.bf16.msra.mxu0 0
    %6300 = vmatprep.subr.bf16.mxu0 0
    %6301 = vmatpush1.bf16.msra.mxu0 0
    %6302 = vmatprep.subr.bf16.mxu0 0
    %6303 = vmatpush1.bf16.msra.mxu0 0
    %6304 = vmatprep.subr.bf16.mxu0 0
    %6305 = vmatpush1.bf16.msra.mxu0 0
    %6306 = vmatprep.subr.bf16.mxu0 0
    %6307 = vmatpush1.bf16.msra.mxu0 0
    %6308 = vmatprep.subr.bf16.mxu0 0
    %6309 = vmatpush1.bf16.msra.mxu0 0
    %6310 = vmatprep.subr.bf16.mxu0 0
    %6311 = vmatpush1.bf16.msra.mxu0 0
    %6312 = vmatprep.subr.bf16.mxu0 0
    %6313 = vmatpush1.bf16.msra.mxu0 0
    %6314 = vmatprep.subr.bf16.mxu0 0
    %6315 = vmatpush1.bf16.msra.mxu0 0
    %6316 = vmatprep.subr.bf16.mxu0 0
    %6317 = vmatpush1.bf16.msra.mxu0 0
    %6318 = vmatprep.subr.bf16.mxu0 0
    %6319 = vmatpush1.bf16.msra.mxu0 0
    %6320 = vmatprep.subr.bf16.mxu0 0
    %6321 = vmatpush1.bf16.msra.mxu0 0
    %6322 = vmatprep.subr.bf16.mxu0 0
    %6323 = vmatpush1.bf16.msra.mxu0 0
    %6324 = vmatprep.subr.bf16.mxu0 0
    %6325 = vmatpush1.bf16.msra.mxu0 0
    %6326 = vmatprep.mubr.bf16.mxu0 0
    %6327 = vmatmul.mubr.bf16.gmra.mrb[0].mxu0 %v5470
    %v6328 = vpop.f32.mrb[0].mxu0
    %v6329 = vadd.f32 %v5397, %v6328
    %v6330 = vpop.f32.mrb[0].mxu0
    %v6331 = vpop.f32.mrb[0].mxu0
    %v6332 = vadd.f32 %v5398, %v6331
    %v6333 = vpop.f32.mrb[0].mxu0
    %6334 = vmatprep.mubr.bf16.mxu0 0
    %6335 = vmatmul.mubr.bf16.gmra.mrb[0].mxu0 %v5473
    %v6336 = vpop.f32.mrb[0].mxu0
    %v6337 = vadd.f32 %v5399, %v6336
    %v6338 = vpop.f32.mrb[0].mxu0
    %v6339 = vpop.f32.mrb[0].mxu0
    %v6340 = vadd.f32 %v5400, %v6339
    %v6341 = vpop.f32.mrb[0].mxu0
    %6342 = vmatprep.mubr.bf16.mxu0 0
    %6343 = vmatmul.mubr.bf16.gmra.mrb[0].mxu0 %v5476
    %v6344 = vpop.f32.mrb[0].mxu0
    %v6345 = vadd.f32 %v5401, %v6344
    %v6346 = vpop.f32.mrb[0].mxu0
    %v6347 = vpop.f32.mrb[0].mxu0
    %v6348 = vpop.f32.mrb[0].mxu0
    %6349 = vdwg.mxu0
    %v6354 = vunpack.c.l.b16 %v5292
    %v6355 = vunpack.c.l.b16 %v5293
    %v6356 = vunpack.c.l.b16 %v5294
    %v6357 = vunpack.c.l.b16 %v5295
    %v6358 = vpack.c.b16 %v6355, %v6354
    %v6359 = vpack.c.b16 %v6357, %v6356
    %6362 = vmatprep.subr.bf16.mxu0 0
    %6363 = vmatpush1.bf16.msra.mxu0 %v6358
    %6364 = vmatprep.subr.bf16.mxu0 0
    %6365 = vmatpush1.bf16.msra.mxu0 %v6359
    %6366 = vmatprep.subr.bf16.mxu0 0
    %6367 = vmatpush1.bf16.msra.mxu0 0
    %6368 = vmatprep.subr.bf16.mxu0 0
    %6369 = vmatpush1.bf16.msra.mxu0 0
    %6370 = vmatprep.subr.bf16.mxu0 0
    %6371 = vmatpush1.bf16.msra.mxu0 0
    %6372 = vmatprep.subr.bf16.mxu0 0
    %6373 = vmatpush1.bf16.msra.mxu0 0
    %6374 = vmatprep.subr.bf16.mxu0 0
    %6375 = vmatpush1.bf16.msra.mxu0 0
    %6376 = vmatprep.subr.bf16.mxu0 0
    %6377 = vmatpush1.bf16.msra.mxu0 0
    %6378 = vmatprep.subr.bf16.mxu0 0
    %6379 = vmatpush1.bf16.msra.mxu0 0
    %6380 = vmatprep.subr.bf16.mxu0 0
    %6381 = vmatpush1.bf16.msra.mxu0 0
    %6382 = vmatprep.subr.bf16.mxu0 0
    %6383 = vmatpush1.bf16.msra.mxu0 0
    %6384 = vmatprep.subr.bf16.mxu0 0
    %6385 = vmatpush1.bf16.msra.mxu0 0
    %6386 = vmatprep.subr.bf16.mxu0 0
    %6387 = vmatpush1.bf16.msra.mxu0 0
    %6388 = vmatprep.subr.bf16.mxu0 0
    %6389 = vmatpush1.bf16.msra.mxu0 0
    %6390 = vmatprep.subr.bf16.mxu0 0
    %6391 = vmatpush1.bf16.msra.mxu0 0
    %6392 = vmatprep.subr.bf16.mxu0 0
    %6393 = vmatpush1.bf16.msra.mxu0 0
    %6394 = vmatprep.mubr.bf16.mxu0 0
    %6395 = vmatmul.mubr.bf16.gmra.mrb[0].mxu0 %v5470
    %v6396 = vpop.f32.mrb[0].mxu0
    %v6397 = vadd.f32 %v5402, %v6396
    %v6398 = vpop.f32.mrb[0].mxu0
    %v6399 = vpop.f32.mrb[0].mxu0
    %v6400 = vadd.f32 %v5403, %v6399
    %v6401 = vpop.f32.mrb[0].mxu0
    %6402 = vmatprep.mubr.bf16.mxu0 0
    %6403 = vmatmul.mubr.bf16.gmra.mrb[0].mxu0 %v5473
    %v6404 = vpop.f32.mrb[0].mxu0
    %v6405 = vadd.f32 %v5404, %v6404
    %v6406 = vpop.f32.mrb[0].mxu0
    %v6407 = vpop.f32.mrb[0].mxu0
    %v6408 = vadd.f32 %v5405, %v6407
    %v6409 = vpop.f32.mrb[0].mxu0
    %6410 = vmatprep.mubr.bf16.mxu0 0
    %6411 = vmatmul.mubr.bf16.gmra.mrb[0].mxu0 %v5476
    %v6412 = vpop.f32.mrb[0].mxu0
    %v6413 = vadd.f32 %v5406, %v6412
    %v6414 = vpop.f32.mrb[0].mxu0
    %v6415 = vpop.f32.mrb[0].mxu0
    %v6416 = vpop.f32.mrb[0].mxu0
    %6417 = vdwg.mxu0
    %v6422 = vunpack.c.l.b16 %v5296
    %v6423 = vunpack.c.l.b16 %v5297
    %v6424 = vunpack.c.l.b16 %v5298
    %v6425 = vunpack.c.l.b16 %v5299
    %v6426 = vpack.c.b16 %v6423, %v6422
    %v6427 = vpack.c.b16 %v6425, %v6424
    %6430 = vmatprep.subr.bf16.mxu0 0
    %6431 = vmatpush1.bf16.msra.mxu0 %v6426
    %6432 = vmatprep.subr.bf16.mxu0 0
    %6433 = vmatpush1.bf16.msra.mxu0 %v6427
    %6434 = vmatprep.subr.bf16.mxu0 0
    %6435 = vmatpush1.bf16.msra.mxu0 0
    %6436 = vmatprep.subr.bf16.mxu0 0
    %6437 = vmatpush1.bf16.msra.mxu0 0
    %6438 = vmatprep.subr.bf16.mxu0 0
    %6439 = vmatpush1.bf16.msra.mxu0 0
    %6440 = vmatprep.subr.bf16.mxu0 0
    %6441 = vmatpush1.bf16.msra.mxu0 0
    %6442 = vmatprep.subr.bf16.mxu0 0
    %6443 = vmatpush1.bf16.msra.mxu0 0
    %6444 = vmatprep.subr.bf16.mxu0 0
    %6445 = vmatpush1.bf16.msra.mxu0 0
    %6446 = vmatprep.subr.bf16.mxu0 0
    %6447 = vmatpush1.bf16.msra.mxu0 0
    %6448 = vmatprep.subr.bf16.mxu0 0
    %6449 = vmatpush1.bf16.msra.mxu0 0
    %6450 = vmatprep.subr.bf16.mxu0 0
    %6451 = vmatpush1.bf16.msra.mxu0 0
    %6452 = vmatprep.subr.bf16.mxu0 0
    %6453 = vmatpush1.bf16.msra.mxu0 0
    %6454 = vmatprep.subr.bf16.mxu0 0
    %6455 = vmatpush1.bf16.msra.mxu0 0
    %6456 = vmatprep.subr.bf16.mxu0 0
    %6457 = vmatpush1.bf16.msra.mxu0 0
    %6458 = vmatprep.subr.bf16.mxu0 0
    %6459 = vmatpush1.bf16.msra.mxu0 0
    %6460 = vmatprep.subr.bf16.mxu0 0
    %6461 = vmatpush1.bf16.msra.mxu0 0
    %6462 = vmatprep.mubr.bf16.mxu0 0
    %6463 = vmatmul.mubr.bf16.gmra.mrb[0].mxu0 %v5470
    %v6464 = vpop.f32.mrb[0].mxu0
    %v6465 = vadd.f32 %v5407, %v6464
    %v6466 = vpop.f32.mrb[0].mxu0
    %v6467 = vpop.f32.mrb[0].mxu0
    %v6468 = vadd.f32 %v5408, %v6467
    %v6469 = vpop.f32.mrb[0].mxu0
    %6470 = vmatprep.mubr.bf16.mxu0 0
    %6471 = vmatmul.mubr.bf16.gmra.mrb[0].mxu0 %v5473
    %v6472 = vpop.f32.mrb[0].mxu0
    %v6473 = vadd.f32 %v5409, %v6472
    %v6474 = vpop.f32.mrb[0].mxu0
    %v6475 = vpop.f32.mrb[0].mxu0
    %v6476 = vadd.f32 %v5410, %v6475
    %v6477 = vpop.f32.mrb[0].mxu0
    %6478 = vmatprep.mubr.bf16.mxu0 0
    %6479 = vmatmul.mubr.bf16.gmra.mrb[0].mxu0 %v5476
    %v6480 = vpop.f32.mrb[0].mxu0
    %v6481 = vadd.f32 %v5411, %v6480
    %v6482 = vpop.f32.mrb[0].mxu0
    %v6483 = vpop.f32.mrb[0].mxu0
    %v6484 = vpop.f32.mrb[0].mxu0
    %6485 = vdwg.mxu0
    %v6490 = vunpack.c.l.b16 %v5300
    %v6491 = vunpack.c.l.b16 %v5301
    %v6492 = vunpack.c.l.b16 %v5302
    %v6493 = vunpack.c.l.b16 %v5303
    %v6494 = vpack.c.b16 %v6491, %v6490
    %v6495 = vpack.c.b16 %v6493, %v6492
    %6498 = vmatprep.subr.bf16.mxu0 0
    %6499 = vmatpush1.bf16.msra.mxu0 %v6494
    %6500 = vmatprep.subr.bf16.mxu0 0
    %6501 = vmatpush1.bf16.msra.mxu0 %v6495
    %6502 = vmatprep.subr.bf16.mxu0 0
    %6503 = vmatpush1.bf16.msra.mxu0 0
    %6504 = vmatprep.subr.bf16.mxu0 0
    %6505 = vmatpush1.bf16.msra.mxu0 0
    %6506 = vmatprep.subr.bf16.mxu0 0
    %6507 = vmatpush1.bf16.msra.mxu0 0
    %6508 = vmatprep.subr.bf16.mxu0 0
    %6509 = vmatpush1.bf16.msra.mxu0 0
    %6510 = vmatprep.subr.bf16.mxu0 0
    %6511 = vmatpush1.bf16.msra.mxu0 0
    %6512 = vmatprep.subr.bf16.mxu0 0
    %6513 = vmatpush1.bf16.msra.mxu0 0
    %6514 = vmatprep.subr.bf16.mxu0 0
    %6515 = vmatpush1.bf16.msra.mxu0 0
    %6516 = vmatprep.subr.bf16.mxu0 0
    %6517 = vmatpush1.bf16.msra.mxu0 0
    %6518 = vmatprep.subr.bf16.mxu0 0
    %6519 = vmatpush1.bf16.msra.mxu0 0
    %6520 = vmatprep.subr.bf16.mxu0 0
    %6521 = vmatpush1.bf16.msra.mxu0 0
    %6522 = vmatprep.subr.bf16.mxu0 0
    %6523 = vmatpush1.bf16.msra.mxu0 0
    %6524 = vmatprep.subr.bf16.mxu0 0
    %6525 = vmatpush1.bf16.msra.mxu0 0
    %6526 = vmatprep.subr.bf16.mxu0 0
    %6527 = vmatpush1.bf16.msra.mxu0 0
    %6528 = vmatprep.subr.bf16.mxu0 0
    %6529 = vmatpush1.bf16.msra.mxu0 0
    %6530 = vmatprep.mubr.bf16.mxu0 0
    %6531 = vmatmul.mubr.bf16.gmra.mrb[0].mxu0 %v5470
    %v6532 = vpop.f32.mrb[0].mxu0
    %v6533 = vadd.f32 %v5412, %v6532
    %v6534 = vpop.f32.mrb[0].mxu0
    %v6535 = vpop.f32.mrb[0].mxu0
    %v6536 = vadd.f32 %v5413, %v6535
    %v6537 = vpop.f32.mrb[0].mxu0
    %6538 = vmatprep.mubr.bf16.mxu0 0
    %6539 = vmatmul.mubr.bf16.gmra.mrb[0].mxu0 %v5473
    %v6540 = vpop.f32.mrb[0].mxu0
    %v6541 = vadd.f32 %v5414, %v6540
    %v6542 = vpop.f32.mrb[0].mxu0
    %v6543 = vpop.f32.mrb[0].mxu0
    %v6544 = vadd.f32 %v5415, %v6543
    %v6545 = vpop.f32.mrb[0].mxu0
    %6546 = vmatprep.mubr.bf16.mxu0 0
    %6547 = vmatmul.mubr.bf16.gmra.mrb[0].mxu0 %v5476
    %v6548 = vpop.f32.mrb[0].mxu0
    %v6549 = vadd.f32 %v5416, %v6548
    %v6550 = vpop.f32.mrb[0].mxu0
    %v6551 = vpop.f32.mrb[0].mxu0
    %v6552 = vpop.f32.mrb[0].mxu0
    %6553 = vdwg.mxu0
    %v6558 = vunpack.c.l.b16 %v5304
    %v6559 = vunpack.c.l.b16 %v5305
    %v6560 = vunpack.c.l.b16 %v5306
    %v6561 = vunpack.c.l.b16 %v5307
    %v6562 = vpack.c.b16 %v6559, %v6558
    %v6563 = vpack.c.b16 %v6561, %v6560
    %6566 = vmatprep.subr.bf16.mxu0 0
    %6567 = vmatpush1.bf16.msra.mxu0 %v6562
    %6568 = vmatprep.subr.bf16.mxu0 0
    %6569 = vmatpush1.bf16.msra.mxu0 %v6563
    %6570 = vmatprep.subr.bf16.mxu0 0
    %6571 = vmatpush1.bf16.msra.mxu0 0
    %6572 = vmatprep.subr.bf16.mxu0 0
    %6573 = vmatpush1.bf16.msra.mxu0 0
    %6574 = vmatprep.subr.bf16.mxu0 0
    %6575 = vmatpush1.bf16.msra.mxu0 0
    %6576 = vmatprep.subr.bf16.mxu0 0
    %6577 = vmatpush1.bf16.msra.mxu0 0
    %6578 = vmatprep.subr.bf16.mxu0 0
    %6579 = vmatpush1.bf16.msra.mxu0 0
    %6580 = vmatprep.subr.bf16.mxu0 0
    %6581 = vmatpush1.bf16.msra.mxu0 0
    %6582 = vmatprep.subr.bf16.mxu0 0
    %6583 = vmatpush1.bf16.msra.mxu0 0
    %6584 = vmatprep.subr.bf16.mxu0 0
    %6585 = vmatpush1.bf16.msra.mxu0 0
    %6586 = vmatprep.subr.bf16.mxu0 0
    %6587 = vmatpush1.bf16.msra.mxu0 0
    %6588 = vmatprep.subr.bf16.mxu0 0
    %6589 = vmatpush1.bf16.msra.mxu0 0
    %6590 = vmatprep.subr.bf16.mxu0 0
    %6591 = vmatpush1.bf16.msra.mxu0 0
    %6592 = vmatprep.subr.bf16.mxu0 0
    %6593 = vmatpush1.bf16.msra.mxu0 0
    %6594 = vmatprep.subr.bf16.mxu0 0
    %6595 = vmatpush1.bf16.msra.mxu0 0
    %6596 = vmatprep.subr.bf16.mxu0 0
    %6597 = vmatpush1.bf16.msra.mxu0 0
    %6598 = vmatprep.mubr.bf16.mxu0 0
    %6599 = vmatmul.mubr.bf16.gmra.mrb[0].mxu0 %v5470
    %v6600 = vpop.f32.mrb[0].mxu0
    %v6601 = vadd.f32 %v5417, %v6600
    %v6602 = vpop.f32.mrb[0].mxu0
    %v6603 = vpop.f32.mrb[0].mxu0
    %v6604 = vadd.f32 %v5418, %v6603
    %v6605 = vpop.f32.mrb[0].mxu0
    %6606 = vmatprep.mubr.bf16.mxu0 0
    %6607 = vmatmul.mubr.bf16.gmra.mrb[0].mxu0 %v5473
    %v6608 = vpop.f32.mrb[0].mxu0
    %v6609 = vadd.f32 %v5419, %v6608
    %v6610 = vpop.f32.mrb[0].mxu0
    %v6611 = vpop.f32.mrb[0].mxu0
    %v6612 = vadd.f32 %v5420, %v6611
    %v6613 = vpop.f32.mrb[0].mxu0
    %6614 = vmatprep.mubr.bf16.mxu0 0
    %6615 = vmatmul.mubr.bf16.gmra.mrb[0].mxu0 %v5476
    %v6616 = vpop.f32.mrb[0].mxu0
    %v6617 = vadd.f32 %v5421, %v6616
    %v6618 = vpop.f32.mrb[0].mxu0
    %v6619 = vpop.f32.mrb[0].mxu0
    %v6620 = vpop.f32.mrb[0].mxu0
    %6621 = vdwg.mxu0
    %v6626 = vunpack.c.l.b16 %v5308
    %v6627 = vunpack.c.l.b16 %v5309
    %v6628 = vunpack.c.l.b16 %v5310
    %v6629 = vunpack.c.l.b16 %v5311
    %v6630 = vpack.c.b16 %v6627, %v6626
    %v6631 = vpack.c.b16 %v6629, %v6628
    %6634 = vmatprep.subr.bf16.mxu0 0
    %6635 = vmatpush1.bf16.msra.mxu0 %v6630
    %6636 = vmatprep.subr.bf16.mxu0 0
    %6637 = vmatpush1.bf16.msra.mxu0 %v6631
    %6638 = vmatprep.subr.bf16.mxu0 0
    %6639 = vmatpush1.bf16.msra.mxu0 0
    %6640 = vmatprep.subr.bf16.mxu0 0
    %6641 = vmatpush1.bf16.msra.mxu0 0
    %6642 = vmatprep.subr.bf16.mxu0 0
    %6643 = vmatpush1.bf16.msra.mxu0 0
    %6644 = vmatprep.subr.bf16.mxu0 0
    %6645 = vmatpush1.bf16.msra.mxu0 0
    %6646 = vmatprep.subr.bf16.mxu0 0
    %6647 = vmatpush1.bf16.msra.mxu0 0
    %6648 = vmatprep.subr.bf16.mxu0 0
    %6649 = vmatpush1.bf16.msra.mxu0 0
    %6650 = vmatprep.subr.bf16.mxu0 0
    %6651 = vmatpush1.bf16.msra.mxu0 0
    %6652 = vmatprep.subr.bf16.mxu0 0
    %6653 = vmatpush1.bf16.msra.mxu0 0
    %6654 = vmatprep.subr.bf16.mxu0 0
    %6655 = vmatpush1.bf16.msra.mxu0 0
    %6656 = vmatprep.subr.bf16.mxu0 0
    %6657 = vmatpush1.bf16.msra.mxu0 0
    %6658 = vmatprep.subr.bf16.mxu0 0
    %6659 = vmatpush1.bf16.msra.mxu0 0
    %6660 = vmatprep.subr.bf16.mxu0 0
    %6661 = vmatpush1.bf16.msra.mxu0 0
    %6662 = vmatprep.subr.bf16.mxu0 0
    %6663 = vmatpush1.bf16.msra.mxu0 0
    %6664 = vmatprep.subr.bf16.mxu0 0
    %6665 = vmatpush1.bf16.msra.mxu0 0
    %6666 = vmatprep.mubr.bf16.mxu0 0
    %6667 = vmatmul.mubr.bf16.gmra.mrb[0].mxu0 %v5470
    %v6668 = vpop.f32.mrb[0].mxu0
    %v6669 = vadd.f32 %v5422, %v6668
    %v6670 = vpop.f32.mrb[0].mxu0
    %v6671 = vpop.f32.mrb[0].mxu0
    %v6672 = vadd.f32 %v5423, %v6671
    %v6673 = vpop.f32.mrb[0].mxu0
    %6674 = vmatprep.mubr.bf16.mxu0 0
    %6675 = vmatmul.mubr.bf16.gmra.mrb[0].mxu0 %v5473
    %v6676 = vpop.f32.mrb[0].mxu0
    %v6677 = vadd.f32 %v5424, %v6676
    %v6678 = vpop.f32.mrb[0].mxu0
    %v6679 = vpop.f32.mrb[0].mxu0
    %v6680 = vadd.f32 %v5425, %v6679
    %v6681 = vpop.f32.mrb[0].mxu0
    %6682 = vmatprep.mubr.bf16.mxu0 0
    %6683 = vmatmul.mubr.bf16.gmra.mrb[0].mxu0 %v5476
    %v6684 = vpop.f32.mrb[0].mxu0
    %v6685 = vadd.f32 %v5426, %v6684
    %v6686 = vpop.f32.mrb[0].mxu0
    %v6687 = vpop.f32.mrb[0].mxu0
    %v6688 = vpop.f32.mrb[0].mxu0
    %6689 = vdwg.mxu0
    %v6694 = vunpack.c.l.b16 %v5312
    %v6695 = vunpack.c.l.b16 %v5313
    %v6696 = vunpack.c.l.b16 %v5314
    %v6697 = vunpack.c.l.b16 %v5315
    %v6698 = vpack.c.b16 %v6695, %v6694
    %v6699 = vpack.c.b16 %v6697, %v6696
    %6702 = vmatprep.subr.bf16.mxu0 0
    %6703 = vmatpush1.bf16.msra.mxu0 %v6698
    %6704 = vmatprep.subr.bf16.mxu0 0
    %6705 = vmatpush1.bf16.msra.mxu0 %v6699
    %6706 = vmatprep.subr.bf16.mxu0 0
    %6707 = vmatpush1.bf16.msra.mxu0 0
    %6708 = vmatprep.subr.bf16.mxu0 0
    %6709 = vmatpush1.bf16.msra.mxu0 0
    %6710 = vmatprep.subr.bf16.mxu0 0
    %6711 = vmatpush1.bf16.msra.mxu0 0
    %6712 = vmatprep.subr.bf16.mxu0 0
    %6713 = vmatpush1.bf16.msra.mxu0 0
    %6714 = vmatprep.subr.bf16.mxu0 0
    %6715 = vmatpush1.bf16.msra.mxu0 0
    %6716 = vmatprep.subr.bf16.mxu0 0
    %6717 = vmatpush1.bf16.msra.mxu0 0
    %6718 = vmatprep.subr.bf16.mxu0 0
    %6719 = vmatpush1.bf16.msra.mxu0 0
    %6720 = vmatprep.subr.bf16.mxu0 0
    %6721 = vmatpush1.bf16.msra.mxu0 0
    %6722 = vmatprep.subr.bf16.mxu0 0
    %6723 = vmatpush1.bf16.msra.mxu0 0
    %6724 = vmatprep.subr.bf16.mxu0 0
    %6725 = vmatpush1.bf16.msra.mxu0 0
    %6726 = vmatprep.subr.bf16.mxu0 0
    %6727 = vmatpush1.bf16.msra.mxu0 0
    %6728 = vmatprep.subr.bf16.mxu0 0
    %6729 = vmatpush1.bf16.msra.mxu0 0
    %6730 = vmatprep.subr.bf16.mxu0 0
    %6731 = vmatpush1.bf16.msra.mxu0 0
    %6732 = vmatprep.subr.bf16.mxu0 0
    %6733 = vmatpush1.bf16.msra.mxu0 0
    %6734 = vmatprep.mubr.bf16.mxu0 0
    %6735 = vmatmul.mubr.bf16.gmra.mrb[0].mxu0 %v5470
    %v6736 = vpop.f32.mrb[0].mxu0
    %v6737 = vadd.f32 %v5427, %v6736
    %v6738 = vpop.f32.mrb[0].mxu0
    %v6739 = vpop.f32.mrb[0].mxu0
    %v6740 = vadd.f32 %v5428, %v6739
    %v6741 = vpop.f32.mrb[0].mxu0
    %6742 = vmatprep.mubr.bf16.mxu0 0
    %6743 = vmatmul.mubr.bf16.gmra.mrb[0].mxu0 %v5473
    %v6744 = vpop.f32.mrb[0].mxu0
    %v6745 = vadd.f32 %v5429, %v6744
    %v6746 = vpop.f32.mrb[0].mxu0
    %v6747 = vpop.f32.mrb[0].mxu0
    %v6748 = vadd.f32 %v5430, %v6747
    %v6749 = vpop.f32.mrb[0].mxu0
    %6750 = vmatprep.mubr.bf16.mxu0 0
    %6751 = vmatmul.mubr.bf16.gmra.mrb[0].mxu0 %v5476
    %v6752 = vpop.f32.mrb[0].mxu0
    %v6753 = vadd.f32 %v5431, %v6752
    %v6754 = vpop.f32.mrb[0].mxu0
    %v6755 = vpop.f32.mrb[0].mxu0
    %v6756 = vpop.f32.mrb[0].mxu0
    %6757 = vdwg.mxu0
    %v6762 = vunpack.c.l.b16 %v5316
    %v6763 = vunpack.c.l.b16 %v5317
    %v6764 = vunpack.c.l.b16 %v5318
    %v6765 = vunpack.c.l.b16 %v5319
    %v6766 = vpack.c.b16 %v6763, %v6762
    %v6767 = vpack.c.b16 %v6765, %v6764
    %6770 = vmatprep.subr.bf16.mxu0 0
    %6771 = vmatpush1.bf16.msra.mxu0 %v6766
    %6772 = vmatprep.subr.bf16.mxu0 0
    %6773 = vmatpush1.bf16.msra.mxu0 %v6767
    %6774 = vmatprep.subr.bf16.mxu0 0
    %6775 = vmatpush1.bf16.msra.mxu0 0
    %6776 = vmatprep.subr.bf16.mxu0 0
    %6777 = vmatpush1.bf16.msra.mxu0 0
    %6778 = vmatprep.subr.bf16.mxu0 0
    %6779 = vmatpush1.bf16.msra.mxu0 0
    %6780 = vmatprep.subr.bf16.mxu0 0
    %6781 = vmatpush1.bf16.msra.mxu0 0
    %6782 = vmatprep.subr.bf16.mxu0 0
    %6783 = vmatpush1.bf16.msra.mxu0 0
    %6784 = vmatprep.subr.bf16.mxu0 0
    %6785 = vmatpush1.bf16.msra.mxu0 0
    %6786 = vmatprep.subr.bf16.mxu0 0
    %6787 = vmatpush1.bf16.msra.mxu0 0
    %6788 = vmatprep.subr.bf16.mxu0 0
    %6789 = vmatpush1.bf16.msra.mxu0 0
    %6790 = vmatprep.subr.bf16.mxu0 0
    %6791 = vmatpush1.bf16.msra.mxu0 0
    %6792 = vmatprep.subr.bf16.mxu0 0
    %6793 = vmatpush1.bf16.msra.mxu0 0
    %6794 = vmatprep.subr.bf16.mxu0 0
    %6795 = vmatpush1.bf16.msra.mxu0 0
    %6796 = vmatprep.subr.bf16.mxu0 0
    %6797 = vmatpush1.bf16.msra.mxu0 0
    %6798 = vmatprep.subr.bf16.mxu0 0
    %6799 = vmatpush1.bf16.msra.mxu0 0
    %6800 = vmatprep.subr.bf16.mxu0 0
    %6801 = vmatpush1.bf16.msra.mxu0 0
    %6802 = vmatprep.mubr.bf16.mxu0 0
    %6803 = vmatmul.mubr.bf16.gmra.mrb[0].mxu0 %v5470
    %v6804 = vpop.f32.mrb[0].mxu0
    %v6805 = vadd.f32 %v5432, %v6804
    %v6806 = vpop.f32.mrb[0].mxu0
    %v6807 = vpop.f32.mrb[0].mxu0
    %v6808 = vadd.f32 %v5433, %v6807
    %v6809 = vpop.f32.mrb[0].mxu0
    %6810 = vmatprep.mubr.bf16.mxu0 0
    %6811 = vmatmul.mubr.bf16.gmra.mrb[0].mxu0 %v5473
    %v6812 = vpop.f32.mrb[0].mxu0
    %v6813 = vadd.f32 %v5434, %v6812
    %v6814 = vpop.f32.mrb[0].mxu0
    %v6815 = vpop.f32.mrb[0].mxu0
    %v6816 = vadd.f32 %v5435, %v6815
    %v6817 = vpop.f32.mrb[0].mxu0
    %6818 = vmatprep.mubr.bf16.mxu0 0
    %6819 = vmatmul.mubr.bf16.gmra.mrb[0].mxu0 %v5476
    %v6820 = vpop.f32.mrb[0].mxu0
    %v6821 = vadd.f32 %v5436, %v6820
    %v6822 = vpop.f32.mrb[0].mxu0
    %v6823 = vpop.f32.mrb[0].mxu0
    %v6824 = vpop.f32.mrb[0].mxu0
    %6825 = vdwg.mxu0
    %v6830 = vunpack.c.l.b16 %v5320
    %v6831 = vunpack.c.l.b16 %v5321
    %v6832 = vunpack.c.l.b16 %v5322
    %v6833 = vunpack.c.l.b16 %v5323
    %v6834 = vpack.c.b16 %v6831, %v6830
    %v6835 = vpack.c.b16 %v6833, %v6832
    %6838 = vmatprep.subr.bf16.mxu0 0
    %6839 = vmatpush1.bf16.msra.mxu0 %v6834
    %6840 = vmatprep.subr.bf16.mxu0 0
    %6841 = vmatpush1.bf16.msra.mxu0 %v6835
    %6842 = vmatprep.subr.bf16.mxu0 0
    %6843 = vmatpush1.bf16.msra.mxu0 0
    %6844 = vmatprep.subr.bf16.mxu0 0
    %6845 = vmatpush1.bf16.msra.mxu0 0
    %6846 = vmatprep.subr.bf16.mxu0 0
    %6847 = vmatpush1.bf16.msra.mxu0 0
    %6848 = vmatprep.subr.bf16.mxu0 0
    %6849 = vmatpush1.bf16.msra.mxu0 0
    %6850 = vmatprep.subr.bf16.mxu0 0
    %6851 = vmatpush1.bf16.msra.mxu0 0
    %6852 = vmatprep.subr.bf16.mxu0 0
    %6853 = vmatpush1.bf16.msra.mxu0 0
    %6854 = vmatprep.subr.bf16.mxu0 0
    %6855 = vmatpush1.bf16.msra.mxu0 0
    %6856 = vmatprep.subr.bf16.mxu0 0
    %6857 = vmatpush1.bf16.msra.mxu0 0
    %6858 = vmatprep.subr.bf16.mxu0 0
    %6859 = vmatpush1.bf16.msra.mxu0 0
    %6860 = vmatprep.subr.bf16.mxu0 0
    %6861 = vmatpush1.bf16.msra.mxu0 0
    %6862 = vmatprep.subr.bf16.mxu0 0
    %6863 = vmatpush1.bf16.msra.mxu0 0
    %6864 = vmatprep.subr.bf16.mxu0 0
    %6865 = vmatpush1.bf16.msra.mxu0 0
    %6866 = vmatprep.subr.bf16.mxu0 0
    %6867 = vmatpush1.bf16.msra.mxu0 0
    %6868 = vmatprep.subr.bf16.mxu0 0
    %6869 = vmatpush1.bf16.msra.mxu0 0
    %6870 = vmatprep.mubr.bf16.mxu0 0
    %6871 = vmatmul.mubr.bf16.gmra.mrb[0].mxu0 %v5470
    %v6872 = vpop.f32.mrb[0].mxu0
    %v6873 = vadd.f32 %v5437, %v6872
    %v6874 = vpop.f32.mrb[0].mxu0
    %v6875 = vpop.f32.mrb[0].mxu0
    %v6876 = vadd.f32 %v5438, %v6875
    %v6877 = vpop.f32.mrb[0].mxu0
    %6878 = vmatprep.mubr.bf16.mxu0 0
    %6879 = vmatmul.mubr.bf16.gmra.mrb[0].mxu0 %v5473
    %v6880 = vpop.f32.mrb[0].mxu0
    %v6881 = vadd.f32 %v5439, %v6880
    %v6882 = vpop.f32.mrb[0].mxu0
    %v6883 = vpop.f32.mrb[0].mxu0
    %v6884 = vadd.f32 %v5440, %v6883
    %v6885 = vpop.f32.mrb[0].mxu0
    %6886 = vmatprep.mubr.bf16.mxu0 0
    %6887 = vmatmul.mubr.bf16.gmra.mrb[0].mxu0 %v5476
    %v6888 = vpop.f32.mrb[0].mxu0
    %v6889 = vadd.f32 %v5441, %v6888
    %v6890 = vpop.f32.mrb[0].mxu0
    %v6891 = vpop.f32.mrb[0].mxu0
    %v6892 = vpop.f32.mrb[0].mxu0
    %6893 = vdwg.mxu0
    %v6898 = vunpack.c.l.b16 %v5324
    %v6899 = vunpack.c.l.b16 %v5325
    %v6900 = vunpack.c.l.b16 %v5326
    %v6901 = vunpack.c.l.b16 %v5327
    %v6902 = vpack.c.b16 %v6899, %v6898
    %v6903 = vpack.c.b16 %v6901, %v6900
    %6906 = vmatprep.subr.bf16.mxu0 0
    %6907 = vmatpush1.bf16.msra.mxu0 %v6902
    %6908 = vmatprep.subr.bf16.mxu0 0
    %6909 = vmatpush1.bf16.msra.mxu0 %v6903
    %6910 = vmatprep.subr.bf16.mxu0 0
    %6911 = vmatpush1.bf16.msra.mxu0 0
    %6912 = vmatprep.subr.bf16.mxu0 0
    %6913 = vmatpush1.bf16.msra.mxu0 0
    %6914 = vmatprep.subr.bf16.mxu0 0
    %6915 = vmatpush1.bf16.msra.mxu0 0
    %6916 = vmatprep.subr.bf16.mxu0 0
    %6917 = vmatpush1.bf16.msra.mxu0 0
    %6918 = vmatprep.subr.bf16.mxu0 0
    %6919 = vmatpush1.bf16.msra.mxu0 0
    %6920 = vmatprep.subr.bf16.mxu0 0
    %6921 = vmatpush1.bf16.msra.mxu0 0
    %6922 = vmatprep.subr.bf16.mxu0 0
    %6923 = vmatpush1.bf16.msra.mxu0 0
    %6924 = vmatprep.subr.bf16.mxu0 0
    %6925 = vmatpush1.bf16.msra.mxu0 0
    %6926 = vmatprep.subr.bf16.mxu0 0
    %6927 = vmatpush1.bf16.msra.mxu0 0
    %6928 = vmatprep.subr.bf16.mxu0 0
    %6929 = vmatpush1.bf16.msra.mxu0 0
    %6930 = vmatprep.subr.bf16.mxu0 0
    %6931 = vmatpush1.bf16.msra.mxu0 0
    %6932 = vmatprep.subr.bf16.mxu0 0
    %6933 = vmatpush1.bf16.msra.mxu0 0
    %6934 = vmatprep.subr.bf16.mxu0 0
    %6935 = vmatpush1.bf16.msra.mxu0 0
    %6936 = vmatprep.subr.bf16.mxu0 0
    %6937 = vmatpush1.bf16.msra.mxu0 0
    %6938 = vmatprep.mubr.bf16.mxu0 0
    %6939 = vmatmul.mubr.bf16.gmra.mrb[0].mxu0 %v5470
    %v6940 = vpop.f32.mrb[0].mxu0
    %v6941 = vadd.f32 %v5442, %v6940
    %v6942 = vpop.f32.mrb[0].mxu0
    %v6943 = vpop.f32.mrb[0].mxu0
    %v6944 = vadd.f32 %v5443, %v6943
    %v6945 = vpop.f32.mrb[0].mxu0
    %6946 = vmatprep.mubr.bf16.mxu0 0
    %6947 = vmatmul.mubr.bf16.gmra.mrb[0].mxu0 %v5473
    %v6948 = vpop.f32.mrb[0].mxu0
    %v6949 = vadd.f32 %v5444, %v6948
    %v6950 = vpop.f32.mrb[0].mxu0
    %v6951 = vpop.f32.mrb[0].mxu0
    %v6952 = vadd.f32 %v5445, %v6951
    %v6953 = vpop.f32.mrb[0].mxu0
    %6954 = vmatprep.mubr.bf16.mxu0 0
    %6955 = vmatmul.mubr.bf16.gmra.mrb[0].mxu0 %v5476
    %v6956 = vpop.f32.mrb[0].mxu0
    %v6957 = vadd.f32 %v5446, %v6956
    %v6958 = vpop.f32.mrb[0].mxu0
    %v6959 = vpop.f32.mrb[0].mxu0
    %v6960 = vpop.f32.mrb[0].mxu0
    %6961 = vdwg.mxu0
    %v6966 = vunpack.c.l.b16 %v5328
    %v6967 = vunpack.c.l.b16 %v5329
    %v6968 = vunpack.c.l.b16 %v5330
    %v6969 = vunpack.c.l.b16 %v5331
    %v6970 = vpack.c.b16 %v6967, %v6966
    %v6971 = vpack.c.b16 %v6969, %v6968
    %6974 = vmatprep.subr.bf16.mxu0 0
    %6975 = vmatpush1.bf16.msra.mxu0 %v6970
    %6976 = vmatprep.subr.bf16.mxu0 0
    %6977 = vmatpush1.bf16.msra.mxu0 %v6971
    %6978 = vmatprep.subr.bf16.mxu0 0
    %6979 = vmatpush1.bf16.msra.mxu0 0
    %6980 = vmatprep.subr.bf16.mxu0 0
    %6981 = vmatpush1.bf16.msra.mxu0 0
    %6982 = vmatprep.subr.bf16.mxu0 0
    %6983 = vmatpush1.bf16.msra.mxu0 0
    %6984 = vmatprep.subr.bf16.mxu0 0
    %6985 = vmatpush1.bf16.msra.mxu0 0
    %6986 = vmatprep.subr.bf16.mxu0 0
    %6987 = vmatpush1.bf16.msra.mxu0 0
    %6988 = vmatprep.subr.bf16.mxu0 0
    %6989 = vmatpush1.bf16.msra.mxu0 0
    %6990 = vmatprep.subr.bf16.mxu0 0
    %6991 = vmatpush1.bf16.msra.mxu0 0
    %6992 = vmatprep.subr.bf16.mxu0 0
    %6993 = vmatpush1.bf16.msra.mxu0 0
    %6994 = vmatprep.subr.bf16.mxu0 0
    %6995 = vmatpush1.bf16.msra.mxu0 0
    %6996 = vmatprep.subr.bf16.mxu0 0
    %6997 = vmatpush1.bf16.msra.mxu0 0
    %6998 = vmatprep.subr.bf16.mxu0 0
    %6999 = vmatpush1.bf16.msra.mxu0 0
    %7000 = vmatprep.subr.bf16.mxu0 0
    %7001 = vmatpush1.bf16.msra.mxu0 0
    %7002 = vmatprep.subr.bf16.mxu0 0
    %7003 = vmatpush1.bf16.msra.mxu0 0
    %7004 = vmatprep.subr.bf16.mxu0 0
    %7005 = vmatpush1.bf16.msra.mxu0 0
    %7006 = vmatprep.mubr.bf16.mxu0 0
    %7007 = vmatmul.mubr.bf16.gmra.mrb[0].mxu0 %v5470
    %v7008 = vpop.f32.mrb[0].mxu0
    %v7009 = vadd.f32 %v5447, %v7008
    %v7010 = vpop.f32.mrb[0].mxu0
    %v7011 = vpop.f32.mrb[0].mxu0
    %v7012 = vadd.f32 %v5448, %v7011
    %v7013 = vpop.f32.mrb[0].mxu0
    %7014 = vmatprep.mubr.bf16.mxu0 0
    %7015 = vmatmul.mubr.bf16.gmra.mrb[0].mxu0 %v5473
    %v7016 = vpop.f32.mrb[0].mxu0
    %v7017 = vadd.f32 %v5449, %v7016
    %v7018 = vpop.f32.mrb[0].mxu0
    %v7019 = vpop.f32.mrb[0].mxu0
    %v7020 = vadd.f32 %v5450, %v7019
    %v7021 = vpop.f32.mrb[0].mxu0
    %7022 = vmatprep.mubr.bf16.mxu0 0
    %7023 = vmatmul.mubr.bf16.gmra.mrb[0].mxu0 %v5476
    %v7024 = vpop.f32.mrb[0].mxu0
    %v7025 = vadd.f32 %v5451, %v7024
    %v7026 = vpop.f32.mrb[0].mxu0
    %v7027 = vpop.f32.mrb[0].mxu0
    %v7028 = vpop.f32.mrb[0].mxu0
    %7029 = vdwg.mxu0
    %v7034 = vunpack.c.l.b16 %v5332
    %v7035 = vunpack.c.l.b16 %v5333
    %v7036 = vunpack.c.l.b16 %v5334
    %v7037 = vunpack.c.l.b16 %v5335
    %v7038 = vpack.c.b16 %v7035, %v7034
    %v7039 = vpack.c.b16 %v7037, %v7036
    %7042 = vmatprep.subr.bf16.mxu0 0
    %7043 = vmatpush1.bf16.msra.mxu0 %v7038
    %7044 = vmatprep.subr.bf16.mxu0 0
    %7045 = vmatpush1.bf16.msra.mxu0 %v7039
    %7046 = vmatprep.subr.bf16.mxu0 0
    %7047 = vmatpush1.bf16.msra.mxu0 0
    %7048 = vmatprep.subr.bf16.mxu0 0
    %7049 = vmatpush1.bf16.msra.mxu0 0
    %7050 = vmatprep.subr.bf16.mxu0 0
    %7051 = vmatpush1.bf16.msra.mxu0 0
    %7052 = vmatprep.subr.bf16.mxu0 0
    %7053 = vmatpush1.bf16.msra.mxu0 0
    %7054 = vmatprep.subr.bf16.mxu0 0
    %7055 = vmatpush1.bf16.msra.mxu0 0
    %7056 = vmatprep.subr.bf16.mxu0 0
    %7057 = vmatpush1.bf16.msra.mxu0 0
    %7058 = vmatprep.subr.bf16.mxu0 0
    %7059 = vmatpush1.bf16.msra.mxu0 0
    %7060 = vmatprep.subr.bf16.mxu0 0
    %7061 = vmatpush1.bf16.msra.mxu0 0
    %7062 = vmatprep.subr.bf16.mxu0 0
    %7063 = vmatpush1.bf16.msra.mxu0 0
    %7064 = vmatprep.subr.bf16.mxu0 0
    %7065 = vmatpush1.bf16.msra.mxu0 0
    %7066 = vmatprep.subr.bf16.mxu0 0
    %7067 = vmatpush1.bf16.msra.mxu0 0
    %7068 = vmatprep.subr.bf16.mxu0 0
    %7069 = vmatpush1.bf16.msra.mxu0 0
    %7070 = vmatprep.subr.bf16.mxu0 0
    %7071 = vmatpush1.bf16.msra.mxu0 0
    %7072 = vmatprep.subr.bf16.mxu0 0
    %7073 = vmatpush1.bf16.msra.mxu0 0
    %7074 = vmatprep.mubr.bf16.mxu0 0
    %7075 = vmatmul.mubr.bf16.gmra.mrb[0].mxu0 %v5470
    %v7076 = vpop.f32.mrb[0].mxu0
    %v7077 = vadd.f32 %v5452, %v7076
    %v7078 = vpop.f32.mrb[0].mxu0
    %v7079 = vpop.f32.mrb[0].mxu0
    %v7080 = vadd.f32 %v5453, %v7079
    %v7081 = vpop.f32.mrb[0].mxu0
    %7082 = vmatprep.mubr.bf16.mxu0 0
    %7083 = vmatmul.mubr.bf16.gmra.mrb[0].mxu0 %v5473
    %v7084 = vpop.f32.mrb[0].mxu0
    %v7085 = vadd.f32 %v5454, %v7084
    %v7086 = vpop.f32.mrb[0].mxu0
    %v7087 = vpop.f32.mrb[0].mxu0
    %v7088 = vadd.f32 %v5455, %v7087
    %v7089 = vpop.f32.mrb[0].mxu0
    %7090 = vmatprep.mubr.bf16.mxu0 0
    %7091 = vmatmul.mubr.bf16.gmra.mrb[0].mxu0 %v5476
    %v7092 = vpop.f32.mrb[0].mxu0
    %v7093 = vadd.f32 %v5456, %v7092
    %v7094 = vpop.f32.mrb[0].mxu0
    %v7095 = vpop.f32.mrb[0].mxu0
    %v7096 = vpop.f32.mrb[0].mxu0
    %7097 = vdwg.mxu0
    %v7098 = vpack.c.bf16 %v5516, %v5513
    %v7099 = vpack.c.bf16 %v5524, %v5521
    %v7100 = vpack.c.bf16 %v5529, %v5529
    %v7101 = vpack.c.bf16 %v5584, %v5581
    %v7102 = vpack.c.bf16 %v5592, %v5589
    %v7103 = vpack.c.bf16 %v5597, %v5597
    %v7104 = vpack.c.bf16 %v5652, %v5649
    %v7105 = vpack.c.bf16 %v5660, %v5657
    %v7106 = vpack.c.bf16 %v5665, %v5665
    %v7107 = vpack.c.bf16 %v5720, %v5717
    %v7108 = vpack.c.bf16 %v5728, %v5725
    %v7109 = vpack.c.bf16 %v5733, %v5733
    %v7110 = vpack.c.bf16 %v5788, %v5785
    %v7111 = vpack.c.bf16 %v5796, %v5793
    %v7112 = vpack.c.bf16 %v5801, %v5801
    %v7113 = vpack.c.bf16 %v5856, %v5853
    %v7114 = vpack.c.bf16 %v5864, %v5861
    %v7115 = vpack.c.bf16 %v5869, %v5869
    %v7116 = vpack.c.bf16 %v5924, %v5921
    %v7117 = vpack.c.bf16 %v5932, %v5929
    %v7118 = vpack.c.bf16 %v5937, %v5937
    %v7119 = vpack.c.bf16 %v5992, %v5989
    %v7120 = vpack.c.bf16 %v6000, %v5997
    %v7121 = vpack.c.bf16 %v6005, %v6005
    %v7122 = vpack.c.bf16 %v6060, %v6057
    %v7123 = vpack.c.bf16 %v6068, %v6065
    %v7124 = vpack.c.bf16 %v6073, %v6073
    %v7125 = vpack.c.bf16 %v6128, %v6125
    %v7126 = vpack.c.bf16 %v6136, %v6133
    %v7127 = vpack.c.bf16 %v6141, %v6141
    %v7128 = vpack.c.bf16 %v6196, %v6193
    %v7129 = vpack.c.bf16 %v6204, %v6201
    %v7130 = vpack.c.bf16 %v6209, %v6209
    %v7131 = vpack.c.bf16 %v6264, %v6261
    %v7132 = vpack.c.bf16 %v6272, %v6269
    %v7133 = vpack.c.bf16 %v6277, %v6277
    %v7134 = vpack.c.bf16 %v6332, %v6329
    %v7135 = vpack.c.bf16 %v6340, %v6337
    %v7136 = vpack.c.bf16 %v6345, %v6345
    %v7137 = vpack.c.bf16 %v6400, %v6397
    %v7138 = vpack.c.bf16 %v6408, %v6405
    %v7139 = vpack.c.bf16 %v6413, %v6413
    %v7140 = vpack.c.bf16 %v6468, %v6465
    %v7141 = vpack.c.bf16 %v6476, %v6473
    %v7142 = vpack.c.bf16 %v6481, %v6481
    %v7143 = vpack.c.bf16 %v6536, %v6533
    %v7144 = vpack.c.bf16 %v6544, %v6541
    %v7145 = vpack.c.bf16 %v6549, %v6549
    %v7147 = vsel %vm2175, %v7098, 0
    %v7150 = vsel %vm2175, %v7099, 0
    %v7153 = vsel %vm2175, %v7100, 0
    %v7156 = vsel %vm2175, %v7122, 0
    %v7159 = vsel %vm2175, %v7123, 0
    %v7162 = vsel %vm2175, %v7124, 0
    %7164 = vmatprep.subr.bf16.mxu0 0
    %7165 = vmatpush1.bf16.xpose.msra.mxu0 %v7156
    %7166 = vmatprep.subr.bf16.mxu0 0
    %7167 = vmatpush1.bf16.xpose.msra.mxu0 %v7159
    %7168 = vmatprep.subr.bf16.mxu0 0
    %7169 = vmatpush1.bf16.xpose.msra.mxu0 %v7162
    %7170 = vmatprep.subr.bf16.mxu0 0
    %7171 = vmatpush1.bf16.xpose.msra.mxu0 0
    %7172 = vmatprep.subr.bf16.mxu0 0
    %7173 = vmatpush1.bf16.xpose.msra.mxu0 0
    %7174 = vmatprep.subr.bf16.mxu0 0
    %7175 = vmatpush1.bf16.xpose.msra.mxu0 0
    %7176 = vmatprep.subr.bf16.mxu0 0
    %7177 = vmatpush1.bf16.xpose.msra.mxu0 0
    %7178 = vmatprep.subr.bf16.mxu0 0
    %7179 = vmatpush1.bf16.xpose.msra.mxu0 0
    %7180 = vmatprep.subr.bf16.mxu0 0
    %7181 = vmatpush1.bf16.xpose.msra.mxu0 0
    %7182 = vmatprep.subr.bf16.mxu0 0
    %7183 = vmatpush1.bf16.xpose.msra.mxu0 0
    %7184 = vmatprep.subr.bf16.mxu0 0
    %7185 = vmatpush1.bf16.xpose.msra.mxu0 0
    %7186 = vmatprep.subr.bf16.mxu0 0
    %7187 = vmatpush1.bf16.xpose.msra.mxu0 0
    %7188 = vmatprep.subr.bf16.mxu0 0
    %7189 = vmatpush1.bf16.xpose.msra.mxu0 0
    %7190 = vmatprep.subr.bf16.mxu0 0
    %7191 = vmatpush1.bf16.xpose.msra.mxu0 0
    %7192 = vmatprep.subr.bf16.mxu0 0
    %7193 = vmatpush1.bf16.xpose.msra.mxu0 0
    %7194 = vmatprep.subr.bf16.mxu0 0
    %7195 = vmatpush1.bf16.xpose.msra.mxu0 0
    %7196 = vmatprep.mubr.bf16.mxu0 0
    %7197 = vmatmul.mubr.bf16.gmra.mrb[0].mxu0 %v7147
    %v7198 = vpop.f32.mrb[0].mxu0
    %v7199 = vadd.f32 0.0, %v7198
    %v7200 = vpop.f32.mrb[0].mxu0
    %v7201 = vpop.f32.mrb[0].mxu0
    %v7202 = vadd.f32 0.0, %v7201
    %v7203 = vpop.f32.mrb[0].mxu0
    %7204 = vmatprep.mubr.bf16.mxu0 0
    %7205 = vmatmul.mubr.bf16.gmra.mrb[0].mxu0 %v7150
    %v7206 = vpop.f32.mrb[0].mxu0
    %v7207 = vadd.f32 0.0, %v7206
    %v7208 = vpop.f32.mrb[0].mxu0
    %v7209 = vpop.f32.mrb[0].mxu0
    %v7210 = vadd.f32 0.0, %v7209
    %v7211 = vpop.f32.mrb[0].mxu0
    %7212 = vmatprep.mubr.bf16.mxu0 0
    %7213 = vmatmul.mubr.bf16.gmra.mrb[0].mxu0 %v7153
    %v7214 = vpop.f32.mrb[0].mxu0
    %v7215 = vadd.f32 0.0, %v7214
    %v7216 = vpop.f32.mrb[0].mxu0
    %v7217 = vpop.f32.mrb[0].mxu0
    %v7218 = vpop.f32.mrb[0].mxu0
    %7219 = vdwg.mxu0
    %v7221 = vsel %vm2175, %v7101, 0
    %v7224 = vsel %vm2175, %v7102, 0
    %v7227 = vsel %vm2175, %v7103, 0
    %v7230 = vsel %vm2175, %v7125, 0
    %v7233 = vsel %vm2175, %v7126, 0
    %v7236 = vsel %vm2175, %v7127, 0
    %7238 = vmatprep.subr.bf16.mxu0 0
    %7239 = vmatpush1.bf16.xpose.msra.mxu0 %v7230
    %7240 = vmatprep.subr.bf16.mxu0 0
    %7241 = vmatpush1.bf16.xpose.msra.mxu0 %v7233
    %7242 = vmatprep.subr.bf16.mxu0 0
    %7243 = vmatpush1.bf16.xpose.msra.mxu0 %v7236
    %7244 = vmatprep.subr.bf16.mxu0 0
    %7245 = vmatpush1.bf16.xpose.msra.mxu0 0
    %7246 = vmatprep.subr.bf16.mxu0 0
    %7247 = vmatpush1.bf16.xpose.msra.mxu0 0
    %7248 = vmatprep.subr.bf16.mxu0 0
    %7249 = vmatpush1.bf16.xpose.msra.mxu0 0
    %7250 = vmatprep.subr.bf16.mxu0 0
    %7251 = vmatpush1.bf16.xpose.msra.mxu0 0
    %7252 = vmatprep.subr.bf16.mxu0 0
    %7253 = vmatpush1.bf16.xpose.msra.mxu0 0
    %7254 = vmatprep.subr.bf16.mxu0 0
    %7255 = vmatpush1.bf16.xpose.msra.mxu0 0
    %7256 = vmatprep.subr.bf16.mxu0 0
    %7257 = vmatpush1.bf16.xpose.msra.mxu0 0
    %7258 = vmatprep.subr.bf16.mxu0 0
    %7259 = vmatpush1.bf16.xpose.msra.mxu0 0
    %7260 = vmatprep.subr.bf16.mxu0 0
    %7261 = vmatpush1.bf16.xpose.msra.mxu0 0
    %7262 = vmatprep.subr.bf16.mxu0 0
    %7263 = vmatpush1.bf16.xpose.msra.mxu0 0
    %7264 = vmatprep.subr.bf16.mxu0 0
    %7265 = vmatpush1.bf16.xpose.msra.mxu0 0
    %7266 = vmatprep.subr.bf16.mxu0 0
    %7267 = vmatpush1.bf16.xpose.msra.mxu0 0
    %7268 = vmatprep.subr.bf16.mxu0 0
    %7269 = vmatpush1.bf16.xpose.msra.mxu0 0
    %7270 = vmatprep.mubr.bf16.mxu0 0
    %7271 = vmatmul.mubr.bf16.gmra.mrb[0].mxu0 %v7221
    %v7272 = vpop.f32.mrb[0].mxu0
    %v7273 = vadd.f32 0.0, %v7272
    %v7274 = vpop.f32.mrb[0].mxu0
    %v7275 = vpop.f32.mrb[0].mxu0
    %v7276 = vadd.f32 0.0, %v7275
    %v7277 = vpop.f32.mrb[0].mxu0
    %7278 = vmatprep.mubr.bf16.mxu0 0
    %7279 = vmatmul.mubr.bf16.gmra.mrb[0].mxu0 %v7224
    %v7280 = vpop.f32.mrb[0].mxu0
    %v7281 = vadd.f32 0.0, %v7280
    %v7282 = vpop.f32.mrb[0].mxu0
    %v7283 = vpop.f32.mrb[0].mxu0
    %v7284 = vadd.f32 0.0, %v7283
    %v7285 = vpop.f32.mrb[0].mxu0
    %7286 = vmatprep.mubr.bf16.mxu0 0
    %7287 = vmatmul.mubr.bf16.gmra.mrb[0].mxu0 %v7227
    %v7288 = vpop.f32.mrb[0].mxu0
    %v7289 = vadd.f32 0.0, %v7288
    %v7290 = vpop.f32.mrb[0].mxu0
    %v7291 = vpop.f32.mrb[0].mxu0
    %v7292 = vpop.f32.mrb[0].mxu0
    %7293 = vdwg.mxu0
    %v7295 = vsel %vm2175, %v7104, 0
    %v7298 = vsel %vm2175, %v7105, 0
    %v7301 = vsel %vm2175, %v7106, 0
    %v7304 = vsel %vm2175, %v7128, 0
    %v7307 = vsel %vm2175, %v7129, 0
    %v7310 = vsel %vm2175, %v7130, 0
    %7312 = vmatprep.subr.bf16.mxu0 0
    %7313 = vmatpush1.bf16.xpose.msra.mxu0 %v7304
    %7314 = vmatprep.subr.bf16.mxu0 0
    %7315 = vmatpush1.bf16.xpose.msra.mxu0 %v7307
    %7316 = vmatprep.subr.bf16.mxu0 0
    %7317 = vmatpush1.bf16.xpose.msra.mxu0 %v7310
    %7318 = vmatprep.subr.bf16.mxu0 0
    %7319 = vmatpush1.bf16.xpose.msra.mxu0 0
    %7320 = vmatprep.subr.bf16.mxu0 0
    %7321 = vmatpush1.bf16.xpose.msra.mxu0 0
    %7322 = vmatprep.subr.bf16.mxu0 0
    %7323 = vmatpush1.bf16.xpose.msra.mxu0 0
    %7324 = vmatprep.subr.bf16.mxu0 0
    %7325 = vmatpush1.bf16.xpose.msra.mxu0 0
    %7326 = vmatprep.subr.bf16.mxu0 0
    %7327 = vmatpush1.bf16.xpose.msra.mxu0 0
    %7328 = vmatprep.subr.bf16.mxu0 0
    %7329 = vmatpush1.bf16.xpose.msra.mxu0 0
    %7330 = vmatprep.subr.bf16.mxu0 0
    %7331 = vmatpush1.bf16.xpose.msra.mxu0 0
    %7332 = vmatprep.subr.bf16.mxu0 0
    %7333 = vmatpush1.bf16.xpose.msra.mxu0 0
    %7334 = vmatprep.subr.bf16.mxu0 0
    %7335 = vmatpush1.bf16.xpose.msra.mxu0 0
    %7336 = vmatprep.subr.bf16.mxu0 0
    %7337 = vmatpush1.bf16.xpose.msra.mxu0 0
    %7338 = vmatprep.subr.bf16.mxu0 0
    %7339 = vmatpush1.bf16.xpose.msra.mxu0 0
    %7340 = vmatprep.subr.bf16.mxu0 0
    %7341 = vmatpush1.bf16.xpose.msra.mxu0 0
    %7342 = vmatprep.subr.bf16.mxu0 0
    %7343 = vmatpush1.bf16.xpose.msra.mxu0 0
    %7344 = vmatprep.mubr.bf16.mxu0 0
    %7345 = vmatmul.mubr.bf16.gmra.mrb[0].mxu0 %v7295
    %v7346 = vpop.f32.mrb[0].mxu0
    %v7347 = vadd.f32 0.0, %v7346
    %v7348 = vpop.f32.mrb[0].mxu0
    %v7349 = vpop.f32.mrb[0].mxu0
    %v7350 = vadd.f32 0.0, %v7349
    %v7351 = vpop.f32.mrb[0].mxu0
    %7352 = vmatprep.mubr.bf16.mxu0 0
    %7353 = vmatmul.mubr.bf16.gmra.mrb[0].mxu0 %v7298
    %v7354 = vpop.f32.mrb[0].mxu0
    %v7355 = vadd.f32 0.0, %v7354
    %v7356 = vpop.f32.mrb[0].mxu0
    %v7357 = vpop.f32.mrb[0].mxu0
    %v7358 = vadd.f32 0.0, %v7357
    %v7359 = vpop.f32.mrb[0].mxu0
    %7360 = vmatprep.mubr.bf16.mxu0 0
    %7361 = vmatmul.mubr.bf16.gmra.mrb[0].mxu0 %v7301
    %v7362 = vpop.f32.mrb[0].mxu0
    %v7363 = vadd.f32 0.0, %v7362
    %v7364 = vpop.f32.mrb[0].mxu0
    %v7365 = vpop.f32.mrb[0].mxu0
    %v7366 = vpop.f32.mrb[0].mxu0
    %7367 = vdwg.mxu0
    %v7369 = vsel %vm2175, %v7107, 0
    %v7372 = vsel %vm2175, %v7108, 0
    %v7375 = vsel %vm2175, %v7109, 0
    %v7378 = vsel %vm2175, %v7131, 0
    %v7381 = vsel %vm2175, %v7132, 0
    %v7384 = vsel %vm2175, %v7133, 0
    %7386 = vmatprep.subr.bf16.mxu0 0
    %7387 = vmatpush1.bf16.xpose.msra.mxu0 %v7378
    %7388 = vmatprep.subr.bf16.mxu0 0
    %7389 = vmatpush1.bf16.xpose.msra.mxu0 %v7381
    %7390 = vmatprep.subr.bf16.mxu0 0
    %7391 = vmatpush1.bf16.xpose.msra.mxu0 %v7384
    %7392 = vmatprep.subr.bf16.mxu0 0
    %7393 = vmatpush1.bf16.xpose.msra.mxu0 0
    %7394 = vmatprep.subr.bf16.mxu0 0
    %7395 = vmatpush1.bf16.xpose.msra.mxu0 0
    %7396 = vmatprep.subr.bf16.mxu0 0
    %7397 = vmatpush1.bf16.xpose.msra.mxu0 0
    %7398 = vmatprep.subr.bf16.mxu0 0
    %7399 = vmatpush1.bf16.xpose.msra.mxu0 0
    %7400 = vmatprep.subr.bf16.mxu0 0
    %7401 = vmatpush1.bf16.xpose.msra.mxu0 0
    %7402 = vmatprep.subr.bf16.mxu0 0
    %7403 = vmatpush1.bf16.xpose.msra.mxu0 0
    %7404 = vmatprep.subr.bf16.mxu0 0
    %7405 = vmatpush1.bf16.xpose.msra.mxu0 0
    %7406 = vmatprep.subr.bf16.mxu0 0
    %7407 = vmatpush1.bf16.xpose.msra.mxu0 0
    %7408 = vmatprep.subr.bf16.mxu0 0
    %7409 = vmatpush1.bf16.xpose.msra.mxu0 0
    %7410 = vmatprep.subr.bf16.mxu0 0
    %7411 = vmatpush1.bf16.xpose.msra.mxu0 0
    %7412 = vmatprep.subr.bf16.mxu0 0
    %7413 = vmatpush1.bf16.xpose.msra.mxu0 0
    %7414 = vmatprep.subr.bf16.mxu0 0
    %7415 = vmatpush1.bf16.xpose.msra.mxu0 0
    %7416 = vmatprep.subr.bf16.mxu0 0
    %7417 = vmatpush1.bf16.xpose.msra.mxu0 0
    %7418 = vmatprep.mubr.bf16.mxu0 0
    %7419 = vmatmul.mubr.bf16.gmra.mrb[0].mxu0 %v7369
    %v7420 = vpop.f32.mrb[0].mxu0
    %v7421 = vadd.f32 0.0, %v7420
    %v7422 = vpop.f32.mrb[0].mxu0
    %v7423 = vpop.f32.mrb[0].mxu0
    %v7424 = vadd.f32 0.0, %v7423
    %v7425 = vpop.f32.mrb[0].mxu0
    %7426 = vmatprep.mubr.bf16.mxu0 0
    %7427 = vmatmul.mubr.bf16.gmra.mrb[0].mxu0 %v7372
    %v7428 = vpop.f32.mrb[0].mxu0
    %v7429 = vadd.f32 0.0, %v7428
    %v7430 = vpop.f32.mrb[0].mxu0
    %v7431 = vpop.f32.mrb[0].mxu0
    %v7432 = vadd.f32 0.0, %v7431
    %v7433 = vpop.f32.mrb[0].mxu0
    %7434 = vmatprep.mubr.bf16.mxu0 0
    %7435 = vmatmul.mubr.bf16.gmra.mrb[0].mxu0 %v7375
    %v7436 = vpop.f32.mrb[0].mxu0
    %v7437 = vadd.f32 0.0, %v7436
    %v7438 = vpop.f32.mrb[0].mxu0
    %v7439 = vpop.f32.mrb[0].mxu0
    %v7440 = vpop.f32.mrb[0].mxu0
    %7441 = vdwg.mxu0
    %v7443 = vsel %vm2175, %v7110, 0
    %v7446 = vsel %vm2175, %v7111, 0
    %v7449 = vsel %vm2175, %v7112, 0
    %v7452 = vsel %vm2175, %v7134, 0
    %v7455 = vsel %vm2175, %v7135, 0
    %v7458 = vsel %vm2175, %v7136, 0
    %7460 = vmatprep.subr.bf16.mxu0 0
    %7461 = vmatpush1.bf16.xpose.msra.mxu0 %v7452
    %7462 = vmatprep.subr.bf16.mxu0 0
    %7463 = vmatpush1.bf16.xpose.msra.mxu0 %v7455
    %7464 = vmatprep.subr.bf16.mxu0 0
    %7465 = vmatpush1.bf16.xpose.msra.mxu0 %v7458
    %7466 = vmatprep.subr.bf16.mxu0 0
    %7467 = vmatpush1.bf16.xpose.msra.mxu0 0
    %7468 = vmatprep.subr.bf16.mxu0 0
    %7469 = vmatpush1.bf16.xpose.msra.mxu0 0
    %7470 = vmatprep.subr.bf16.mxu0 0
    %7471 = vmatpush1.bf16.xpose.msra.mxu0 0
    %7472 = vmatprep.subr.bf16.mxu0 0
    %7473 = vmatpush1.bf16.xpose.msra.mxu0 0
    %7474 = vmatprep.subr.bf16.mxu0 0
    %7475 = vmatpush1.bf16.xpose.msra.mxu0 0
    %7476 = vmatprep.subr.bf16.mxu0 0
    %7477 = vmatpush1.bf16.xpose.msra.mxu0 0
    %7478 = vmatprep.subr.bf16.mxu0 0
    %7479 = vmatpush1.bf16.xpose.msra.mxu0 0
    %7480 = vmatprep.subr.bf16.mxu0 0
    %7481 = vmatpush1.bf16.xpose.msra.mxu0 0
    %7482 = vmatprep.subr.bf16.mxu0 0
    %7483 = vmatpush1.bf16.xpose.msra.mxu0 0
    %7484 = vmatprep.subr.bf16.mxu0 0
    %7485 = vmatpush1.bf16.xpose.msra.mxu0 0
    %7486 = vmatprep.subr.bf16.mxu0 0
    %7487 = vmatpush1.bf16.xpose.msra.mxu0 0
    %7488 = vmatprep.subr.bf16.mxu0 0
    %7489 = vmatpush1.bf16.xpose.msra.mxu0 0
    %7490 = vmatprep.subr.bf16.mxu0 0
    %7491 = vmatpush1.bf16.xpose.msra.mxu0 0
    %7492 = vmatprep.mubr.bf16.mxu0 0
    %7493 = vmatmul.mubr.bf16.gmra.mrb[0].mxu0 %v7443
    %v7494 = vpop.f32.mrb[0].mxu0
    %v7495 = vadd.f32 0.0, %v7494
    %v7496 = vpop.f32.mrb[0].mxu0
    %v7497 = vpop.f32.mrb[0].mxu0
    %v7498 = vadd.f32 0.0, %v7497
    %v7499 = vpop.f32.mrb[0].mxu0
    %7500 = vmatprep.mubr.bf16.mxu0 0
    %7501 = vmatmul.mubr.bf16.gmra.mrb[0].mxu0 %v7446
    %v7502 = vpop.f32.mrb[0].mxu0
    %v7503 = vadd.f32 0.0, %v7502
    %v7504 = vpop.f32.mrb[0].mxu0
    %v7505 = vpop.f32.mrb[0].mxu0
    %v7506 = vadd.f32 0.0, %v7505
    %v7507 = vpop.f32.mrb[0].mxu0
    %7508 = vmatprep.mubr.bf16.mxu0 0
    %7509 = vmatmul.mubr.bf16.gmra.mrb[0].mxu0 %v7449
    %v7510 = vpop.f32.mrb[0].mxu0
    %v7511 = vadd.f32 0.0, %v7510
    %v7512 = vpop.f32.mrb[0].mxu0
    %v7513 = vpop.f32.mrb[0].mxu0
    %v7514 = vpop.f32.mrb[0].mxu0
    %7515 = vdwg.mxu0
    %v7517 = vsel %vm2175, %v7113, 0
    %v7520 = vsel %vm2175, %v7114, 0
    %v7523 = vsel %vm2175, %v7115, 0
    %v7526 = vsel %vm2175, %v7137, 0
    %v7529 = vsel %vm2175, %v7138, 0
    %v7532 = vsel %vm2175, %v7139, 0
    %7534 = vmatprep.subr.bf16.mxu0 0
    %7535 = vmatpush1.bf16.xpose.msra.mxu0 %v7526
    %7536 = vmatprep.subr.bf16.mxu0 0
    %7537 = vmatpush1.bf16.xpose.msra.mxu0 %v7529
    %7538 = vmatprep.subr.bf16.mxu0 0
    %7539 = vmatpush1.bf16.xpose.msra.mxu0 %v7532
    %7540 = vmatprep.subr.bf16.mxu0 0
    %7541 = vmatpush1.bf16.xpose.msra.mxu0 0
    %7542 = vmatprep.subr.bf16.mxu0 0
    %7543 = vmatpush1.bf16.xpose.msra.mxu0 0
    %7544 = vmatprep.subr.bf16.mxu0 0
    %7545 = vmatpush1.bf16.xpose.msra.mxu0 0
    %7546 = vmatprep.subr.bf16.mxu0 0
    %7547 = vmatpush1.bf16.xpose.msra.mxu0 0
    %7548 = vmatprep.subr.bf16.mxu0 0
    %7549 = vmatpush1.bf16.xpose.msra.mxu0 0
    %7550 = vmatprep.subr.bf16.mxu0 0
    %7551 = vmatpush1.bf16.xpose.msra.mxu0 0
    %7552 = vmatprep.subr.bf16.mxu0 0
    %7553 = vmatpush1.bf16.xpose.msra.mxu0 0
    %7554 = vmatprep.subr.bf16.mxu0 0
    %7555 = vmatpush1.bf16.xpose.msra.mxu0 0
    %7556 = vmatprep.subr.bf16.mxu0 0
    %7557 = vmatpush1.bf16.xpose.msra.mxu0 0
    %7558 = vmatprep.subr.bf16.mxu0 0
    %7559 = vmatpush1.bf16.xpose.msra.mxu0 0
    %7560 = vmatprep.subr.bf16.mxu0 0
    %7561 = vmatpush1.bf16.xpose.msra.mxu0 0
    %7562 = vmatprep.subr.bf16.mxu0 0
    %7563 = vmatpush1.bf16.xpose.msra.mxu0 0
    %7564 = vmatprep.subr.bf16.mxu0 0
    %7565 = vmatpush1.bf16.xpose.msra.mxu0 0
    %7566 = vmatprep.mubr.bf16.mxu0 0
    %7567 = vmatmul.mubr.bf16.gmra.mrb[0].mxu0 %v7517
    %v7568 = vpop.f32.mrb[0].mxu0
    %v7569 = vadd.f32 0.0, %v7568
    %v7570 = vpop.f32.mrb[0].mxu0
    %v7571 = vpop.f32.mrb[0].mxu0
    %v7572 = vadd.f32 0.0, %v7571
    %v7573 = vpop.f32.mrb[0].mxu0
    %7574 = vmatprep.mubr.bf16.mxu0 0
    %7575 = vmatmul.mubr.bf16.gmra.mrb[0].mxu0 %v7520
    %v7576 = vpop.f32.mrb[0].mxu0
    %v7577 = vadd.f32 0.0, %v7576
    %v7578 = vpop.f32.mrb[0].mxu0
    %v7579 = vpop.f32.mrb[0].mxu0
    %v7580 = vadd.f32 0.0, %v7579
    %v7581 = vpop.f32.mrb[0].mxu0
    %7582 = vmatprep.mubr.bf16.mxu0 0
    %7583 = vmatmul.mubr.bf16.gmra.mrb[0].mxu0 %v7523
    %v7584 = vpop.f32.mrb[0].mxu0
    %v7585 = vadd.f32 0.0, %v7584
    %v7586 = vpop.f32.mrb[0].mxu0
    %v7587 = vpop.f32.mrb[0].mxu0
    %v7588 = vpop.f32.mrb[0].mxu0
    %7589 = vdwg.mxu0
    %v7591 = vsel %vm2175, %v7116, 0
    %v7594 = vsel %vm2175, %v7117, 0
    %v7597 = vsel %vm2175, %v7118, 0
    %v7600 = vsel %vm2175, %v7140, 0
    %v7603 = vsel %vm2175, %v7141, 0
    %v7606 = vsel %vm2175, %v7142, 0
    %7608 = vmatprep.subr.bf16.mxu0 0
    %7609 = vmatpush1.bf16.xpose.msra.mxu0 %v7600
    %7610 = vmatprep.subr.bf16.mxu0 0
    %7611 = vmatpush1.bf16.xpose.msra.mxu0 %v7603
    %7612 = vmatprep.subr.bf16.mxu0 0
    %7613 = vmatpush1.bf16.xpose.msra.mxu0 %v7606
    %7614 = vmatprep.subr.bf16.mxu0 0
    %7615 = vmatpush1.bf16.xpose.msra.mxu0 0
    %7616 = vmatprep.subr.bf16.mxu0 0
    %7617 = vmatpush1.bf16.xpose.msra.mxu0 0
    %7618 = vmatprep.subr.bf16.mxu0 0
    %7619 = vmatpush1.bf16.xpose.msra.mxu0 0
    %7620 = vmatprep.subr.bf16.mxu0 0
    %7621 = vmatpush1.bf16.xpose.msra.mxu0 0
    %7622 = vmatprep.subr.bf16.mxu0 0
    %7623 = vmatpush1.bf16.xpose.msra.mxu0 0
    %7624 = vmatprep.subr.bf16.mxu0 0
    %7625 = vmatpush1.bf16.xpose.msra.mxu0 0
    %7626 = vmatprep.subr.bf16.mxu0 0
    %7627 = vmatpush1.bf16.xpose.msra.mxu0 0
    %7628 = vmatprep.subr.bf16.mxu0 0
    %7629 = vmatpush1.bf16.xpose.msra.mxu0 0
    %7630 = vmatprep.subr.bf16.mxu0 0
    %7631 = vmatpush1.bf16.xpose.msra.mxu0 0
    %7632 = vmatprep.subr.bf16.mxu0 0
    %7633 = vmatpush1.bf16.xpose.msra.mxu0 0
    %7634 = vmatprep.subr.bf16.mxu0 0
    %7635 = vmatpush1.bf16.xpose.msra.mxu0 0
    %7636 = vmatprep.subr.bf16.mxu0 0
    %7637 = vmatpush1.bf16.xpose.msra.mxu0 0
    %7638 = vmatprep.subr.bf16.mxu0 0
    %7639 = vmatpush1.bf16.xpose.msra.mxu0 0
    %7640 = vmatprep.mubr.bf16.mxu0 0
    %7641 = vmatmul.mubr.bf16.gmra.mrb[0].mxu0 %v7591
    %v7642 = vpop.f32.mrb[0].mxu0
    %v7643 = vadd.f32 0.0, %v7642
    %v7644 = vpop.f32.mrb[0].mxu0
    %v7645 = vpop.f32.mrb[0].mxu0
    %v7646 = vadd.f32 0.0, %v7645
    %v7647 = vpop.f32.mrb[0].mxu0
    %7648 = vmatprep.mubr.bf16.mxu0 0
    %7649 = vmatmul.mubr.bf16.gmra.mrb[0].mxu0 %v7594
    %v7650 = vpop.f32.mrb[0].mxu0
    %v7651 = vadd.f32 0.0, %v7650
    %v7652 = vpop.f32.mrb[0].mxu0
    %v7653 = vpop.f32.mrb[0].mxu0
    %v7654 = vadd.f32 0.0, %v7653
    %v7655 = vpop.f32.mrb[0].mxu0
    %7656 = vmatprep.mubr.bf16.mxu0 0
    %7657 = vmatmul.mubr.bf16.gmra.mrb[0].mxu0 %v7597
    %v7658 = vpop.f32.mrb[0].mxu0
    %v7659 = vadd.f32 0.0, %v7658
    %v7660 = vpop.f32.mrb[0].mxu0
    %v7661 = vpop.f32.mrb[0].mxu0
    %v7662 = vpop.f32.mrb[0].mxu0
    %7663 = vdwg.mxu0
    %v7665 = vsel %vm2175, %v7119, 0
    %v7668 = vsel %vm2175, %v7120, 0
    %v7671 = vsel %vm2175, %v7121, 0
    %v7674 = vsel %vm2175, %v7143, 0
    %v7677 = vsel %vm2175, %v7144, 0
    %v7680 = vsel %vm2175, %v7145, 0
    %7682 = vmatprep.subr.bf16.mxu0 0
    %7683 = vmatpush1.bf16.xpose.msra.mxu0 %v7674
    %7684 = vmatprep.subr.bf16.mxu0 0
    %7685 = vmatpush1.bf16.xpose.msra.mxu0 %v7677
    %7686 = vmatprep.subr.bf16.mxu0 0
    %7687 = vmatpush1.bf16.xpose.msra.mxu0 %v7680
    %7688 = vmatprep.subr.bf16.mxu0 0
    %7689 = vmatpush1.bf16.xpose.msra.mxu0 0
    %7690 = vmatprep.subr.bf16.mxu0 0
    %7691 = vmatpush1.bf16.xpose.msra.mxu0 0
    %7692 = vmatprep.subr.bf16.mxu0 0
    %7693 = vmatpush1.bf16.xpose.msra.mxu0 0
    %7694 = vmatprep.subr.bf16.mxu0 0
    %7695 = vmatpush1.bf16.xpose.msra.mxu0 0
    %7696 = vmatprep.subr.bf16.mxu0 0
    %7697 = vmatpush1.bf16.xpose.msra.mxu0 0
    %7698 = vmatprep.subr.bf16.mxu0 0
    %7699 = vmatpush1.bf16.xpose.msra.mxu0 0
    %7700 = vmatprep.subr.bf16.mxu0 0
    %7701 = vmatpush1.bf16.xpose.msra.mxu0 0
    %7702 = vmatprep.subr.bf16.mxu0 0
    %7703 = vmatpush1.bf16.xpose.msra.mxu0 0
    %7704 = vmatprep.subr.bf16.mxu0 0
    %7705 = vmatpush1.bf16.xpose.msra.mxu0 0
    %7706 = vmatprep.subr.bf16.mxu0 0
    %7707 = vmatpush1.bf16.xpose.msra.mxu0 0
    %7708 = vmatprep.subr.bf16.mxu0 0
    %7709 = vmatpush1.bf16.xpose.msra.mxu0 0
    %7710 = vmatprep.subr.bf16.mxu0 0
    %7711 = vmatpush1.bf16.xpose.msra.mxu0 0
    %7712 = vmatprep.subr.bf16.mxu0 0
    %7713 = vmatpush1.bf16.xpose.msra.mxu0 0
    %7714 = vmatprep.mubr.bf16.mxu0 0
    %7715 = vmatmul.mubr.bf16.gmra.mrb[0].mxu0 %v7665
    %v7716 = vpop.f32.mrb[0].mxu0
    %v7717 = vadd.f32 0.0, %v7716
    %v7718 = vpop.f32.mrb[0].mxu0
    %v7719 = vpop.f32.mrb[0].mxu0
    %v7720 = vadd.f32 0.0, %v7719
    %v7721 = vpop.f32.mrb[0].mxu0
    %7722 = vmatprep.mubr.bf16.mxu0 0
    %7723 = vmatmul.mubr.bf16.gmra.mrb[0].mxu0 %v7668
    %v7724 = vpop.f32.mrb[0].mxu0
    %v7725 = vadd.f32 0.0, %v7724
    %v7726 = vpop.f32.mrb[0].mxu0
    %v7727 = vpop.f32.mrb[0].mxu0
    %v7728 = vadd.f32 0.0, %v7727
    %v7729 = vpop.f32.mrb[0].mxu0
    %7730 = vmatprep.mubr.bf16.mxu0 0
    %7731 = vmatmul.mubr.bf16.gmra.mrb[0].mxu0 %v7671
    %v7732 = vpop.f32.mrb[0].mxu0
    %v7733 = vadd.f32 0.0, %v7732
    %v7734 = vpop.f32.mrb[0].mxu0
    %v7735 = vpop.f32.mrb[0].mxu0
    %v7736 = vpop.f32.mrb[0].mxu0
    %7737 = vdwg.mxu0
    %v7738 = vmul.f32 %v7199, 0.609375
    %v7739 = vmul.f32 %v7202, 0.609375
    %v7740 = vmul.f32 %v7207, 0.609375
    %v7741 = vmul.f32 %v7210, 0.609375
    %v7742 = vmul.f32 %v7215, 0.609375
    %v7743 = vmul.f32 %v7273, 0.609375
    %v7744 = vmul.f32 %v7276, 0.609375
    %v7745 = vmul.f32 %v7281, 0.609375
    %v7746 = vmul.f32 %v7284, 0.609375
    %v7747 = vmul.f32 %v7289, 0.609375
    %v7748 = vmul.f32 %v7347, 0.609375
    %v7749 = vmul.f32 %v7350, 0.609375
    %v7750 = vmul.f32 %v7355, 0.609375
    %v7751 = vmul.f32 %v7358, 0.609375
    %v7752 = vmul.f32 %v7363, 0.609375
    %v7753 = vmul.f32 %v7421, 0.609375
    %v7754 = vmul.f32 %v7424, 0.609375
    %v7755 = vmul.f32 %v7429, 0.609375
    %v7756 = vmul.f32 %v7432, 0.609375
    %v7757 = vmul.f32 %v7437, 0.609375
    %v7758 = vmul.f32 %v7495, 0.609375
    %v7759 = vmul.f32 %v7498, 0.609375
    %v7760 = vmul.f32 %v7503, 0.609375
    %v7761 = vmul.f32 %v7506, 0.609375
    %v7762 = vmul.f32 %v7511, 0.609375
    %v7763 = vmul.f32 %v7569, 0.609375
    %v7764 = vmul.f32 %v7572, 0.609375
    %v7765 = vmul.f32 %v7577, 0.609375
    %v7766 = vmul.f32 %v7580, 0.609375
    %v7767 = vmul.f32 %v7585, 0.609375
    %v7768 = vmul.f32 %v7643, 0.609375
    %v7769 = vmul.f32 %v7646, 0.609375
    %v7770 = vmul.f32 %v7651, 0.609375
    %v7771 = vmul.f32 %v7654, 0.609375
    %v7772 = vmul.f32 %v7659, 0.609375
    %v7773 = vmul.f32 %v7717, 0.609375
    %v7774 = vmul.f32 %v7720, 0.609375
    %v7775 = vmul.f32 %v7725, 0.609375
    %v7776 = vmul.f32 %v7728, 0.609375
    %v7777 = vmul.f32 %v7733, 0.609375
    %v7778 = vadd.f32 %v7738, %v170
    %v7779 = vadd.f32 %v7739, %v171
    %v7780 = vadd.f32 %v7740, %v172
    %v7781 = vadd.f32 %v7741, %v173
    %v7782 = vadd.f32 %v7742, %v174
    %v7783 = vadd.f32 %v7743, %v170
    %v7784 = vadd.f32 %v7744, %v171
    %v7785 = vadd.f32 %v7745, %v172
    %v7786 = vadd.f32 %v7746, %v173
    %v7787 = vadd.f32 %v7747, %v174
    %v7788 = vadd.f32 %v7748, %v170
    %v7789 = vadd.f32 %v7749, %v171
    %v7790 = vadd.f32 %v7750, %v172
    %v7791 = vadd.f32 %v7751, %v173
    %v7792 = vadd.f32 %v7752, %v174
    %v7793 = vadd.f32 %v7753, %v170
    %v7794 = vadd.f32 %v7754, %v171
    %v7795 = vadd.f32 %v7755, %v172
    %v7796 = vadd.f32 %v7756, %v173
    %v7797 = vadd.f32 %v7757, %v174
    %v7798 = vadd.f32 %v7758, %v170
    %v7799 = vadd.f32 %v7759, %v171
    %v7800 = vadd.f32 %v7760, %v172
    %v7801 = vadd.f32 %v7761, %v173
    %v7802 = vadd.f32 %v7762, %v174
    %v7803 = vadd.f32 %v7763, %v170
    %v7804 = vadd.f32 %v7764, %v171
    %v7805 = vadd.f32 %v7765, %v172
    %v7806 = vadd.f32 %v7766, %v173
    %v7807 = vadd.f32 %v7767, %v174
    %v7808 = vadd.f32 %v7768, %v170
    %v7809 = vadd.f32 %v7769, %v171
    %v7810 = vadd.f32 %v7770, %v172
    %v7811 = vadd.f32 %v7771, %v173
    %v7812 = vadd.f32 %v7772, %v174
    %v7813 = vadd.f32 %v7773, %v170
    %v7814 = vadd.f32 %v7774, %v171
    %v7815 = vadd.f32 %v7775, %v172
    %v7816 = vadd.f32 %v7776, %v173
    %v7817 = vadd.f32 %v7777, %v174
    %v7818 = vsel %vm2848, %v7778, -inf
    %7819 = vmax.xlane.f32.xlu0 %v7818
    %v7820 = vpop.xlane.xlu0 %7819
    %v7821 = vsel %vm2848, %v7779, -inf
    %7822 = vmax.xlane.f32.xlu0 %v7821
    %v7823 = vpop.xlane.xlu0 %7822
    %v7824 = vsel %vm2848, %v7780, -inf
    %7825 = vmax.xlane.f32.xlu0 %v7824
    %v7826 = vpop.xlane.xlu0 %7825
    %v7827 = vsel %vm2848, %v7781, -inf
    %7828 = vmax.xlane.f32.xlu0 %v7827
    %v7829 = vpop.xlane.xlu0 %7828
    %v7830 = vsel %vm2861, %v7782, -inf
    %7831 = vmax.xlane.f32.xlu0 %v7830
    %v7832 = vpop.xlane.xlu0 %7831
    %v7833 = vsel %vm2848, %v7783, -inf
    %7834 = vmax.xlane.f32.xlu0 %v7833
    %v7835 = vpop.xlane.xlu0 %7834
    %v7836 = vsel %vm2848, %v7784, -inf
    %7837 = vmax.xlane.f32.xlu0 %v7836
    %v7838 = vpop.xlane.xlu0 %7837
    %v7839 = vsel %vm2848, %v7785, -inf
    %7840 = vmax.xlane.f32.xlu0 %v7839
    %v7841 = vpop.xlane.xlu0 %7840
    %v7842 = vsel %vm2848, %v7786, -inf
    %7843 = vmax.xlane.f32.xlu0 %v7842
    %v7844 = vpop.xlane.xlu0 %7843
    %v7845 = vsel %vm2861, %v7787, -inf
    %7846 = vmax.xlane.f32.xlu0 %v7845
    %v7847 = vpop.xlane.xlu0 %7846
    %v7848 = vsel %vm2848, %v7788, -inf
    %7849 = vmax.xlane.f32.xlu0 %v7848
    %v7850 = vpop.xlane.xlu0 %7849
    %v7851 = vsel %vm2848, %v7789, -inf
    %7852 = vmax.xlane.f32.xlu0 %v7851
    %v7853 = vpop.xlane.xlu0 %7852
    %v7854 = vsel %vm2848, %v7790, -inf
    %7855 = vmax.xlane.f32.xlu0 %v7854
    %v7856 = vpop.xlane.xlu0 %7855
    %v7857 = vsel %vm2848, %v7791, -inf
    %7858 = vmax.xlane.f32.xlu0 %v7857
    %v7859 = vpop.xlane.xlu0 %7858
    %v7860 = vsel %vm2861, %v7792, -inf
    %7861 = vmax.xlane.f32.xlu0 %v7860
    %v7862 = vpop.xlane.xlu0 %7861
    %v7863 = vsel %vm2848, %v7793, -inf
    %7864 = vmax.xlane.f32.xlu0 %v7863
    %v7865 = vpop.xlane.xlu0 %7864
    %v7866 = vsel %vm2848, %v7794, -inf
    %7867 = vmax.xlane.f32.xlu0 %v7866
    %v7868 = vpop.xlane.xlu0 %7867
    %v7869 = vsel %vm2848, %v7795, -inf
    %7870 = vmax.xlane.f32.xlu0 %v7869
    %v7871 = vpop.xlane.xlu0 %7870
    %v7872 = vsel %vm2848, %v7796, -inf
    %7873 = vmax.xlane.f32.xlu0 %v7872
    %v7874 = vpop.xlane.xlu0 %7873
    %v7875 = vsel %vm2861, %v7797, -inf
    %7876 = vmax.xlane.f32.xlu0 %v7875
    %v7877 = vpop.xlane.xlu0 %7876
    %v7878 = vsel %vm2848, %v7798, -inf
    %7879 = vmax.xlane.f32.xlu0 %v7878
    %v7880 = vpop.xlane.xlu0 %7879
    %v7881 = vsel %vm2848, %v7799, -inf
    %7882 = vmax.xlane.f32.xlu0 %v7881
    %v7883 = vpop.xlane.xlu0 %7882
    %v7884 = vsel %vm2848, %v7800, -inf
    %7885 = vmax.xlane.f32.xlu0 %v7884
    %v7886 = vpop.xlane.xlu0 %7885
    %v7887 = vsel %vm2848, %v7801, -inf
    %7888 = vmax.xlane.f32.xlu0 %v7887
    %v7889 = vpop.xlane.xlu0 %7888
    %v7890 = vsel %vm2861, %v7802, -inf
    %7891 = vmax.xlane.f32.xlu0 %v7890
    %v7892 = vpop.xlane.xlu0 %7891
    %v7893 = vsel %vm2848, %v7803, -inf
    %7894 = vmax.xlane.f32.xlu0 %v7893
    %v7895 = vpop.xlane.xlu0 %7894
    %v7896 = vsel %vm2848, %v7804, -inf
    %7897 = vmax.xlane.f32.xlu0 %v7896
    %v7898 = vpop.xlane.xlu0 %7897
    %v7899 = vsel %vm2848, %v7805, -inf
    %7900 = vmax.xlane.f32.xlu0 %v7899
    %v7901 = vpop.xlane.xlu0 %7900
    %v7902 = vsel %vm2848, %v7806, -inf
    %7903 = vmax.xlane.f32.xlu0 %v7902
    %v7904 = vpop.xlane.xlu0 %7903
    %v7905 = vsel %vm2861, %v7807, -inf
    %7906 = vmax.xlane.f32.xlu0 %v7905
    %v7907 = vpop.xlane.xlu0 %7906
    %v7908 = vsel %vm2848, %v7808, -inf
    %7909 = vmax.xlane.f32.xlu0 %v7908
    %v7910 = vpop.xlane.xlu0 %7909
    %v7911 = vsel %vm2848, %v7809, -inf
    %7912 = vmax.xlane.f32.xlu0 %v7911
    %v7913 = vpop.xlane.xlu0 %7912
    %v7914 = vsel %vm2848, %v7810, -inf
    %7915 = vmax.xlane.f32.xlu0 %v7914
    %v7916 = vpop.xlane.xlu0 %7915
    %v7917 = vsel %vm2848, %v7811, -inf
    %7918 = vmax.xlane.f32.xlu0 %v7917
    %v7919 = vpop.xlane.xlu0 %7918
    %v7920 = vsel %vm2861, %v7812, -inf
    %7921 = vmax.xlane.f32.xlu0 %v7920
    %v7922 = vpop.xlane.xlu0 %7921
    %v7923 = vsel %vm2848, %v7813, -inf
    %7924 = vmax.xlane.f32.xlu0 %v7923
    %v7925 = vpop.xlane.xlu0 %7924
    %v7926 = vsel %vm2848, %v7814, -inf
    %7927 = vmax.xlane.f32.xlu0 %v7926
    %v7928 = vpop.xlane.xlu0 %7927
    %v7929 = vsel %vm2848, %v7815, -inf
    %7930 = vmax.xlane.f32.xlu0 %v7929
    %v7931 = vpop.xlane.xlu0 %7930
    %v7932 = vsel %vm2848, %v7816, -inf
    %7933 = vmax.xlane.f32.xlu0 %v7932
    %v7934 = vpop.xlane.xlu0 %7933
    %v7935 = vsel %vm2861, %v7817, -inf
    %7936 = vmax.xlane.f32.xlu0 %v7935
    %v7937 = vpop.xlane.xlu0 %7936
    %v7938 = vsub.f32 %v7778, %v7820
    %v7939 = vsub.f32 %v7779, %v7823
    %v7940 = vsub.f32 %v7780, %v7826
    %v7941 = vsub.f32 %v7781, %v7829
    %v7942 = vsub.f32 %v7782, %v7832
    %v7943 = vsub.f32 %v7783, %v7835
    %v7944 = vsub.f32 %v7784, %v7838
    %v7945 = vsub.f32 %v7785, %v7841
    %v7946 = vsub.f32 %v7786, %v7844
    %v7947 = vsub.f32 %v7787, %v7847
    %v7948 = vsub.f32 %v7788, %v7850
    %v7949 = vsub.f32 %v7789, %v7853
    %v7950 = vsub.f32 %v7790, %v7856
    %v7951 = vsub.f32 %v7791, %v7859
    %v7952 = vsub.f32 %v7792, %v7862
    %v7953 = vsub.f32 %v7793, %v7865
    %v7954 = vsub.f32 %v7794, %v7868
    %v7955 = vsub.f32 %v7795, %v7871
    %v7956 = vsub.f32 %v7796, %v7874
    %v7957 = vsub.f32 %v7797, %v7877
    %v7958 = vsub.f32 %v7798, %v7880
    %v7959 = vsub.f32 %v7799, %v7883
    %v7960 = vsub.f32 %v7800, %v7886
    %v7961 = vsub.f32 %v7801, %v7889
    %v7962 = vsub.f32 %v7802, %v7892
    %v7963 = vsub.f32 %v7803, %v7895
    %v7964 = vsub.f32 %v7804, %v7898
    %v7965 = vsub.f32 %v7805, %v7901
    %v7966 = vsub.f32 %v7806, %v7904
    %v7967 = vsub.f32 %v7807, %v7907
    %v7968 = vsub.f32 %v7808, %v7910
    %v7969 = vsub.f32 %v7809, %v7913
    %v7970 = vsub.f32 %v7810, %v7916
    %v7971 = vsub.f32 %v7811, %v7919
    %v7972 = vsub.f32 %v7812, %v7922
    %v7973 = vsub.f32 %v7813, %v7925
    %v7974 = vsub.f32 %v7814, %v7928
    %v7975 = vsub.f32 %v7815, %v7931
    %v7976 = vsub.f32 %v7816, %v7934
    %v7977 = vsub.f32 %v7817, %v7937
    %v7978 = vmul.f32 %v7938, 1.442695
    %v7979 = vpow.pop %v7978
    %v7980 = vmul.f32 %v7939, 1.442695
    %v7981 = vpow.pop %v7980
    %v7982 = vmul.f32 %v7940, 1.442695
    %v7983 = vpow.pop %v7982
    %v7984 = vmul.f32 %v7941, 1.442695
    %v7985 = vpow.pop %v7984
    %v7986 = vmul.f32 %v7942, 1.442695
    %v7987 = vpow.pop %v7986
    %v7988 = vmul.f32 %v7943, 1.442695
    %v7989 = vpow.pop %v7988
    %v7990 = vmul.f32 %v7944, 1.442695
    %v7991 = vpow.pop %v7990
    %v7992 = vmul.f32 %v7945, 1.442695
    %v7993 = vpow.pop %v7992
    %v7994 = vmul.f32 %v7946, 1.442695
    %v7995 = vpow.pop %v7994
    %v7996 = vmul.f32 %v7947, 1.442695
    %v7997 = vpow.pop %v7996
    %v7998 = vmul.f32 %v7948, 1.442695
    %v7999 = vpow.pop %v7998
    %v8000 = vmul.f32 %v7949, 1.442695
    %v8001 = vpow.pop %v8000
    %v8002 = vmul.f32 %v7950, 1.442695
    %v8003 = vpow.pop %v8002
    %v8004 = vmul.f32 %v7951, 1.442695
    %v8005 = vpow.pop %v8004
    %v8006 = vmul.f32 %v7952, 1.442695
    %v8007 = vpow.pop %v8006
    %v8008 = vmul.f32 %v7953, 1.442695
    %v8009 = vpow.pop %v8008
    %v8010 = vmul.f32 %v7954, 1.442695
    %v8011 = vpow.pop %v8010
    %v8012 = vmul.f32 %v7955, 1.442695
    %v8013 = vpow.pop %v8012
    %v8014 = vmul.f32 %v7956, 1.442695
    %v8015 = vpow.pop %v8014
    %v8016 = vmul.f32 %v7957, 1.442695
    %v8017 = vpow.pop %v8016
    %v8018 = vmul.f32 %v7958, 1.442695
    %v8019 = vpow.pop %v8018
    %v8020 = vmul.f32 %v7959, 1.442695
    %v8021 = vpow.pop %v8020
    %v8022 = vmul.f32 %v7960, 1.442695
    %v8023 = vpow.pop %v8022
    %v8024 = vmul.f32 %v7961, 1.442695
    %v8025 = vpow.pop %v8024
    %v8026 = vmul.f32 %v7962, 1.442695
    %v8027 = vpow.pop %v8026
    %v8028 = vmul.f32 %v7963, 1.442695
    %v8029 = vpow.pop %v8028
    %v8030 = vmul.f32 %v7964, 1.442695
    %v8031 = vpow.pop %v8030
    %v8032 = vmul.f32 %v7965, 1.442695
    %v8033 = vpow.pop %v8032
    %v8034 = vmul.f32 %v7966, 1.442695
    %v8035 = vpow.pop %v8034
    %v8036 = vmul.f32 %v7967, 1.442695
    %v8037 = vpow.pop %v8036
    %v8038 = vmul.f32 %v7968, 1.442695
    %v8039 = vpow.pop %v8038
    %v8040 = vmul.f32 %v7969, 1.442695
    %v8041 = vpow.pop %v8040
    %v8042 = vmul.f32 %v7970, 1.442695
    %v8043 = vpow.pop %v8042
    %v8044 = vmul.f32 %v7971, 1.442695
    %v8045 = vpow.pop %v8044
    %v8046 = vmul.f32 %v7972, 1.442695
    %v8047 = vpow.pop %v8046
    %v8048 = vmul.f32 %v7973, 1.442695
    %v8049 = vpow.pop %v8048
    %v8050 = vmul.f32 %v7974, 1.442695
    %v8051 = vpow.pop %v8050
    %v8052 = vmul.f32 %v7975, 1.442695
    %v8053 = vpow.pop %v8052
    %v8054 = vmul.f32 %v7976, 1.442695
    %v8055 = vpow.pop %v8054
    %v8056 = vmul.f32 %v7977, 1.442695
    %v8057 = vpow.pop %v8056
    %v8058 = vsel %vm2848, %v7979, 0.0
    %8059 = vadd.xlane.f32.xlu0 %v8058
    %v8060 = vpop.xlane.xlu0 %8059
    %v8061 = vsel %vm2848, %v7981, 0.0
    %8062 = vadd.xlane.f32.xlu0 %v8061
    %v8063 = vpop.xlane.xlu0 %8062
    %v8064 = vsel %vm2848, %v7983, 0.0
    %8065 = vadd.xlane.f32.xlu0 %v8064
    %v8066 = vpop.xlane.xlu0 %8065
    %v8067 = vsel %vm2848, %v7985, 0.0
    %8068 = vadd.xlane.f32.xlu0 %v8067
    %v8069 = vpop.xlane.xlu0 %8068
    %v8070 = vsel %vm2861, %v7987, 0.0
    %8071 = vadd.xlane.f32.xlu0 %v8070
    %v8072 = vpop.xlane.xlu0 %8071
    %v8073 = vsel %vm2848, %v7989, 0.0
    %8074 = vadd.xlane.f32.xlu0 %v8073
    %v8075 = vpop.xlane.xlu0 %8074
    %v8076 = vsel %vm2848, %v7991, 0.0
    %8077 = vadd.xlane.f32.xlu0 %v8076
    %v8078 = vpop.xlane.xlu0 %8077
    %v8079 = vsel %vm2848, %v7993, 0.0
    %8080 = vadd.xlane.f32.xlu0 %v8079
    %v8081 = vpop.xlane.xlu0 %8080
    %v8082 = vsel %vm2848, %v7995, 0.0
    %8083 = vadd.xlane.f32.xlu0 %v8082
    %v8084 = vpop.xlane.xlu0 %8083
    %v8085 = vsel %vm2861, %v7997, 0.0
    %8086 = vadd.xlane.f32.xlu0 %v8085
    %v8087 = vpop.xlane.xlu0 %8086
    %v8088 = vsel %vm2848, %v7999, 0.0
    %8089 = vadd.xlane.f32.xlu0 %v8088
    %v8090 = vpop.xlane.xlu0 %8089
    %v8091 = vsel %vm2848, %v8001, 0.0
    %8092 = vadd.xlane.f32.xlu0 %v8091
    %v8093 = vpop.xlane.xlu0 %8092
    %v8094 = vsel %vm2848, %v8003, 0.0
    %8095 = vadd.xlane.f32.xlu0 %v8094
    %v8096 = vpop.xlane.xlu0 %8095
    %v8097 = vsel %vm2848, %v8005, 0.0
    %8098 = vadd.xlane.f32.xlu0 %v8097
    %v8099 = vpop.xlane.xlu0 %8098
    %v8100 = vsel %vm2861, %v8007, 0.0
    %8101 = vadd.xlane.f32.xlu0 %v8100
    %v8102 = vpop.xlane.xlu0 %8101
    %v8103 = vsel %vm2848, %v8009, 0.0
    %8104 = vadd.xlane.f32.xlu0 %v8103
    %v8105 = vpop.xlane.xlu0 %8104
    %v8106 = vsel %vm2848, %v8011, 0.0
    %8107 = vadd.xlane.f32.xlu0 %v8106
    %v8108 = vpop.xlane.xlu0 %8107
    %v8109 = vsel %vm2848, %v8013, 0.0
    %8110 = vadd.xlane.f32.xlu0 %v8109
    %v8111 = vpop.xlane.xlu0 %8110
    %v8112 = vsel %vm2848, %v8015, 0.0
    %8113 = vadd.xlane.f32.xlu0 %v8112
    %v8114 = vpop.xlane.xlu0 %8113
    %v8115 = vsel %vm2861, %v8017, 0.0
    %8116 = vadd.xlane.f32.xlu0 %v8115
    %v8117 = vpop.xlane.xlu0 %8116
    %v8118 = vsel %vm2848, %v8019, 0.0
    %8119 = vadd.xlane.f32.xlu0 %v8118
    %v8120 = vpop.xlane.xlu0 %8119
    %v8121 = vsel %vm2848, %v8021, 0.0
    %8122 = vadd.xlane.f32.xlu0 %v8121
    %v8123 = vpop.xlane.xlu0 %8122
    %v8124 = vsel %vm2848, %v8023, 0.0
    %8125 = vadd.xlane.f32.xlu0 %v8124
    %v8126 = vpop.xlane.xlu0 %8125
    %v8127 = vsel %vm2848, %v8025, 0.0
    %8128 = vadd.xlane.f32.xlu0 %v8127
    %v8129 = vpop.xlane.xlu0 %8128
    %v8130 = vsel %vm2861, %v8027, 0.0
    %8131 = vadd.xlane.f32.xlu0 %v8130
    %v8132 = vpop.xlane.xlu0 %8131
    %v8133 = vsel %vm2848, %v8029, 0.0
    %8134 = vadd.xlane.f32.xlu0 %v8133
    %v8135 = vpop.xlane.xlu0 %8134
    %v8136 = vsel %vm2848, %v8031, 0.0
    %8137 = vadd.xlane.f32.xlu0 %v8136
    %v8138 = vpop.xlane.xlu0 %8137
    %v8139 = vsel %vm2848, %v8033, 0.0
    %8140 = vadd.xlane.f32.xlu0 %v8139
    %v8141 = vpop.xlane.xlu0 %8140
    %v8142 = vsel %vm2848, %v8035, 0.0
    %8143 = vadd.xlane.f32.xlu0 %v8142
    %v8144 = vpop.xlane.xlu0 %8143
    %v8145 = vsel %vm2861, %v8037, 0.0
    %8146 = vadd.xlane.f32.xlu0 %v8145
    %v8147 = vpop.xlane.xlu0 %8146
    %v8148 = vsel %vm2848, %v8039, 0.0
    %8149 = vadd.xlane.f32.xlu0 %v8148
    %v8150 = vpop.xlane.xlu0 %8149
    %v8151 = vsel %vm2848, %v8041, 0.0
    %8152 = vadd.xlane.f32.xlu0 %v8151
    %v8153 = vpop.xlane.xlu0 %8152
    %v8154 = vsel %vm2848, %v8043, 0.0
    %8155 = vadd.xlane.f32.xlu0 %v8154
    %v8156 = vpop.xlane.xlu0 %8155
    %v8157 = vsel %vm2848, %v8045, 0.0
    %8158 = vadd.xlane.f32.xlu0 %v8157
    %v8159 = vpop.xlane.xlu0 %8158
    %v8160 = vsel %vm2861, %v8047, 0.0
    %8161 = vadd.xlane.f32.xlu0 %v8160
    %v8162 = vpop.xlane.xlu0 %8161
    %v8163 = vsel %vm2848, %v8049, 0.0
    %8164 = vadd.xlane.f32.xlu0 %v8163
    %v8165 = vpop.xlane.xlu0 %8164
    %v8166 = vsel %vm2848, %v8051, 0.0
    %8167 = vadd.xlane.f32.xlu0 %v8166
    %v8168 = vpop.xlane.xlu0 %8167
    %v8169 = vsel %vm2848, %v8053, 0.0
    %8170 = vadd.xlane.f32.xlu0 %v8169
    %v8171 = vpop.xlane.xlu0 %8170
    %v8172 = vsel %vm2848, %v8055, 0.0
    %8173 = vadd.xlane.f32.xlu0 %v8172
    %v8174 = vpop.xlane.xlu0 %8173
    %v8175 = vsel %vm2861, %v8057, 0.0
    %8176 = vadd.xlane.f32.xlu0 %v8175
    %v8177 = vpop.xlane.xlu0 %8176
    %v8178 = vrcp.pop %v8060
    %v8179 = vrcp.pop %v8063
    %v8180 = vrcp.pop %v8066
    %v8181 = vrcp.pop %v8069
    %v8182 = vrcp.pop %v8072
    %v8183 = vrcp.pop %v8075
    %v8184 = vrcp.pop %v8078
    %v8185 = vrcp.pop %v8081
    %v8186 = vrcp.pop %v8084
    %v8187 = vrcp.pop %v8087
    %v8188 = vrcp.pop %v8090
    %v8189 = vrcp.pop %v8093
    %v8190 = vrcp.pop %v8096
    %v8191 = vrcp.pop %v8099
    %v8192 = vrcp.pop %v8102
    %v8193 = vrcp.pop %v8105
    %v8194 = vrcp.pop %v8108
    %v8195 = vrcp.pop %v8111
    %v8196 = vrcp.pop %v8114
    %v8197 = vrcp.pop %v8117
    %v8198 = vrcp.pop %v8120
    %v8199 = vrcp.pop %v8123
    %v8200 = vrcp.pop %v8126
    %v8201 = vrcp.pop %v8129
    %v8202 = vrcp.pop %v8132
    %v8203 = vrcp.pop %v8135
    %v8204 = vrcp.pop %v8138
    %v8205 = vrcp.pop %v8141
    %v8206 = vrcp.pop %v8144
    %v8207 = vrcp.pop %v8147
    %v8208 = vrcp.pop %v8150
    %v8209 = vrcp.pop %v8153
    %v8210 = vrcp.pop %v8156
    %v8211 = vrcp.pop %v8159
    %v8212 = vrcp.pop %v8162
    %v8213 = vrcp.pop %v8165
    %v8214 = vrcp.pop %v8168
    %v8215 = vrcp.pop %v8171
    %v8216 = vrcp.pop %v8174
    %v8217 = vrcp.pop %v8177
    %v8218 = vmul.f32 %v7979, %v8178
    %v8219 = vmul.f32 %v7981, %v8179
    %v8220 = vmul.f32 %v7983, %v8180
    %v8221 = vmul.f32 %v7985, %v8181
    %v8222 = vmul.f32 %v7987, %v8182
    %v8223 = vmul.f32 %v7989, %v8183
    %v8224 = vmul.f32 %v7991, %v8184
    %v8225 = vmul.f32 %v7993, %v8185
    %v8226 = vmul.f32 %v7995, %v8186
    %v8227 = vmul.f32 %v7997, %v8187
    %v8228 = vmul.f32 %v7999, %v8188
    %v8229 = vmul.f32 %v8001, %v8189
    %v8230 = vmul.f32 %v8003, %v8190
    %v8231 = vmul.f32 %v8005, %v8191
    %v8232 = vmul.f32 %v8007, %v8192
    %v8233 = vmul.f32 %v8009, %v8193
    %v8234 = vmul.f32 %v8011, %v8194
    %v8235 = vmul.f32 %v8013, %v8195
    %v8236 = vmul.f32 %v8015, %v8196
    %v8237 = vmul.f32 %v8017, %v8197
    %v8238 = vmul.f32 %v8019, %v8198
    %v8239 = vmul.f32 %v8021, %v8199
    %v8240 = vmul.f32 %v8023, %v8200
    %v8241 = vmul.f32 %v8025, %v8201
    %v8242 = vmul.f32 %v8027, %v8202
    %v8243 = vmul.f32 %v8029, %v8203
    %v8244 = vmul.f32 %v8031, %v8204
    %v8245 = vmul.f32 %v8033, %v8205
    %v8246 = vmul.f32 %v8035, %v8206
    %v8247 = vmul.f32 %v8037, %v8207
    %v8248 = vmul.f32 %v8039, %v8208
    %v8249 = vmul.f32 %v8041, %v8209
    %v8250 = vmul.f32 %v8043, %v8210
    %v8251 = vmul.f32 %v8045, %v8211
    %v8252 = vmul.f32 %v8047, %v8212
    %v8253 = vmul.f32 %v8049, %v8213
    %v8254 = vmul.f32 %v8051, %v8214
    %v8255 = vmul.f32 %v8053, %v8215
    %v8256 = vmul.f32 %v8055, %v8216
    %v8257 = vmul.f32 %v8057, %v8217
    %v8258 = vpack.c.bf16 %v8219, %v8218
    %v8259 = vpack.c.bf16 %v8221, %v8220
    %v8260 = vpack.c.bf16 %v8222, %v8222
    %v8261 = vpack.c.bf16 %v8224, %v8223
    %v8262 = vpack.c.bf16 %v8226, %v8225
    %v8263 = vpack.c.bf16 %v8227, %v8227
    %v8264 = vpack.c.bf16 %v8229, %v8228
    %v8265 = vpack.c.bf16 %v8231, %v8230
    %v8266 = vpack.c.bf16 %v8232, %v8232
    %v8267 = vpack.c.bf16 %v8234, %v8233
    %v8268 = vpack.c.bf16 %v8236, %v8235
    %v8269 = vpack.c.bf16 %v8237, %v8237
    %v8270 = vpack.c.bf16 %v8239, %v8238
    %v8271 = vpack.c.bf16 %v8241, %v8240
    %v8272 = vpack.c.bf16 %v8242, %v8242
    %v8273 = vpack.c.bf16 %v8244, %v8243
    %v8274 = vpack.c.bf16 %v8246, %v8245
    %v8275 = vpack.c.bf16 %v8247, %v8247
    %v8276 = vpack.c.bf16 %v8249, %v8248
    %v8277 = vpack.c.bf16 %v8251, %v8250
    %v8278 = vpack.c.bf16 %v8252, %v8252
    %v8279 = vpack.c.bf16 %v8254, %v8253
    %v8280 = vpack.c.bf16 %v8256, %v8255
    %v8281 = vpack.c.bf16 %v8257, %v8257
    %v8282 = vpack.c.bf16 %v6604, %v6601
    %v8283 = vpack.c.bf16 %v6612, %v6609
    %v8284 = vpack.c.bf16 %v6617, %v6617
    %v8285 = vpack.c.bf16 %v6672, %v6669
    %v8286 = vpack.c.bf16 %v6680, %v6677
    %v8287 = vpack.c.bf16 %v6685, %v6685
    %v8288 = vpack.c.bf16 %v6740, %v6737
    %v8289 = vpack.c.bf16 %v6748, %v6745
    %v8290 = vpack.c.bf16 %v6753, %v6753
    %v8291 = vpack.c.bf16 %v6808, %v6805
    %v8292 = vpack.c.bf16 %v6816, %v6813
    %v8293 = vpack.c.bf16 %v6821, %v6821
    %v8294 = vpack.c.bf16 %v6876, %v6873
    %v8295 = vpack.c.bf16 %v6884, %v6881
    %v8296 = vpack.c.bf16 %v6889, %v6889
    %v8297 = vpack.c.bf16 %v6944, %v6941
    %v8298 = vpack.c.bf16 %v6952, %v6949
    %v8299 = vpack.c.bf16 %v6957, %v6957
    %v8300 = vpack.c.bf16 %v7012, %v7009
    %v8301 = vpack.c.bf16 %v7020, %v7017
    %v8302 = vpack.c.bf16 %v7025, %v7025
    %v8303 = vpack.c.bf16 %v7080, %v7077
    %v8304 = vpack.c.bf16 %v7088, %v7085
    %v8305 = vpack.c.bf16 %v7093, %v7093
    %v8307 = vsel %vm2848, %v8258, 0
    %v8310 = vsel %vm2848, %v8259, 0
    %v8313 = vsel %vm2848, %v8260, 0
    %v8316 = vsel %vm3347, %v8284, 0
    %8318 = vmatprep.subr.bf16.mxu0 0
    %8319 = vmatpush1.bf16.msra.mxu0 %v8282
    %8320 = vmatprep.subr.bf16.mxu0 0
    %8321 = vmatpush1.bf16.msra.mxu0 %v8283
    %8322 = vmatprep.subr.bf16.mxu0 0
    %8323 = vmatpush1.bf16.msra.mxu0 %v8316
    %8324 = vmatprep.subr.bf16.mxu0 0
    %8325 = vmatpush1.bf16.msra.mxu0 0
    %8326 = vmatprep.subr.bf16.mxu0 0
    %8327 = vmatpush1.bf16.msra.mxu0 0
    %8328 = vmatprep.subr.bf16.mxu0 0
    %8329 = vmatpush1.bf16.msra.mxu0 0
    %8330 = vmatprep.subr.bf16.mxu0 0
    %8331 = vmatpush1.bf16.msra.mxu0 0
    %8332 = vmatprep.subr.bf16.mxu0 0
    %8333 = vmatpush1.bf16.msra.mxu0 0
    %8334 = vmatprep.subr.bf16.mxu0 0
    %8335 = vmatpush1.bf16.msra.mxu0 0
    %8336 = vmatprep.subr.bf16.mxu0 0
    %8337 = vmatpush1.bf16.msra.mxu0 0
    %8338 = vmatprep.subr.bf16.mxu0 0
    %8339 = vmatpush1.bf16.msra.mxu0 0
    %8340 = vmatprep.subr.bf16.mxu0 0
    %8341 = vmatpush1.bf16.msra.mxu0 0
    %8342 = vmatprep.subr.bf16.mxu0 0
    %8343 = vmatpush1.bf16.msra.mxu0 0
    %8344 = vmatprep.subr.bf16.mxu0 0
    %8345 = vmatpush1.bf16.msra.mxu0 0
    %8346 = vmatprep.subr.bf16.mxu0 0
    %8347 = vmatpush1.bf16.msra.mxu0 0
    %8348 = vmatprep.subr.bf16.mxu0 0
    %8349 = vmatpush1.bf16.msra.mxu0 0
    %8350 = vmatprep.mubr.bf16.mxu0 0
    %8351 = vmatmul.mubr.bf16.gmra.mrb[0].mxu0 %v8307
    %v8352 = vpop.f32.mrb[0].mxu0
    %v8353 = vadd.f32 0.0, %v8352
    %v8354 = vpop.f32.mrb[0].mxu0
    %v8355 = vpop.f32.mrb[0].mxu0
    %v8356 = vadd.f32 0.0, %v8355
    %v8357 = vpop.f32.mrb[0].mxu0
    %8358 = vmatprep.mubr.bf16.mxu0 0
    %8359 = vmatmul.mubr.bf16.gmra.mrb[0].mxu0 %v8310
    %v8360 = vpop.f32.mrb[0].mxu0
    %v8361 = vadd.f32 0.0, %v8360
    %v8362 = vpop.f32.mrb[0].mxu0
    %v8363 = vpop.f32.mrb[0].mxu0
    %v8364 = vadd.f32 0.0, %v8363
    %v8365 = vpop.f32.mrb[0].mxu0
    %8366 = vmatprep.mubr.bf16.mxu0 0
    %8367 = vmatmul.mubr.bf16.gmra.mrb[0].mxu0 %v8313
    %v8368 = vpop.f32.mrb[0].mxu0
    %v8369 = vadd.f32 0.0, %v8368
    %v8370 = vpop.f32.mrb[0].mxu0
    %v8371 = vpop.f32.mrb[0].mxu0
    %v8372 = vpop.f32.mrb[0].mxu0
    %8373 = vdwg.mxu0
    %v8375 = vsel %vm2848, %v8261, 0
    %v8378 = vsel %vm2848, %v8262, 0
    %v8381 = vsel %vm2848, %v8263, 0
    %v8384 = vsel %vm3347, %v8287, 0
    %8386 = vmatprep.subr.bf16.mxu0 0
    %8387 = vmatpush1.bf16.msra.mxu0 %v8285
    %8388 = vmatprep.subr.bf16.mxu0 0
    %8389 = vmatpush1.bf16.msra.mxu0 %v8286
    %8390 = vmatprep.subr.bf16.mxu0 0
    %8391 = vmatpush1.bf16.msra.mxu0 %v8384
    %8392 = vmatprep.subr.bf16.mxu0 0
    %8393 = vmatpush1.bf16.msra.mxu0 0
    %8394 = vmatprep.subr.bf16.mxu0 0
    %8395 = vmatpush1.bf16.msra.mxu0 0
    %8396 = vmatprep.subr.bf16.mxu0 0
    %8397 = vmatpush1.bf16.msra.mxu0 0
    %8398 = vmatprep.subr.bf16.mxu0 0
    %8399 = vmatpush1.bf16.msra.mxu0 0
    %8400 = vmatprep.subr.bf16.mxu0 0
    %8401 = vmatpush1.bf16.msra.mxu0 0
    %8402 = vmatprep.subr.bf16.mxu0 0
    %8403 = vmatpush1.bf16.msra.mxu0 0
    %8404 = vmatprep.subr.bf16.mxu0 0
    %8405 = vmatpush1.bf16.msra.mxu0 0
    %8406 = vmatprep.subr.bf16.mxu0 0
    %8407 = vmatpush1.bf16.msra.mxu0 0
    %8408 = vmatprep.subr.bf16.mxu0 0
    %8409 = vmatpush1.bf16.msra.mxu0 0
    %8410 = vmatprep.subr.bf16.mxu0 0
    %8411 = vmatpush1.bf16.msra.mxu0 0
    %8412 = vmatprep.subr.bf16.mxu0 0
    %8413 = vmatpush1.bf16.msra.mxu0 0
    %8414 = vmatprep.subr.bf16.mxu0 0
    %8415 = vmatpush1.bf16.msra.mxu0 0
    %8416 = vmatprep.subr.bf16.mxu0 0
    %8417 = vmatpush1.bf16.msra.mxu0 0
    %8418 = vmatprep.mubr.bf16.mxu0 0
    %8419 = vmatmul.mubr.bf16.gmra.mrb[0].mxu0 %v8375
    %v8420 = vpop.f32.mrb[0].mxu0
    %v8421 = vadd.f32 0.0, %v8420
    %v8422 = vpop.f32.mrb[0].mxu0
    %v8423 = vpop.f32.mrb[0].mxu0
    %v8424 = vadd.f32 0.0, %v8423
    %v8425 = vpop.f32.mrb[0].mxu0
    %8426 = vmatprep.mubr.bf16.mxu0 0
    %8427 = vmatmul.mubr.bf16.gmra.mrb[0].mxu0 %v8378
    %v8428 = vpop.f32.mrb[0].mxu0
    %v8429 = vadd.f32 0.0, %v8428
    %v8430 = vpop.f32.mrb[0].mxu0
    %v8431 = vpop.f32.mrb[0].mxu0
    %v8432 = vadd.f32 0.0, %v8431
    %v8433 = vpop.f32.mrb[0].mxu0
    %8434 = vmatprep.mubr.bf16.mxu0 0
    %8435 = vmatmul.mubr.bf16.gmra.mrb[0].mxu0 %v8381
    %v8436 = vpop.f32.mrb[0].mxu0
    %v8437 = vadd.f32 0.0, %v8436
    %v8438 = vpop.f32.mrb[0].mxu0
    %v8439 = vpop.f32.mrb[0].mxu0
    %v8440 = vpop.f32.mrb[0].mxu0
    %8441 = vdwg.mxu0
    %v8443 = vsel %vm2848, %v8264, 0
    %v8446 = vsel %vm2848, %v8265, 0
    %v8449 = vsel %vm2848, %v8266, 0
    %v8452 = vsel %vm3347, %v8290, 0
    %8454 = vmatprep.subr.bf16.mxu0 0
    %8455 = vmatpush1.bf16.msra.mxu0 %v8288
    %8456 = vmatprep.subr.bf16.mxu0 0
    %8457 = vmatpush1.bf16.msra.mxu0 %v8289
    %8458 = vmatprep.subr.bf16.mxu0 0
    %8459 = vmatpush1.bf16.msra.mxu0 %v8452
    %8460 = vmatprep.subr.bf16.mxu0 0
    %8461 = vmatpush1.bf16.msra.mxu0 0
    %8462 = vmatprep.subr.bf16.mxu0 0
    %8463 = vmatpush1.bf16.msra.mxu0 0
    %8464 = vmatprep.subr.bf16.mxu0 0
    %8465 = vmatpush1.bf16.msra.mxu0 0
    %8466 = vmatprep.subr.bf16.mxu0 0
    %8467 = vmatpush1.bf16.msra.mxu0 0
    %8468 = vmatprep.subr.bf16.mxu0 0
    %8469 = vmatpush1.bf16.msra.mxu0 0
    %8470 = vmatprep.subr.bf16.mxu0 0
    %8471 = vmatpush1.bf16.msra.mxu0 0
    %8472 = vmatprep.subr.bf16.mxu0 0
    %8473 = vmatpush1.bf16.msra.mxu0 0
    %8474 = vmatprep.subr.bf16.mxu0 0
    %8475 = vmatpush1.bf16.msra.mxu0 0
    %8476 = vmatprep.subr.bf16.mxu0 0
    %8477 = vmatpush1.bf16.msra.mxu0 0
    %8478 = vmatprep.subr.bf16.mxu0 0
    %8479 = vmatpush1.bf16.msra.mxu0 0
    %8480 = vmatprep.subr.bf16.mxu0 0
    %8481 = vmatpush1.bf16.msra.mxu0 0
    %8482 = vmatprep.subr.bf16.mxu0 0
    %8483 = vmatpush1.bf16.msra.mxu0 0
    %8484 = vmatprep.subr.bf16.mxu0 0
    %8485 = vmatpush1.bf16.msra.mxu0 0
    %8486 = vmatprep.mubr.bf16.mxu0 0
    %8487 = vmatmul.mubr.bf16.gmra.mrb[0].mxu0 %v8443
    %v8488 = vpop.f32.mrb[0].mxu0
    %v8489 = vadd.f32 0.0, %v8488
    %v8490 = vpop.f32.mrb[0].mxu0
    %v8491 = vpop.f32.mrb[0].mxu0
    %v8492 = vadd.f32 0.0, %v8491
    %v8493 = vpop.f32.mrb[0].mxu0
    %8494 = vmatprep.mubr.bf16.mxu0 0
    %8495 = vmatmul.mubr.bf16.gmra.mrb[0].mxu0 %v8446
    %v8496 = vpop.f32.mrb[0].mxu0
    %v8497 = vadd.f32 0.0, %v8496
    %v8498 = vpop.f32.mrb[0].mxu0
    %v8499 = vpop.f32.mrb[0].mxu0
    %v8500 = vadd.f32 0.0, %v8499
    %v8501 = vpop.f32.mrb[0].mxu0
    %8502 = vmatprep.mubr.bf16.mxu0 0
    %8503 = vmatmul.mubr.bf16.gmra.mrb[0].mxu0 %v8449
    %v8504 = vpop.f32.mrb[0].mxu0
    %v8505 = vadd.f32 0.0, %v8504
    %v8506 = vpop.f32.mrb[0].mxu0
    %v8507 = vpop.f32.mrb[0].mxu0
    %v8508 = vpop.f32.mrb[0].mxu0
    %8509 = vdwg.mxu0
    %v8511 = vsel %vm2848, %v8267, 0
    %v8514 = vsel %vm2848, %v8268, 0
    %v8517 = vsel %vm2848, %v8269, 0
    %v8520 = vsel %vm3347, %v8293, 0
    %8522 = vmatprep.subr.bf16.mxu0 0
    %8523 = vmatpush1.bf16.msra.mxu0 %v8291
    %8524 = vmatprep.subr.bf16.mxu0 0
    %8525 = vmatpush1.bf16.msra.mxu0 %v8292
    %8526 = vmatprep.subr.bf16.mxu0 0
    %8527 = vmatpush1.bf16.msra.mxu0 %v8520
    %8528 = vmatprep.subr.bf16.mxu0 0
    %8529 = vmatpush1.bf16.msra.mxu0 0
    %8530 = vmatprep.subr.bf16.mxu0 0
    %8531 = vmatpush1.bf16.msra.mxu0 0
    %8532 = vmatprep.subr.bf16.mxu0 0
    %8533 = vmatpush1.bf16.msra.mxu0 0
    %8534 = vmatprep.subr.bf16.mxu0 0
    %8535 = vmatpush1.bf16.msra.mxu0 0
    %8536 = vmatprep.subr.bf16.mxu0 0
    %8537 = vmatpush1.bf16.msra.mxu0 0
    %8538 = vmatprep.subr.bf16.mxu0 0
    %8539 = vmatpush1.bf16.msra.mxu0 0
    %8540 = vmatprep.subr.bf16.mxu0 0
    %8541 = vmatpush1.bf16.msra.mxu0 0
    %8542 = vmatprep.subr.bf16.mxu0 0
    %8543 = vmatpush1.bf16.msra.mxu0 0
    %8544 = vmatprep.subr.bf16.mxu0 0
    %8545 = vmatpush1.bf16.msra.mxu0 0
    %8546 = vmatprep.subr.bf16.mxu0 0
    %8547 = vmatpush1.bf16.msra.mxu0 0
    %8548 = vmatprep.subr.bf16.mxu0 0
    %8549 = vmatpush1.bf16.msra.mxu0 0
    %8550 = vmatprep.subr.bf16.mxu0 0
    %8551 = vmatpush1.bf16.msra.mxu0 0
    %8552 = vmatprep.subr.bf16.mxu0 0
    %8553 = vmatpush1.bf16.msra.mxu0 0
    %8554 = vmatprep.mubr.bf16.mxu0 0
    %8555 = vmatmul.mubr.bf16.gmra.mrb[0].mxu0 %v8511
    %v8556 = vpop.f32.mrb[0].mxu0
    %v8557 = vadd.f32 0.0, %v8556
    %v8558 = vpop.f32.mrb[0].mxu0
    %v8559 = vpop.f32.mrb[0].mxu0
    %v8560 = vadd.f32 0.0, %v8559
    %v8561 = vpop.f32.mrb[0].mxu0
    %8562 = vmatprep.mubr.bf16.mxu0 0
    %8563 = vmatmul.mubr.bf16.gmra.mrb[0].mxu0 %v8514
    %v8564 = vpop.f32.mrb[0].mxu0
    %v8565 = vadd.f32 0.0, %v8564
    %v8566 = vpop.f32.mrb[0].mxu0
    %v8567 = vpop.f32.mrb[0].mxu0
    %v8568 = vadd.f32 0.0, %v8567
    %v8569 = vpop.f32.mrb[0].mxu0
    %8570 = vmatprep.mubr.bf16.mxu0 0
    %8571 = vmatmul.mubr.bf16.gmra.mrb[0].mxu0 %v8517
    %v8572 = vpop.f32.mrb[0].mxu0
    %v8573 = vadd.f32 0.0, %v8572
    %v8574 = vpop.f32.mrb[0].mxu0
    %v8575 = vpop.f32.mrb[0].mxu0
    %v8576 = vpop.f32.mrb[0].mxu0
    %8577 = vdwg.mxu0
    %v8579 = vsel %vm2848, %v8270, 0
    %v8582 = vsel %vm2848, %v8271, 0
    %v8585 = vsel %vm2848, %v8272, 0
    %v8588 = vsel %vm3347, %v8296, 0
    %8590 = vmatprep.subr.bf16.mxu0 0
    %8591 = vmatpush1.bf16.msra.mxu0 %v8294
    %8592 = vmatprep.subr.bf16.mxu0 0
    %8593 = vmatpush1.bf16.msra.mxu0 %v8295
    %8594 = vmatprep.subr.bf16.mxu0 0
    %8595 = vmatpush1.bf16.msra.mxu0 %v8588
    %8596 = vmatprep.subr.bf16.mxu0 0
    %8597 = vmatpush1.bf16.msra.mxu0 0
    %8598 = vmatprep.subr.bf16.mxu0 0
    %8599 = vmatpush1.bf16.msra.mxu0 0
    %8600 = vmatprep.subr.bf16.mxu0 0
    %8601 = vmatpush1.bf16.msra.mxu0 0
    %8602 = vmatprep.subr.bf16.mxu0 0
    %8603 = vmatpush1.bf16.msra.mxu0 0
    %8604 = vmatprep.subr.bf16.mxu0 0
    %8605 = vmatpush1.bf16.msra.mxu0 0
    %8606 = vmatprep.subr.bf16.mxu0 0
    %8607 = vmatpush1.bf16.msra.mxu0 0
    %8608 = vmatprep.subr.bf16.mxu0 0
    %8609 = vmatpush1.bf16.msra.mxu0 0
    %8610 = vmatprep.subr.bf16.mxu0 0
    %8611 = vmatpush1.bf16.msra.mxu0 0
    %8612 = vmatprep.subr.bf16.mxu0 0
    %8613 = vmatpush1.bf16.msra.mxu0 0
    %8614 = vmatprep.subr.bf16.mxu0 0
    %8615 = vmatpush1.bf16.msra.mxu0 0
    %8616 = vmatprep.subr.bf16.mxu0 0
    %8617 = vmatpush1.bf16.msra.mxu0 0
    %8618 = vmatprep.subr.bf16.mxu0 0
    %8619 = vmatpush1.bf16.msra.mxu0 0
    %8620 = vmatprep.subr.bf16.mxu0 0
    %8621 = vmatpush1.bf16.msra.mxu0 0
    %8622 = vmatprep.mubr.bf16.mxu0 0
    %8623 = vmatmul.mubr.bf16.gmra.mrb[0].mxu0 %v8579
    %v8624 = vpop.f32.mrb[0].mxu0
    %v8625 = vadd.f32 0.0, %v8624
    %v8626 = vpop.f32.mrb[0].mxu0
    %v8627 = vpop.f32.mrb[0].mxu0
    %v8628 = vadd.f32 0.0, %v8627
    %v8629 = vpop.f32.mrb[0].mxu0
    %8630 = vmatprep.mubr.bf16.mxu0 0
    %8631 = vmatmul.mubr.bf16.gmra.mrb[0].mxu0 %v8582
    %v8632 = vpop.f32.mrb[0].mxu0
    %v8633 = vadd.f32 0.0, %v8632
    %v8634 = vpop.f32.mrb[0].mxu0
    %v8635 = vpop.f32.mrb[0].mxu0
    %v8636 = vadd.f32 0.0, %v8635
    %v8637 = vpop.f32.mrb[0].mxu0
    %8638 = vmatprep.mubr.bf16.mxu0 0
    %8639 = vmatmul.mubr.bf16.gmra.mrb[0].mxu0 %v8585
    %v8640 = vpop.f32.mrb[0].mxu0
    %v8641 = vadd.f32 0.0, %v8640
    %v8642 = vpop.f32.mrb[0].mxu0
    %v8643 = vpop.f32.mrb[0].mxu0
    %v8644 = vpop.f32.mrb[0].mxu0
    %8645 = vdwg.mxu0
    %v8647 = vsel %vm2848, %v8273, 0
    %v8650 = vsel %vm2848, %v8274, 0
    %v8653 = vsel %vm2848, %v8275, 0
    %v8656 = vsel %vm3347, %v8299, 0
    %8658 = vmatprep.subr.bf16.mxu0 0
    %8659 = vmatpush1.bf16.msra.mxu0 %v8297
    %8660 = vmatprep.subr.bf16.mxu0 0
    %8661 = vmatpush1.bf16.msra.mxu0 %v8298
    %8662 = vmatprep.subr.bf16.mxu0 0
    %8663 = vmatpush1.bf16.msra.mxu0 %v8656
    %8664 = vmatprep.subr.bf16.mxu0 0
    %8665 = vmatpush1.bf16.msra.mxu0 0
    %8666 = vmatprep.subr.bf16.mxu0 0
    %8667 = vmatpush1.bf16.msra.mxu0 0
    %8668 = vmatprep.subr.bf16.mxu0 0
    %8669 = vmatpush1.bf16.msra.mxu0 0
    %8670 = vmatprep.subr.bf16.mxu0 0
    %8671 = vmatpush1.bf16.msra.mxu0 0
    %8672 = vmatprep.subr.bf16.mxu0 0
    %8673 = vmatpush1.bf16.msra.mxu0 0
    %8674 = vmatprep.subr.bf16.mxu0 0
    %8675 = vmatpush1.bf16.msra.mxu0 0
    %8676 = vmatprep.subr.bf16.mxu0 0
    %8677 = vmatpush1.bf16.msra.mxu0 0
    %8678 = vmatprep.subr.bf16.mxu0 0
    %8679 = vmatpush1.bf16.msra.mxu0 0
    %8680 = vmatprep.subr.bf16.mxu0 0
    %8681 = vmatpush1.bf16.msra.mxu0 0
    %8682 = vmatprep.subr.bf16.mxu0 0
    %8683 = vmatpush1.bf16.msra.mxu0 0
    %8684 = vmatprep.subr.bf16.mxu0 0
    %8685 = vmatpush1.bf16.msra.mxu0 0
    %8686 = vmatprep.subr.bf16.mxu0 0
    %8687 = vmatpush1.bf16.msra.mxu0 0
    %8688 = vmatprep.subr.bf16.mxu0 0
    %8689 = vmatpush1.bf16.msra.mxu0 0
    %8690 = vmatprep.mubr.bf16.mxu0 0
    %8691 = vmatmul.mubr.bf16.gmra.mrb[0].mxu0 %v8647
    %v8692 = vpop.f32.mrb[0].mxu0
    %v8693 = vadd.f32 0.0, %v8692
    %v8694 = vpop.f32.mrb[0].mxu0
    %v8695 = vpop.f32.mrb[0].mxu0
    %v8696 = vadd.f32 0.0, %v8695
    %v8697 = vpop.f32.mrb[0].mxu0
    %8698 = vmatprep.mubr.bf16.mxu0 0
    %8699 = vmatmul.mubr.bf16.gmra.mrb[0].mxu0 %v8650
    %v8700 = vpop.f32.mrb[0].mxu0
    %v8701 = vadd.f32 0.0, %v8700
    %v8702 = vpop.f32.mrb[0].mxu0
    %v8703 = vpop.f32.mrb[0].mxu0
    %v8704 = vadd.f32 0.0, %v8703
    %v8705 = vpop.f32.mrb[0].mxu0
    %8706 = vmatprep.mubr.bf16.mxu0 0
    %8707 = vmatmul.mubr.bf16.gmra.mrb[0].mxu0 %v8653
    %v8708 = vpop.f32.mrb[0].mxu0
    %v8709 = vadd.f32 0.0, %v8708
    %v8710 = vpop.f32.mrb[0].mxu0
    %v8711 = vpop.f32.mrb[0].mxu0
    %v8712 = vpop.f32.mrb[0].mxu0
    %8713 = vdwg.mxu0
    %v8715 = vsel %vm2848, %v8276, 0
    %v8718 = vsel %vm2848, %v8277, 0
    %v8721 = vsel %vm2848, %v8278, 0
    %v8724 = vsel %vm3347, %v8302, 0
    %8726 = vmatprep.subr.bf16.mxu0 0
    %8727 = vmatpush1.bf16.msra.mxu0 %v8300
    %8728 = vmatprep.subr.bf16.mxu0 0
    %8729 = vmatpush1.bf16.msra.mxu0 %v8301
    %8730 = vmatprep.subr.bf16.mxu0 0
    %8731 = vmatpush1.bf16.msra.mxu0 %v8724
    %8732 = vmatprep.subr.bf16.mxu0 0
    %8733 = vmatpush1.bf16.msra.mxu0 0
    %8734 = vmatprep.subr.bf16.mxu0 0
    %8735 = vmatpush1.bf16.msra.mxu0 0
    %8736 = vmatprep.subr.bf16.mxu0 0
    %8737 = vmatpush1.bf16.msra.mxu0 0
    %8738 = vmatprep.subr.bf16.mxu0 0
    %8739 = vmatpush1.bf16.msra.mxu0 0
    %8740 = vmatprep.subr.bf16.mxu0 0
    %8741 = vmatpush1.bf16.msra.mxu0 0
    %8742 = vmatprep.subr.bf16.mxu0 0
    %8743 = vmatpush1.bf16.msra.mxu0 0
    %8744 = vmatprep.subr.bf16.mxu0 0
    %8745 = vmatpush1.bf16.msra.mxu0 0
    %8746 = vmatprep.subr.bf16.mxu0 0
    %8747 = vmatpush1.bf16.msra.mxu0 0
    %8748 = vmatprep.subr.bf16.mxu0 0
    %8749 = vmatpush1.bf16.msra.mxu0 0
    %8750 = vmatprep.subr.bf16.mxu0 0
    %8751 = vmatpush1.bf16.msra.mxu0 0
    %8752 = vmatprep.subr.bf16.mxu0 0
    %8753 = vmatpush1.bf16.msra.mxu0 0
    %8754 = vmatprep.subr.bf16.mxu0 0
    %8755 = vmatpush1.bf16.msra.mxu0 0
    %8756 = vmatprep.subr.bf16.mxu0 0
    %8757 = vmatpush1.bf16.msra.mxu0 0
    %8758 = vmatprep.mubr.bf16.mxu0 0
    %8759 = vmatmul.mubr.bf16.gmra.mrb[0].mxu0 %v8715
    %v8760 = vpop.f32.mrb[0].mxu0
    %v8761 = vadd.f32 0.0, %v8760
    %v8762 = vpop.f32.mrb[0].mxu0
    %v8763 = vpop.f32.mrb[0].mxu0
    %v8764 = vadd.f32 0.0, %v8763
    %v8765 = vpop.f32.mrb[0].mxu0
    %8766 = vmatprep.mubr.bf16.mxu0 0
    %8767 = vmatmul.mubr.bf16.gmra.mrb[0].mxu0 %v8718
    %v8768 = vpop.f32.mrb[0].mxu0
    %v8769 = vadd.f32 0.0, %v8768
    %v8770 = vpop.f32.mrb[0].mxu0
    %v8771 = vpop.f32.mrb[0].mxu0
    %v8772 = vadd.f32 0.0, %v8771
    %v8773 = vpop.f32.mrb[0].mxu0
    %8774 = vmatprep.mubr.bf16.mxu0 0
    %8775 = vmatmul.mubr.bf16.gmra.mrb[0].mxu0 %v8721
    %v8776 = vpop.f32.mrb[0].mxu0
    %v8777 = vadd.f32 0.0, %v8776
    %v8778 = vpop.f32.mrb[0].mxu0
    %v8779 = vpop.f32.mrb[0].mxu0
    %v8780 = vpop.f32.mrb[0].mxu0
    %8781 = vdwg.mxu0
    %v8783 = vsel %vm2848, %v8279, 0
    %v8786 = vsel %vm2848, %v8280, 0
    %v8789 = vsel %vm2848, %v8281, 0
    %v8792 = vsel %vm3347, %v8305, 0
    %8794 = vmatprep.subr.bf16.mxu0 0
    %8795 = vmatpush1.bf16.msra.mxu0 %v8303
    %8796 = vmatprep.subr.bf16.mxu0 0
    %8797 = vmatpush1.bf16.msra.mxu0 %v8304
    %8798 = vmatprep.subr.bf16.mxu0 0
    %8799 = vmatpush1.bf16.msra.mxu0 %v8792
    %8800 = vmatprep.subr.bf16.mxu0 0
    %8801 = vmatpush1.bf16.msra.mxu0 0
    %8802 = vmatprep.subr.bf16.mxu0 0
    %8803 = vmatpush1.bf16.msra.mxu0 0
    %8804 = vmatprep.subr.bf16.mxu0 0
    %8805 = vmatpush1.bf16.msra.mxu0 0
    %8806 = vmatprep.subr.bf16.mxu0 0
    %8807 = vmatpush1.bf16.msra.mxu0 0
    %8808 = vmatprep.subr.bf16.mxu0 0
    %8809 = vmatpush1.bf16.msra.mxu0 0
    %8810 = vmatprep.subr.bf16.mxu0 0
    %8811 = vmatpush1.bf16.msra.mxu0 0
    %8812 = vmatprep.subr.bf16.mxu0 0
    %8813 = vmatpush1.bf16.msra.mxu0 0
    %8814 = vmatprep.subr.bf16.mxu0 0
    %8815 = vmatpush1.bf16.msra.mxu0 0
    %8816 = vmatprep.subr.bf16.mxu0 0
    %8817 = vmatpush1.bf16.msra.mxu0 0
    %8818 = vmatprep.subr.bf16.mxu0 0
    %8819 = vmatpush1.bf16.msra.mxu0 0
    %8820 = vmatprep.subr.bf16.mxu0 0
    %8821 = vmatpush1.bf16.msra.mxu0 0
    %8822 = vmatprep.subr.bf16.mxu0 0
    %8823 = vmatpush1.bf16.msra.mxu0 0
    %8824 = vmatprep.subr.bf16.mxu0 0
    %8825 = vmatpush1.bf16.msra.mxu0 0
    %8826 = vmatprep.mubr.bf16.mxu0 0
    %8827 = vmatmul.mubr.bf16.gmra.mrb[0].mxu0 %v8783
    %v8828 = vpop.f32.mrb[0].mxu0
    %v8829 = vadd.f32 0.0, %v8828
    %v8830 = vpop.f32.mrb[0].mxu0
    %v8831 = vpop.f32.mrb[0].mxu0
    %v8832 = vadd.f32 0.0, %v8831
    %v8833 = vpop.f32.mrb[0].mxu0
    %8834 = vmatprep.mubr.bf16.mxu0 0
    %8835 = vmatmul.mubr.bf16.gmra.mrb[0].mxu0 %v8786
    %v8836 = vpop.f32.mrb[0].mxu0
    %v8837 = vadd.f32 0.0, %v8836
    %v8838 = vpop.f32.mrb[0].mxu0
    %v8839 = vpop.f32.mrb[0].mxu0
    %v8840 = vadd.f32 0.0, %v8839
    %v8841 = vpop.f32.mrb[0].mxu0
    %8842 = vmatprep.mubr.bf16.mxu0 0
    %8843 = vmatmul.mubr.bf16.gmra.mrb[0].mxu0 %v8789
    %v8844 = vpop.f32.mrb[0].mxu0
    %v8845 = vadd.f32 0.0, %v8844
    %v8846 = vpop.f32.mrb[0].mxu0
    %v8847 = vpop.f32.mrb[0].mxu0
    %v8848 = vpop.f32.mrb[0].mxu0
    %8849 = vdwg.mxu0
    %v8850 = vpack.c.bf16 %v8356, %v8353
    %v8851 = vpack.c.bf16 %v8364, %v8361
    %v8852 = vpack.c.bf16 %v8369, %v8369
    %v8853 = vpack.c.bf16 %v8424, %v8421
    %v8854 = vpack.c.bf16 %v8432, %v8429
    %v8855 = vpack.c.bf16 %v8437, %v8437
    %v8856 = vpack.c.bf16 %v8492, %v8489
    %v8857 = vpack.c.bf16 %v8500, %v8497
    %v8858 = vpack.c.bf16 %v8505, %v8505
    %v8859 = vpack.c.bf16 %v8560, %v8557
    %v8860 = vpack.c.bf16 %v8568, %v8565
    %v8861 = vpack.c.bf16 %v8573, %v8573
    %v8862 = vpack.c.bf16 %v8628, %v8625
    %v8863 = vpack.c.bf16 %v8636, %v8633
    %v8864 = vpack.c.bf16 %v8641, %v8641
    %v8865 = vpack.c.bf16 %v8696, %v8693
    %v8866 = vpack.c.bf16 %v8704, %v8701
    %v8867 = vpack.c.bf16 %v8709, %v8709
    %v8868 = vpack.c.bf16 %v8764, %v8761
    %v8869 = vpack.c.bf16 %v8772, %v8769
    %v8870 = vpack.c.bf16 %v8777, %v8777
    %v8871 = vpack.c.bf16 %v8832, %v8829
    %v8872 = vpack.c.bf16 %v8840, %v8837
    %v8873 = vpack.c.bf16 %v8845, %v8845
    %s8874 = scalar_lea.vmem %s8, 16
    %v8875 = vld [vmem:[%s8874] sm:$0x3]
    %v8876 = vld [vmem:[%s8874 + $0x2] sm:$0x3]
    %v8877 = vld [vmem:[%s8874 + $0x4] sm:$0x3]
    %v8878 = vld [vmem:[%s8874 + $0x6] sm:$0x3]
    %v8879 = vld [vmem:[%s8874 + $0x8] sm:$0x3]
    %v8880 = vld [vmem:[%s8874 + $0xa] sm:$0x3]
    %v8881 = vld [vmem:[%s8874 + $0xc] sm:$0x3]
    %v8882 = vld [vmem:[%s8874 + $0xe] sm:$0x3]
    %v8884 = vsel %vm2175, %v8850, 0
    %v8887 = vsel %vm2175, %v8851, 0
    %v8890 = vsel %vm2175, %v8852, 0
    %v8893 = vsel %vm3924, %v8875, 0
    %8895 = vmatprep.subr.bf16.mxu0 0
    %8896 = vmatpush1.bf16.msra.mxu0 %v8893
    %8897 = vmatprep.subr.bf16.mxu0 0
    %8898 = vmatpush1.bf16.msra.mxu0 0
    %8899 = vmatprep.subr.bf16.mxu0 0
    %8900 = vmatpush1.bf16.msra.mxu0 0
    %8901 = vmatprep.subr.bf16.mxu0 0
    %8902 = vmatpush1.bf16.msra.mxu0 0
    %8903 = vmatprep.subr.bf16.mxu0 0
    %8904 = vmatpush1.bf16.msra.mxu0 0
    %8905 = vmatprep.subr.bf16.mxu0 0
    %8906 = vmatpush1.bf16.msra.mxu0 0
    %8907 = vmatprep.subr.bf16.mxu0 0
    %8908 = vmatpush1.bf16.msra.mxu0 0
    %8909 = vmatprep.subr.bf16.mxu0 0
    %8910 = vmatpush1.bf16.msra.mxu0 0
    %8911 = vmatprep.subr.bf16.mxu0 0
    %8912 = vmatpush1.bf16.msra.mxu0 0
    %8913 = vmatprep.subr.bf16.mxu0 0
    %8914 = vmatpush1.bf16.msra.mxu0 0
    %8915 = vmatprep.subr.bf16.mxu0 0
    %8916 = vmatpush1.bf16.msra.mxu0 0
    %8917 = vmatprep.subr.bf16.mxu0 0
    %8918 = vmatpush1.bf16.msra.mxu0 0
    %8919 = vmatprep.subr.bf16.mxu0 0
    %8920 = vmatpush1.bf16.msra.mxu0 0
    %8921 = vmatprep.subr.bf16.mxu0 0
    %8922 = vmatpush1.bf16.msra.mxu0 0
    %8923 = vmatprep.subr.bf16.mxu0 0
    %8924 = vmatpush1.bf16.msra.mxu0 0
    %8925 = vmatprep.subr.bf16.mxu0 0
    %8926 = vmatpush1.bf16.msra.mxu0 0
    %8927 = vmatprep.mubr.bf16.mxu0 0
    %8928 = vmatmul.mubr.bf16.gmra.mrb[0].mxu0 %v8884
    %v8929 = vpop.f32.mrb[0].mxu0
    %v8930 = vadd.f32 0.0, %v8929
    %v8931 = vpop.f32.mrb[0].mxu0
    %v8932 = vpop.f32.mrb[0].mxu0
    %v8933 = vadd.f32 0.0, %v8932
    %v8934 = vpop.f32.mrb[0].mxu0
    %8935 = vmatprep.mubr.bf16.mxu0 0
    %8936 = vmatmul.mubr.bf16.gmra.mrb[0].mxu0 %v8887
    %v8937 = vpop.f32.mrb[0].mxu0
    %v8938 = vadd.f32 0.0, %v8937
    %v8939 = vpop.f32.mrb[0].mxu0
    %v8940 = vpop.f32.mrb[0].mxu0
    %v8941 = vadd.f32 0.0, %v8940
    %v8942 = vpop.f32.mrb[0].mxu0
    %8943 = vmatprep.mubr.bf16.mxu0 0
    %8944 = vmatmul.mubr.bf16.gmra.mrb[0].mxu0 %v8890
    %v8945 = vpop.f32.mrb[0].mxu0
    %v8946 = vadd.f32 0.0, %v8945
    %v8947 = vpop.f32.mrb[0].mxu0
    %v8948 = vpop.f32.mrb[0].mxu0
    %v8949 = vpop.f32.mrb[0].mxu0
    %8950 = vdwg.mxu0
    %v8952 = vsel %vm2175, %v8853, 0
    %v8955 = vsel %vm2175, %v8854, 0
    %v8958 = vsel %vm2175, %v8855, 0
    %v8961 = vsel %vm3924, %v8876, 0
    %8963 = vmatprep.subr.bf16.mxu0 0
    %8964 = vmatpush1.bf16.msra.mxu0 %v8961
    %8965 = vmatprep.subr.bf16.mxu0 0
    %8966 = vmatpush1.bf16.msra.mxu0 0
    %8967 = vmatprep.subr.bf16.mxu0 0
    %8968 = vmatpush1.bf16.msra.mxu0 0
    %8969 = vmatprep.subr.bf16.mxu0 0
    %8970 = vmatpush1.bf16.msra.mxu0 0
    %8971 = vmatprep.subr.bf16.mxu0 0
    %8972 = vmatpush1.bf16.msra.mxu0 0
    %8973 = vmatprep.subr.bf16.mxu0 0
    %8974 = vmatpush1.bf16.msra.mxu0 0
    %8975 = vmatprep.subr.bf16.mxu0 0
    %8976 = vmatpush1.bf16.msra.mxu0 0
    %8977 = vmatprep.subr.bf16.mxu0 0
    %8978 = vmatpush1.bf16.msra.mxu0 0
    %8979 = vmatprep.subr.bf16.mxu0 0
    %8980 = vmatpush1.bf16.msra.mxu0 0
    %8981 = vmatprep.subr.bf16.mxu0 0
    %8982 = vmatpush1.bf16.msra.mxu0 0
    %8983 = vmatprep.subr.bf16.mxu0 0
    %8984 = vmatpush1.bf16.msra.mxu0 0
    %8985 = vmatprep.subr.bf16.mxu0 0
    %8986 = vmatpush1.bf16.msra.mxu0 0
    %8987 = vmatprep.subr.bf16.mxu0 0
    %8988 = vmatpush1.bf16.msra.mxu0 0
    %8989 = vmatprep.subr.bf16.mxu0 0
    %8990 = vmatpush1.bf16.msra.mxu0 0
    %8991 = vmatprep.subr.bf16.mxu0 0
    %8992 = vmatpush1.bf16.msra.mxu0 0
    %8993 = vmatprep.subr.bf16.mxu0 0
    %8994 = vmatpush1.bf16.msra.mxu0 0
    %8995 = vmatprep.mubr.bf16.mxu0 0
    %8996 = vmatmul.mubr.bf16.gmra.mrb[0].mxu0 %v8952
    %v8997 = vpop.f32.mrb[0].mxu0
    %v8998 = vadd.f32 0.0, %v8997
    %v8999 = vpop.f32.mrb[0].mxu0
    %v9000 = vpop.f32.mrb[0].mxu0
    %v9001 = vadd.f32 0.0, %v9000
    %v9002 = vpop.f32.mrb[0].mxu0
    %9003 = vmatprep.mubr.bf16.mxu0 0
    %9004 = vmatmul.mubr.bf16.gmra.mrb[0].mxu0 %v8955
    %v9005 = vpop.f32.mrb[0].mxu0
    %v9006 = vadd.f32 0.0, %v9005
    %v9007 = vpop.f32.mrb[0].mxu0
    %v9008 = vpop.f32.mrb[0].mxu0
    %v9009 = vadd.f32 0.0, %v9008
    %v9010 = vpop.f32.mrb[0].mxu0
    %9011 = vmatprep.mubr.bf16.mxu0 0
    %9012 = vmatmul.mubr.bf16.gmra.mrb[0].mxu0 %v8958
    %v9013 = vpop.f32.mrb[0].mxu0
    %v9014 = vadd.f32 0.0, %v9013
    %v9015 = vpop.f32.mrb[0].mxu0
    %v9016 = vpop.f32.mrb[0].mxu0
    %v9017 = vpop.f32.mrb[0].mxu0
    %9018 = vdwg.mxu0
    %v9020 = vsel %vm2175, %v8856, 0
    %v9023 = vsel %vm2175, %v8857, 0
    %v9026 = vsel %vm2175, %v8858, 0
    %v9029 = vsel %vm3924, %v8877, 0
    %9031 = vmatprep.subr.bf16.mxu0 0
    %9032 = vmatpush1.bf16.msra.mxu0 %v9029
    %9033 = vmatprep.subr.bf16.mxu0 0
    %9034 = vmatpush1.bf16.msra.mxu0 0
    %9035 = vmatprep.subr.bf16.mxu0 0
    %9036 = vmatpush1.bf16.msra.mxu0 0
    %9037 = vmatprep.subr.bf16.mxu0 0
    %9038 = vmatpush1.bf16.msra.mxu0 0
    %9039 = vmatprep.subr.bf16.mxu0 0
    %9040 = vmatpush1.bf16.msra.mxu0 0
    %9041 = vmatprep.subr.bf16.mxu0 0
    %9042 = vmatpush1.bf16.msra.mxu0 0
    %9043 = vmatprep.subr.bf16.mxu0 0
    %9044 = vmatpush1.bf16.msra.mxu0 0
    %9045 = vmatprep.subr.bf16.mxu0 0
    %9046 = vmatpush1.bf16.msra.mxu0 0
    %9047 = vmatprep.subr.bf16.mxu0 0
    %9048 = vmatpush1.bf16.msra.mxu0 0
    %9049 = vmatprep.subr.bf16.mxu0 0
    %9050 = vmatpush1.bf16.msra.mxu0 0
    %9051 = vmatprep.subr.bf16.mxu0 0
    %9052 = vmatpush1.bf16.msra.mxu0 0
    %9053 = vmatprep.subr.bf16.mxu0 0
    %9054 = vmatpush1.bf16.msra.mxu0 0
    %9055 = vmatprep.subr.bf16.mxu0 0
    %9056 = vmatpush1.bf16.msra.mxu0 0
    %9057 = vmatprep.subr.bf16.mxu0 0
    %9058 = vmatpush1.bf16.msra.mxu0 0
    %9059 = vmatprep.subr.bf16.mxu0 0
    %9060 = vmatpush1.bf16.msra.mxu0 0
    %9061 = vmatprep.subr.bf16.mxu0 0
    %9062 = vmatpush1.bf16.msra.mxu0 0
    %9063 = vmatprep.mubr.bf16.mxu0 0
    %9064 = vmatmul.mubr.bf16.gmra.mrb[0].mxu0 %v9020
    %v9065 = vpop.f32.mrb[0].mxu0
    %v9066 = vadd.f32 0.0, %v9065
    %v9067 = vpop.f32.mrb[0].mxu0
    %v9068 = vpop.f32.mrb[0].mxu0
    %v9069 = vadd.f32 0.0, %v9068
    %v9070 = vpop.f32.mrb[0].mxu0
    %9071 = vmatprep.mubr.bf16.mxu0 0
    %9072 = vmatmul.mubr.bf16.gmra.mrb[0].mxu0 %v9023
    %v9073 = vpop.f32.mrb[0].mxu0
    %v9074 = vadd.f32 0.0, %v9073
    %v9075 = vpop.f32.mrb[0].mxu0
    %v9076 = vpop.f32.mrb[0].mxu0
    %v9077 = vadd.f32 0.0, %v9076
    %v9078 = vpop.f32.mrb[0].mxu0
    %9079 = vmatprep.mubr.bf16.mxu0 0
    %9080 = vmatmul.mubr.bf16.gmra.mrb[0].mxu0 %v9026
    %v9081 = vpop.f32.mrb[0].mxu0
    %v9082 = vadd.f32 0.0, %v9081
    %v9083 = vpop.f32.mrb[0].mxu0
    %v9084 = vpop.f32.mrb[0].mxu0
    %v9085 = vpop.f32.mrb[0].mxu0
    %9086 = vdwg.mxu0
    %v9088 = vsel %vm2175, %v8859, 0
    %v9091 = vsel %vm2175, %v8860, 0
    %v9094 = vsel %vm2175, %v8861, 0
    %v9097 = vsel %vm3924, %v8878, 0
    %9099 = vmatprep.subr.bf16.mxu0 0
    %9100 = vmatpush1.bf16.msra.mxu0 %v9097
    %9101 = vmatprep.subr.bf16.mxu0 0
    %9102 = vmatpush1.bf16.msra.mxu0 0
    %9103 = vmatprep.subr.bf16.mxu0 0
    %9104 = vmatpush1.bf16.msra.mxu0 0
    %9105 = vmatprep.subr.bf16.mxu0 0
    %9106 = vmatpush1.bf16.msra.mxu0 0
    %9107 = vmatprep.subr.bf16.mxu0 0
    %9108 = vmatpush1.bf16.msra.mxu0 0
    %9109 = vmatprep.subr.bf16.mxu0 0
    %9110 = vmatpush1.bf16.msra.mxu0 0
    %9111 = vmatprep.subr.bf16.mxu0 0
    %9112 = vmatpush1.bf16.msra.mxu0 0
    %9113 = vmatprep.subr.bf16.mxu0 0
    %9114 = vmatpush1.bf16.msra.mxu0 0
    %9115 = vmatprep.subr.bf16.mxu0 0
    %9116 = vmatpush1.bf16.msra.mxu0 0
    %9117 = vmatprep.subr.bf16.mxu0 0
    %9118 = vmatpush1.bf16.msra.mxu0 0
    %9119 = vmatprep.subr.bf16.mxu0 0
    %9120 = vmatpush1.bf16.msra.mxu0 0
    %9121 = vmatprep.subr.bf16.mxu0 0
    %9122 = vmatpush1.bf16.msra.mxu0 0
    %9123 = vmatprep.subr.bf16.mxu0 0
    %9124 = vmatpush1.bf16.msra.mxu0 0
    %9125 = vmatprep.subr.bf16.mxu0 0
    %9126 = vmatpush1.bf16.msra.mxu0 0
    %9127 = vmatprep.subr.bf16.mxu0 0
    %9128 = vmatpush1.bf16.msra.mxu0 0
    %9129 = vmatprep.subr.bf16.mxu0 0
    %9130 = vmatpush1.bf16.msra.mxu0 0
    %9131 = vmatprep.mubr.bf16.mxu0 0
    %9132 = vmatmul.mubr.bf16.gmra.mrb[0].mxu0 %v9088
    %v9133 = vpop.f32.mrb[0].mxu0
    %v9134 = vadd.f32 0.0, %v9133
    %v9135 = vpop.f32.mrb[0].mxu0
    %v9136 = vpop.f32.mrb[0].mxu0
    %v9137 = vadd.f32 0.0, %v9136
    %v9138 = vpop.f32.mrb[0].mxu0
    %9139 = vmatprep.mubr.bf16.mxu0 0
    %9140 = vmatmul.mubr.bf16.gmra.mrb[0].mxu0 %v9091
    %v9141 = vpop.f32.mrb[0].mxu0
    %v9142 = vadd.f32 0.0, %v9141
    %v9143 = vpop.f32.mrb[0].mxu0
    %v9144 = vpop.f32.mrb[0].mxu0
    %v9145 = vadd.f32 0.0, %v9144
    %v9146 = vpop.f32.mrb[0].mxu0
    %9147 = vmatprep.mubr.bf16.mxu0 0
    %9148 = vmatmul.mubr.bf16.gmra.mrb[0].mxu0 %v9094
    %v9149 = vpop.f32.mrb[0].mxu0
    %v9150 = vadd.f32 0.0, %v9149
    %v9151 = vpop.f32.mrb[0].mxu0
    %v9152 = vpop.f32.mrb[0].mxu0
    %v9153 = vpop.f32.mrb[0].mxu0
    %9154 = vdwg.mxu0
    %v9156 = vsel %vm2175, %v8862, 0
    %v9159 = vsel %vm2175, %v8863, 0
    %v9162 = vsel %vm2175, %v8864, 0
    %v9165 = vsel %vm3924, %v8879, 0
    %9167 = vmatprep.subr.bf16.mxu0 0
    %9168 = vmatpush1.bf16.msra.mxu0 %v9165
    %9169 = vmatprep.subr.bf16.mxu0 0
    %9170 = vmatpush1.bf16.msra.mxu0 0
    %9171 = vmatprep.subr.bf16.mxu0 0
    %9172 = vmatpush1.bf16.msra.mxu0 0
    %9173 = vmatprep.subr.bf16.mxu0 0
    %9174 = vmatpush1.bf16.msra.mxu0 0
    %9175 = vmatprep.subr.bf16.mxu0 0
    %9176 = vmatpush1.bf16.msra.mxu0 0
    %9177 = vmatprep.subr.bf16.mxu0 0
    %9178 = vmatpush1.bf16.msra.mxu0 0
    %9179 = vmatprep.subr.bf16.mxu0 0
    %9180 = vmatpush1.bf16.msra.mxu0 0
    %9181 = vmatprep.subr.bf16.mxu0 0
    %9182 = vmatpush1.bf16.msra.mxu0 0
    %9183 = vmatprep.subr.bf16.mxu0 0
    %9184 = vmatpush1.bf16.msra.mxu0 0
    %9185 = vmatprep.subr.bf16.mxu0 0
    %9186 = vmatpush1.bf16.msra.mxu0 0
    %9187 = vmatprep.subr.bf16.mxu0 0
    %9188 = vmatpush1.bf16.msra.mxu0 0
    %9189 = vmatprep.subr.bf16.mxu0 0
    %9190 = vmatpush1.bf16.msra.mxu0 0
    %9191 = vmatprep.subr.bf16.mxu0 0
    %9192 = vmatpush1.bf16.msra.mxu0 0
    %9193 = vmatprep.subr.bf16.mxu0 0
    %9194 = vmatpush1.bf16.msra.mxu0 0
    %9195 = vmatprep.subr.bf16.mxu0 0
    %9196 = vmatpush1.bf16.msra.mxu0 0
    %9197 = vmatprep.subr.bf16.mxu0 0
    %9198 = vmatpush1.bf16.msra.mxu0 0
    %9199 = vmatprep.mubr.bf16.mxu0 0
    %9200 = vmatmul.mubr.bf16.gmra.mrb[0].mxu0 %v9156
    %v9201 = vpop.f32.mrb[0].mxu0
    %v9202 = vadd.f32 0.0, %v9201
    %v9203 = vpop.f32.mrb[0].mxu0
    %v9204 = vpop.f32.mrb[0].mxu0
    %v9205 = vadd.f32 0.0, %v9204
    %v9206 = vpop.f32.mrb[0].mxu0
    %9207 = vmatprep.mubr.bf16.mxu0 0
    %9208 = vmatmul.mubr.bf16.gmra.mrb[0].mxu0 %v9159
    %v9209 = vpop.f32.mrb[0].mxu0
    %v9210 = vadd.f32 0.0, %v9209
    %v9211 = vpop.f32.mrb[0].mxu0
    %v9212 = vpop.f32.mrb[0].mxu0
    %v9213 = vadd.f32 0.0, %v9212
    %v9214 = vpop.f32.mrb[0].mxu0
    %9215 = vmatprep.mubr.bf16.mxu0 0
    %9216 = vmatmul.mubr.bf16.gmra.mrb[0].mxu0 %v9162
    %v9217 = vpop.f32.mrb[0].mxu0
    %v9218 = vadd.f32 0.0, %v9217
    %v9219 = vpop.f32.mrb[0].mxu0
    %v9220 = vpop.f32.mrb[0].mxu0
    %v9221 = vpop.f32.mrb[0].mxu0
    %9222 = vdwg.mxu0
    %v9224 = vsel %vm2175, %v8865, 0
    %v9227 = vsel %vm2175, %v8866, 0
    %v9230 = vsel %vm2175, %v8867, 0
    %v9233 = vsel %vm3924, %v8880, 0
    %9235 = vmatprep.subr.bf16.mxu0 0
    %9236 = vmatpush1.bf16.msra.mxu0 %v9233
    %9237 = vmatprep.subr.bf16.mxu0 0
    %9238 = vmatpush1.bf16.msra.mxu0 0
    %9239 = vmatprep.subr.bf16.mxu0 0
    %9240 = vmatpush1.bf16.msra.mxu0 0
    %9241 = vmatprep.subr.bf16.mxu0 0
    %9242 = vmatpush1.bf16.msra.mxu0 0
    %9243 = vmatprep.subr.bf16.mxu0 0
    %9244 = vmatpush1.bf16.msra.mxu0 0
    %9245 = vmatprep.subr.bf16.mxu0 0
    %9246 = vmatpush1.bf16.msra.mxu0 0
    %9247 = vmatprep.subr.bf16.mxu0 0
    %9248 = vmatpush1.bf16.msra.mxu0 0
    %9249 = vmatprep.subr.bf16.mxu0 0
    %9250 = vmatpush1.bf16.msra.mxu0 0
    %9251 = vmatprep.subr.bf16.mxu0 0
    %9252 = vmatpush1.bf16.msra.mxu0 0
    %9253 = vmatprep.subr.bf16.mxu0 0
    %9254 = vmatpush1.bf16.msra.mxu0 0
    %9255 = vmatprep.subr.bf16.mxu0 0
    %9256 = vmatpush1.bf16.msra.mxu0 0
    %9257 = vmatprep.subr.bf16.mxu0 0
    %9258 = vmatpush1.bf16.msra.mxu0 0
    %9259 = vmatprep.subr.bf16.mxu0 0
    %9260 = vmatpush1.bf16.msra.mxu0 0
    %9261 = vmatprep.subr.bf16.mxu0 0
    %9262 = vmatpush1.bf16.msra.mxu0 0
    %9263 = vmatprep.subr.bf16.mxu0 0
    %9264 = vmatpush1.bf16.msra.mxu0 0
    %9265 = vmatprep.subr.bf16.mxu0 0
    %9266 = vmatpush1.bf16.msra.mxu0 0
    %9267 = vmatprep.mubr.bf16.mxu0 0
    %9268 = vmatmul.mubr.bf16.gmra.mrb[0].mxu0 %v9224
    %v9269 = vpop.f32.mrb[0].mxu0
    %v9270 = vadd.f32 0.0, %v9269
    %v9271 = vpop.f32.mrb[0].mxu0
    %v9272 = vpop.f32.mrb[0].mxu0
    %v9273 = vadd.f32 0.0, %v9272
    %v9274 = vpop.f32.mrb[0].mxu0
    %9275 = vmatprep.mubr.bf16.mxu0 0
    %9276 = vmatmul.mubr.bf16.gmra.mrb[0].mxu0 %v9227
    %v9277 = vpop.f32.mrb[0].mxu0
    %v9278 = vadd.f32 0.0, %v9277
    %v9279 = vpop.f32.mrb[0].mxu0
    %v9280 = vpop.f32.mrb[0].mxu0
    %v9281 = vadd.f32 0.0, %v9280
    %v9282 = vpop.f32.mrb[0].mxu0
    %9283 = vmatprep.mubr.bf16.mxu0 0
    %9284 = vmatmul.mubr.bf16.gmra.mrb[0].mxu0 %v9230
    %v9285 = vpop.f32.mrb[0].mxu0
    %v9286 = vadd.f32 0.0, %v9285
    %v9287 = vpop.f32.mrb[0].mxu0
    %v9288 = vpop.f32.mrb[0].mxu0
    %v9289 = vpop.f32.mrb[0].mxu0
    %9290 = vdwg.mxu0
    %v9292 = vsel %vm2175, %v8868, 0
    %v9295 = vsel %vm2175, %v8869, 0
    %v9298 = vsel %vm2175, %v8870, 0
    %v9301 = vsel %vm3924, %v8881, 0
    %9303 = vmatprep.subr.bf16.mxu0 0
    %9304 = vmatpush1.bf16.msra.mxu0 %v9301
    %9305 = vmatprep.subr.bf16.mxu0 0
    %9306 = vmatpush1.bf16.msra.mxu0 0
    %9307 = vmatprep.subr.bf16.mxu0 0
    %9308 = vmatpush1.bf16.msra.mxu0 0
    %9309 = vmatprep.subr.bf16.mxu0 0
    %9310 = vmatpush1.bf16.msra.mxu0 0
    %9311 = vmatprep.subr.bf16.mxu0 0
    %9312 = vmatpush1.bf16.msra.mxu0 0
    %9313 = vmatprep.subr.bf16.mxu0 0
    %9314 = vmatpush1.bf16.msra.mxu0 0
    %9315 = vmatprep.subr.bf16.mxu0 0
    %9316 = vmatpush1.bf16.msra.mxu0 0
    %9317 = vmatprep.subr.bf16.mxu0 0
    %9318 = vmatpush1.bf16.msra.mxu0 0
    %9319 = vmatprep.subr.bf16.mxu0 0
    %9320 = vmatpush1.bf16.msra.mxu0 0
    %9321 = vmatprep.subr.bf16.mxu0 0
    %9322 = vmatpush1.bf16.msra.mxu0 0
    %9323 = vmatprep.subr.bf16.mxu0 0
    %9324 = vmatpush1.bf16.msra.mxu0 0
    %9325 = vmatprep.subr.bf16.mxu0 0
    %9326 = vmatpush1.bf16.msra.mxu0 0
    %9327 = vmatprep.subr.bf16.mxu0 0
    %9328 = vmatpush1.bf16.msra.mxu0 0
    %9329 = vmatprep.subr.bf16.mxu0 0
    %9330 = vmatpush1.bf16.msra.mxu0 0
    %9331 = vmatprep.subr.bf16.mxu0 0
    %9332 = vmatpush1.bf16.msra.mxu0 0
    %9333 = vmatprep.subr.bf16.mxu0 0
    %9334 = vmatpush1.bf16.msra.mxu0 0
    %9335 = vmatprep.mubr.bf16.mxu0 0
    %9336 = vmatmul.mubr.bf16.gmra.mrb[0].mxu0 %v9292
    %v9337 = vpop.f32.mrb[0].mxu0
    %v9338 = vadd.f32 0.0, %v9337
    %v9339 = vpop.f32.mrb[0].mxu0
    %v9340 = vpop.f32.mrb[0].mxu0
    %v9341 = vadd.f32 0.0, %v9340
    %v9342 = vpop.f32.mrb[0].mxu0
    %9343 = vmatprep.mubr.bf16.mxu0 0
    %9344 = vmatmul.mubr.bf16.gmra.mrb[0].mxu0 %v9295
    %v9345 = vpop.f32.mrb[0].mxu0
    %v9346 = vadd.f32 0.0, %v9345
    %v9347 = vpop.f32.mrb[0].mxu0
    %v9348 = vpop.f32.mrb[0].mxu0
    %v9349 = vadd.f32 0.0, %v9348
    %v9350 = vpop.f32.mrb[0].mxu0
    %9351 = vmatprep.mubr.bf16.mxu0 0
    %9352 = vmatmul.mubr.bf16.gmra.mrb[0].mxu0 %v9298
    %v9353 = vpop.f32.mrb[0].mxu0
    %v9354 = vadd.f32 0.0, %v9353
    %v9355 = vpop.f32.mrb[0].mxu0
    %v9356 = vpop.f32.mrb[0].mxu0
    %v9357 = vpop.f32.mrb[0].mxu0
    %9358 = vdwg.mxu0
    %v9360 = vsel %vm2175, %v8871, 0
    %v9363 = vsel %vm2175, %v8872, 0
    %v9366 = vsel %vm2175, %v8873, 0
    %v9369 = vsel %vm3924, %v8882, 0
    %9371 = vmatprep.subr.bf16.mxu0 0
    %9372 = vmatpush1.bf16.msra.mxu0 %v9369
    %9373 = vmatprep.subr.bf16.mxu0 0
    %9374 = vmatpush1.bf16.msra.mxu0 0
    %9375 = vmatprep.subr.bf16.mxu0 0
    %9376 = vmatpush1.bf16.msra.mxu0 0
    %9377 = vmatprep.subr.bf16.mxu0 0
    %9378 = vmatpush1.bf16.msra.mxu0 0
    %9379 = vmatprep.subr.bf16.mxu0 0
    %9380 = vmatpush1.bf16.msra.mxu0 0
    %9381 = vmatprep.subr.bf16.mxu0 0
    %9382 = vmatpush1.bf16.msra.mxu0 0
    %9383 = vmatprep.subr.bf16.mxu0 0
    %9384 = vmatpush1.bf16.msra.mxu0 0
    %9385 = vmatprep.subr.bf16.mxu0 0
    %9386 = vmatpush1.bf16.msra.mxu0 0
    %9387 = vmatprep.subr.bf16.mxu0 0
    %9388 = vmatpush1.bf16.msra.mxu0 0
    %9389 = vmatprep.subr.bf16.mxu0 0
    %9390 = vmatpush1.bf16.msra.mxu0 0
    %9391 = vmatprep.subr.bf16.mxu0 0
    %9392 = vmatpush1.bf16.msra.mxu0 0
    %9393 = vmatprep.subr.bf16.mxu0 0
    %9394 = vmatpush1.bf16.msra.mxu0 0
    %9395 = vmatprep.subr.bf16.mxu0 0
    %9396 = vmatpush1.bf16.msra.mxu0 0
    %9397 = vmatprep.subr.bf16.mxu0 0
    %9398 = vmatpush1.bf16.msra.mxu0 0
    %9399 = vmatprep.subr.bf16.mxu0 0
    %9400 = vmatpush1.bf16.msra.mxu0 0
    %9401 = vmatprep.subr.bf16.mxu0 0
    %9402 = vmatpush1.bf16.msra.mxu0 0
    %9403 = vmatprep.mubr.bf16.mxu0 0
    %9404 = vmatmul.mubr.bf16.gmra.mrb[0].mxu0 %v9360
    %v9405 = vpop.f32.mrb[0].mxu0
    %v9406 = vadd.f32 0.0, %v9405
    %v9407 = vpop.f32.mrb[0].mxu0
    %v9408 = vpop.f32.mrb[0].mxu0
    %v9409 = vadd.f32 0.0, %v9408
    %v9410 = vpop.f32.mrb[0].mxu0
    %9411 = vmatprep.mubr.bf16.mxu0 0
    %9412 = vmatmul.mubr.bf16.gmra.mrb[0].mxu0 %v9363
    %v9413 = vpop.f32.mrb[0].mxu0
    %v9414 = vadd.f32 0.0, %v9413
    %v9415 = vpop.f32.mrb[0].mxu0
    %v9416 = vpop.f32.mrb[0].mxu0
    %v9417 = vadd.f32 0.0, %v9416
    %v9418 = vpop.f32.mrb[0].mxu0
    %9419 = vmatprep.mubr.bf16.mxu0 0
    %9420 = vmatmul.mubr.bf16.gmra.mrb[0].mxu0 %v9366
    %v9421 = vpop.f32.mrb[0].mxu0
    %v9422 = vadd.f32 0.0, %v9421
    %v9423 = vpop.f32.mrb[0].mxu0
    %v9424 = vpop.f32.mrb[0].mxu0
    %v9425 = vpop.f32.mrb[0].mxu0
    %9426 = vdwg.mxu0
    %v9427 = vsel %vm177, %v8930, 0.0
    %v9428 = vsel %vm177, %v8998, 0.0
    %v9429 = vadd.f32 %v9427, %v9428
    %v9430 = vsel %vm177, %v9066, 0.0
    %v9431 = vadd.f32 %v9429, %v9430
    %v9432 = vsel %vm177, %v9134, 0.0
    %v9433 = vadd.f32 %v9431, %v9432
    %v9434 = vsel %vm177, %v9202, 0.0
    %v9435 = vadd.f32 %v9433, %v9434
    %v9436 = vsel %vm177, %v9270, 0.0
    %v9437 = vadd.f32 %v9435, %v9436
    %v9438 = vsel %vm177, %v9338, 0.0
    %v9439 = vadd.f32 %v9437, %v9438
    %v9440 = vsel %vm177, %v9406, 0.0
    %v9441 = vadd.f32 %v9439, %v9440
    %v9442 = vsel %vm177, %v8933, 0.0
    %v9443 = vsel %vm177, %v9001, 0.0
    %v9444 = vadd.f32 %v9442, %v9443
    %v9445 = vsel %vm177, %v9069, 0.0
    %v9446 = vadd.f32 %v9444, %v9445
    %v9447 = vsel %vm177, %v9137, 0.0
    %v9448 = vadd.f32 %v9446, %v9447
    %v9449 = vsel %vm177, %v9205, 0.0
    %v9450 = vadd.f32 %v9448, %v9449
    %v9451 = vsel %vm177, %v9273, 0.0
    %v9452 = vadd.f32 %v9450, %v9451
    %v9453 = vsel %vm177, %v9341, 0.0
    %v9454 = vadd.f32 %v9452, %v9453
    %v9455 = vsel %vm177, %v9409, 0.0
    %v9456 = vadd.f32 %v9454, %v9455
    %v9457 = vsel %vm177, %v8938, 0.0
    %v9458 = vsel %vm177, %v9006, 0.0
    %v9459 = vadd.f32 %v9457, %v9458
    %v9460 = vsel %vm177, %v9074, 0.0
    %v9461 = vadd.f32 %v9459, %v9460
    %v9462 = vsel %vm177, %v9142, 0.0
    %v9463 = vadd.f32 %v9461, %v9462
    %v9464 = vsel %vm177, %v9210, 0.0
    %v9465 = vadd.f32 %v9463, %v9464
    %v9466 = vsel %vm177, %v9278, 0.0
    %v9467 = vadd.f32 %v9465, %v9466
    %v9468 = vsel %vm177, %v9346, 0.0
    %v9469 = vadd.f32 %v9467, %v9468
    %v9470 = vsel %vm177, %v9414, 0.0
    %v9471 = vadd.f32 %v9469, %v9470
    %v9472 = vsel %vm177, %v8941, 0.0
    %v9473 = vsel %vm177, %v9009, 0.0
    %v9474 = vadd.f32 %v9472, %v9473
    %v9475 = vsel %vm177, %v9077, 0.0
    %v9476 = vadd.f32 %v9474, %v9475
    %v9477 = vsel %vm177, %v9145, 0.0
    %v9478 = vadd.f32 %v9476, %v9477
    %v9479 = vsel %vm177, %v9213, 0.0
    %v9480 = vadd.f32 %v9478, %v9479
    %v9481 = vsel %vm177, %v9281, 0.0
    %v9482 = vadd.f32 %v9480, %v9481
    %v9483 = vsel %vm177, %v9349, 0.0
    %v9484 = vadd.f32 %v9482, %v9483
    %v9485 = vsel %vm177, %v9417, 0.0
    %v9486 = vadd.f32 %v9484, %v9485
    %v9487 = vsel %vm190, %v8946, 0.0
    %v9488 = vsel %vm190, %v9014, 0.0
    %v9489 = vadd.f32 %v9487, %v9488
    %v9490 = vsel %vm190, %v9082, 0.0
    %v9491 = vadd.f32 %v9489, %v9490
    %v9492 = vsel %vm190, %v9150, 0.0
    %v9493 = vadd.f32 %v9491, %v9492
    %v9494 = vsel %vm190, %v9218, 0.0
    %v9495 = vadd.f32 %v9493, %v9494
    %v9496 = vsel %vm190, %v9286, 0.0
    %v9497 = vadd.f32 %v9495, %v9496
    %v9498 = vsel %vm190, %v9354, 0.0
    %v9499 = vadd.f32 %v9497, %v9498
    %v9500 = vsel %vm190, %v9422, 0.0
    %v9501 = vadd.f32 %v9499, %v9500
    %s9502 = scalar_lea.vmem %s9, 1
    %v9503 = vld [vmem:[%s9502] sm:$0x1]
    %v9505 = vlaneseq
    %v9506 = vshrl.u32 %v9505, 7
    %v9507 = vsub.s32 0, %v9506
    %v9508 = vrot.slane %v9503, %v9507
    %v9510 = vadd.f32 %v9441, %v9508
    %v9511 = vadd.f32 %v9456, %v9508
    %v9512 = vadd.f32 %v9471, %v9508
    %v9513 = vadd.f32 %v9486, %v9508
    %v9514 = vadd.f32 %v9501, %v9508
    %v9515 = vadd.f32 %v9510, %v5140
    %v9516 = vadd.f32 %v9511, %v5141
    %v9517 = vadd.f32 %v9512, %v5142
    %v9518 = vadd.f32 %v9513, %v5143
    %v9519 = vadd.f32 %v9514, %v5144
    %s9520 = scalar_lea.vmem %s10, 1
    %v9521 = vld [vmem:[%s9520] sm:$0x1]
    %s9522 = scalar_lea.vmem %s11, 1
    %v9523 = vld [vmem:[%s9522] sm:$0x1]
    %v9524 = vsel %vm177, %v9515, 0.0
    %9525 = vadd.xlane.f32.xlu0 %v9524
    %v9526 = vpop.xlane.xlu0 %9525
    %v9527 = vsel %vm177, %v9516, 0.0
    %9528 = vadd.xlane.f32.xlu0 %v9527
    %v9529 = vpop.xlane.xlu0 %9528
    %v9530 = vsel %vm177, %v9517, 0.0
    %9531 = vadd.xlane.f32.xlu0 %v9530
    %v9532 = vpop.xlane.xlu0 %9531
    %v9533 = vsel %vm177, %v9518, 0.0
    %9534 = vadd.xlane.f32.xlu0 %v9533
    %v9535 = vpop.xlane.xlu0 %9534
    %v9536 = vsel %vm190, %v9519, 0.0
    %9537 = vadd.xlane.f32.xlu0 %v9536
    %v9538 = vpop.xlane.xlu0 %9537
    %v9539 = vmul.f32 %v9526, %v194
    %v9540 = vmul.f32 %v9529, %v194
    %v9541 = vmul.f32 %v9532, %v194
    %v9542 = vmul.f32 %v9535, %v194
    %v9543 = vmul.f32 %v9538, %v194
    %v9544 = vsub.f32 %v9515, %v9539
    %v9545 = vsub.f32 %v9516, %v9540
    %v9546 = vsub.f32 %v9517, %v9541
    %v9547 = vsub.f32 %v9518, %v9542
    %v9548 = vsub.f32 %v9519, %v9543
    %v9549 = vmul.f32 %v9544, %v9544
    %v9550 = vmul.f32 %v9545, %v9545
    %v9551 = vmul.f32 %v9546, %v9546
    %v9552 = vmul.f32 %v9547, %v9547
    %v9553 = vmul.f32 %v9548, %v9548
    %v9554 = vsel %vm177, %v9549, 0.0
    %9555 = vadd.xlane.f32.xlu0 %v9554
    %v9556 = vpop.xlane.xlu0 %9555
    %v9557 = vsel %vm177, %v9550, 0.0
    %9558 = vadd.xlane.f32.xlu0 %v9557
    %v9559 = vpop.xlane.xlu0 %9558
    %v9560 = vsel %vm177, %v9551, 0.0
    %9561 = vadd.xlane.f32.xlu0 %v9560
    %v9562 = vpop.xlane.xlu0 %9561
    %v9563 = vsel %vm177, %v9552, 0.0
    %9564 = vadd.xlane.f32.xlu0 %v9563
    %v9565 = vpop.xlane.xlu0 %9564
    %v9566 = vsel %vm190, %v9553, 0.0
    %9567 = vadd.xlane.f32.xlu0 %v9566
    %v9568 = vpop.xlane.xlu0 %9567
    %v9569 = vmul.f32 %v9556, %v194
    %v9570 = vmul.f32 %v9559, %v194
    %v9571 = vmul.f32 %v9562, %v194
    %v9572 = vmul.f32 %v9565, %v194
    %v9573 = vmul.f32 %v9568, %v194
    %v9574 = vadd.f32 %v9569, 1e-05
    %v9575 = vadd.f32 %v9570, 1e-05
    %v9576 = vadd.f32 %v9571, 1e-05
    %v9577 = vadd.f32 %v9572, 1e-05
    %v9578 = vadd.f32 %v9573, 1e-05
    %v9579 = vrsqrt.pop %v9574
    %v9580 = vrsqrt.pop %v9575
    %v9581 = vrsqrt.pop %v9576
    %v9582 = vrsqrt.pop %v9577
    %v9583 = vrsqrt.pop %v9578
    %v9584 = vmul.f32 %v9544, %v9579
    %v9585 = vmul.f32 %v9545, %v9580
    %v9586 = vmul.f32 %v9546, %v9581
    %v9587 = vmul.f32 %v9547, %v9582
    %v9588 = vmul.f32 %v9548, %v9583
    %v9590 = vlaneseq
    %v9591 = vshrl.u32 %v9590, 7
    %v9592 = vsub.s32 0, %v9591
    %v9593 = vrot.slane %v9521, %v9592
    %v9595 = vmul.f32 %v9584, %v9593
    %v9596 = vmul.f32 %v9585, %v9593
    %v9597 = vmul.f32 %v9586, %v9593
    %v9598 = vmul.f32 %v9587, %v9593
    %v9599 = vmul.f32 %v9588, %v9593
    %v9601 = vlaneseq
    %v9602 = vshrl.u32 %v9601, 7
    %v9603 = vsub.s32 0, %v9602
    %v9604 = vrot.slane %v9523, %v9603
    %v9606 = vadd.f32 %v9595, %v9604
    %v9607 = vadd.f32 %v9596, %v9604
    %v9608 = vadd.f32 %v9597, %v9604
    %v9609 = vadd.f32 %v9598, %v9604
    %v9610 = vadd.f32 %v9599, %v9604
    %v9611 = vpack.c.bf16 %v9607, %v9606
    %v9612 = vpack.c.bf16 %v9609, %v9608
    %v9613 = vpack.c.bf16 %v9610, %v9610
    %s9614 = scalar_lea.vmem %s12, 16
    %v9615 = vld [vmem:[%s9614] sm:$0xf]
    %v9616 = vld [vmem:[%s9614 + $0x4] sm:$0xf]
    %v9617 = vld [vmem:[%s9614 + $0x8] sm:$0xf]
    %v9618 = vld [vmem:[%s9614 + $0xc] sm:$0xf]
    %s9619 = scalar_lea.vmem %s13, 1
    %v9620 = vld [vmem:[%s9619] sm:$0x1]
    %v9622 = vlaneseq
    %v9623 = vshrl.u32 %v9622, 7
    %v9624 = vsub.s32 0, %v9623
    %v9625 = vrot.slane %v9620, %v9624
    %v9631 = vunpack.c.l.b16 %v9615
    %v9632 = vunpack.c.l.b16 %v9616
    %v9633 = vunpack.c.l.b16 %v9617
    %v9634 = vunpack.c.l.b16 %v9618
    %v9635 = vpack.c.b16 %v9632, %v9631
    %v9636 = vpack.c.b16 %v9634, %v9633
    %v9640 = vsel %vm177, %v9611, 0
    %v9643 = vsel %vm177, %v9612, 0
    %v9646 = vsel %vm177, %v9613, 0
    %9648 = vmatprep.subr.bf16.mxu0 0
    %9649 = vmatpush1.bf16.msra.mxu0 %v9635
    %9650 = vmatprep.subr.bf16.mxu0 0
    %9651 = vmatpush1.bf16.msra.mxu0 %v9636
    %9652 = vmatprep.subr.bf16.mxu0 0
    %9653 = vmatpush1.bf16.msra.mxu0 0
    %9654 = vmatprep.subr.bf16.mxu0 0
    %9655 = vmatpush1.bf16.msra.mxu0 0
    %9656 = vmatprep.subr.bf16.mxu0 0
    %9657 = vmatpush1.bf16.msra.mxu0 0
    %9658 = vmatprep.subr.bf16.mxu0 0
    %9659 = vmatpush1.bf16.msra.mxu0 0
    %9660 = vmatprep.subr.bf16.mxu0 0
    %9661 = vmatpush1.bf16.msra.mxu0 0
    %9662 = vmatprep.subr.bf16.mxu0 0
    %9663 = vmatpush1.bf16.msra.mxu0 0
    %9664 = vmatprep.subr.bf16.mxu0 0
    %9665 = vmatpush1.bf16.msra.mxu0 0
    %9666 = vmatprep.subr.bf16.mxu0 0
    %9667 = vmatpush1.bf16.msra.mxu0 0
    %9668 = vmatprep.subr.bf16.mxu0 0
    %9669 = vmatpush1.bf16.msra.mxu0 0
    %9670 = vmatprep.subr.bf16.mxu0 0
    %9671 = vmatpush1.bf16.msra.mxu0 0
    %9672 = vmatprep.subr.bf16.mxu0 0
    %9673 = vmatpush1.bf16.msra.mxu0 0
    %9674 = vmatprep.subr.bf16.mxu0 0
    %9675 = vmatpush1.bf16.msra.mxu0 0
    %9676 = vmatprep.subr.bf16.mxu0 0
    %9677 = vmatpush1.bf16.msra.mxu0 0
    %9678 = vmatprep.subr.bf16.mxu0 0
    %9679 = vmatpush1.bf16.msra.mxu0 0
    %9680 = vmatprep.mubr.bf16.mxu0 0
    %9681 = vmatmul.mubr.bf16.gmra.mrb[0].mxu0 %v9640
    %v9682 = vpop.f32.mrb[0].mxu0
    %v9683 = vadd.f32 %v9625, %v9682
    %v9684 = vpop.f32.mrb[0].mxu0
    %v9685 = vpop.f32.mrb[0].mxu0
    %v9686 = vadd.f32 %v9625, %v9685
    %v9687 = vpop.f32.mrb[0].mxu0
    %9688 = vmatprep.mubr.bf16.mxu0 0
    %9689 = vmatmul.mubr.bf16.gmra.mrb[0].mxu0 %v9643
    %v9690 = vpop.f32.mrb[0].mxu0
    %v9691 = vadd.f32 %v9625, %v9690
    %v9692 = vpop.f32.mrb[0].mxu0
    %v9693 = vpop.f32.mrb[0].mxu0
    %v9694 = vadd.f32 %v9625, %v9693
    %v9695 = vpop.f32.mrb[0].mxu0
    %9696 = vmatprep.mubr.bf16.mxu0 0
    %9697 = vmatmul.mubr.bf16.gmra.mrb[0].mxu0 %v9646
    %v9698 = vpop.f32.mrb[0].mxu0
    %v9699 = vadd.f32 %v9625, %v9698
    %v9700 = vpop.f32.mrb[0].mxu0
    %v9701 = vpop.f32.mrb[0].mxu0
    %v9702 = vpop.f32.mrb[0].mxu0
    %9703 = vdwg.mxu0
    %v9704 = vmul.f32 %v9683, 0.5
    %v9705 = vmul.f32 %v9686, 0.5
    %v9706 = vmul.f32 %v9691, 0.5
    %v9707 = vmul.f32 %v9694, 0.5
    %v9708 = vmul.f32 %v9699, 0.5
    %v9709 = vmul.f32 %v9683, 0.70710677
    %v9710 = vmul.f32 %v9686, 0.70710677
    %v9711 = vmul.f32 %v9691, 0.70710677
    %v9712 = vmul.f32 %v9694, 0.70710677
    %v9713 = vmul.f32 %v9699, 0.70710677
    %v9714 = vmax.f32 %v9709, -4.0
    %v9715 = vmax.f32 %v9710, -4.0
    %v9716 = vmax.f32 %v9711, -4.0
    %v9717 = vmax.f32 %v9712, -4.0
    %v9718 = vmax.f32 %v9713, -4.0
    %v9719 = vmin.f32 %v9714, 4.0
    %v9720 = vmin.f32 %v9715, 4.0
    %v9721 = vmin.f32 %v9716, 4.0
    %v9722 = vmin.f32 %v9717, 4.0
    %v9723 = vmin.f32 %v9718, 4.0
    %v9724 = vmul.f32 %v9719, %v9719
    %v9725 = vmul.f32 %v9720, %v9720
    %v9726 = vmul.f32 %v9721, %v9721
    %v9727 = vmul.f32 %v9722, %v9722
    %v9728 = vmul.f32 %v9723, %v9723
    %v9729 = vmul.f32 %v9724, -2.7261424e-10
    %v9730 = vmul.f32 %v9725, -2.7261424e-10
    %v9731 = vmul.f32 %v9726, -2.7261424e-10
    %v9732 = vmul.f32 %v9727, -2.7261424e-10
    %v9733 = vmul.f32 %v9728, -2.7261424e-10
    %v9734 = vadd.f32 %v9729, 2.7706815e-08
    %v9735 = vadd.f32 %v9730, 2.7706815e-08
    %v9736 = vadd.f32 %v9731, 2.7706815e-08
    %v9737 = vadd.f32 %v9732, 2.7706815e-08
    %v9738 = vadd.f32 %v9733, 2.7706815e-08
    %v9739 = vmul.f32 %v9734, %v9724
    %v9740 = vmul.f32 %v9735, %v9725
    %v9741 = vmul.f32 %v9736, %v9726
    %v9742 = vmul.f32 %v9737, %v9727
    %v9743 = vmul.f32 %v9738, %v9728
    %v9744 = vadd.f32 %v9739, -2.101024e-06
    %v9745 = vadd.f32 %v9740, -2.101024e-06
    %v9746 = vadd.f32 %v9741, -2.101024e-06
    %v9747 = vadd.f32 %v9742, -2.101024e-06
    %v9748 = vadd.f32 %v9743, -2.101024e-06
    %v9749 = vmul.f32 %v9744, %v9724
    %v9750 = vmul.f32 %v9745, %v9725
    %v9751 = vmul.f32 %v9746, %v9726
    %v9752 = vmul.f32 %v9747, %v9727
    %v9753 = vmul.f32 %v9748, %v9728
    %v9754 = vadd.f32 %v9749, -5.6925062e-05
    %v9755 = vadd.f32 %v9750, -5.6925062e-05
    %v9756 = vadd.f32 %v9751, -5.6925062e-05
    %v9757 = vadd.f32 %v9752, -5.6925062e-05
    %v9758 = vadd.f32 %v9753, -5.6925062e-05
    %v9759 = vmul.f32 %v9754, %v9724
    %v9760 = vmul.f32 %v9755, %v9725
    %v9761 = vmul.f32 %v9756, %v9726
    %v9762 = vmul.f32 %v9757, %v9727
    %v9763 = vmul.f32 %v9758, %v9728
    %v9764 = vadd.f32 %v9759, -0.00073499064
    %v9765 = vadd.f32 %v9760, -0.00073499064
    %v9766 = vadd.f32 %v9761, -0.00073499064
    %v9767 = vadd.f32 %v9762, -0.00073499064
    %v9768 = vadd.f32 %v9763, -0.00073499064
    %v9769 = vmul.f32 %v9764, %v9724
    %v9770 = vmul.f32 %v9765, %v9725
    %v9771 = vmul.f32 %v9766, %v9726
    %v9772 = vmul.f32 %v9767, %v9727
    %v9773 = vmul.f32 %v9768, %v9728
    %v9774 = vadd.f32 %v9769, -0.0029546
    %v9775 = vadd.f32 %v9770, -0.0029546
    %v9776 = vadd.f32 %v9771, -0.0029546
    %v9777 = vadd.f32 %v9772, -0.0029546
    %v9778 = vadd.f32 %v9773, -0.0029546
    %v9779 = vmul.f32 %v9774, %v9724
    %v9780 = vmul.f32 %v9775, %v9725
    %v9781 = vmul.f32 %v9776, %v9726
    %v9782 = vmul.f32 %v9777, %v9727
    %v9783 = vmul.f32 %v9778, %v9728
    %v9784 = vadd.f32 %v9779, -0.016096033
    %v9785 = vadd.f32 %v9780, -0.016096033
    %v9786 = vadd.f32 %v9781, -0.016096033
    %v9787 = vadd.f32 %v9782, -0.016096033
    %v9788 = vadd.f32 %v9783, -0.016096033
    %v9789 = vmul.f32 %v9784, %v9719
    %v9790 = vmul.f32 %v9785, %v9720
    %v9791 = vmul.f32 %v9786, %v9721
    %v9792 = vmul.f32 %v9787, %v9722
    %v9793 = vmul.f32 %v9788, %v9723
    %v9794 = vmul.f32 %v9724, -1.45660715e-05
    %v9795 = vmul.f32 %v9725, -1.45660715e-05
    %v9796 = vmul.f32 %v9726, -1.45660715e-05
    %v9797 = vmul.f32 %v9727, -1.45660715e-05
    %v9798 = vmul.f32 %v9728, -1.45660715e-05
    %v9799 = vadd.f32 %v9794, -0.00021337405
    %v9800 = vadd.f32 %v9795, -0.00021337405
    %v9801 = vadd.f32 %v9796, -0.00021337405
    %v9802 = vadd.f32 %v9797, -0.00021337405
    %v9803 = vadd.f32 %v9798, -0.00021337405
    %v9804 = vmul.f32 %v9799, %v9724
    %v9805 = vmul.f32 %v9800, %v9725
    %v9806 = vmul.f32 %v9801, %v9726
    %v9807 = vmul.f32 %v9802, %v9727
    %v9808 = vmul.f32 %v9803, %v9728
    %v9809 = vadd.f32 %v9804, -0.001682827
    %v9810 = vadd.f32 %v9805, -0.001682827
    %v9811 = vadd.f32 %v9806, -0.001682827
    %v9812 = vadd.f32 %v9807, -0.001682827
    %v9813 = vadd.f32 %v9808, -0.001682827
    %v9814 = vmul.f32 %v9809, %v9724
    %v9815 = vmul.f32 %v9810, %v9725
    %v9816 = vmul.f32 %v9811, %v9726
    %v9817 = vmul.f32 %v9812, %v9727
    %v9818 = vmul.f32 %v9813, %v9728
    %v9819 = vadd.f32 %v9814, -0.0073733293
    %v9820 = vadd.f32 %v9815, -0.0073733293
    %v9821 = vadd.f32 %v9816, -0.0073733293
    %v9822 = vadd.f32 %v9817, -0.0073733293
    %v9823 = vadd.f32 %v9818, -0.0073733293
    %v9824 = vmul.f32 %v9819, %v9724
    %v9825 = vmul.f32 %v9820, %v9725
    %v9826 = vmul.f32 %v9821, %v9726
    %v9827 = vmul.f32 %v9822, %v9727
    %v9828 = vmul.f32 %v9823, %v9728
    %v9829 = vadd.f32 %v9824, -0.014264739
    %v9830 = vadd.f32 %v9825, -0.014264739
    %v9831 = vadd.f32 %v9826, -0.014264739
    %v9832 = vadd.f32 %v9827, -0.014264739
    %v9833 = vadd.f32 %v9828, -0.014264739
    %v9834 = vrcp.pop %v9829
    %v9835 = vmul.f32 %v9789, %v9834
    %v9836 = vrcp.pop %v9830
    %v9837 = vmul.f32 %v9790, %v9836
    %v9838 = vrcp.pop %v9831
    %v9839 = vmul.f32 %v9791, %v9838
    %v9840 = vrcp.pop %v9832
    %v9841 = vmul.f32 %v9792, %v9840
    %v9842 = vrcp.pop %v9833
    %v9843 = vmul.f32 %v9793, %v9842
    %v9844 = vadd.f32 %v9835, 1.0
    %v9845 = vadd.f32 %v9837, 1.0
    %v9846 = vadd.f32 %v9839, 1.0
    %v9847 = vadd.f32 %v9841, 1.0
    %v9848 = vadd.f32 %v9843, 1.0
    %v9849 = vmul.f32 %v9704, %v9844
    %v9850 = vmul.f32 %v9705, %v9845
    %v9851 = vmul.f32 %v9706, %v9846
    %v9852 = vmul.f32 %v9707, %v9847
    %v9853 = vmul.f32 %v9708, %v9848
    %v9854 = vpack.c.bf16 %v9850, %v9849
    %v9855 = vpack.c.bf16 %v9852, %v9851
    %v9856 = vpack.c.bf16 %v9853, %v9853
    %s9857 = scalar_lea.vmem %s14, 32
    %v9858 = vld [vmem:[%s9857] sm:$0xf]
    %v9859 = vld [vmem:[%s9857 + $0x4] sm:$0xf]
    %v9860 = vld [vmem:[%s9857 + $0x8] sm:$0xf]
    %v9861 = vld [vmem:[%s9857 + $0xc] sm:$0xf]
    %v9862 = vld [vmem:[%s9857 + $0x10] sm:$0xf]
    %v9863 = vld [vmem:[%s9857 + $0x14] sm:$0xf]
    %v9864 = vld [vmem:[%s9857 + $0x18] sm:$0xf]
    %v9865 = vld [vmem:[%s9857 + $0x1c] sm:$0xf]
    %s9866 = scalar_lea.vmem %s15, 1
    %v9867 = vld [vmem:[%s9866] sm:$0x1]
    %v9869 = vlaneseq
    %v9870 = vshrl.u32 %v9869, 7
    %v9871 = vsub.s32 0, %v9870
    %v9872 = vrot.slane %v9867, %v9871
    %v9882 = vunpack.c.l.b16 %v9858
    %v9883 = vunpack.c.l.b16 %v9859
    %v9884 = vunpack.c.l.b16 %v9860
    %v9885 = vunpack.c.l.b16 %v9861
    %v9886 = vunpack.c.l.b16 %v9862
    %v9887 = vunpack.c.l.b16 %v9863
    %v9888 = vunpack.c.l.b16 %v9864
    %v9889 = vunpack.c.l.b16 %v9865
    %v9890 = vpack.c.b16 %v9883, %v9882
    %v9891 = vpack.c.b16 %v9885, %v9884
    %v9892 = vpack.c.b16 %v9887, %v9886
    %v9893 = vpack.c.b16 %v9889, %v9888
    %v9899 = vsel %vm4924, %v9854, 0
    %v9902 = vsel %vm4924, %v9855, 0
    %v9905 = vsel %vm4924, %v9856, 0
    %9907 = vmatprep.subr.bf16.mxu0 0
    %9908 = vmatpush1.bf16.msra.mxu0 %v9890
    %9909 = vmatprep.subr.bf16.mxu0 0
    %9910 = vmatpush1.bf16.msra.mxu0 %v9891
    %9911 = vmatprep.subr.bf16.mxu0 0
    %9912 = vmatpush1.bf16.msra.mxu0 %v9892
    %9913 = vmatprep.subr.bf16.mxu0 0
    %9914 = vmatpush1.bf16.msra.mxu0 %v9893
    %9915 = vmatprep.subr.bf16.mxu0 0
    %9916 = vmatpush1.bf16.msra.mxu0 0
    %9917 = vmatprep.subr.bf16.mxu0 0
    %9918 = vmatpush1.bf16.msra.mxu0 0
    %9919 = vmatprep.subr.bf16.mxu0 0
    %9920 = vmatpush1.bf16.msra.mxu0 0
    %9921 = vmatprep.subr.bf16.mxu0 0
    %9922 = vmatpush1.bf16.msra.mxu0 0
    %9923 = vmatprep.subr.bf16.mxu0 0
    %9924 = vmatpush1.bf16.msra.mxu0 0
    %9925 = vmatprep.subr.bf16.mxu0 0
    %9926 = vmatpush1.bf16.msra.mxu0 0
    %9927 = vmatprep.subr.bf16.mxu0 0
    %9928 = vmatpush1.bf16.msra.mxu0 0
    %9929 = vmatprep.subr.bf16.mxu0 0
    %9930 = vmatpush1.bf16.msra.mxu0 0
    %9931 = vmatprep.subr.bf16.mxu0 0
    %9932 = vmatpush1.bf16.msra.mxu0 0
    %9933 = vmatprep.subr.bf16.mxu0 0
    %9934 = vmatpush1.bf16.msra.mxu0 0
    %9935 = vmatprep.subr.bf16.mxu0 0
    %9936 = vmatpush1.bf16.msra.mxu0 0
    %9937 = vmatprep.subr.bf16.mxu0 0
    %9938 = vmatpush1.bf16.msra.mxu0 0
    %9939 = vmatprep.mubr.bf16.mxu0 0
    %9940 = vmatmul.mubr.bf16.gmra.mrb[0].mxu0 %v9899
    %v9941 = vpop.f32.mrb[0].mxu0
    %v9942 = vadd.f32 %v9872, %v9941
    %v9943 = vpop.f32.mrb[0].mxu0
    %v9944 = vpop.f32.mrb[0].mxu0
    %v9945 = vpop.f32.mrb[0].mxu0
    %9946 = vmatprep.mubr.bf16.mxu0 0
    %9947 = vmatmul.mubr.bf16.gmra.mrb[0].mxu0 %v9902
    %v9948 = vpop.f32.mrb[0].mxu0
    %v9949 = vadd.f32 %v9872, %v9948
    %v9950 = vpop.f32.mrb[0].mxu0
    %v9951 = vpop.f32.mrb[0].mxu0
    %v9952 = vpop.f32.mrb[0].mxu0
    %9953 = vmatprep.mubr.bf16.mxu0 0
    %9954 = vmatmul.mubr.bf16.gmra.mrb[0].mxu0 %v9905
    %v9955 = vpop.f32.mrb[0].mxu0
    %v9956 = vpop.f32.mrb[0].mxu0
    %v9957 = vpop.f32.mrb[0].mxu0
    %v9958 = vpop.f32.mrb[0].mxu0
    %9959 = vdwg.mxu0
    %v9960 = vmul.f32 %v9942, 0.5
    %v9961 = vmul.f32 %v9949, 0.5
    %v9962 = vmul.f32 %v9942, 0.70710677
    %v9963 = vmul.f32 %v9949, 0.70710677
    %v9964 = vmax.f32 %v9962, -4.0
    %v9965 = vmax.f32 %v9963, -4.0
    %v9966 = vmin.f32 %v9964, 4.0
    %v9967 = vmin.f32 %v9965, 4.0
    %v9968 = vmul.f32 %v9966, %v9966
    %v9969 = vmul.f32 %v9967, %v9967
    %v9970 = vmul.f32 %v9968, -2.7261424e-10
    %v9971 = vmul.f32 %v9969, -2.7261424e-10
    %v9972 = vadd.f32 %v9970, 2.7706815e-08
    %v9973 = vadd.f32 %v9971, 2.7706815e-08
    %v9974 = vmul.f32 %v9972, %v9968
    %v9975 = vmul.f32 %v9973, %v9969
    %v9976 = vadd.f32 %v9974, -2.101024e-06
    %v9977 = vadd.f32 %v9975, -2.101024e-06
    %v9978 = vmul.f32 %v9976, %v9968
    %v9979 = vmul.f32 %v9977, %v9969
    %v9980 = vadd.f32 %v9978, -5.6925062e-05
    %v9981 = vadd.f32 %v9979, -5.6925062e-05
    %v9982 = vmul.f32 %v9980, %v9968
    %v9983 = vmul.f32 %v9981, %v9969
    %v9984 = vadd.f32 %v9982, -0.00073499064
    %v9985 = vadd.f32 %v9983, -0.00073499064
    %v9986 = vmul.f32 %v9984, %v9968
    %v9987 = vmul.f32 %v9985, %v9969
    %v9988 = vadd.f32 %v9986, -0.0029546
    %v9989 = vadd.f32 %v9987, -0.0029546
    %v9990 = vmul.f32 %v9988, %v9968
    %v9991 = vmul.f32 %v9989, %v9969
    %v9992 = vadd.f32 %v9990, -0.016096033
    %v9993 = vadd.f32 %v9991, -0.016096033
    %v9994 = vmul.f32 %v9992, %v9966
    %v9995 = vmul.f32 %v9993, %v9967
    %v9996 = vmul.f32 %v9968, -1.45660715e-05
    %v9997 = vmul.f32 %v9969, -1.45660715e-05
    %v9998 = vadd.f32 %v9996, -0.00021337405
    %v9999 = vadd.f32 %v9997, -0.00021337405
    %v10000 = vmul.f32 %v9998, %v9968
    %v10001 = vmul.f32 %v9999, %v9969
    %v10002 = vadd.f32 %v10000, -0.001682827
    %v10003 = vadd.f32 %v10001, -0.001682827
    %v10004 = vmul.f32 %v10002, %v9968
    %v10005 = vmul.f32 %v10003, %v9969
    %v10006 = vadd.f32 %v10004, -0.0073733293
    %v10007 = vadd.f32 %v10005, -0.0073733293
    %v10008 = vmul.f32 %v10006, %v9968
    %v10009 = vmul.f32 %v10007, %v9969
    %v10010 = vadd.f32 %v10008, -0.014264739
    %v10011 = vadd.f32 %v10009, -0.014264739
    %v10012 = vrcp.pop %v10010
    %v10013 = vmul.f32 %v9994, %v10012
    %v10014 = vrcp.pop %v10011
    %v10015 = vmul.f32 %v9995, %v10014
    %v10016 = vadd.f32 %v10013, 1.0
    %v10017 = vadd.f32 %v10015, 1.0
    %v10018 = vmul.f32 %v9960, %v10016
    %v10019 = vmul.f32 %v9961, %v10017
    %v10020 = vadd.f32 %v10018, %v9515
    %v10021 = vadd.f32 %v10019, %v9517
    %v10022 = vsel %vm3347, %v10020, %v10021
    %v10023 = vld [vmem:[%s16] sm:$0x1]
    %v10024 = vld [vmem:[%s17] sm:$0x1]
    %v10025 = vsel %vm190, %v10022, 0.0
    %10026 = vadd.xlane.f32.xlu0 %v10025
    %v10027 = vpop.xlane.xlu0 %10026
    %v10028 = vmul.f32 %v10027, %v194
    %v10029 = vsub.f32 %v10022, %v10028
    %v10030 = vmul.f32 %v10029, %v10029
    %v10031 = vsel %vm190, %v10030, 0.0
    %10032 = vadd.xlane.f32.xlu0 %v10031
    %v10033 = vpop.xlane.xlu0 %10032
    %v10034 = vmul.f32 %v10033, %v194
    %v10035 = vadd.f32 %v10034, 1e-05
    %v10036 = vrsqrt.pop %v10035
    %v10037 = vmul.f32 %v10029, %v10036
    %v10039 = vlaneseq
    %v10040 = vshrl.u32 %v10039, 7
    %v10041 = vsub.s32 0, %v10040
    %v10042 = vrot.slane %v10023, %v10041
    %v10044 = vmul.f32 %v10037, %v10042
    %v10046 = vlaneseq
    %v10047 = vshrl.u32 %v10046, 7
    %v10048 = vsub.s32 0, %v10047
    %v10049 = vrot.slane %v10024, %v10048
    %v10051 = vadd.f32 %v10044, %v10049
    %v10052 = vpack.c.bf16 %v10051, %v10051
    %v10053 = vld [vmem:[%s18] sm:$0xf]
    %v10054 = vld [vmem:[%s18 + $0x4] sm:$0xf]
    %v10055 = vld [vmem:[%s18 + $0x8] sm:$0xf]
    %v10056 = vld [vmem:[%s18 + $0xc] sm:$0xf]
    %v10057 = vld [vmem:[%s19] sm:$0x1]
    %v10059 = vlaneseq
    %v10060 = vshrl.u32 %v10059, 7
    %v10061 = vsub.s32 0, %v10060
    %v10062 = vrot.slane %v10057, %v10061
    %v10068 = vunpack.c.l.b16 %v10053
    %v10069 = vunpack.c.l.b16 %v10054
    %v10070 = vunpack.c.l.b16 %v10055
    %v10071 = vunpack.c.l.b16 %v10056
    %v10072 = vpack.c.b16 %v10069, %v10068
    %v10073 = vpack.c.b16 %v10071, %v10070
    %v10077 = vsel %vm177, %v10052, 0
    %10079 = vmatprep.subr.bf16.mxu0 0
    %10080 = vmatpush1.bf16.msra.mxu0 %v10072
    %10081 = vmatprep.subr.bf16.mxu0 0
    %10082 = vmatpush1.bf16.msra.mxu0 %v10073
    %10083 = vmatprep.subr.bf16.mxu0 0
    %10084 = vmatpush1.bf16.msra.mxu0 0
    %10085 = vmatprep.subr.bf16.mxu0 0
    %10086 = vmatpush1.bf16.msra.mxu0 0
    %10087 = vmatprep.subr.bf16.mxu0 0
    %10088 = vmatpush1.bf16.msra.mxu0 0
    %10089 = vmatprep.subr.bf16.mxu0 0
    %10090 = vmatpush1.bf16.msra.mxu0 0
    %10091 = vmatprep.subr.bf16.mxu0 0
    %10092 = vmatpush1.bf16.msra.mxu0 0
    %10093 = vmatprep.subr.bf16.mxu0 0
    %10094 = vmatpush1.bf16.msra.mxu0 0
    %10095 = vmatprep.subr.bf16.mxu0 0
    %10096 = vmatpush1.bf16.msra.mxu0 0
    %10097 = vmatprep.subr.bf16.mxu0 0
    %10098 = vmatpush1.bf16.msra.mxu0 0
    %10099 = vmatprep.subr.bf16.mxu0 0
    %10100 = vmatpush1.bf16.msra.mxu0 0
    %10101 = vmatprep.subr.bf16.mxu0 0
    %10102 = vmatpush1.bf16.msra.mxu0 0
    %10103 = vmatprep.subr.bf16.mxu0 0
    %10104 = vmatpush1.bf16.msra.mxu0 0
    %10105 = vmatprep.subr.bf16.mxu0 0
    %10106 = vmatpush1.bf16.msra.mxu0 0
    %10107 = vmatprep.subr.bf16.mxu0 0
    %10108 = vmatpush1.bf16.msra.mxu0 0
    %10109 = vmatprep.subr.bf16.mxu0 0
    %10110 = vmatpush1.bf16.msra.mxu0 0
    %10111 = vmatprep.mubr.bf16.mxu0 0
    %10112 = vmatmul.mubr.bf16.gmra.mrb[0].mxu0 %v10077
    %v10113 = vpop.f32.mrb[0].mxu0
    %v10114 = vadd.f32 %v10062, %v10113
    %v10115 = vpop.f32.mrb[0].mxu0
    %v10116 = vpop.f32.mrb[0].mxu0
    %v10117 = vpop.f32.mrb[0].mxu0
    %10118 = vdwg.mxu0
    %vm10119 = vcmask 74752
    %10120 = vst.msk [vmem:[#allocation2] sm:$0x3] %vm10119, %v10114
    // Predicated region
    $region82: #{tpu_custom_call.1} parent=1 // pred_check
      _
    $region83: #{tpu_custom_call.1} parent=1 // pred_check_branch
      %10122 = sbr.rel (0) target = $region85
    $region84: #{tpu_custom_call.1} parent=1 // pred_region
      %s10124 = ssub.s32 32, 32
      %10125 = vsyncadd [#allocation3], %s10124
      %s10127 = sshll.u32 [#allocation2], 4
      %s10128 = int_to_ptr.vmem [resolvable:$true] %s10127
      %10130 = dma.vmem_to_hbm [thread:$0]  %s10128, 32, %s20, [#allocation3]
    $region85: #{tpu_custom_call.1} parent=1 // pred_fallthru
      _
    // Predicated region
    $region86: #{tpu_custom_call.1} parent=1 // pred_check
      _
    $region87: #{tpu_custom_call.1} parent=1 // pred_check_branch
      %10132 = sbr.rel (0) target = $region89
    $region88: #{tpu_custom_call.1} parent=1 // pred_region
      %10133 = dma.done [#allocation3], 32
    $region89: #{tpu_custom_call.1} parent=1 // pred_fallthru
      _
    %10134 = vsyncpa [#allocation3], 1

</llo_original>
